<compile_context>
chip_gen: v7x
topology: tpu7x:2x2x1
jax: 0.10.0
libtpu: 0.0.40
codegen_flags: <defaults>
</compile_context>

<pallas_src>
import functools

import jax
import jax.numpy as jnp
from jax import lax
from jax.experimental import pallas as pl
from jax.experimental.pallas import tpu as pltpu

EPS = 1e-5           # nn.InstanceNorm2d default eps
LEAKY_SLOPE = 0.01   # nn.LeakyReLU(0.01) per the reference module (not 0.2)
NHIDDEN = 128        # SPADE hidden width
LANE = 128


def _round_up(n, m=LANE):
    return ((n + m - 1) // m) * m


def _pick_tile(c_p):
    # 256-wide output tiles fill the 256-lane MXU on v6e/v7x; on v5e (128-wide
    # MXU) a 256 tile is just two native passes, so this is safe everywhere.
    return 256 if c_p % 256 == 0 else LANE


def _halo_rows(H, W):
    """Rows of the flat bf16 halo scratch (incl. borders and tap-read slack)."""
    Wp = W + 2
    return ((H + 2) * Wp + 2 + 7) // 8 * 8


# ----------------------------- Pallas kernels -----------------------------

def _spade_modulate_kernel(src_ref, x_ref, mask_ref, wsh_ref, bsh_ref,
                           wgb_ref, bgb_ref, o_ref, ahalo_ref, *, H, W, leaky):
    """One fused SPADE layer.

    Prologue (m == 0, once per batch): label_nc=1 -> NHIDDEN shared 3x3 conv +
    ReLU evaluated on the column-padded (H, W+2) grid, written into a bf16 flat
    halo scratch (border bands zeroed, interior stored per spatial row).

    Body (every output-channel tile m): gamma/beta 3x3 conv as 9 contiguous
    row-block bf16 MXU matmuls over the actv halo, then instance-norm (f32
    stats over valid pixels only) + SPADE modulation (+ LeakyReLU).  Emits the
    modulated activation h as bf16 in the same column-padded flat layout.
    """
    Wp = W + 2
    OFF = Wp + 1                 # first interior row of the flat halo
    HWp = H * Wp
    nh = ahalo_ref.shape[-1]     # NHIDDEN
    rows = ahalo_ref.shape[0]

    @pl.when(pl.program_id(1) == 0)
    def _build_actv_halo():
        # TODO(synk): for label_nc > 1 this prologue should be a K-dim MXU matmul.
        s = src_ref[0]                                           # (H+2, W+4, 1) f32
        acc = jnp.zeros((H, Wp, nh), jnp.float32)
        for kh in range(3):
            for kw in range(3):
                acc = acc + (s[kh:kh + H, kw:kw + Wp, :]
                             * wsh_ref[kh * 3 + kw][None, :, :])
        actv = jnp.maximum(acc + bsh_ref[...][None, :, :], 0.0)
        # zero the pad columns (they double as the halo's left/right border)
        mcol = mask_ref[0:Wp, :]                                 # (Wp, 1): 1..1,0,0
        actv = (actv * mcol[None, :, :]).astype(jnp.bfloat16)
        # border-band zeroing only (interior overwritten right below)
        ahalo_ref[0:OFF, :] = jnp.zeros((OFF, nh), jnp.bfloat16)
        ahalo_ref[OFF + HWp:rows, :] = jnp.zeros((rows - OFF - HWp, nh),
                                                 jnp.bfloat16)
        for i in range(H):                                       # contiguous rows
            ahalo_ref[OFF + i * Wp:OFF + (i + 1) * Wp, :] = actv[i]

    # gamma/beta 3x3 conv: 9 contiguous-row bf16 matmuls (no window copies)
    tm = o_ref.shape[-1]
    acc = jnp.zeros((HWp, 2 * tm), jnp.float32)
    for kh in range(3):
        for kw in range(3):
            start = kh * Wp + kw
            a = ahalo_ref[start:start + HWp, :]                  # (H*Wp, nh) bf16
            acc = acc + jnp.dot(a, wgb_ref[0, kh * 3 + kw],
                                preferred_element_type=jnp.float32)
    acc = acc + bgb_ref[0]
    gamma = acc[:, :tm]
    beta = acc[:, tm:]

    # InstanceNorm2d statistics in f32, over valid pixels only (pads masked)
    mask = mask_ref[...]                                         # (H*Wp, 1) f32
    x = x_ref[0].astype(jnp.float32)                             # (H*Wp, tm)
    inv_hw = 1.0 / (H * W)
    xm = x * mask
    mean = jnp.sum(xm, axis=0, keepdims=True) * inv_hw
    d = (x - mean) * mask
    var = jnp.sum(d * d, axis=0, keepdims=True) * inv_hw
    xn = (x - mean) * lax.rsqrt(var + EPS)

    h = xn * (1.0 + gamma) + beta
    if leaky:
        h = jnp.where(h >= 0, h, LEAKY_SLOPE * h)
    o_ref[0] = (h * mask).astype(o_ref.dtype)                    # keep pads zero


def _conv3x3_kernel(*refs, H, W, has_res):
    """3x3 'same' conv on an already-modulated bf16 activation (column-padded
    flat layout).  Halo build = one contiguous copy + two border zero stores,
    done once per batch (m == 0) and reused by every output-channel tile; the
    conv is 9 contiguous-row bf16 MXU matmuls with f32 accumulation; optional
    fused residual add in the epilogue."""
    it = iter(refs)
    h_ref = next(it)
    w_ref = next(it)
    b_ref = next(it)
    res_ref = next(it) if has_res else None
    o_ref = next(it)
    hpad_ref = next(it)

    Wp = W + 2
    OFF = Wp + 1
    HWp = H * Wp
    cin_p = h_ref.shape[-1]
    rows = hpad_ref.shape[0]

    @pl.when(pl.program_id(1) == 0)
    def _build_halo():
        hpad_ref[0:OFF, :] = jnp.zeros((OFF, cin_p), jnp.bfloat16)
        hpad_ref[OFF + HWp:rows, :] = jnp.zeros((rows - OFF - HWp, cin_p),
                                                jnp.bfloat16)
        hpad_ref[OFF:OFF + HWp, :] = h_ref[0].astype(jnp.bfloat16)

    tm = o_ref.shape[-1]
    # TODO(synk): for production H*W (>= 4096 rows) tile this accumulator over
    # row blocks so it stays in vregs (and use the MRB on v7x).
    acc = jnp.zeros((HWp, tm), jnp.float32)
    for kh in range(3):
        for kw in range(3):
            start = kh * Wp + kw
            a = hpad_ref[start:start + HWp, :]                   # contiguous bf16
            acc = acc + jnp.dot(a, w_ref[kh * 3 + kw],
                                preferred_element_type=jnp.float32)
    out = acc + b_ref[...]
    if has_res:
        out = out + res_ref[0].astype(jnp.float32)               # fused residual
    o_ref[0] = out.astype(o_ref.dtype)


def _conv1x1_kernel(h_ref, w_ref, o_ref):
    """Shortcut 1x1 conv (no bias): one bf16 MXU matmul per output tile."""
    o_ref[0] = jnp.dot(h_ref[0], w_ref[...],
                       preferred_element_type=jnp.float32).astype(o_ref.dtype)


# ------------------------------ pallas_call wrappers -----------------------

def spade_modulate(x_flat, src_pad, mask, sp, H, W, *, leaky):
    """x_flat: (B, H*(W+2), cin_p); src_pad: (B, H+2, W+4, 1) f32;
    mask: (H*(W+2), 1) f32.  Returns h (bf16) in the same padded-flat layout."""
    B, HWp, cin_p = x_flat.shape
    n_m, _, _, two_tm = sp["w_gb"].shape
    tm = two_tm // 2
    kernel = functools.partial(_spade_modulate_kernel, H=H, W=W, leaky=leaky)
    return pl.pallas_call(
        kernel,
        out_shape=jax.ShapeDtypeStruct((B, HWp, cin_p), jnp.bfloat16),
        grid=(B, n_m),
        in_specs=[
            pl.BlockSpec((1, H + 2, W + 4, 1), lambda b, m: (b, 0, 0, 0)),
            pl.BlockSpec((1, HWp, tm), lambda b, m: (b, 0, m)),
            pl.BlockSpec((HWp, 1), lambda b, m: (0, 0)),
            pl.BlockSpec((9, 1, NHIDDEN), lambda b, m: (0, 0, 0)),
            pl.BlockSpec((1, NHIDDEN), lambda b, m: (0, 0)),
            pl.BlockSpec((1, 9, NHIDDEN, two_tm), lambda b, m: (m, 0, 0, 0)),
            pl.BlockSpec((1, 1, two_tm), lambda b, m: (m, 0, 0)),
        ],
        out_specs=pl.BlockSpec((1, HWp, tm), lambda b, m: (b, 0, m)),
        scratch_shapes=[pltpu.VMEM((_halo_rows(H, W), NHIDDEN), jnp.bfloat16)],
        compiler_params=pltpu.CompilerParams(
            dimension_semantics=("parallel", "arbitrary")),
    )(src_pad, x_flat, mask, sp["w_shared"], sp["b_shared"],
      sp["w_gb"], sp["b_gb"])


def conv3x3(h, w9, bias, H, W, *, residual=None, out_dtype=jnp.bfloat16, tm=None):
    """h: (B, H*(W+2), cin_p) bf16; w9: (9, cin_p, cout_p) bf16; bias: (1, cout_p)."""
    B, HWp, cin_p = h.shape
    cout_p = w9.shape[-1]
    if tm is None:
        tm = _pick_tile(cout_p)
    has_res = residual is not None
    in_specs = [pl.BlockSpec((1, HWp, cin_p), lambda b, m: (b, 0, 0)),
                pl.BlockSpec((9, cin_p, tm), lambda b, m: (0, 0, m)),
                pl.BlockSpec((1, tm), lambda b, m: (0, m))]
    args = [h, w9, bias]
    if has_res:
        in_specs.append(pl.BlockSpec((1, HWp, tm), lambda b, m: (b, 0, m)))
        args.append(residual)
    return pl.pallas_call(
        functools.partial(_conv3x3_kernel, H=H, W=W, has_res=has_res),
        out_shape=jax.ShapeDtypeStruct((B, HWp, cout_p), out_dtype),
        grid=(B, cout_p // tm),
        in_specs=in_specs,
        out_specs=pl.BlockSpec((1, HWp, tm), lambda b, m: (b, 0, m)),
        scratch_shapes=[pltpu.VMEM((_halo_rows(H, W), cin_p), jnp.bfloat16)],
        compiler_params=pltpu.CompilerParams(
            dimension_semantics=("parallel", "arbitrary")),
    )(*args)


def conv1x1(h, w, *, out_dtype=jnp.float32, tm=None):
    B, HWp, cin_p = h.shape
    cout_p = w.shape[-1]
    if tm is None:
        tm = _pick_tile(cout_p)
    return pl.pallas_call(
        _conv1x1_kernel,
        out_shape=jax.ShapeDtypeStruct((B, HWp, cout_p), out_dtype),
        grid=(B, cout_p // tm),
        in_specs=[pl.BlockSpec((1, HWp, cin_p), lambda b, m: (b, 0, 0)),
                  pl.BlockSpec((cin_p, tm), lambda b, m: (0, m))],
        out_specs=pl.BlockSpec((1, HWp, tm), lambda b, m: (b, 0, m)),
        compiler_params=pltpu.CompilerParams(
            dimension_semantics=("parallel", "parallel")),
    )(h, w)


# ------------------------------- JAX glue ---------------------------------
# One-time layout / weight-repacking glue (outside the hot kernels).

def nearest_resize_nchw(src, H, W):
    """F.interpolate(mode='nearest'): src_idx = floor(dst_idx * in/out)."""
    B, C, Hs, Ws = src.shape
    hi = (jnp.arange(H) * Hs) // H
    wi = (jnp.arange(W) * Ws) // W
    return src[:, :, hi[:, None], wi[None, :]]


def _prep_conv3(w_oihw, bias, cin_p, cout_p):
    O, I, _, _ = w_oihw.shape
    w = jnp.transpose(w_oihw, (2, 3, 1, 0))                     # (3, 3, I, O)
    w = jnp.pad(w, ((0, 0), (0, 0), (0, cin_p - I), (0, cout_p - O)))
    w = w.reshape(9, cin_p, cout_p).astype(jnp.bfloat16)
    b = jnp.pad(bias, (0, cout_p - O)).reshape(1, cout_p).astype(jnp.float32)
    return w, b


def _prep_spade(p, norm_nc_p, tm):
    """Kernel-ready SPADE weights; gamma/beta convs interleaved per output tile
    so each 2*tm tile carries matching [gamma_m | beta_m] channels."""
    ws = jnp.transpose(p["w_shared"], (2, 3, 1, 0)).reshape(9, 1, NHIDDEN)
    bs = p["b_shared"].reshape(1, NHIDDEN).astype(jnp.float32)
    wg, bg = _prep_conv3(p["w_gamma"], p["b_gamma"], NHIDDEN, norm_nc_p)
    wb, bb = _prep_conv3(p["w_beta"], p["b_beta"], NHIDDEN, norm_nc_p)
    n_m = norm_nc_p // tm
    w_gb = jnp.concatenate([wg.reshape(9, NHIDDEN, n_m, tm),
                            wb.reshape(9, NHIDDEN, n_m, tm)], axis=-1)
    w_gb = jnp.transpose(w_gb, (2, 0, 1, 3))                    # (n_m,9,128,2tm) bf16
    b_gb = jnp.concatenate([bg.reshape(n_m, tm), bb.reshape(n_m, tm)], axis=-1)
    b_gb = b_gb.reshape(n_m, 1, 2 * tm).astype(jnp.float32)
    return {"w_shared": ws.astype(jnp.float32), "b_shared": bs,
            "w_gb": w_gb, "b_gb": b_gb}


def spade_resnet_block_forward(x, source, params):
    B, fin, H, W = x.shape
    fout = params["fout"]
    fmiddle = min(fin, fout)
    fin_p, fmid_p, fout_p = _round_up(fin), _round_up(fmiddle), _round_up(fout)
    Wp = W + 2
    HWp = H * Wp

    # ---- boundary layout: NCHW -> column-padded flat NHWC (lane-padded C) ----
    x_nhwc = jnp.transpose(x, (0, 2, 3, 1))
    x_nhwc = jnp.pad(x_nhwc, ((0, 0), (0, 0), (0, Wp - W), (0, fin_p - fin)))
    x_flat = x_nhwc.reshape(B, HWp, fin_p).astype(jnp.float32)

    # nearest-resized label map, padded for the shared conv evaluated on the
    # column-padded (H, W+2) grid
    src = nearest_resize_nchw(source, H, W)[:, 0]                 # (B, H, W)
    src_pad = jnp.pad(src, ((0, 0), (1, 1), (1, 3)))[..., None].astype(jnp.float32)

    # valid-pixel mask over the column-padded flat layout
    mask = (jnp.arange(HWp) % Wp < W).astype(jnp.float32).reshape(HWp, 1)

    # kernel-ready weights (in a real module this repacking is precomputed once)
    tm0, tm1 = _pick_tile(fin_p), _pick_tile(fmid_p)
    p0 = _prep_spade(params["norm_0"], fin_p, tm0)
    p1 = _prep_spade(params["norm_1"], fmid_p, tm1)
    w0, b0 = _prep_conv3(params["w_conv0"], params["b_conv0"], fin_p, fmid_p)
    w1, b1 = _prep_conv3(params["w_conv1"], params["b_conv1"], fmid_p, fout_p)

    # ---- shortcut: x_s = conv_s(norm_s(x, src)) (no activation, no bias) ----
    if params["learned_shortcut"]:
        ps = _prep_spade(params["norm_s"], fin_p, tm0)
        hs = spade_modulate(x_flat, src_pad, mask, ps, H, W, leaky=False)
        ws = jnp.pad(params["w_convs"].reshape(fout, fin).T,
                     ((0, fin_p - fin), (0, fout_p - fout))).astype(jnp.bfloat16)
        x_s = conv1x1(hs, ws)                                     # (B, HWp, fout_p) f32
    else:
        x_s = x_flat                                              # fin_p == fout_p

    # ---- dx = conv_0(actvn(norm_0(x)));  out = conv_1(actvn(norm_1(dx))) + x_s
    h0 = spade_modulate(x_flat, src_pad, mask, p0, H, W, leaky=True)   # bf16
    dx = conv3x3(h0, w0, b0, H, W, out_dtype=jnp.bfloat16)             # bf16
    h1 = spade_modulate(dx, src_pad, mask, p1, H, W, leaky=True)       # bf16
    out = conv3x3(h1, w1, b1, H, W, residual=x_s, out_dtype=jnp.float32)

    # ---- boundary layout back to NCHW, dropping column/channel padding ----
    out = out.reshape(B, H, Wp, fout_p)[:, :, :W, :fout]
    return jnp.transpose(out, (0, 3, 1, 2))


# --------------------------- parameter init --------------------------------

def init_params(key, fin, fout):
    fmiddle = min(fin, fout)
    learned_shortcut = fin != fout
    keys = list(jax.random.split(key, 64))
    it = iter(keys)

    def conv_w(cout, cin, k):
        return 0.1 * jax.random.normal(next(it), (cout, cin, k, k), jnp.float32)

    def conv_b(cout):
        return 0.1 * jax.random.normal(next(it), (cout,), jnp.float32)

    def spade_params(norm_nc):
        return {
            "w_shared": conv_w(NHIDDEN, 1, 3), "b_shared": conv_b(NHIDDEN),
            "w_gamma": conv_w(norm_nc, NHIDDEN, 3), "b_gamma": conv_b(norm_nc),
            "w_beta": conv_w(norm_nc, NHIDDEN, 3), "b_beta": conv_b(norm_nc),
        }

    params = {
        "fout": fout,
        "learned_shortcut": learned_shortcut,
        "w_conv0": conv_w(fmiddle, fin, 3), "b_conv0": conv_b(fmiddle),
        "w_conv1": conv_w(fout, fmiddle, 3), "b_conv1": conv_b(fout),
        "norm_0": spade_params(fin),
        "norm_1": spade_params(fmiddle),
    }
    if learned_shortcut:
        params["w_convs"] = conv_w(fout, fin, 1)
        params["norm_s"] = spade_params(fin)
    return params


# --------------------------- pure-JAX reference -----------------------------

def _ref_conv(x, w, b=None):
    out = lax.conv_general_dilated(x, w, (1, 1), "SAME",
                                   dimension_numbers=("NCHW", "OIHW", "NCHW"))
    if b is not None:
        out = out + b[None, :, None, None]
    return out


def _ref_instance_norm(x):
    mean = jnp.mean(x, axis=(2, 3), keepdims=True)
    var = jnp.mean(jnp.square(x - mean), axis=(2, 3), keepdims=True)
    return (x - mean) * lax.rsqrt(var + EPS)


def _ref_spade(x, source, p):
    _, _, H, W = x.shape
    src = nearest_resize_nchw(source, H, W)
    normalized = _ref_instance_norm(x)
    actv = jnp.maximum(_ref_conv(src, p["w_shared"], p["b_shared"]), 0.0)
    gamma = _ref_conv(actv, p["w_gamma"], p["b_gamma"])
    beta = _ref_conv(actv, p["w_beta"], p["b_beta"])
    return normalized * (1.0 + gamma) + beta


def _ref_leaky(x):
    return jnp.where(x >= 0, x, LEAKY_SLOPE * x)


def _ref_block(x, source, params):
    if params["learned_shortcut"]:
        x_s = _ref_conv(_ref_spade(x, source, params["norm_s"]), params["w_convs"])
    else:
        x_s = x
    dx = _ref_conv(_ref_leaky(_ref_spade(x, source, params["norm_0"])),
                   params["w_conv0"], params["b_conv0"])
    dx = _ref_conv(_ref_leaky(_ref_spade(dx, source, params["norm_1"])),
                   params["w_conv1"], params["b_conv1"])
    return x_s + dx


# --------------------------------- main -------------------------------------

if __name__ == "__main__":
    key = jax.random.PRNGKey(0)
    kx, ks, kp, kx2, kp2 = jax.random.split(key, 5)

    # Config 1: fin != fout -> learned-shortcut path (exercises every kernel).
    B, fin, fout, H, W = 2, 4, 8, 16, 16
    x = jax.random.normal(kx, (B, fin, H, W), jnp.float32)
    source = jax.random.normal(ks, (B, 1, 8, 8), jnp.float32)   # label_nc = 1
    params = init_params(kp, fin, fout)

    out = jax.block_until_ready(spade_resnet_block_forward(x, source, params))
    ref = jax.block_until_ready(_ref_block(x, source, params))
    assert out.shape == (B, fout, H, W), out.shape
    # bf16 MXU operands and bf16 inter-kernel activations vs. an all-f32
    # reference: use a bf16-appropriate tolerance (real indexing bugs are O(1)).
    err = float(jnp.max(jnp.abs(out - ref)))
    assert jnp.allclose(out, ref, atol=1e-1, rtol=1e-1), f"max abs err {err}"

    # Config 2: fin == fout -> identity-shortcut path.
    fin2 = fout2 = 8
    x2 = jax.random.normal(kx2, (B, fin2, H, W), jnp.float32)
    params2 = init_params(kp2, fin2, fout2)
    out2 = jax.block_until_ready(spade_resnet_block_forward(x2, source, params2))
    ref2 = jax.block_until_ready(_ref_block(x2, source, params2))
    err2 = float(jnp.max(jnp.abs(out2 - ref2)))
    assert jnp.allclose(out2, ref2, atol=1e-1, rtol=1e-1), f"max abs err {err2}"

    print("KERNEL_OK")
</pallas_src>

<mosaic_0001>
module attributes {stable_mosaic.version = 11 : i64} {
  func.func @_spade_modulate_kernel(%arg0: i32, %arg1: i32, %arg2: memref<1x18x20x1xf32, #tpu.memory_space<vmem>>, %arg3: memref<1x288x128xf32, #tpu.memory_space<vmem>>, %arg4: memref<288x1xf32, #tpu.memory_space<vmem>>, %arg5: memref<9x1x128xf32, #tpu.memory_space<vmem>>, %arg6: memref<1x128xf32, #tpu.memory_space<vmem>>, %arg7: memref<1x9x128x256xbf16, #tpu.memory_space<vmem>>, %arg8: memref<1x1x256xf32, #tpu.memory_space<vmem>>, %arg9: memref<1x288x128xbf16, #tpu.memory_space<vmem>>, %arg10: memref<328x128xbf16, #tpu.memory_space<vmem>>) attributes {dimension_semantics = [#tpu.dimension_semantics<parallel>, #tpu.dimension_semantics<arbitrary>], iteration_bounds = array<i64: 2, 1>, scalar_prefetch = 0 : i64, scratch_operands = 1 : i64, tpu.core_type = #tpu.core_type<tc>, window_params = [{transform_indices = @transform_0, window_bounds = array<i64: 1, 18, 20, 1>}, {transform_indices = @transform_1, window_bounds = array<i64: 1, 288, 128>}, {pipeline_mode = #tpu.pipeline_mode<synchronous>, transform_indices = @transform_2, window_bounds = array<i64: 288, 1>}, {pipeline_mode = #tpu.pipeline_mode<synchronous>, transform_indices = @transform_3, window_bounds = array<i64: 9, 1, 128>}, {pipeline_mode = #tpu.pipeline_mode<synchronous>, transform_indices = @transform_4, window_bounds = array<i64: 1, 128>}, {transform_indices = @transform_5, window_bounds = array<i64: 1, 9, 128, 256>}, {transform_indices = @transform_6, window_bounds = array<i64: 1, 1, 256>}, {transform_indices = @transform_7, window_bounds = array<i64: 1, 288, 128>}]} {
    %c0_i32 = arith.constant 0 : i32
    %0 = arith.cmpi eq, %arg1, %c0_i32 : i32
    %1 = arith.extui %0 : i1 to i32
    %c0_i32_0 = arith.constant 0 : i32
    %2 = arith.cmpi ne, %1, %c0_i32_0 : i32
    scf.if %2 {
      %c0_66 = arith.constant 0 : index
      %c0_67 = arith.constant 0 : index
      %c0_68 = arith.constant 0 : index
      %c0_69 = arith.constant 0 : index
      %90 = vector.load %arg2[%c0_66, %c0_67, %c0_68, %c0_69] : memref<1x18x20x1xf32, #tpu.memory_space<vmem>>, vector<1x18x20x1xf32>
      %91 = vector.shape_cast %90 : vector<1x18x20x1xf32> to vector<18x20x1xf32>
      %cst_70 = arith.constant 0.000000e+00 : f32
      %92 = vector.broadcast %cst_70 : f32 to vector<16x18x128xf32>
      %93 = vector.extract_strided_slice %91 {offsets = [0, 0, 0], sizes = [16, 18, 1], strides = [1, 1, 1]} : vector<18x20x1xf32> to vector<16x18x1xf32>
      %c0_71 = arith.constant 0 : index
      %c0_72 = arith.constant 0 : index
      %c0_73 = arith.constant 0 : index
      %94 = vector.load %arg5[%c0_71, %c0_72, %c0_73] : memref<9x1x128xf32, #tpu.memory_space<vmem>>, vector<1x1x128xf32>
      %95 = vector.shape_cast %94 : vector<1x1x128xf32> to vector<1x128xf32>
      %96 = vector.shape_cast %95 : vector<1x128xf32> to vector<1x1x128xf32>
      %97 = vector.broadcast %93 : vector<16x18x1xf32> to vector<16x18x128xf32>
      %98 = vector.broadcast %96 : vector<1x1x128xf32> to vector<16x18x128xf32>
      %99 = arith.mulf %97, %98 : vector<16x18x128xf32>
      %100 = arith.addf %92, %99 : vector<16x18x128xf32>
      %101 = vector.extract_strided_slice %91 {offsets = [0, 1, 0], sizes = [16, 18, 1], strides = [1, 1, 1]} : vector<18x20x1xf32> to vector<16x18x1xf32>
      %c1_74 = arith.constant 1 : index
      %c0_75 = arith.constant 0 : index
      %c0_76 = arith.constant 0 : index
      %102 = vector.load %arg5[%c1_74, %c0_75, %c0_76] : memref<9x1x128xf32, #tpu.memory_space<vmem>>, vector<1x1x128xf32>
      %103 = vector.shape_cast %102 : vector<1x1x128xf32> to vector<1x128xf32>
      %104 = vector.shape_cast %103 : vector<1x128xf32> to vector<1x1x128xf32>
      %105 = vector.broadcast %101 : vector<16x18x1xf32> to vector<16x18x128xf32>
      %106 = vector.broadcast %104 : vector<1x1x128xf32> to vector<16x18x128xf32>
      %107 = arith.mulf %105, %106 : vector<16x18x128xf32>
      %108 = arith.addf %100, %107 : vector<16x18x128xf32>
      %109 = vector.extract_strided_slice %91 {offsets = [0, 2, 0], sizes = [16, 18, 1], strides = [1, 1, 1]} : vector<18x20x1xf32> to vector<16x18x1xf32>
      %c2_77 = arith.constant 2 : index
      %c0_78 = arith.constant 0 : index
      %c0_79 = arith.constant 0 : index
      %110 = vector.load %arg5[%c2_77, %c0_78, %c0_79] : memref<9x1x128xf32, #tpu.memory_space<vmem>>, vector<1x1x128xf32>
      %111 = vector.shape_cast %110 : vector<1x1x128xf32> to vector<1x128xf32>
      %112 = vector.shape_cast %111 : vector<1x128xf32> to vector<1x1x128xf32>
      %113 = vector.broadcast %109 : vector<16x18x1xf32> to vector<16x18x128xf32>
      %114 = vector.broadcast %112 : vector<1x1x128xf32> to vector<16x18x128xf32>
      %115 = arith.mulf %113, %114 : vector<16x18x128xf32>
      %116 = arith.addf %108, %115 : vector<16x18x128xf32>
      %117 = vector.extract_strided_slice %91 {offsets = [1, 0, 0], sizes = [16, 18, 1], strides = [1, 1, 1]} : vector<18x20x1xf32> to vector<16x18x1xf32>
      %c3_80 = arith.constant 3 : index
      %c0_81 = arith.constant 0 : index
      %c0_82 = arith.constant 0 : index
      %118 = vector.load %arg5[%c3_80, %c0_81, %c0_82] : memref<9x1x128xf32, #tpu.memory_space<vmem>>, vector<1x1x128xf32>
      %119 = vector.shape_cast %118 : vector<1x1x128xf32> to vector<1x128xf32>
      %120 = vector.shape_cast %119 : vector<1x128xf32> to vector<1x1x128xf32>
      %121 = vector.broadcast %117 : vector<16x18x1xf32> to vector<16x18x128xf32>
      %122 = vector.broadcast %120 : vector<1x1x128xf32> to vector<16x18x128xf32>
      %123 = arith.mulf %121, %122 : vector<16x18x128xf32>
      %124 = arith.addf %116, %123 : vector<16x18x128xf32>
      %125 = vector.extract_strided_slice %91 {offsets = [1, 1, 0], sizes = [16, 18, 1], strides = [1, 1, 1]} : vector<18x20x1xf32> to vector<16x18x1xf32>
      %c4_83 = arith.constant 4 : index
      %c0_84 = arith.constant 0 : index
      %c0_85 = arith.constant 0 : index
      %126 = vector.load %arg5[%c4_83, %c0_84, %c0_85] : memref<9x1x128xf32, #tpu.memory_space<vmem>>, vector<1x1x128xf32>
      %127 = vector.shape_cast %126 : vector<1x1x128xf32> to vector<1x128xf32>
      %128 = vector.shape_cast %127 : vector<1x128xf32> to vector<1x1x128xf32>
      %129 = vector.broadcast %125 : vector<16x18x1xf32> to vector<16x18x128xf32>
      %130 = vector.broadcast %128 : vector<1x1x128xf32> to vector<16x18x128xf32>
      %131 = arith.mulf %129, %130 : vector<16x18x128xf32>
      %132 = arith.addf %124, %131 : vector<16x18x128xf32>
      %133 = vector.extract_strided_slice %91 {offsets = [1, 2, 0], sizes = [16, 18, 1], strides = [1, 1, 1]} : vector<18x20x1xf32> to vector<16x18x1xf32>
      %c5_86 = arith.constant 5 : index
      %c0_87 = arith.constant 0 : index
      %c0_88 = arith.constant 0 : index
      %134 = vector.load %arg5[%c5_86, %c0_87, %c0_88] : memref<9x1x128xf32, #tpu.memory_space<vmem>>, vector<1x1x128xf32>
      %135 = vector.shape_cast %134 : vector<1x1x128xf32> to vector<1x128xf32>
      %136 = vector.shape_cast %135 : vector<1x128xf32> to vector<1x1x128xf32>
      %137 = vector.broadcast %133 : vector<16x18x1xf32> to vector<16x18x128xf32>
      %138 = vector.broadcast %136 : vector<1x1x128xf32> to vector<16x18x128xf32>
      %139 = arith.mulf %137, %138 : vector<16x18x128xf32>
      %140 = arith.addf %132, %139 : vector<16x18x128xf32>
      %141 = vector.extract_strided_slice %91 {offsets = [2, 0, 0], sizes = [16, 18, 1], strides = [1, 1, 1]} : vector<18x20x1xf32> to vector<16x18x1xf32>
      %c6_89 = arith.constant 6 : index
      %c0_90 = arith.constant 0 : index
      %c0_91 = arith.constant 0 : index
      %142 = vector.load %arg5[%c6_89, %c0_90, %c0_91] : memref<9x1x128xf32, #tpu.memory_space<vmem>>, vector<1x1x128xf32>
      %143 = vector.shape_cast %142 : vector<1x1x128xf32> to vector<1x128xf32>
      %144 = vector.shape_cast %143 : vector<1x128xf32> to vector<1x1x128xf32>
      %145 = vector.broadcast %141 : vector<16x18x1xf32> to vector<16x18x128xf32>
      %146 = vector.broadcast %144 : vector<1x1x128xf32> to vector<16x18x128xf32>
      %147 = arith.mulf %145, %146 : vector<16x18x128xf32>
      %148 = arith.addf %140, %147 : vector<16x18x128xf32>
      %149 = vector.extract_strided_slice %91 {offsets = [2, 1, 0], sizes = [16, 18, 1], strides = [1, 1, 1]} : vector<18x20x1xf32> to vector<16x18x1xf32>
      %c7_92 = arith.constant 7 : index
      %c0_93 = arith.constant 0 : index
      %c0_94 = arith.constant 0 : index
      %150 = vector.load %arg5[%c7_92, %c0_93, %c0_94] : memref<9x1x128xf32, #tpu.memory_space<vmem>>, vector<1x1x128xf32>
      %151 = vector.shape_cast %150 : vector<1x1x128xf32> to vector<1x128xf32>
      %152 = vector.shape_cast %151 : vector<1x128xf32> to vector<1x1x128xf32>
      %153 = vector.broadcast %149 : vector<16x18x1xf32> to vector<16x18x128xf32>
      %154 = vector.broadcast %152 : vector<1x1x128xf32> to vector<16x18x128xf32>
      %155 = arith.mulf %153, %154 : vector<16x18x128xf32>
      %156 = arith.addf %148, %155 : vector<16x18x128xf32>
      %157 = vector.extract_strided_slice %91 {offsets = [2, 2, 0], sizes = [16, 18, 1], strides = [1, 1, 1]} : vector<18x20x1xf32> to vector<16x18x1xf32>
      %c8_95 = arith.constant 8 : index
      %c0_96 = arith.constant 0 : index
      %c0_97 = arith.constant 0 : index
      %158 = vector.load %arg5[%c8_95, %c0_96, %c0_97] : memref<9x1x128xf32, #tpu.memory_space<vmem>>, vector<1x1x128xf32>
      %159 = vector.shape_cast %158 : vector<1x1x128xf32> to vector<1x128xf32>
      %160 = vector.shape_cast %159 : vector<1x128xf32> to vector<1x1x128xf32>
      %161 = vector.broadcast %157 : vector<16x18x1xf32> to vector<16x18x128xf32>
      %162 = vector.broadcast %160 : vector<1x1x128xf32> to vector<16x18x128xf32>
      %163 = arith.mulf %161, %162 : vector<16x18x128xf32>
      %164 = arith.addf %156, %163 : vector<16x18x128xf32>
      %c0_98 = arith.constant 0 : index
      %c0_99 = arith.constant 0 : index
      %165 = vector.load %arg6[%c0_98, %c0_99] : memref<1x128xf32, #tpu.memory_space<vmem>>, vector<1x128xf32>
      %166 = vector.shape_cast %165 : vector<1x128xf32> to vector<1x1x128xf32>
      %167 = vector.broadcast %166 : vector<1x1x128xf32> to vector<16x18x128xf32>
      %168 = arith.addf %164, %167 : vector<16x18x128xf32>
      %cst_100 = arith.constant 0.000000e+00 : f32
      %169 = vector.broadcast %cst_100 : f32 to vector<16x18x128xf32>
      %170 = arith.maximumf %168, %169 : vector<16x18x128xf32>
      %c0_101 = arith.constant 0 : index
      %c0_102 = arith.constant 0 : index
      %171 = vector.load %arg4[%c0_101, %c0_102] : memref<288x1xf32, #tpu.memory_space<vmem>>, vector<18x1xf32>
      %172 = vector.shape_cast %171 : vector<18x1xf32> to vector<1x18x1xf32>
      %173 = vector.broadcast %172 : vector<1x18x1xf32> to vector<16x18x128xf32>
      %174 = arith.mulf %170, %173 : vector<16x18x128xf32>
      %175 = arith.truncf %174 : vector<16x18x128xf32> to vector<16x18x128xbf16>
      %cst_103 = arith.constant 0.000000e+00 : bf16
      %176 = vector.broadcast %cst_103 : bf16 to vector<19x128xbf16>
      %c0_104 = arith.constant 0 : index
      %c0_105 = arith.constant 0 : index
      %177 = vector.load %arg10[%c0_104, %c0_105] : memref<328x128xbf16, #tpu.memory_space<vmem>>, vector<19x128xbf16>
      tpu.vector_store %arg10[%c0_104, %c0_105], %176 {strides = array<i32>} : memref<328x128xbf16, #tpu.memory_space<vmem>>, vector<19x128xbf16>,
      %cst_106 = arith.constant 0.000000e+00 : bf16
      %178 = vector.broadcast %cst_106 : bf16 to vector<21x128xbf16>
      %c307 = arith.constant 307 : index
      %c0_107 = arith.constant 0 : index
      %179 = vector.load %arg10[%c307, %c0_107] : memref<328x128xbf16, #tpu.memory_space<vmem>>, vector<21x128xbf16>
      tpu.vector_store %arg10[%c307, %c0_107], %178 {strides = array<i32>} : memref<328x128xbf16, #tpu.memory_space<vmem>>, vector<21x128xbf16>,
      %180 = vector.extract_strided_slice %175 {offsets = [0, 0, 0], sizes = [1, 18, 128], strides = [1, 1, 1]} : vector<16x18x128xbf16> to vector<1x18x128xbf16>
      %181 = vector.shape_cast %180 : vector<1x18x128xbf16> to vector<18x128xbf16>
      %c19_108 = arith.constant 19 : index
      %c0_109 = arith.constant 0 : index
      %182 = vector.load %arg10[%c19_108, %c0_109] : memref<328x128xbf16, #tpu.memory_space<vmem>>, vector<18x128xbf16>
      tpu.vector_store %arg10[%c19_108, %c0_109], %181 {strides = array<i32>} : memref<328x128xbf16, #tpu.memory_space<vmem>>, vector<18x128xbf16>,
      %183 = vector.extract_strided_slice %175 {offsets = [1, 0, 0], sizes = [1, 18, 128], strides = [1, 1, 1]} : vector<16x18x128xbf16> to vector<1x18x128xbf16>
      %184 = vector.shape_cast %183 : vector<1x18x128xbf16> to vector<18x128xbf16>
      %c37_110 = arith.constant 37 : index
      %c0_111 = arith.constant 0 : index
      %185 = vector.load %arg10[%c37_110, %c0_111] : memref<328x128xbf16, #tpu.memory_space<vmem>>, vector<18x128xbf16>
      tpu.vector_store %arg10[%c37_110, %c0_111], %184 {strides = array<i32>} : memref<328x128xbf16, #tpu.memory_space<vmem>>, vector<18x128xbf16>,
      %186 = vector.extract_strided_slice %175 {offsets = [2, 0, 0], sizes = [1, 18, 128], strides = [1, 1, 1]} : vector<16x18x128xbf16> to vector<1x18x128xbf16>
      %187 = vector.shape_cast %186 : vector<1x18x128xbf16> to vector<18x128xbf16>
      %c55 = arith.constant 55 : index
      %c0_112 = arith.constant 0 : index
      %188 = vector.load %arg10[%c55, %c0_112] : memref<328x128xbf16, #tpu.memory_space<vmem>>, vector<18x128xbf16>
      tpu.vector_store %arg10[%c55, %c0_112], %187 {strides = array<i32>} : memref<328x128xbf16, #tpu.memory_space<vmem>>, vector<18x128xbf16>,
      %189 = vector.extract_strided_slice %175 {offsets = [3, 0, 0], sizes = [1, 18, 128], strides = [1, 1, 1]} : vector<16x18x128xbf16> to vector<1x18x128xbf16>
      %190 = vector.shape_cast %189 : vector<1x18x128xbf16> to vector<18x128xbf16>
      %c73 = arith.constant 73 : index
      %c0_113 = arith.constant 0 : index
      %191 = vector.load %arg10[%c73, %c0_113] : memref<328x128xbf16, #tpu.memory_space<vmem>>, vector<18x128xbf16>
      tpu.vector_store %arg10[%c73, %c0_113], %190 {strides = array<i32>} : memref<328x128xbf16, #tpu.memory_space<vmem>>, vector<18x128xbf16>,
      %192 = vector.extract_strided_slice %175 {offsets = [4, 0, 0], sizes = [1, 18, 128], strides = [1, 1, 1]} : vector<16x18x128xbf16> to vector<1x18x128xbf16>
      %193 = vector.shape_cast %192 : vector<1x18x128xbf16> to vector<18x128xbf16>
      %c91 = arith.constant 91 : index
      %c0_114 = arith.constant 0 : index
      %194 = vector.load %arg10[%c91, %c0_114] : memref<328x128xbf16, #tpu.memory_space<vmem>>, vector<18x128xbf16>
      tpu.vector_store %arg10[%c91, %c0_114], %193 {strides = array<i32>} : memref<328x128xbf16, #tpu.memory_space<vmem>>, vector<18x128xbf16>,
      %195 = vector.extract_strided_slice %175 {offsets = [5, 0, 0], sizes = [1, 18, 128], strides = [1, 1, 1]} : vector<16x18x128xbf16> to vector<1x18x128xbf16>
      %196 = vector.shape_cast %195 : vector<1x18x128xbf16> to vector<18x128xbf16>
      %c109 = arith.constant 109 : index
      %c0_115 = arith.constant 0 : index
      %197 = vector.load %arg10[%c109, %c0_115] : memref<328x128xbf16, #tpu.memory_space<vmem>>, vector<18x128xbf16>
      tpu.vector_store %arg10[%c109, %c0_115], %196 {strides = array<i32>} : memref<328x128xbf16, #tpu.memory_space<vmem>>, vector<18x128xbf16>,
      %198 = vector.extract_strided_slice %175 {offsets = [6, 0, 0], sizes = [1, 18, 128], strides = [1, 1, 1]} : vector<16x18x128xbf16> to vector<1x18x128xbf16>
      %199 = vector.shape_cast %198 : vector<1x18x128xbf16> to vector<18x128xbf16>
      %c127 = arith.constant 127 : index
      %c0_116 = arith.constant 0 : index
      %200 = vector.load %arg10[%c127, %c0_116] : memref<328x128xbf16, #tpu.memory_space<vmem>>, vector<18x128xbf16>
      tpu.vector_store %arg10[%c127, %c0_116], %199 {strides = array<i32>} : memref<328x128xbf16, #tpu.memory_space<vmem>>, vector<18x128xbf16>,
      %201 = vector.extract_strided_slice %175 {offsets = [7, 0, 0], sizes = [1, 18, 128], strides = [1, 1, 1]} : vector<16x18x128xbf16> to vector<1x18x128xbf16>
      %202 = vector.shape_cast %201 : vector<1x18x128xbf16> to vector<18x128xbf16>
      %c145 = arith.constant 145 : index
      %c0_117 = arith.constant 0 : index
      %203 = vector.load %arg10[%c145, %c0_117] : memref<328x128xbf16, #tpu.memory_space<vmem>>, vector<18x128xbf16>
      tpu.vector_store %arg10[%c145, %c0_117], %202 {strides = array<i32>} : memref<328x128xbf16, #tpu.memory_space<vmem>>, vector<18x128xbf16>,
      %204 = vector.extract_strided_slice %175 {offsets = [8, 0, 0], sizes = [1, 18, 128], strides = [1, 1, 1]} : vector<16x18x128xbf16> to vector<1x18x128xbf16>
      %205 = vector.shape_cast %204 : vector<1x18x128xbf16> to vector<18x128xbf16>
      %c163 = arith.constant 163 : index
      %c0_118 = arith.constant 0 : index
      %206 = vector.load %arg10[%c163, %c0_118] : memref<328x128xbf16, #tpu.memory_space<vmem>>, vector<18x128xbf16>
      tpu.vector_store %arg10[%c163, %c0_118], %205 {strides = array<i32>} : memref<328x128xbf16, #tpu.memory_space<vmem>>, vector<18x128xbf16>,
      %207 = vector.extract_strided_slice %175 {offsets = [9, 0, 0], sizes = [1, 18, 128], strides = [1, 1, 1]} : vector<16x18x128xbf16> to vector<1x18x128xbf16>
      %208 = vector.shape_cast %207 : vector<1x18x128xbf16> to vector<18x128xbf16>
      %c181 = arith.constant 181 : index
      %c0_119 = arith.constant 0 : index
      %209 = vector.load %arg10[%c181, %c0_119] : memref<328x128xbf16, #tpu.memory_space<vmem>>, vector<18x128xbf16>
      tpu.vector_store %arg10[%c181, %c0_119], %208 {strides = array<i32>} : memref<328x128xbf16, #tpu.memory_space<vmem>>, vector<18x128xbf16>,
      %210 = vector.extract_strided_slice %175 {offsets = [10, 0, 0], sizes = [1, 18, 128], strides = [1, 1, 1]} : vector<16x18x128xbf16> to vector<1x18x128xbf16>
      %211 = vector.shape_cast %210 : vector<1x18x128xbf16> to vector<18x128xbf16>
      %c199 = arith.constant 199 : index
      %c0_120 = arith.constant 0 : index
      %212 = vector.load %arg10[%c199, %c0_120] : memref<328x128xbf16, #tpu.memory_space<vmem>>, vector<18x128xbf16>
      tpu.vector_store %arg10[%c199, %c0_120], %211 {strides = array<i32>} : memref<328x128xbf16, #tpu.memory_space<vmem>>, vector<18x128xbf16>,
      %213 = vector.extract_strided_slice %175 {offsets = [11, 0, 0], sizes = [1, 18, 128], strides = [1, 1, 1]} : vector<16x18x128xbf16> to vector<1x18x128xbf16>
      %214 = vector.shape_cast %213 : vector<1x18x128xbf16> to vector<18x128xbf16>
      %c217 = arith.constant 217 : index
      %c0_121 = arith.constant 0 : index
      %215 = vector.load %arg10[%c217, %c0_121] : memref<328x128xbf16, #tpu.memory_space<vmem>>, vector<18x128xbf16>
      tpu.vector_store %arg10[%c217, %c0_121], %214 {strides = array<i32>} : memref<328x128xbf16, #tpu.memory_space<vmem>>, vector<18x128xbf16>,
      %216 = vector.extract_strided_slice %175 {offsets = [12, 0, 0], sizes = [1, 18, 128], strides = [1, 1, 1]} : vector<16x18x128xbf16> to vector<1x18x128xbf16>
      %217 = vector.shape_cast %216 : vector<1x18x128xbf16> to vector<18x128xbf16>
      %c235 = arith.constant 235 : index
      %c0_122 = arith.constant 0 : index
      %218 = vector.load %arg10[%c235, %c0_122] : memref<328x128xbf16, #tpu.memory_space<vmem>>, vector<18x128xbf16>
      tpu.vector_store %arg10[%c235, %c0_122], %217 {strides = array<i32>} : memref<328x128xbf16, #tpu.memory_space<vmem>>, vector<18x128xbf16>,
      %219 = vector.extract_strided_slice %175 {offsets = [13, 0, 0], sizes = [1, 18, 128], strides = [1, 1, 1]} : vector<16x18x128xbf16> to vector<1x18x128xbf16>
      %220 = vector.shape_cast %219 : vector<1x18x128xbf16> to vector<18x128xbf16>
      %c253 = arith.constant 253 : index
      %c0_123 = arith.constant 0 : index
      %221 = vector.load %arg10[%c253, %c0_123] : memref<328x128xbf16, #tpu.memory_space<vmem>>, vector<18x128xbf16>
      tpu.vector_store %arg10[%c253, %c0_123], %220 {strides = array<i32>} : memref<328x128xbf16, #tpu.memory_space<vmem>>, vector<18x128xbf16>,
      %222 = vector.extract_strided_slice %175 {offsets = [14, 0, 0], sizes = [1, 18, 128], strides = [1, 1, 1]} : vector<16x18x128xbf16> to vector<1x18x128xbf16>
      %223 = vector.shape_cast %222 : vector<1x18x128xbf16> to vector<18x128xbf16>
      %c271 = arith.constant 271 : index
      %c0_124 = arith.constant 0 : index
      %224 = vector.load %arg10[%c271, %c0_124] : memref<328x128xbf16, #tpu.memory_space<vmem>>, vector<18x128xbf16>
      tpu.vector_store %arg10[%c271, %c0_124], %223 {strides = array<i32>} : memref<328x128xbf16, #tpu.memory_space<vmem>>, vector<18x128xbf16>,
      %225 = vector.extract_strided_slice %175 {offsets = [15, 0, 0], sizes = [1, 18, 128], strides = [1, 1, 1]} : vector<16x18x128xbf16> to vector<1x18x128xbf16>
      %226 = vector.shape_cast %225 : vector<1x18x128xbf16> to vector<18x128xbf16>
      %c289 = arith.constant 289 : index
      %c0_125 = arith.constant 0 : index
      %227 = vector.load %arg10[%c289, %c0_125] : memref<328x128xbf16, #tpu.memory_space<vmem>>, vector<18x128xbf16>
      tpu.vector_store %arg10[%c289, %c0_125], %226 {strides = array<i32>} : memref<328x128xbf16, #tpu.memory_space<vmem>>, vector<18x128xbf16>,
    } else {
    }
    %cst = arith.constant 0.000000e+00 : f32
    %3 = vector.broadcast %cst : f32 to vector<288x256xf32>
    %c0 = arith.constant 0 : index
    %c0_1 = arith.constant 0 : index
    %4 = vector.load %arg10[%c0, %c0_1] : memref<328x128xbf16, #tpu.memory_space<vmem>>, vector<288x128xbf16>
    %c0_2 = arith.constant 0 : index
    %c0_3 = arith.constant 0 : index
    %c0_4 = arith.constant 0 : index
    %c0_5 = arith.constant 0 : index
    %5 = vector.load %arg7[%c0_2, %c0_3, %c0_4, %c0_5] : memref<1x9x128x256xbf16, #tpu.memory_space<vmem>>, vector<1x1x128x256xbf16>
    %6 = vector.shape_cast %5 : vector<1x1x128x256xbf16> to vector<128x256xbf16>
    %cst_6 = arith.constant dense<0.000000e+00> : vector<288x256xf32>
    %7 = tpu.matmul %4, %6, %cst_6 {dimension_numbers = #tpu.dot_dimension_numbers<[1], [0], [0], [1], [0, 0, 1, 1], [], []>} : vector<288x128xbf16>, vector<128x256xbf16>, vector<288x256xf32> -> vector<288x256xf32>
    %8 = arith.addf %3, %7 : vector<288x256xf32>
    %c1 = arith.constant 1 : index
    %c0_7 = arith.constant 0 : index
    %9 = vector.load %arg10[%c1, %c0_7] : memref<328x128xbf16, #tpu.memory_space<vmem>>, vector<288x128xbf16>
    %c0_8 = arith.constant 0 : index
    %c1_9 = arith.constant 1 : index
    %c0_10 = arith.constant 0 : index
    %c0_11 = arith.constant 0 : index
    %10 = vector.load %arg7[%c0_8, %c1_9, %c0_10, %c0_11] : memref<1x9x128x256xbf16, #tpu.memory_space<vmem>>, vector<1x1x128x256xbf16>
    %11 = vector.shape_cast %10 : vector<1x1x128x256xbf16> to vector<128x256xbf16>
    %cst_12 = arith.constant dense<0.000000e+00> : vector<288x256xf32>
    %12 = tpu.matmul %9, %11, %cst_12 {dimension_numbers = #tpu.dot_dimension_numbers<[1], [0], [0], [1], [0, 0, 1, 1], [], []>} : vector<288x128xbf16>, vector<128x256xbf16>, vector<288x256xf32> -> vector<288x256xf32>
    %13 = arith.addf %8, %12 : vector<288x256xf32>
    %c2 = arith.constant 2 : index
    %c0_13 = arith.constant 0 : index
    %14 = vector.load %arg10[%c2, %c0_13] : memref<328x128xbf16, #tpu.memory_space<vmem>>, vector<288x128xbf16>
    %c0_14 = arith.constant 0 : index
    %c2_15 = arith.constant 2 : index
    %c0_16 = arith.constant 0 : index
    %c0_17 = arith.constant 0 : index
    %15 = vector.load %arg7[%c0_14, %c2_15, %c0_16, %c0_17] : memref<1x9x128x256xbf16, #tpu.memory_space<vmem>>, vector<1x1x128x256xbf16>
    %16 = vector.shape_cast %15 : vector<1x1x128x256xbf16> to vector<128x256xbf16>
    %cst_18 = arith.constant dense<0.000000e+00> : vector<288x256xf32>
    %17 = tpu.matmul %14, %16, %cst_18 {dimension_numbers = #tpu.dot_dimension_numbers<[1], [0], [0], [1], [0, 0, 1, 1], [], []>} : vector<288x128xbf16>, vector<128x256xbf16>, vector<288x256xf32> -> vector<288x256xf32>
    %18 = arith.addf %13, %17 : vector<288x256xf32>
    %c18 = arith.constant 18 : index
    %c0_19 = arith.constant 0 : index
    %19 = vector.load %arg10[%c18, %c0_19] : memref<328x128xbf16, #tpu.memory_space<vmem>>, vector<288x128xbf16>
    %c0_20 = arith.constant 0 : index
    %c3 = arith.constant 3 : index
    %c0_21 = arith.constant 0 : index
    %c0_22 = arith.constant 0 : index
    %20 = vector.load %arg7[%c0_20, %c3, %c0_21, %c0_22] : memref<1x9x128x256xbf16, #tpu.memory_space<vmem>>, vector<1x1x128x256xbf16>
    %21 = vector.shape_cast %20 : vector<1x1x128x256xbf16> to vector<128x256xbf16>
    %cst_23 = arith.constant dense<0.000000e+00> : vector<288x256xf32>
    %22 = tpu.matmul %19, %21, %cst_23 {dimension_numbers = #tpu.dot_dimension_numbers<[1], [0], [0], [1], [0, 0, 1, 1], [], []>} : vector<288x128xbf16>, vector<128x256xbf16>, vector<288x256xf32> -> vector<288x256xf32>
    %23 = arith.addf %18, %22 : vector<288x256xf32>
    %c19 = arith.constant 19 : index
    %c0_24 = arith.constant 0 : index
    %24 = vector.load %arg10[%c19, %c0_24] : memref<328x128xbf16, #tpu.memory_space<vmem>>, vector<288x128xbf16>
    %c0_25 = arith.constant 0 : index
    %c4 = arith.constant 4 : index
    %c0_26 = arith.constant 0 : index
    %c0_27 = arith.constant 0 : index
    %25 = vector.load %arg7[%c0_25, %c4, %c0_26, %c0_27] : memref<1x9x128x256xbf16, #tpu.memory_space<vmem>>, vector<1x1x128x256xbf16>
    %26 = vector.shape_cast %25 : vector<1x1x128x256xbf16> to vector<128x256xbf16>
    %cst_28 = arith.constant dense<0.000000e+00> : vector<288x256xf32>
    %27 = tpu.matmul %24, %26, %cst_28 {dimension_numbers = #tpu.dot_dimension_numbers<[1], [0], [0], [1], [0, 0, 1, 1], [], []>} : vector<288x128xbf16>, vector<128x256xbf16>, vector<288x256xf32> -> vector<288x256xf32>
    %28 = arith.addf %23, %27 : vector<288x256xf32>
    %c20 = arith.constant 20 : index
    %c0_29 = arith.constant 0 : index
    %29 = vector.load %arg10[%c20, %c0_29] : memref<328x128xbf16, #tpu.memory_space<vmem>>, vector<288x128xbf16>
    %c0_30 = arith.constant 0 : index
    %c5 = arith.constant 5 : index
    %c0_31 = arith.constant 0 : index
    %c0_32 = arith.constant 0 : index
    %30 = vector.load %arg7[%c0_30, %c5, %c0_31, %c0_32] : memref<1x9x128x256xbf16, #tpu.memory_space<vmem>>, vector<1x1x128x256xbf16>
    %31 = vector.shape_cast %30 : vector<1x1x128x256xbf16> to vector<128x256xbf16>
    %cst_33 = arith.constant dense<0.000000e+00> : vector<288x256xf32>
    %32 = tpu.matmul %29, %31, %cst_33 {dimension_numbers = #tpu.dot_dimension_numbers<[1], [0], [0], [1], [0, 0, 1, 1], [], []>} : vector<288x128xbf16>, vector<128x256xbf16>, vector<288x256xf32> -> vector<288x256xf32>
    %33 = arith.addf %28, %32 : vector<288x256xf32>
    %c36 = arith.constant 36 : index
    %c0_34 = arith.constant 0 : index
    %34 = vector.load %arg10[%c36, %c0_34] : memref<328x128xbf16, #tpu.memory_space<vmem>>, vector<288x128xbf16>
    %c0_35 = arith.constant 0 : index
    %c6 = arith.constant 6 : index
    %c0_36 = arith.constant 0 : index
    %c0_37 = arith.constant 0 : index
    %35 = vector.load %arg7[%c0_35, %c6, %c0_36, %c0_37] : memref<1x9x128x256xbf16, #tpu.memory_space<vmem>>, vector<1x1x128x256xbf16>
    %36 = vector.shape_cast %35 : vector<1x1x128x256xbf16> to vector<128x256xbf16>
    %cst_38 = arith.constant dense<0.000000e+00> : vector<288x256xf32>
    %37 = tpu.matmul %34, %36, %cst_38 {dimension_numbers = #tpu.dot_dimension_numbers<[1], [0], [0], [1], [0, 0, 1, 1], [], []>} : vector<288x128xbf16>, vector<128x256xbf16>, vector<288x256xf32> -> vector<288x256xf32>
    %38 = arith.addf %33, %37 : vector<288x256xf32>
    %c37 = arith.constant 37 : index
    %c0_39 = arith.constant 0 : index
    %39 = vector.load %arg10[%c37, %c0_39] : memref<328x128xbf16, #tpu.memory_space<vmem>>, vector<288x128xbf16>
    %c0_40 = arith.constant 0 : index
    %c7 = arith.constant 7 : index
    %c0_41 = arith.constant 0 : index
    %c0_42 = arith.constant 0 : index
    %40 = vector.load %arg7[%c0_40, %c7, %c0_41, %c0_42] : memref<1x9x128x256xbf16, #tpu.memory_space<vmem>>, vector<1x1x128x256xbf16>
    %41 = vector.shape_cast %40 : vector<1x1x128x256xbf16> to vector<128x256xbf16>
    %cst_43 = arith.constant dense<0.000000e+00> : vector<288x256xf32>
    %42 = tpu.matmul %39, %41, %cst_43 {dimension_numbers = #tpu.dot_dimension_numbers<[1], [0], [0], [1], [0, 0, 1, 1], [], []>} : vector<288x128xbf16>, vector<128x256xbf16>, vector<288x256xf32> -> vector<288x256xf32>
    %43 = arith.addf %38, %42 : vector<288x256xf32>
    %c38 = arith.constant 38 : index
    %c0_44 = arith.constant 0 : index
    %44 = vector.load %arg10[%c38, %c0_44] : memref<328x128xbf16, #tpu.memory_space<vmem>>, vector<288x128xbf16>
    %c0_45 = arith.constant 0 : index
    %c8 = arith.constant 8 : index
    %c0_46 = arith.constant 0 : index
    %c0_47 = arith.constant 0 : index
    %45 = vector.load %arg7[%c0_45, %c8, %c0_46, %c0_47] : memref<1x9x128x256xbf16, #tpu.memory_space<vmem>>, vector<1x1x128x256xbf16>
    %46 = vector.shape_cast %45 : vector<1x1x128x256xbf16> to vector<128x256xbf16>
    %cst_48 = arith.constant dense<0.000000e+00> : vector<288x256xf32>
    %47 = tpu.matmul %44, %46, %cst_48 {dimension_numbers = #tpu.dot_dimension_numbers<[1], [0], [0], [1], [0, 0, 1, 1], [], []>} : vector<288x128xbf16>, vector<128x256xbf16>, vector<288x256xf32> -> vector<288x256xf32>
    %48 = arith.addf %43, %47 : vector<288x256xf32>
    %c0_49 = arith.constant 0 : index
    %c0_50 = arith.constant 0 : index
    %c0_51 = arith.constant 0 : index
    %49 = vector.load %arg8[%c0_49, %c0_50, %c0_51] : memref<1x1x256xf32, #tpu.memory_space<vmem>>, vector<1x1x256xf32>
    %50 = vector.shape_cast %49 : vector<1x1x256xf32> to vector<1x256xf32>
    %51 = vector.broadcast %50 : vector<1x256xf32> to vector<288x256xf32>
    %52 = arith.addf %48, %51 : vector<288x256xf32>
    %53 = vector.extract_strided_slice %52 {offsets = [0, 0], sizes = [288, 128], strides = [1, 1]} : vector<288x256xf32> to vector<288x128xf32>
    %54 = vector.extract_strided_slice %52 {offsets = [0, 128], sizes = [288, 128], strides = [1, 1]} : vector<288x256xf32> to vector<288x128xf32>
    %c0_52 = arith.constant 0 : index
    %c0_53 = arith.constant 0 : index
    %55 = vector.load %arg4[%c0_52, %c0_53] : memref<288x1xf32, #tpu.memory_space<vmem>>, vector<288x1xf32>
    %c0_54 = arith.constant 0 : index
    %c0_55 = arith.constant 0 : index
    %c0_56 = arith.constant 0 : index
    %56 = vector.load %arg3[%c0_54, %c0_55, %c0_56] : memref<1x288x128xf32, #tpu.memory_space<vmem>>, vector<1x288x128xf32>
    %57 = vector.shape_cast %56 : vector<1x288x128xf32> to vector<288x128xf32>
    %58 = vector.broadcast %55 : vector<288x1xf32> to vector<288x128xf32>
    %59 = arith.mulf %57, %58 : vector<288x128xf32>
    %cst_57 = arith.constant dense<0.000000e+00> : vector<128xf32>
    %60 = vector.multi_reduction <add>, %59, %cst_57 [0] : vector<288x128xf32> to vector<128xf32>
    %61 = vector.shape_cast %60 : vector<128xf32> to vector<1x128xf32>
    %cst_58 = arith.constant 3.906250e-03 : f32
    %62 = vector.broadcast %cst_58 : f32 to vector<1x128xf32>
    %63 = arith.mulf %61, %62 : vector<1x128xf32>
    %64 = vector.broadcast %63 : vector<1x128xf32> to vector<288x128xf32>
    %65 = arith.subf %57, %64 : vector<288x128xf32>
    %66 = vector.broadcast %55 : vector<288x1xf32> to vector<288x128xf32>
    %67 = arith.mulf %65, %66 : vector<288x128xf32>
    %68 = arith.mulf %67, %67 : vector<288x128xf32>
    %cst_59 = arith.constant dense<0.000000e+00> : vector<128xf32>
    %69 = vector.multi_reduction <add>, %68, %cst_59 [0] : vector<288x128xf32> to vector<128xf32>
    %70 = vector.shape_cast %69 : vector<128xf32> to vector<1x128xf32>
    %cst_60 = arith.constant 3.906250e-03 : f32
    %71 = vector.broadcast %cst_60 : f32 to vector<1x128xf32>
    %72 = arith.mulf %70, %71 : vector<1x128xf32>
    %73 = vector.broadcast %63 : vector<1x128xf32> to vector<288x128xf32>
    %74 = arith.subf %57, %73 : vector<288x128xf32>
    %cst_61 = arith.constant 9.99999974E-6 : f32
    %75 = vector.broadcast %cst_61 : f32 to vector<1x128xf32>
    %76 = arith.addf %72, %75 : vector<1x128xf32>
    %77 = math.rsqrt %76 : vector<1x128xf32>
    %78 = vector.broadcast %77 : vector<1x128xf32> to vector<288x128xf32>
    %79 = arith.mulf %74, %78 : vector<288x128xf32>
    %cst_62 = arith.constant 1.000000e+00 : f32
    %80 = vector.broadcast %cst_62 : f32 to vector<288x128xf32>
    %81 = arith.addf %80, %53 : vector<288x128xf32>
    %82 = arith.mulf %79, %81 : vector<288x128xf32>
    %83 = arith.addf %82, %54 : vector<288x128xf32>
    %84 = vector.broadcast %55 : vector<288x1xf32> to vector<288x128xf32>
    %85 = arith.mulf %83, %84 : vector<288x128xf32>
    %86 = arith.truncf %85 : vector<288x128xf32> to vector<288x128xbf16>
    %c0_63 = arith.constant 0 : index
    %c0_64 = arith.constant 0 : index
    %c0_65 = arith.constant 0 : index
    %87 = vector.load %arg9[%c0_63, %c0_64, %c0_65] : memref<1x288x128xbf16, #tpu.memory_space<vmem>>, vector<1x288x128xbf16>
    %88 = vector.shape_cast %87 : vector<1x288x128xbf16> to vector<288x128xbf16>
    %89 = vector.shape_cast %86 : vector<288x128xbf16> to vector<1x288x128xbf16>
    tpu.vector_store %arg9[%c0_63, %c0_64, %c0_65], %89 {strides = array<i32>} : memref<1x288x128xbf16, #tpu.memory_space<vmem>>, vector<1x288x128xbf16>,
    return
  }
  func.func @transform_0(%arg0: i32, %arg1: i32) -> (i32, i32, i32, i32) {
    %c0_i32 = arith.constant 0 : i32
    %c0_i32_0 = arith.constant 0 : i32
    %c0_i32_1 = arith.constant 0 : i32
    %c0_i32_2 = arith.constant 0 : i32
    return %arg0, %c0_i32, %c0_i32_0, %c0_i32_1 : i32, i32, i32, i32
  }
  func.func @transform_1(%arg0: i32, %arg1: i32) -> (i32, i32, i32) {
    %c0_i32 = arith.constant 0 : i32
    %c0_i32_0 = arith.constant 0 : i32
    return %arg0, %c0_i32, %arg1 : i32, i32, i32
  }
  func.func @transform_2(%arg0: i32, %arg1: i32) -> (i32, i32) {
    %c0_i32 = arith.constant 0 : i32
    %c0_i32_0 = arith.constant 0 : i32
    %c0_i32_1 = arith.constant 0 : i32
    return %c0_i32, %c0_i32_0 : i32, i32
  }
  func.func @transform_3(%arg0: i32, %arg1: i32) -> (i32, i32, i32) {
    %c0_i32 = arith.constant 0 : i32
    %c0_i32_0 = arith.constant 0 : i32
    %c0_i32_1 = arith.constant 0 : i32
    %c0_i32_2 = arith.constant 0 : i32
    return %c0_i32, %c0_i32_0, %c0_i32_1 : i32, i32, i32
  }
  func.func @transform_4(%arg0: i32, %arg1: i32) -> (i32, i32) {
    %c0_i32 = arith.constant 0 : i32
    %c0_i32_0 = arith.constant 0 : i32
    %c0_i32_1 = arith.constant 0 : i32
    return %c0_i32, %c0_i32_0 : i32, i32
  }
  func.func @transform_5(%arg0: i32, %arg1: i32) -> (i32, i32, i32, i32) {
    %c0_i32 = arith.constant 0 : i32
    %c0_i32_0 = arith.constant 0 : i32
    %c0_i32_1 = arith.constant 0 : i32
    %c0_i32_2 = arith.constant 0 : i32
    return %arg1, %c0_i32, %c0_i32_0, %c0_i32_1 : i32, i32, i32, i32
  }
  func.func @transform_6(%arg0: i32, %arg1: i32) -> (i32, i32, i32) {
    %c0_i32 = arith.constant 0 : i32
    %c0_i32_0 = arith.constant 0 : i32
    %c0_i32_1 = arith.constant 0 : i32
    return %arg1, %c0_i32, %c0_i32_0 : i32, i32, i32
  }
  func.func @transform_7(%arg0: i32, %arg1: i32) -> (i32, i32, i32) {
    %c0_i32 = arith.constant 0 : i32
    %c0_i32_0 = arith.constant 0 : i32
    return %arg0, %c0_i32, %arg1 : i32, i32, i32
  }
}

</mosaic_0001>

<llo_original>
// kernel: tpu_custom_call.1
$region0: #{tpu_custom_call.1}
  #allocation0 [shape = 'u32[]', space=smem, size = 0x4, offset = 0x4, fixed_abs, tag = 'smem constant byte address 0x4 - core index']
  #allocation1 [shape = 'u32[144,128]{1,0:T(1,128)}', space=vmem, size = 0x12000, scoped, tag = 'internal scratch']
  #allocation2 [shape = 'bf16[328,128]{1,0:T(8,128)(2,1)}', space=vmem, size = 0x14800, scoped, tag = 'scratch operand']
  %s0 = inlined_call_operand.vmem [shape: f32[2,18,20,1], index: 0, kind: input, shape index: {}]
  %s1 = inlined_call_operand.hbm [shape: f32[2,288,128], index: 1, kind: input, shape index: {}]
  %s2 = inlined_call_operand.vmem [shape: f32[288,1], index: 2, kind: input, shape index: {}]
  %s3 = inlined_call_operand.vmem [shape: f32[9,1,128], index: 3, kind: input, shape index: {}]
  %s4 = inlined_call_operand.vmem [shape: f32[1,128], index: 4, kind: input, shape index: {}]
  %s5 = inlined_call_operand.vmem [shape: bf16[1,9,128,256], index: 5, kind: input, shape index: {}]
  %s6 = inlined_call_operand.vmem [shape: f32[1,1,256], index: 6, kind: input, shape index: {}]
  %s7 = inlined_call_operand.hbm [shape: bf16[2,288,128], index: 7, kind: output, shape index: {}]
  %s8 = sld [smem:[#allocation0]]
  $region69: #{tpu_custom_call.1} parent=0
    _
  %s10 = ssub.s32 1, %s8
  %s11 = scalar_select 0, %s10, %s8
  $region1: #{tpu_custom_call.1} parent=0
    #allocation3 [shape = 'u8[294912]{0}', space=vmem, size = 0x48000, scoped, tag = 'input window, operand 1']
    #allocation4 [shape = 's32[2]{0}', space=sflag, size = 0x8, scoped, tag = 'scoped memory for tpu_custom_call.1']
    #allocation5 [shape = 's32[2]{0}', space=sflag, size = 0x8, scoped, tag = 'scoped memory for tpu_custom_call.1']
    #allocation6 [shape = 'u8[147456]{0}', space=vmem, size = 0x24000, scoped, tag = 'output window, operand 0']
    %12 = vsyncpa [#allocation4], 0
    %s13 = scalar_lea.sflag [#allocation4], 1
    %14 = vsyncpa %s13, 0
    %15 = vsyncpa [#allocation5], 0
    %s16 = scalar_lea.sflag [#allocation5], 1
    %17 = vsyncpa %s16, 0
    loop: start=0, step=1, limit=4
    $region2: #{tpu_custom_call.1} parent=1 // loop_pre_header
      _
    $region3: #{tpu_custom_call.1} parent=1 // loop_header
      %s19 = sphi 0, %s23
      %p20 = scmp.ge.s32.totalorder %s19, 4
      %s26 = sphi 0, %s38
      %s27 = sphi 0, %s34
      %s28 = sphi 0, %s26
      %s29 = sphi 0, %s27
      %s30 = sphi 0, %s28
      %s31 = sphi 0, %s29
      %s41 = sphi 0, %s43
      %s44 = sphi 0, %s41
      %s45 = sphi 0, %s44
      %s61 = sphi 0, %s45
      %s69 = sphi 0, %s71
      %s72 = sphi 0, %s69
      %s73 = sphi 0, %s72
      %s89 = sphi 0, %s73
      %s93 = sphi 0, %s93
      %s95 = sphi 0, %s93
      %s96 = sphi 0, %s95
      %s110 = sphi 0, %s96
      %s114 = sphi 0, %s114
      %s116 = sphi 0, %s114
      %s117 = sphi 0, %s116
      %s131 = sphi 0, %s117
      %s135 = sphi 0, %s135
      %s137 = sphi 0, %s135
      %s138 = sphi 0, %s137
      %s152 = sphi 0, %s138
      %s158 = sphi 0, %s160
      %s161 = sphi 0, %s158
      %s162 = sphi 0, %s161
      %s178 = sphi 0, %s162
      %s184 = sphi 0, %s186
      %s187 = sphi 0, %s184
      %s188 = sphi 0, %s187
      %s204 = sphi 0, %s188
      %s212 = sphi 0, %s214
      %s215 = sphi 0, %s212
      %s216 = sphi 0, %s215
      %s232 = sphi 0, %s216
    $region4: #{tpu_custom_call.1} parent=1 // loop_header_branch
      %22 = sbr.rel (%p20) target = $region8
    $region5: #{tpu_custom_call.1} parent=1 // loop_body
      %s24 = ssub.s32 %s19, 1
      %s25 = ssub.s32 %s19, 2
      %s32 = sadd.s32 1, %s27
      %p33 = scmp.ge.s32.totalorder %s32, 1
      %s34 = scalar_select %p33, 0, %s32
      %s35 = sadd.s32 1, %s26
      %s36 = scalar_select %p33, %s35, %s26
      %p37 = scmp.ge.s32.totalorder %s36, 2
      %s38 = scalar_select %p37, 0, %s36
      %s39 = ssub.s32 %s26, %s38
      %p40 = scmp.eq.s32.totalorder %s39, 0
      %s42 = sadd.s32 %s41, 1
      %s43 = scalar_select %p40, %s41, %s42
      %p46 = pneg %p40
      %p47 = scmp.eq.s32.totalorder %s19, 1
      %p48 = por %p46, %p47
      %p49 = scmp.ne.s32.totalorder %s41, %s44
      %p50 = scmp.eq.s32.totalorder %s19, 0
      %p51 = por %p49, %p50
      %p52 = scmp.ne.s32.totalorder %s41, %s44
      %p53 = scmp.eq.s32.totalorder %s24, 1
      %p54 = por %p52, %p53
      %p55 = scmp.ne.s32.totalorder %s44, %s45
      %p56 = scmp.eq.s32.totalorder %s24, 0
      %p57 = por %p55, %p56
      %p58 = scmp.ne.s32.totalorder %s44, %s45
      %p59 = scmp.eq.s32.totalorder %s25, 1
      %p60 = por %p58, %p59
      %p62 = scmp.ne.s32.totalorder %s45, %s61
      %p63 = scmp.eq.s32.totalorder %s25, 0
      %p64 = por %p62, %p63
      %s65 = ssub.s32 %s26, %s38
      %s66 = ssub.s32 %s27, %s34
      %s67 = sor.u32 %s65, %s66
      %p68 = scmp.eq.s32.totalorder %s67, 0
      %s70 = sadd.s32 %s69, 1
      %s71 = scalar_select %p68, %s69, %s70
      %p74 = pneg %p68
      %p75 = scmp.eq.s32.totalorder %s19, 1
      %p76 = por %p74, %p75
      %p77 = scmp.ne.s32.totalorder %s69, %s72
      %p78 = scmp.eq.s32.totalorder %s19, 0
      %p79 = por %p77, %p78
      %p80 = scmp.ne.s32.totalorder %s69, %s72
      %p81 = scmp.eq.s32.totalorder %s24, 1
      %p82 = por %p80, %p81
      %p83 = scmp.ne.s32.totalorder %s72, %s73
      %p84 = scmp.eq.s32.totalorder %s24, 0
      %p85 = por %p83, %p84
      %p86 = scmp.ne.s32.totalorder %s72, %s73
      %p87 = scmp.eq.s32.totalorder %s25, 1
      %p88 = por %p86, %p87
      %p90 = scmp.ne.s32.totalorder %s73, %s89
      %p91 = scmp.eq.s32.totalorder %s25, 0
      %p92 = por %p90, %p91
      %s94 = sadd.s32 %s93, 1
      %p97 = scmp.eq.s32.totalorder %s19, 1
      %p98 = scmp.ne.s32.totalorder %s93, %s95
      %p99 = scmp.eq.s32.totalorder %s19, 0
      %p100 = por %p98, %p99
      %p101 = scmp.ne.s32.totalorder %s93, %s95
      %p102 = scmp.eq.s32.totalorder %s24, 1
      %p103 = por %p101, %p102
      %p104 = scmp.ne.s32.totalorder %s95, %s96
      %p105 = scmp.eq.s32.totalorder %s24, 0
      %p106 = por %p104, %p105
      %p107 = scmp.ne.s32.totalorder %s95, %s96
      %p108 = scmp.eq.s32.totalorder %s25, 1
      %p109 = por %p107, %p108
      %p111 = scmp.ne.s32.totalorder %s96, %s110
      %p112 = scmp.eq.s32.totalorder %s25, 0
      %p113 = por %p111, %p112
      %s115 = sadd.s32 %s114, 1
      %p118 = scmp.eq.s32.totalorder %s19, 1
      %p119 = scmp.ne.s32.totalorder %s114, %s116
      %p120 = scmp.eq.s32.totalorder %s19, 0
      %p121 = por %p119, %p120
      %p122 = scmp.ne.s32.totalorder %s114, %s116
      %p123 = scmp.eq.s32.totalorder %s24, 1
      %p124 = por %p122, %p123
      %p125 = scmp.ne.s32.totalorder %s116, %s117
      %p126 = scmp.eq.s32.totalorder %s24, 0
      %p127 = por %p125, %p126
      %p128 = scmp.ne.s32.totalorder %s116, %s117
      %p129 = scmp.eq.s32.totalorder %s25, 1
      %p130 = por %p128, %p129
      %p132 = scmp.ne.s32.totalorder %s117, %s131
      %p133 = scmp.eq.s32.totalorder %s25, 0
      %p134 = por %p132, %p133
      %s136 = sadd.s32 %s135, 1
      %p139 = scmp.eq.s32.totalorder %s19, 1
      %p140 = scmp.ne.s32.totalorder %s135, %s137
      %p141 = scmp.eq.s32.totalorder %s19, 0
      %p142 = por %p140, %p141
      %p143 = scmp.ne.s32.totalorder %s135, %s137
      %p144 = scmp.eq.s32.totalorder %s24, 1
      %p145 = por %p143, %p144
      %p146 = scmp.ne.s32.totalorder %s137, %s138
      %p147 = scmp.eq.s32.totalorder %s24, 0
      %p148 = por %p146, %p147
      %p149 = scmp.ne.s32.totalorder %s137, %s138
      %p150 = scmp.eq.s32.totalorder %s25, 1
      %p151 = por %p149, %p150
      %p153 = scmp.ne.s32.totalorder %s138, %s152
      %p154 = scmp.eq.s32.totalorder %s25, 0
      %p155 = por %p153, %p154
      %s156 = ssub.s32 %s27, %s34
      %p157 = scmp.eq.s32.totalorder %s156, 0
      %s159 = sadd.s32 %s158, 1
      %s160 = scalar_select %p157, %s158, %s159
      %p163 = pneg %p157
      %p164 = scmp.eq.s32.totalorder %s19, 1
      %p165 = por %p163, %p164
      %p166 = scmp.ne.s32.totalorder %s158, %s161
      %p167 = scmp.eq.s32.totalorder %s19, 0
      %p168 = por %p166, %p167
      %p169 = scmp.ne.s32.totalorder %s158, %s161
      %p170 = scmp.eq.s32.totalorder %s24, 1
      %p171 = por %p169, %p170
      %p172 = scmp.ne.s32.totalorder %s161, %s162
      %p173 = scmp.eq.s32.totalorder %s24, 0
      %p174 = por %p172, %p173
      %p175 = scmp.ne.s32.totalorder %s161, %s162
      %p176 = scmp.eq.s32.totalorder %s25, 1
      %p177 = por %p175, %p176
      %p179 = scmp.ne.s32.totalorder %s162, %s178
      %p180 = scmp.eq.s32.totalorder %s25, 0
      %p181 = por %p179, %p180
      %s182 = ssub.s32 %s27, %s34
      %p183 = scmp.eq.s32.totalorder %s182, 0
      %s185 = sadd.s32 %s184, 1
      %s186 = scalar_select %p183, %s184, %s185
      %p189 = pneg %p183
      %p190 = scmp.eq.s32.totalorder %s19, 1
      %p191 = por %p189, %p190
      %p192 = scmp.ne.s32.totalorder %s184, %s187
      %p193 = scmp.eq.s32.totalorder %s19, 0
      %p194 = por %p192, %p193
      %p195 = scmp.ne.s32.totalorder %s184, %s187
      %p196 = scmp.eq.s32.totalorder %s24, 1
      %p197 = por %p195, %p196
      %p198 = scmp.ne.s32.totalorder %s187, %s188
      %p199 = scmp.eq.s32.totalorder %s24, 0
      %p200 = por %p198, %p199
      %p201 = scmp.ne.s32.totalorder %s187, %s188
      %p202 = scmp.eq.s32.totalorder %s25, 1
      %p203 = por %p201, %p202
      %p205 = scmp.ne.s32.totalorder %s188, %s204
      %p206 = scmp.eq.s32.totalorder %s25, 0
      %p207 = por %p205, %p206
      %s208 = ssub.s32 %s26, %s38
      %s209 = ssub.s32 %s27, %s34
      %s210 = sor.u32 %s208, %s209
      %p211 = scmp.eq.s32.totalorder %s210, 0
      %s213 = sadd.s32 %s212, 1
      %s214 = scalar_select %p211, %s212, %s213
      %p217 = pneg %p211
      %p218 = scmp.eq.s32.totalorder %s19, 1
      %p219 = por %p217, %p218
      %p220 = scmp.ne.s32.totalorder %s212, %s215
      %p221 = scmp.eq.s32.totalorder %s19, 0
      %p222 = por %p220, %p221
      %p223 = scmp.ne.s32.totalorder %s212, %s215
      %p224 = scmp.eq.s32.totalorder %s24, 1
      %p225 = por %p223, %p224
      %p226 = scmp.ne.s32.totalorder %s215, %s216
      %p227 = scmp.eq.s32.totalorder %s24, 0
      %p228 = por %p226, %p227
      %p229 = scmp.ne.s32.totalorder %s215, %s216
      %p230 = scmp.eq.s32.totalorder %s25, 1
      %p231 = por %p229, %p230
      %p233 = scmp.ne.s32.totalorder %s216, %s232
      %p234 = scmp.eq.s32.totalorder %s25, 0
      %p235 = por %p233, %p234
      %p236 = scmp.le.s32.totalorder 1, %s19
      %p237 = scmp.lt.s32.totalorder %s19, 3
      %p238 = pnand %p236, %p237
      %p239 = pneg %p238
      // Predicated region
      $region9: #{tpu_custom_call.1} parent=5 // pred_check
        _
      $region10: #{tpu_custom_call.1} parent=5 // pred_check_branch
        %241 = sbr.rel (%p238) target = $region12
      $region11: #{tpu_custom_call.1} parent=5 // pred_region
        %s242 = ssub.s32 %s19, 1
        // Predicated region
        $region13: #{tpu_custom_call.1} parent=11 // pred_check
          %p243 = pneg %p106
        $region14: #{tpu_custom_call.1} parent=11 // pred_check_branch
          %245 = sbr.rel (%p243) target = $region16
        $region15: #{tpu_custom_call.1} parent=11 // pred_region
          _
        $region16: #{tpu_custom_call.1} parent=11 // pred_fallthru
          _
        // Predicated region
        $region17: #{tpu_custom_call.1} parent=11 // pred_check
          %p246 = pneg %p127
        $region18: #{tpu_custom_call.1} parent=11 // pred_check_branch
          %248 = sbr.rel (%p246) target = $region20
        $region19: #{tpu_custom_call.1} parent=11 // pred_region
          _
        $region20: #{tpu_custom_call.1} parent=11 // pred_fallthru
          _
        // Predicated region
        $region21: #{tpu_custom_call.1} parent=11 // pred_check
          %p249 = pneg %p148
        $region22: #{tpu_custom_call.1} parent=11 // pred_check_branch
          %251 = sbr.rel (%p249) target = $region24
        $region23: #{tpu_custom_call.1} parent=11 // pred_region
          _
        $region24: #{tpu_custom_call.1} parent=11 // pred_fallthru
          _
        // Predicated region
        $region25: #{tpu_custom_call.1} parent=11 // pred_check
          %p252 = pneg %p174
        $region26: #{tpu_custom_call.1} parent=11 // pred_check_branch
          %254 = sbr.rel (%p252) target = $region28
        $region27: #{tpu_custom_call.1} parent=11 // pred_region
          %p255 = scmp.lt.s32.totalorder %s29, 0
          %s256 = scalar_select %p255, %s29, 0
          %s257 = smul.addr %s256, 288
          %s258 = smul.addr %s257, 4
          %s259 = scalar_lea.vmem %s5, %s258
        $region28: #{tpu_custom_call.1} parent=11 // pred_fallthru
          _
        // Predicated region
        $region29: #{tpu_custom_call.1} parent=11 // pred_check
          %p260 = pneg %p200
        $region30: #{tpu_custom_call.1} parent=11 // pred_check_branch
          %262 = sbr.rel (%p260) target = $region32
        $region31: #{tpu_custom_call.1} parent=11 // pred_region
          %p263 = scmp.lt.s32.totalorder %s29, 0
          %s264 = scalar_select %p263, %s29, 0
          %s265 = smul.addr %s264, 2
          %s266 = scalar_lea.vmem %s6, %s265
        $region32: #{tpu_custom_call.1} parent=11 // pred_fallthru
          _
      $region12: #{tpu_custom_call.1} parent=5 // pred_fallthru
        _
      %p267 = scmp.lt.s32.totalorder %s19, 2
      // Predicated region
      $region33: #{tpu_custom_call.1} parent=5 // pred_check
        %p268 = pneg %p267
      $region34: #{tpu_custom_call.1} parent=5 // pred_check_branch
        %270 = sbr.rel (%p268) target = $region36
      $region35: #{tpu_custom_call.1} parent=5 // pred_region
        // Predicated region
        $region37: #{tpu_custom_call.1} parent=35 // pred_check
          %p271 = pneg %p51
        $region38: #{tpu_custom_call.1} parent=35 // pred_check_branch
          %273 = sbr.rel (%p271) target = $region40
        $region39: #{tpu_custom_call.1} parent=35 // pred_region
          %p274 = scmp.lt.s32.totalorder %s26, 1
          %s275 = scalar_select %p274, %s26, 1
          %s276 = smul.addr %s275, 54
          %s277 = smul.addr %s276, 8
          %s278 = scalar_lea.vmem %s0, %s277
        $region40: #{tpu_custom_call.1} parent=35 // pred_fallthru
          _
        // Predicated region
        $region41: #{tpu_custom_call.1} parent=35 // pred_check
          %p279 = pneg %p79
        $region42: #{tpu_custom_call.1} parent=35 // pred_check_branch
          %281 = sbr.rel (%p279) target = $region44
        $region43: #{tpu_custom_call.1} parent=35 // pred_region
          %s282 = sand.u32 %s69, 1
          %s283 = scalar_lea.sflag [#allocation4], %s282
          %s284 = sand.u32 %s69, 1
          %s285 = smul.addr %s284, 288
          %s286 = scalar_lea.vmem [#allocation3], %s285
          %s288 = ssub.s32 4608, 4608
          %289 = vsyncadd %s283, %s288
          %s290 = smul.addr %s26, 36
          %s291 = sadd.s32 %s27, %s290
          %s292 = smul.addr %s291, 128
          %s293 = scalar_lea.hbm %s1, %s292
          %s294 = sshll.u32 %s286, 4
          %s295 = int_to_ptr.vmem [resolvable:$true] %s294
          %300 = dma.hbm_to_vmem [thread:$0]  %s293, 4608, %s295, %s283, 128, 128, 8
        $region44: #{tpu_custom_call.1} parent=35 // pred_fallthru
          _
      $region36: #{tpu_custom_call.1} parent=5 // pred_fallthru
        _
      %p301 = scmp.le.s32.totalorder 1, %s19
      %p302 = scmp.lt.s32.totalorder %s19, 3
      %p303 = pnand %p301, %p302
      %p304 = pneg %p303
      // Predicated region
      $region45: #{tpu_custom_call.1} parent=5 // pred_check
        _
      $region46: #{tpu_custom_call.1} parent=5 // pred_check_branch
        %306 = sbr.rel (%p303) target = $region48
      $region47: #{tpu_custom_call.1} parent=5 // pred_region
        %s307 = ssub.s32 %s19, 1
        %s308 = sand.u32 %s72, 1
        %s309 = scalar_lea.sflag [#allocation4], %s308
        %s310 = sand.u32 %s72, 1
        %s311 = smul.addr %s310, 288
        %s312 = scalar_lea.vmem [#allocation3], %s311
        // Predicated region
        $region49: #{tpu_custom_call.1} parent=47 // pred_check
          %p313 = pneg %p85
        $region50: #{tpu_custom_call.1} parent=47 // pred_check_branch
          %315 = sbr.rel (%p313) target = $region52
        $region51: #{tpu_custom_call.1} parent=47 // pred_region
          %316 = dma.done %s309, 4608
        $region52: #{tpu_custom_call.1} parent=47 // pred_fallthru
          _
        %p317 = scmp.lt.s32.totalorder %s28, 1
        %s318 = scalar_select %p317, %s28, 1
        %s319 = smul.addr %s318, 54
        %s320 = smul.addr %s319, 8
        %s321 = scalar_lea.vmem %s0, %s320
        %p322 = pneg %p57
        %p323 = pneg %p54
        %s324 = sand.u32 %s72, 1
        %s325 = scalar_lea.sflag [#allocation4], %s324
        %s326 = sand.u32 %s72, 1
        %s327 = smul.addr %s326, 288
        %s328 = scalar_lea.vmem [#allocation3], %s327
        %p329 = pneg %p85
        %p330 = pneg %p82
        %p331 = pneg %p106
        %p332 = pneg %p103
        %p333 = pneg %p127
        %p334 = pneg %p124
        %p335 = pneg %p148
        %p336 = pneg %p145
        %p337 = scmp.lt.s32.totalorder %s29, 0
        %s338 = scalar_select %p337, %s29, 0
        %s339 = smul.addr %s338, 288
        %s340 = smul.addr %s339, 4
        %s341 = scalar_lea.vmem %s5, %s340
        %p342 = pneg %p174
        %p343 = pneg %p171
        %p344 = scmp.lt.s32.totalorder %s29, 0
        %s345 = scalar_select %p344, %s29, 0
        %s346 = smul.addr %s345, 2
        %s347 = scalar_lea.vmem %s6, %s346
        %p348 = pneg %p200
        %p349 = pneg %p197
        %p350 = pneg %p228
        %p351 = pneg %p225
        %s352 = sand.u32 %s215, 1
        %s353 = scalar_lea.sflag [#allocation5], %s352
        %s354 = sand.u32 %s215, 1
        %s355 = smul.addr %s354, 144
        %s356 = scalar_lea.vmem [#allocation6], %s355
        %p357 = scmp.lt.s32.totalorder %s28, 1
        %s358 = scalar_select %p357, %s28, 1
        %s359 = smul.addr %s358, 54
        %s360 = smul.addr %s359, 8
        %s361 = scalar_lea.vmem %s0, %s360
        %p362 = scmp.lt.s32.totalorder %s29, 0
        %s363 = scalar_select %p362, %s29, 0
        %s364 = smul.addr %s363, 288
        %s365 = smul.addr %s364, 4
        %s366 = scalar_lea.vmem %s5, %s365
        %p367 = scmp.lt.s32.totalorder %s29, 0
        %s368 = scalar_select %p367, %s29, 0
        %s369 = smul.addr %s368, 2
        %s370 = scalar_lea.vmem %s6, %s369
        %p372 = scmp.eq.s32.totalorder %s29, 0
        // Predicated region
        $region53: #{tpu_custom_call.1} parent=47 // pred_check
          %p373 = pneg %p372
        $region54: #{tpu_custom_call.1} parent=47 // pred_check_branch
          %375 = sbr.rel (%p373) target = $region56
        $region55: #{tpu_custom_call.1} parent=47 // pred_region
          %v376 = vld [vmem:[%s361] sm:$0xff]
          %v377 = vld [vmem:[%s361 + $0x8] sm:$0xff]
          %v378 = vld [vmem:[%s361 + $0x10] sm:$0xf]
          %v379 = vld [vmem:[%s361 + $0x18] sm:$0xff]
          %v380 = vld [vmem:[%s361 + $0x20] sm:$0xff]
          %v381 = vld [vmem:[%s361 + $0x28] sm:$0xf]
          %v382 = vld [vmem:[%s361 + $0x30] sm:$0xff]
          %v383 = vld [vmem:[%s361 + $0x38] sm:$0xff]
          %v384 = vld [vmem:[%s361 + $0x40] sm:$0xf]
          %v385 = vld [vmem:[%s361 + $0x48] sm:$0xff]
          %v386 = vld [vmem:[%s361 + $0x50] sm:$0xff]
          %v387 = vld [vmem:[%s361 + $0x58] sm:$0xf]
          %v388 = vld [vmem:[%s361 + $0x60] sm:$0xff]
          %v389 = vld [vmem:[%s361 + $0x68] sm:$0xff]
          %v390 = vld [vmem:[%s361 + $0x70] sm:$0xf]
          %v391 = vld [vmem:[%s361 + $0x78] sm:$0xff]
          %v392 = vld [vmem:[%s361 + $0x80] sm:$0xff]
          %v393 = vld [vmem:[%s361 + $0x88] sm:$0xf]
          %v394 = vld [vmem:[%s361 + $0x90] sm:$0xff]
          %v395 = vld [vmem:[%s361 + $0x98] sm:$0xff]
          %v396 = vld [vmem:[%s361 + $0xa0] sm:$0xf]
          %v397 = vld [vmem:[%s361 + $0xa8] sm:$0xff]
          %v398 = vld [vmem:[%s361 + $0xb0] sm:$0xff]
          %v399 = vld [vmem:[%s361 + $0xb8] sm:$0xf]
          %v400 = vld [vmem:[%s361 + $0xc0] sm:$0xff]
          %v401 = vld [vmem:[%s361 + $0xc8] sm:$0xff]
          %v402 = vld [vmem:[%s361 + $0xd0] sm:$0xf]
          %v403 = vld [vmem:[%s361 + $0xd8] sm:$0xff]
          %v404 = vld [vmem:[%s361 + $0xe0] sm:$0xff]
          %v405 = vld [vmem:[%s361 + $0xe8] sm:$0xf]
          %v406 = vld [vmem:[%s361 + $0xf0] sm:$0xff]
          %v407 = vld [vmem:[%s361 + $0xf8] sm:$0xff]
          %v408 = vld [vmem:[%s361 + $0x100] sm:$0xf]
          %v409 = vld [vmem:[%s361 + $0x108] sm:$0xff]
          %v410 = vld [vmem:[%s361 + $0x110] sm:$0xff]
          %v411 = vld [vmem:[%s361 + $0x118] sm:$0xf]
          %v412 = vld [vmem:[%s361 + $0x120] sm:$0xff]
          %v413 = vld [vmem:[%s361 + $0x128] sm:$0xff]
          %v414 = vld [vmem:[%s361 + $0x130] sm:$0xf]
          %v415 = vld [vmem:[%s361 + $0x138] sm:$0xff]
          %v416 = vld [vmem:[%s361 + $0x140] sm:$0xff]
          %v417 = vld [vmem:[%s361 + $0x148] sm:$0xf]
          %v418 = vld [vmem:[%s361 + $0x150] sm:$0xff]
          %v419 = vld [vmem:[%s361 + $0x158] sm:$0xff]
          %v420 = vld [vmem:[%s361 + $0x160] sm:$0xf]
          %v421 = vld [vmem:[%s361 + $0x168] sm:$0xff]
          %v422 = vld [vmem:[%s361 + $0x170] sm:$0xff]
          %v423 = vld [vmem:[%s361 + $0x178] sm:$0xf]
          %v424 = vld [vmem:[%s361 + $0x180] sm:$0xff]
          %v425 = vld [vmem:[%s361 + $0x188] sm:$0xff]
          %v426 = vld [vmem:[%s361 + $0x190] sm:$0xf]
          %v427 = vld [vmem:[%s361 + $0x198] sm:$0xff]
          %v428 = vld [vmem:[%s361 + $0x1a0] sm:$0xff]
          %v429 = vld [vmem:[%s361 + $0x1a8] sm:$0xf]
          %v430 = vld [vmem:[%s3] sm:$0x1]
          %432 = vset.pattern.permute.xlu0 0
          %433 = vperm.xlu0 %432, %v376
          %v434 = vpop.permute.xlu0 %433
          %437 = vset.pattern.permute.xlu0 0
          %438 = vperm.xlu0 %437, %v377
          %v439 = vpop.permute.xlu0 %438
          %442 = vset.pattern.permute.xlu0 0
          %443 = vperm.xlu0 %442, %v378
          %v444 = vpop.permute.xlu0 %443
          %447 = vset.pattern.permute.xlu0 0
          %448 = vperm.xlu0 %447, %v379
          %v449 = vpop.permute.xlu0 %448
          %452 = vset.pattern.permute.xlu0 0
          %453 = vperm.xlu0 %452, %v380
          %v454 = vpop.permute.xlu0 %453
          %457 = vset.pattern.permute.xlu0 0
          %458 = vperm.xlu0 %457, %v381
          %v459 = vpop.permute.xlu0 %458
          %462 = vset.pattern.permute.xlu0 0
          %463 = vperm.xlu0 %462, %v382
          %v464 = vpop.permute.xlu0 %463
          %467 = vset.pattern.permute.xlu0 0
          %468 = vperm.xlu0 %467, %v383
          %v469 = vpop.permute.xlu0 %468
          %472 = vset.pattern.permute.xlu0 0
          %473 = vperm.xlu0 %472, %v384
          %v474 = vpop.permute.xlu0 %473
          %477 = vset.pattern.permute.xlu0 0
          %478 = vperm.xlu0 %477, %v385
          %v479 = vpop.permute.xlu0 %478
          %482 = vset.pattern.permute.xlu0 0
          %483 = vperm.xlu0 %482, %v386
          %v484 = vpop.permute.xlu0 %483
          %487 = vset.pattern.permute.xlu0 0
          %488 = vperm.xlu0 %487, %v387
          %v489 = vpop.permute.xlu0 %488
          %492 = vset.pattern.permute.xlu0 0
          %493 = vperm.xlu0 %492, %v388
          %v494 = vpop.permute.xlu0 %493
          %497 = vset.pattern.permute.xlu0 0
          %498 = vperm.xlu0 %497, %v389
          %v499 = vpop.permute.xlu0 %498
          %502 = vset.pattern.permute.xlu0 0
          %503 = vperm.xlu0 %502, %v390
          %v504 = vpop.permute.xlu0 %503
          %507 = vset.pattern.permute.xlu0 0
          %508 = vperm.xlu0 %507, %v391
          %v509 = vpop.permute.xlu0 %508
          %512 = vset.pattern.permute.xlu0 0
          %513 = vperm.xlu0 %512, %v392
          %v514 = vpop.permute.xlu0 %513
          %517 = vset.pattern.permute.xlu0 0
          %518 = vperm.xlu0 %517, %v393
          %v519 = vpop.permute.xlu0 %518
          %522 = vset.pattern.permute.xlu0 0
          %523 = vperm.xlu0 %522, %v394
          %v524 = vpop.permute.xlu0 %523
          %527 = vset.pattern.permute.xlu0 0
          %528 = vperm.xlu0 %527, %v395
          %v529 = vpop.permute.xlu0 %528
          %532 = vset.pattern.permute.xlu0 0
          %533 = vperm.xlu0 %532, %v396
          %v534 = vpop.permute.xlu0 %533
          %537 = vset.pattern.permute.xlu0 0
          %538 = vperm.xlu0 %537, %v397
          %v539 = vpop.permute.xlu0 %538
          %542 = vset.pattern.permute.xlu0 0
          %543 = vperm.xlu0 %542, %v398
          %v544 = vpop.permute.xlu0 %543
          %547 = vset.pattern.permute.xlu0 0
          %548 = vperm.xlu0 %547, %v399
          %v549 = vpop.permute.xlu0 %548
          %552 = vset.pattern.permute.xlu0 0
          %553 = vperm.xlu0 %552, %v400
          %v554 = vpop.permute.xlu0 %553
          %557 = vset.pattern.permute.xlu0 0
          %558 = vperm.xlu0 %557, %v401
          %v559 = vpop.permute.xlu0 %558
          %562 = vset.pattern.permute.xlu0 0
          %563 = vperm.xlu0 %562, %v402
          %v564 = vpop.permute.xlu0 %563
          %567 = vset.pattern.permute.xlu0 0
          %568 = vperm.xlu0 %567, %v403
          %v569 = vpop.permute.xlu0 %568
          %572 = vset.pattern.permute.xlu0 0
          %573 = vperm.xlu0 %572, %v404
          %v574 = vpop.permute.xlu0 %573
          %577 = vset.pattern.permute.xlu0 0
          %578 = vperm.xlu0 %577, %v405
          %v579 = vpop.permute.xlu0 %578
          %582 = vset.pattern.permute.xlu0 0
          %583 = vperm.xlu0 %582, %v406
          %v584 = vpop.permute.xlu0 %583
          %587 = vset.pattern.permute.xlu0 0
          %588 = vperm.xlu0 %587, %v407
          %v589 = vpop.permute.xlu0 %588
          %592 = vset.pattern.permute.xlu0 0
          %593 = vperm.xlu0 %592, %v408
          %v594 = vpop.permute.xlu0 %593
          %597 = vset.pattern.permute.xlu0 0
          %598 = vperm.xlu0 %597, %v409
          %v599 = vpop.permute.xlu0 %598
          %602 = vset.pattern.permute.xlu0 0
          %603 = vperm.xlu0 %602, %v410
          %v604 = vpop.permute.xlu0 %603
          %607 = vset.pattern.permute.xlu0 0
          %608 = vperm.xlu0 %607, %v411
          %v609 = vpop.permute.xlu0 %608
          %612 = vset.pattern.permute.xlu0 0
          %613 = vperm.xlu0 %612, %v412
          %v614 = vpop.permute.xlu0 %613
          %617 = vset.pattern.permute.xlu0 0
          %618 = vperm.xlu0 %617, %v413
          %v619 = vpop.permute.xlu0 %618
          %622 = vset.pattern.permute.xlu0 0
          %623 = vperm.xlu0 %622, %v414
          %v624 = vpop.permute.xlu0 %623
          %627 = vset.pattern.permute.xlu0 0
          %628 = vperm.xlu0 %627, %v415
          %v629 = vpop.permute.xlu0 %628
          %632 = vset.pattern.permute.xlu0 0
          %633 = vperm.xlu0 %632, %v416
          %v634 = vpop.permute.xlu0 %633
          %637 = vset.pattern.permute.xlu0 0
          %638 = vperm.xlu0 %637, %v417
          %v639 = vpop.permute.xlu0 %638
          %642 = vset.pattern.permute.xlu0 0
          %643 = vperm.xlu0 %642, %v418
          %v644 = vpop.permute.xlu0 %643
          %647 = vset.pattern.permute.xlu0 0
          %648 = vperm.xlu0 %647, %v419
          %v649 = vpop.permute.xlu0 %648
          %652 = vset.pattern.permute.xlu0 0
          %653 = vperm.xlu0 %652, %v420
          %v654 = vpop.permute.xlu0 %653
          %657 = vset.pattern.permute.xlu0 0
          %658 = vperm.xlu0 %657, %v421
          %v659 = vpop.permute.xlu0 %658
          %662 = vset.pattern.permute.xlu0 0
          %663 = vperm.xlu0 %662, %v422
          %v664 = vpop.permute.xlu0 %663
          %667 = vset.pattern.permute.xlu0 0
          %668 = vperm.xlu0 %667, %v423
          %v669 = vpop.permute.xlu0 %668
          %v672 = vlaneseq
          %v673 = vshrl.u32 %v672, 7
          %v674 = vsub.s32 0, %v673
          %v675 = vrot.slane %v430, %v674
          %v677 = vmul.f32 %v434, %v675
          %v678 = vmul.f32 %v439, %v675
          %v679 = vmul.f32 %v444, %v675
          %v680 = vmul.f32 %v449, %v675
          %v681 = vmul.f32 %v454, %v675
          %v682 = vmul.f32 %v459, %v675
          %v683 = vmul.f32 %v464, %v675
          %v684 = vmul.f32 %v469, %v675
          %v685 = vmul.f32 %v474, %v675
          %v686 = vmul.f32 %v479, %v675
          %v687 = vmul.f32 %v484, %v675
          %v688 = vmul.f32 %v489, %v675
          %v689 = vmul.f32 %v494, %v675
          %v690 = vmul.f32 %v499, %v675
          %v691 = vmul.f32 %v504, %v675
          %v692 = vmul.f32 %v509, %v675
          %v693 = vmul.f32 %v514, %v675
          %v694 = vmul.f32 %v519, %v675
          %v695 = vmul.f32 %v524, %v675
          %v696 = vmul.f32 %v529, %v675
          %v697 = vmul.f32 %v534, %v675
          %v698 = vmul.f32 %v539, %v675
          %v699 = vmul.f32 %v544, %v675
          %v700 = vmul.f32 %v549, %v675
          %v701 = vmul.f32 %v554, %v675
          %v702 = vmul.f32 %v559, %v675
          %v703 = vmul.f32 %v564, %v675
          %v704 = vmul.f32 %v569, %v675
          %v705 = vmul.f32 %v574, %v675
          %v706 = vmul.f32 %v579, %v675
          %v707 = vmul.f32 %v584, %v675
          %v708 = vmul.f32 %v589, %v675
          %v709 = vmul.f32 %v594, %v675
          %v710 = vmul.f32 %v599, %v675
          %v711 = vmul.f32 %v604, %v675
          %v712 = vmul.f32 %v609, %v675
          %v713 = vmul.f32 %v614, %v675
          %v714 = vmul.f32 %v619, %v675
          %v715 = vmul.f32 %v624, %v675
          %v716 = vmul.f32 %v629, %v675
          %v717 = vmul.f32 %v634, %v675
          %v718 = vmul.f32 %v639, %v675
          %v719 = vmul.f32 %v644, %v675
          %v720 = vmul.f32 %v649, %v675
          %v721 = vmul.f32 %v654, %v675
          %v722 = vmul.f32 %v659, %v675
          %v723 = vmul.f32 %v664, %v675
          %v724 = vmul.f32 %v669, %v675
          %v725 = vadd.f32 %v677, 0.0
          %v726 = vadd.f32 %v678, 0.0
          %v727 = vadd.f32 %v679, 0.0
          %v728 = vadd.f32 %v680, 0.0
          %v729 = vadd.f32 %v681, 0.0
          %v730 = vadd.f32 %v682, 0.0
          %v731 = vadd.f32 %v683, 0.0
          %v732 = vadd.f32 %v684, 0.0
          %v733 = vadd.f32 %v685, 0.0
          %v734 = vadd.f32 %v686, 0.0
          %v735 = vadd.f32 %v687, 0.0
          %v736 = vadd.f32 %v688, 0.0
          %v737 = vadd.f32 %v689, 0.0
          %v738 = vadd.f32 %v690, 0.0
          %v739 = vadd.f32 %v691, 0.0
          %v740 = vadd.f32 %v692, 0.0
          %v741 = vadd.f32 %v693, 0.0
          %v742 = vadd.f32 %v694, 0.0
          %v743 = vadd.f32 %v695, 0.0
          %v744 = vadd.f32 %v696, 0.0
          %v745 = vadd.f32 %v697, 0.0
          %v746 = vadd.f32 %v698, 0.0
          %v747 = vadd.f32 %v699, 0.0
          %v748 = vadd.f32 %v700, 0.0
          %v749 = vadd.f32 %v701, 0.0
          %v750 = vadd.f32 %v702, 0.0
          %v751 = vadd.f32 %v703, 0.0
          %v752 = vadd.f32 %v704, 0.0
          %v753 = vadd.f32 %v705, 0.0
          %v754 = vadd.f32 %v706, 0.0
          %v755 = vadd.f32 %v707, 0.0
          %v756 = vadd.f32 %v708, 0.0
          %v757 = vadd.f32 %v709, 0.0
          %v758 = vadd.f32 %v710, 0.0
          %v759 = vadd.f32 %v711, 0.0
          %v760 = vadd.f32 %v712, 0.0
          %v761 = vadd.f32 %v713, 0.0
          %v762 = vadd.f32 %v714, 0.0
          %v763 = vadd.f32 %v715, 0.0
          %v764 = vadd.f32 %v716, 0.0
          %v765 = vadd.f32 %v717, 0.0
          %v766 = vadd.f32 %v718, 0.0
          %v767 = vadd.f32 %v719, 0.0
          %v768 = vadd.f32 %v720, 0.0
          %v769 = vadd.f32 %v721, 0.0
          %v770 = vadd.f32 %v722, 0.0
          %v771 = vadd.f32 %v723, 0.0
          %v772 = vadd.f32 %v724, 0.0
          %s773 = scalar_lea.vmem %s3, 1
          %v774 = vld [vmem:[%s773] sm:$0x1]
          %v776 = vlaneseq
          %v777 = vshrl.u32 %v776, 7
          %v778 = vsub.s32 0, %v777
          %v779 = vrot.slane %v774, %v778
          %v781 = vmul.f32 %v434, %v779
          %v782 = vmul.f32 %v439, %v779
          %v783 = vmul.f32 %v444, %v779
          %v784 = vmul.f32 %v449, %v779
          %v785 = vmul.f32 %v454, %v779
          %v786 = vmul.f32 %v459, %v779
          %v787 = vmul.f32 %v464, %v779
          %v788 = vmul.f32 %v469, %v779
          %v789 = vmul.f32 %v474, %v779
          %v790 = vmul.f32 %v479, %v779
          %v791 = vmul.f32 %v484, %v779
          %v792 = vmul.f32 %v489, %v779
          %v793 = vmul.f32 %v494, %v779
          %v794 = vmul.f32 %v499, %v779
          %v795 = vmul.f32 %v504, %v779
          %v796 = vmul.f32 %v509, %v779
          %v797 = vmul.f32 %v514, %v779
          %v798 = vmul.f32 %v519, %v779
          %v799 = vmul.f32 %v524, %v779
          %v800 = vmul.f32 %v529, %v779
          %v801 = vmul.f32 %v534, %v779
          %v802 = vmul.f32 %v539, %v779
          %v803 = vmul.f32 %v544, %v779
          %v804 = vmul.f32 %v549, %v779
          %v805 = vmul.f32 %v554, %v779
          %v806 = vmul.f32 %v559, %v779
          %v807 = vmul.f32 %v564, %v779
          %v808 = vmul.f32 %v569, %v779
          %v809 = vmul.f32 %v574, %v779
          %v810 = vmul.f32 %v579, %v779
          %v811 = vmul.f32 %v584, %v779
          %v812 = vmul.f32 %v589, %v779
          %v813 = vmul.f32 %v594, %v779
          %v814 = vmul.f32 %v599, %v779
          %v815 = vmul.f32 %v604, %v779
          %v816 = vmul.f32 %v609, %v779
          %v817 = vmul.f32 %v614, %v779
          %v818 = vmul.f32 %v619, %v779
          %v819 = vmul.f32 %v624, %v779
          %v820 = vmul.f32 %v629, %v779
          %v821 = vmul.f32 %v634, %v779
          %v822 = vmul.f32 %v639, %v779
          %v823 = vmul.f32 %v644, %v779
          %v824 = vmul.f32 %v649, %v779
          %v825 = vmul.f32 %v654, %v779
          %v826 = vmul.f32 %v659, %v779
          %v827 = vmul.f32 %v664, %v779
          %v828 = vmul.f32 %v669, %v779
          %vm877 = vcmask 1046528
          %v878 = vrot.slane %v781, 1
          %v879 = vrot.slane %v782, 1
          %v880 = vsel %vm877, %v878, %v879
          %v881 = vrot.slane %v783, 1
          %v882 = vsel %vm877, %v879, %v881
          %v883 = vrot.slane %v784, 1
          %v884 = vrot.slane %v785, 1
          %v885 = vsel %vm877, %v883, %v884
          %v886 = vrot.slane %v786, 1
          %v887 = vsel %vm877, %v884, %v886
          %v888 = vrot.slane %v787, 1
          %v889 = vrot.slane %v788, 1
          %v890 = vsel %vm877, %v888, %v889
          %v891 = vrot.slane %v789, 1
          %v892 = vsel %vm877, %v889, %v891
          %v893 = vrot.slane %v790, 1
          %v894 = vrot.slane %v791, 1
          %v895 = vsel %vm877, %v893, %v894
          %v896 = vrot.slane %v792, 1
          %v897 = vsel %vm877, %v894, %v896
          %v898 = vrot.slane %v793, 1
          %v899 = vrot.slane %v794, 1
          %v900 = vsel %vm877, %v898, %v899
          %v901 = vrot.slane %v795, 1
          %v902 = vsel %vm877, %v899, %v901
          %v903 = vrot.slane %v796, 1
          %v904 = vrot.slane %v797, 1
          %v905 = vsel %vm877, %v903, %v904
          %v906 = vrot.slane %v798, 1
          %v907 = vsel %vm877, %v904, %v906
          %v908 = vrot.slane %v799, 1
          %v909 = vrot.slane %v800, 1
          %v910 = vsel %vm877, %v908, %v909
          %v911 = vrot.slane %v801, 1
          %v912 = vsel %vm877, %v909, %v911
          %v913 = vrot.slane %v802, 1
          %v914 = vrot.slane %v803, 1
          %v915 = vsel %vm877, %v913, %v914
          %v916 = vrot.slane %v804, 1
          %v917 = vsel %vm877, %v914, %v916
          %v918 = vrot.slane %v805, 1
          %v919 = vrot.slane %v806, 1
          %v920 = vsel %vm877, %v918, %v919
          %v921 = vrot.slane %v807, 1
          %v922 = vsel %vm877, %v919, %v921
          %v923 = vrot.slane %v808, 1
          %v924 = vrot.slane %v809, 1
          %v925 = vsel %vm877, %v923, %v924
          %v926 = vrot.slane %v810, 1
          %v927 = vsel %vm877, %v924, %v926
          %v928 = vrot.slane %v811, 1
          %v929 = vrot.slane %v812, 1
          %v930 = vsel %vm877, %v928, %v929
          %v931 = vrot.slane %v813, 1
          %v932 = vsel %vm877, %v929, %v931
          %v933 = vrot.slane %v814, 1
          %v934 = vrot.slane %v815, 1
          %v935 = vsel %vm877, %v933, %v934
          %v936 = vrot.slane %v816, 1
          %v937 = vsel %vm877, %v934, %v936
          %v938 = vrot.slane %v817, 1
          %v939 = vrot.slane %v818, 1
          %v940 = vsel %vm877, %v938, %v939
          %v941 = vrot.slane %v819, 1
          %v942 = vsel %vm877, %v939, %v941
          %v943 = vrot.slane %v820, 1
          %v944 = vrot.slane %v821, 1
          %v945 = vsel %vm877, %v943, %v944
          %v946 = vrot.slane %v822, 1
          %v947 = vsel %vm877, %v944, %v946
          %v948 = vrot.slane %v823, 1
          %v949 = vrot.slane %v824, 1
          %v950 = vsel %vm877, %v948, %v949
          %v951 = vrot.slane %v825, 1
          %v952 = vsel %vm877, %v949, %v951
          %v953 = vrot.slane %v826, 1
          %v954 = vrot.slane %v827, 1
          %v955 = vsel %vm877, %v953, %v954
          %v956 = vrot.slane %v828, 1
          %v957 = vsel %vm877, %v954, %v956
          %v1006 = vadd.f32 %v725, %v880
          %v1007 = vadd.f32 %v726, %v882
          %v1008 = vadd.f32 %v727, %v881
          %v1009 = vadd.f32 %v728, %v885
          %v1010 = vadd.f32 %v729, %v887
          %v1011 = vadd.f32 %v730, %v886
          %v1012 = vadd.f32 %v731, %v890
          %v1013 = vadd.f32 %v732, %v892
          %v1014 = vadd.f32 %v733, %v891
          %v1015 = vadd.f32 %v734, %v895
          %v1016 = vadd.f32 %v735, %v897
          %v1017 = vadd.f32 %v736, %v896
          %v1018 = vadd.f32 %v737, %v900
          %v1019 = vadd.f32 %v738, %v902
          %v1020 = vadd.f32 %v739, %v901
          %v1021 = vadd.f32 %v740, %v905
          %v1022 = vadd.f32 %v741, %v907
          %v1023 = vadd.f32 %v742, %v906
          %v1024 = vadd.f32 %v743, %v910
          %v1025 = vadd.f32 %v744, %v912
          %v1026 = vadd.f32 %v745, %v911
          %v1027 = vadd.f32 %v746, %v915
          %v1028 = vadd.f32 %v747, %v917
          %v1029 = vadd.f32 %v748, %v916
          %v1030 = vadd.f32 %v749, %v920
          %v1031 = vadd.f32 %v750, %v922
          %v1032 = vadd.f32 %v751, %v921
          %v1033 = vadd.f32 %v752, %v925
          %v1034 = vadd.f32 %v753, %v927
          %v1035 = vadd.f32 %v754, %v926
          %v1036 = vadd.f32 %v755, %v930
          %v1037 = vadd.f32 %v756, %v932
          %v1038 = vadd.f32 %v757, %v931
          %v1039 = vadd.f32 %v758, %v935
          %v1040 = vadd.f32 %v759, %v937
          %v1041 = vadd.f32 %v760, %v936
          %v1042 = vadd.f32 %v761, %v940
          %v1043 = vadd.f32 %v762, %v942
          %v1044 = vadd.f32 %v763, %v941
          %v1045 = vadd.f32 %v764, %v945
          %v1046 = vadd.f32 %v765, %v947
          %v1047 = vadd.f32 %v766, %v946
          %v1048 = vadd.f32 %v767, %v950
          %v1049 = vadd.f32 %v768, %v952
          %v1050 = vadd.f32 %v769, %v951
          %v1051 = vadd.f32 %v770, %v955
          %v1052 = vadd.f32 %v771, %v957
          %v1053 = vadd.f32 %v772, %v956
          %s1054 = scalar_lea.vmem %s3, 2
          %v1055 = vld [vmem:[%s1054] sm:$0x1]
          %v1057 = vlaneseq
          %v1058 = vshrl.u32 %v1057, 7
          %v1059 = vsub.s32 0, %v1058
          %v1060 = vrot.slane %v1055, %v1059
          %v1062 = vmul.f32 %v434, %v1060
          %v1063 = vmul.f32 %v439, %v1060
          %v1064 = vmul.f32 %v444, %v1060
          %v1065 = vmul.f32 %v449, %v1060
          %v1066 = vmul.f32 %v454, %v1060
          %v1067 = vmul.f32 %v459, %v1060
          %v1068 = vmul.f32 %v464, %v1060
          %v1069 = vmul.f32 %v469, %v1060
          %v1070 = vmul.f32 %v474, %v1060
          %v1071 = vmul.f32 %v479, %v1060
          %v1072 = vmul.f32 %v484, %v1060
          %v1073 = vmul.f32 %v489, %v1060
          %v1074 = vmul.f32 %v494, %v1060
          %v1075 = vmul.f32 %v499, %v1060
          %v1076 = vmul.f32 %v504, %v1060
          %v1077 = vmul.f32 %v509, %v1060
          %v1078 = vmul.f32 %v514, %v1060
          %v1079 = vmul.f32 %v519, %v1060
          %v1080 = vmul.f32 %v524, %v1060
          %v1081 = vmul.f32 %v529, %v1060
          %v1082 = vmul.f32 %v534, %v1060
          %v1083 = vmul.f32 %v539, %v1060
          %v1084 = vmul.f32 %v544, %v1060
          %v1085 = vmul.f32 %v549, %v1060
          %v1086 = vmul.f32 %v554, %v1060
          %v1087 = vmul.f32 %v559, %v1060
          %v1088 = vmul.f32 %v564, %v1060
          %v1089 = vmul.f32 %v569, %v1060
          %v1090 = vmul.f32 %v574, %v1060
          %v1091 = vmul.f32 %v579, %v1060
          %v1092 = vmul.f32 %v584, %v1060
          %v1093 = vmul.f32 %v589, %v1060
          %v1094 = vmul.f32 %v594, %v1060
          %v1095 = vmul.f32 %v599, %v1060
          %v1096 = vmul.f32 %v604, %v1060
          %v1097 = vmul.f32 %v609, %v1060
          %v1098 = vmul.f32 %v614, %v1060
          %v1099 = vmul.f32 %v619, %v1060
          %v1100 = vmul.f32 %v624, %v1060
          %v1101 = vmul.f32 %v629, %v1060
          %v1102 = vmul.f32 %v634, %v1060
          %v1103 = vmul.f32 %v639, %v1060
          %v1104 = vmul.f32 %v644, %v1060
          %v1105 = vmul.f32 %v649, %v1060
          %v1106 = vmul.f32 %v654, %v1060
          %v1107 = vmul.f32 %v659, %v1060
          %v1108 = vmul.f32 %v664, %v1060
          %v1109 = vmul.f32 %v669, %v1060
          %vm1158 = vcmask 1045504
          %v1159 = vrot.slane %v1062, 2
          %v1160 = vrot.slane %v1063, 2
          %v1161 = vsel %vm1158, %v1159, %v1160
          %v1162 = vrot.slane %v1064, 2
          %v1163 = vsel %vm1158, %v1160, %v1162
          %v1164 = vrot.slane %v1065, 2
          %v1165 = vrot.slane %v1066, 2
          %v1166 = vsel %vm1158, %v1164, %v1165
          %v1167 = vrot.slane %v1067, 2
          %v1168 = vsel %vm1158, %v1165, %v1167
          %v1169 = vrot.slane %v1068, 2
          %v1170 = vrot.slane %v1069, 2
          %v1171 = vsel %vm1158, %v1169, %v1170
          %v1172 = vrot.slane %v1070, 2
          %v1173 = vsel %vm1158, %v1170, %v1172
          %v1174 = vrot.slane %v1071, 2
          %v1175 = vrot.slane %v1072, 2
          %v1176 = vsel %vm1158, %v1174, %v1175
          %v1177 = vrot.slane %v1073, 2
          %v1178 = vsel %vm1158, %v1175, %v1177
          %v1179 = vrot.slane %v1074, 2
          %v1180 = vrot.slane %v1075, 2
          %v1181 = vsel %vm1158, %v1179, %v1180
          %v1182 = vrot.slane %v1076, 2
          %v1183 = vsel %vm1158, %v1180, %v1182
          %v1184 = vrot.slane %v1077, 2
          %v1185 = vrot.slane %v1078, 2
          %v1186 = vsel %vm1158, %v1184, %v1185
          %v1187 = vrot.slane %v1079, 2
          %v1188 = vsel %vm1158, %v1185, %v1187
          %v1189 = vrot.slane %v1080, 2
          %v1190 = vrot.slane %v1081, 2
          %v1191 = vsel %vm1158, %v1189, %v1190
          %v1192 = vrot.slane %v1082, 2
          %v1193 = vsel %vm1158, %v1190, %v1192
          %v1194 = vrot.slane %v1083, 2
          %v1195 = vrot.slane %v1084, 2
          %v1196 = vsel %vm1158, %v1194, %v1195
          %v1197 = vrot.slane %v1085, 2
          %v1198 = vsel %vm1158, %v1195, %v1197
          %v1199 = vrot.slane %v1086, 2
          %v1200 = vrot.slane %v1087, 2
          %v1201 = vsel %vm1158, %v1199, %v1200
          %v1202 = vrot.slane %v1088, 2
          %v1203 = vsel %vm1158, %v1200, %v1202
          %v1204 = vrot.slane %v1089, 2
          %v1205 = vrot.slane %v1090, 2
          %v1206 = vsel %vm1158, %v1204, %v1205
          %v1207 = vrot.slane %v1091, 2
          %v1208 = vsel %vm1158, %v1205, %v1207
          %v1209 = vrot.slane %v1092, 2
          %v1210 = vrot.slane %v1093, 2
          %v1211 = vsel %vm1158, %v1209, %v1210
          %v1212 = vrot.slane %v1094, 2
          %v1213 = vsel %vm1158, %v1210, %v1212
          %v1214 = vrot.slane %v1095, 2
          %v1215 = vrot.slane %v1096, 2
          %v1216 = vsel %vm1158, %v1214, %v1215
          %v1217 = vrot.slane %v1097, 2
          %v1218 = vsel %vm1158, %v1215, %v1217
          %v1219 = vrot.slane %v1098, 2
          %v1220 = vrot.slane %v1099, 2
          %v1221 = vsel %vm1158, %v1219, %v1220
          %v1222 = vrot.slane %v1100, 2
          %v1223 = vsel %vm1158, %v1220, %v1222
          %v1224 = vrot.slane %v1101, 2
          %v1225 = vrot.slane %v1102, 2
          %v1226 = vsel %vm1158, %v1224, %v1225
          %v1227 = vrot.slane %v1103, 2
          %v1228 = vsel %vm1158, %v1225, %v1227
          %v1229 = vrot.slane %v1104, 2
          %v1230 = vrot.slane %v1105, 2
          %v1231 = vsel %vm1158, %v1229, %v1230
          %v1232 = vrot.slane %v1106, 2
          %v1233 = vsel %vm1158, %v1230, %v1232
          %v1234 = vrot.slane %v1107, 2
          %v1235 = vrot.slane %v1108, 2
          %v1236 = vsel %vm1158, %v1234, %v1235
          %v1237 = vrot.slane %v1109, 2
          %v1238 = vsel %vm1158, %v1235, %v1237
          %v1287 = vadd.f32 %v1006, %v1161
          %v1288 = vadd.f32 %v1007, %v1163
          %v1289 = vadd.f32 %v1008, %v1162
          %v1290 = vadd.f32 %v1009, %v1166
          %v1291 = vadd.f32 %v1010, %v1168
          %v1292 = vadd.f32 %v1011, %v1167
          %v1293 = vadd.f32 %v1012, %v1171
          %v1294 = vadd.f32 %v1013, %v1173
          %v1295 = vadd.f32 %v1014, %v1172
          %v1296 = vadd.f32 %v1015, %v1176
          %v1297 = vadd.f32 %v1016, %v1178
          %v1298 = vadd.f32 %v1017, %v1177
          %v1299 = vadd.f32 %v1018, %v1181
          %v1300 = vadd.f32 %v1019, %v1183
          %v1301 = vadd.f32 %v1020, %v1182
          %v1302 = vadd.f32 %v1021, %v1186
          %v1303 = vadd.f32 %v1022, %v1188
          %v1304 = vadd.f32 %v1023, %v1187
          %v1305 = vadd.f32 %v1024, %v1191
          %v1306 = vadd.f32 %v1025, %v1193
          %v1307 = vadd.f32 %v1026, %v1192
          %v1308 = vadd.f32 %v1027, %v1196
          %v1309 = vadd.f32 %v1028, %v1198
          %v1310 = vadd.f32 %v1029, %v1197
          %v1311 = vadd.f32 %v1030, %v1201
          %v1312 = vadd.f32 %v1031, %v1203
          %v1313 = vadd.f32 %v1032, %v1202
          %v1314 = vadd.f32 %v1033, %v1206
          %v1315 = vadd.f32 %v1034, %v1208
          %v1316 = vadd.f32 %v1035, %v1207
          %v1317 = vadd.f32 %v1036, %v1211
          %v1318 = vadd.f32 %v1037, %v1213
          %v1319 = vadd.f32 %v1038, %v1212
          %v1320 = vadd.f32 %v1039, %v1216
          %v1321 = vadd.f32 %v1040, %v1218
          %v1322 = vadd.f32 %v1041, %v1217
          %v1323 = vadd.f32 %v1042, %v1221
          %v1324 = vadd.f32 %v1043, %v1223
          %v1325 = vadd.f32 %v1044, %v1222
          %v1326 = vadd.f32 %v1045, %v1226
          %v1327 = vadd.f32 %v1046, %v1228
          %v1328 = vadd.f32 %v1047, %v1227
          %v1329 = vadd.f32 %v1048, %v1231
          %v1330 = vadd.f32 %v1049, %v1233
          %v1331 = vadd.f32 %v1050, %v1232
          %v1332 = vadd.f32 %v1051, %v1236
          %v1333 = vadd.f32 %v1052, %v1238
          %v1334 = vadd.f32 %v1053, %v1237
          %s1335 = scalar_lea.vmem %s3, 3
          %v1336 = vld [vmem:[%s1335] sm:$0x1]
          %1338 = vset.pattern.permute.xlu0 0
          %1339 = vperm.xlu0 %1338, %v424
          %v1340 = vpop.permute.xlu0 %1339
          %1343 = vset.pattern.permute.xlu0 0
          %1344 = vperm.xlu0 %1343, %v425
          %v1345 = vpop.permute.xlu0 %1344
          %1348 = vset.pattern.permute.xlu0 0
          %1349 = vperm.xlu0 %1348, %v426
          %v1350 = vpop.permute.xlu0 %1349
          %v1353 = vlaneseq
          %v1354 = vshrl.u32 %v1353, 7
          %v1355 = vsub.s32 0, %v1354
          %v1356 = vrot.slane %v1336, %v1355
          %v1358 = vmul.f32 %v449, %v1356
          %v1359 = vmul.f32 %v454, %v1356
          %v1360 = vmul.f32 %v459, %v1356
          %v1361 = vmul.f32 %v464, %v1356
          %v1362 = vmul.f32 %v469, %v1356
          %v1363 = vmul.f32 %v474, %v1356
          %v1364 = vmul.f32 %v479, %v1356
          %v1365 = vmul.f32 %v484, %v1356
          %v1366 = vmul.f32 %v489, %v1356
          %v1367 = vmul.f32 %v494, %v1356
          %v1368 = vmul.f32 %v499, %v1356
          %v1369 = vmul.f32 %v504, %v1356
          %v1370 = vmul.f32 %v509, %v1356
          %v1371 = vmul.f32 %v514, %v1356
          %v1372 = vmul.f32 %v519, %v1356
          %v1373 = vmul.f32 %v524, %v1356
          %v1374 = vmul.f32 %v529, %v1356
          %v1375 = vmul.f32 %v534, %v1356
          %v1376 = vmul.f32 %v539, %v1356
          %v1377 = vmul.f32 %v544, %v1356
          %v1378 = vmul.f32 %v549, %v1356
          %v1379 = vmul.f32 %v554, %v1356
          %v1380 = vmul.f32 %v559, %v1356
          %v1381 = vmul.f32 %v564, %v1356
          %v1382 = vmul.f32 %v569, %v1356
          %v1383 = vmul.f32 %v574, %v1356
          %v1384 = vmul.f32 %v579, %v1356
          %v1385 = vmul.f32 %v584, %v1356
          %v1386 = vmul.f32 %v589, %v1356
          %v1387 = vmul.f32 %v594, %v1356
          %v1388 = vmul.f32 %v599, %v1356
          %v1389 = vmul.f32 %v604, %v1356
          %v1390 = vmul.f32 %v609, %v1356
          %v1391 = vmul.f32 %v614, %v1356
          %v1392 = vmul.f32 %v619, %v1356
          %v1393 = vmul.f32 %v624, %v1356
          %v1394 = vmul.f32 %v629, %v1356
          %v1395 = vmul.f32 %v634, %v1356
          %v1396 = vmul.f32 %v639, %v1356
          %v1397 = vmul.f32 %v644, %v1356
          %v1398 = vmul.f32 %v649, %v1356
          %v1399 = vmul.f32 %v654, %v1356
          %v1400 = vmul.f32 %v659, %v1356
          %v1401 = vmul.f32 %v664, %v1356
          %v1402 = vmul.f32 %v669, %v1356
          %v1403 = vmul.f32 %v1340, %v1356
          %v1404 = vmul.f32 %v1345, %v1356
          %v1405 = vmul.f32 %v1350, %v1356
          %v1406 = vadd.f32 %v1287, %v1358
          %v1407 = vadd.f32 %v1288, %v1359
          %v1408 = vadd.f32 %v1289, %v1360
          %v1409 = vadd.f32 %v1290, %v1361
          %v1410 = vadd.f32 %v1291, %v1362
          %v1411 = vadd.f32 %v1292, %v1363
          %v1412 = vadd.f32 %v1293, %v1364
          %v1413 = vadd.f32 %v1294, %v1365
          %v1414 = vadd.f32 %v1295, %v1366
          %v1415 = vadd.f32 %v1296, %v1367
          %v1416 = vadd.f32 %v1297, %v1368
          %v1417 = vadd.f32 %v1298, %v1369
          %v1418 = vadd.f32 %v1299, %v1370
          %v1419 = vadd.f32 %v1300, %v1371
          %v1420 = vadd.f32 %v1301, %v1372
          %v1421 = vadd.f32 %v1302, %v1373
          %v1422 = vadd.f32 %v1303, %v1374
          %v1423 = vadd.f32 %v1304, %v1375
          %v1424 = vadd.f32 %v1305, %v1376
          %v1425 = vadd.f32 %v1306, %v1377
          %v1426 = vadd.f32 %v1307, %v1378
          %v1427 = vadd.f32 %v1308, %v1379
          %v1428 = vadd.f32 %v1309, %v1380
          %v1429 = vadd.f32 %v1310, %v1381
          %v1430 = vadd.f32 %v1311, %v1382
          %v1431 = vadd.f32 %v1312, %v1383
          %v1432 = vadd.f32 %v1313, %v1384
          %v1433 = vadd.f32 %v1314, %v1385
          %v1434 = vadd.f32 %v1315, %v1386
          %v1435 = vadd.f32 %v1316, %v1387
          %v1436 = vadd.f32 %v1317, %v1388
          %v1437 = vadd.f32 %v1318, %v1389
          %v1438 = vadd.f32 %v1319, %v1390
          %v1439 = vadd.f32 %v1320, %v1391
          %v1440 = vadd.f32 %v1321, %v1392
          %v1441 = vadd.f32 %v1322, %v1393
          %v1442 = vadd.f32 %v1323, %v1394
          %v1443 = vadd.f32 %v1324, %v1395
          %v1444 = vadd.f32 %v1325, %v1396
          %v1445 = vadd.f32 %v1326, %v1397
          %v1446 = vadd.f32 %v1327, %v1398
          %v1447 = vadd.f32 %v1328, %v1399
          %v1448 = vadd.f32 %v1329, %v1400
          %v1449 = vadd.f32 %v1330, %v1401
          %v1450 = vadd.f32 %v1331, %v1402
          %v1451 = vadd.f32 %v1332, %v1403
          %v1452 = vadd.f32 %v1333, %v1404
          %v1453 = vadd.f32 %v1334, %v1405
          %s1454 = scalar_lea.vmem %s3, 4
          %v1455 = vld [vmem:[%s1454] sm:$0x1]
          %v1457 = vlaneseq
          %v1458 = vshrl.u32 %v1457, 7
          %v1459 = vsub.s32 0, %v1458
          %v1460 = vrot.slane %v1455, %v1459
          %v1462 = vmul.f32 %v449, %v1460
          %v1463 = vmul.f32 %v454, %v1460
          %v1464 = vmul.f32 %v459, %v1460
          %v1465 = vmul.f32 %v464, %v1460
          %v1466 = vmul.f32 %v469, %v1460
          %v1467 = vmul.f32 %v474, %v1460
          %v1468 = vmul.f32 %v479, %v1460
          %v1469 = vmul.f32 %v484, %v1460
          %v1470 = vmul.f32 %v489, %v1460
          %v1471 = vmul.f32 %v494, %v1460
          %v1472 = vmul.f32 %v499, %v1460
          %v1473 = vmul.f32 %v504, %v1460
          %v1474 = vmul.f32 %v509, %v1460
          %v1475 = vmul.f32 %v514, %v1460
          %v1476 = vmul.f32 %v519, %v1460
          %v1477 = vmul.f32 %v524, %v1460
          %v1478 = vmul.f32 %v529, %v1460
          %v1479 = vmul.f32 %v534, %v1460
          %v1480 = vmul.f32 %v539, %v1460
          %v1481 = vmul.f32 %v544, %v1460
          %v1482 = vmul.f32 %v549, %v1460
          %v1483 = vmul.f32 %v554, %v1460
          %v1484 = vmul.f32 %v559, %v1460
          %v1485 = vmul.f32 %v564, %v1460
          %v1486 = vmul.f32 %v569, %v1460
          %v1487 = vmul.f32 %v574, %v1460
          %v1488 = vmul.f32 %v579, %v1460
          %v1489 = vmul.f32 %v584, %v1460
          %v1490 = vmul.f32 %v589, %v1460
          %v1491 = vmul.f32 %v594, %v1460
          %v1492 = vmul.f32 %v599, %v1460
          %v1493 = vmul.f32 %v604, %v1460
          %v1494 = vmul.f32 %v609, %v1460
          %v1495 = vmul.f32 %v614, %v1460
          %v1496 = vmul.f32 %v619, %v1460
          %v1497 = vmul.f32 %v624, %v1460
          %v1498 = vmul.f32 %v629, %v1460
          %v1499 = vmul.f32 %v634, %v1460
          %v1500 = vmul.f32 %v639, %v1460
          %v1501 = vmul.f32 %v644, %v1460
          %v1502 = vmul.f32 %v649, %v1460
          %v1503 = vmul.f32 %v654, %v1460
          %v1504 = vmul.f32 %v659, %v1460
          %v1505 = vmul.f32 %v664, %v1460
          %v1506 = vmul.f32 %v669, %v1460
          %v1507 = vmul.f32 %v1340, %v1460
          %v1508 = vmul.f32 %v1345, %v1460
          %v1509 = vmul.f32 %v1350, %v1460
          %v1558 = vrot.slane %v1462, 1
          %v1559 = vrot.slane %v1463, 1
          %v1560 = vsel %vm877, %v1558, %v1559
          %v1561 = vrot.slane %v1464, 1
          %v1562 = vsel %vm877, %v1559, %v1561
          %v1563 = vrot.slane %v1465, 1
          %v1564 = vrot.slane %v1466, 1
          %v1565 = vsel %vm877, %v1563, %v1564
          %v1566 = vrot.slane %v1467, 1
          %v1567 = vsel %vm877, %v1564, %v1566
          %v1568 = vrot.slane %v1468, 1
          %v1569 = vrot.slane %v1469, 1
          %v1570 = vsel %vm877, %v1568, %v1569
          %v1571 = vrot.slane %v1470, 1
          %v1572 = vsel %vm877, %v1569, %v1571
          %v1573 = vrot.slane %v1471, 1
          %v1574 = vrot.slane %v1472, 1
          %v1575 = vsel %vm877, %v1573, %v1574
          %v1576 = vrot.slane %v1473, 1
          %v1577 = vsel %vm877, %v1574, %v1576
          %v1578 = vrot.slane %v1474, 1
          %v1579 = vrot.slane %v1475, 1
          %v1580 = vsel %vm877, %v1578, %v1579
          %v1581 = vrot.slane %v1476, 1
          %v1582 = vsel %vm877, %v1579, %v1581
          %v1583 = vrot.slane %v1477, 1
          %v1584 = vrot.slane %v1478, 1
          %v1585 = vsel %vm877, %v1583, %v1584
          %v1586 = vrot.slane %v1479, 1
          %v1587 = vsel %vm877, %v1584, %v1586
          %v1588 = vrot.slane %v1480, 1
          %v1589 = vrot.slane %v1481, 1
          %v1590 = vsel %vm877, %v1588, %v1589
          %v1591 = vrot.slane %v1482, 1
          %v1592 = vsel %vm877, %v1589, %v1591
          %v1593 = vrot.slane %v1483, 1
          %v1594 = vrot.slane %v1484, 1
          %v1595 = vsel %vm877, %v1593, %v1594
          %v1596 = vrot.slane %v1485, 1
          %v1597 = vsel %vm877, %v1594, %v1596
          %v1598 = vrot.slane %v1486, 1
          %v1599 = vrot.slane %v1487, 1
          %v1600 = vsel %vm877, %v1598, %v1599
          %v1601 = vrot.slane %v1488, 1
          %v1602 = vsel %vm877, %v1599, %v1601
          %v1603 = vrot.slane %v1489, 1
          %v1604 = vrot.slane %v1490, 1
          %v1605 = vsel %vm877, %v1603, %v1604
          %v1606 = vrot.slane %v1491, 1
          %v1607 = vsel %vm877, %v1604, %v1606
          %v1608 = vrot.slane %v1492, 1
          %v1609 = vrot.slane %v1493, 1
          %v1610 = vsel %vm877, %v1608, %v1609
          %v1611 = vrot.slane %v1494, 1
          %v1612 = vsel %vm877, %v1609, %v1611
          %v1613 = vrot.slane %v1495, 1
          %v1614 = vrot.slane %v1496, 1
          %v1615 = vsel %vm877, %v1613, %v1614
          %v1616 = vrot.slane %v1497, 1
          %v1617 = vsel %vm877, %v1614, %v1616
          %v1618 = vrot.slane %v1498, 1
          %v1619 = vrot.slane %v1499, 1
          %v1620 = vsel %vm877, %v1618, %v1619
          %v1621 = vrot.slane %v1500, 1
          %v1622 = vsel %vm877, %v1619, %v1621
          %v1623 = vrot.slane %v1501, 1
          %v1624 = vrot.slane %v1502, 1
          %v1625 = vsel %vm877, %v1623, %v1624
          %v1626 = vrot.slane %v1503, 1
          %v1627 = vsel %vm877, %v1624, %v1626
          %v1628 = vrot.slane %v1504, 1
          %v1629 = vrot.slane %v1505, 1
          %v1630 = vsel %vm877, %v1628, %v1629
          %v1631 = vrot.slane %v1506, 1
          %v1632 = vsel %vm877, %v1629, %v1631
          %v1633 = vrot.slane %v1507, 1
          %v1634 = vrot.slane %v1508, 1
          %v1635 = vsel %vm877, %v1633, %v1634
          %v1636 = vrot.slane %v1509, 1
          %v1637 = vsel %vm877, %v1634, %v1636
          %v1686 = vadd.f32 %v1406, %v1560
          %v1687 = vadd.f32 %v1407, %v1562
          %v1688 = vadd.f32 %v1408, %v1561
          %v1689 = vadd.f32 %v1409, %v1565
          %v1690 = vadd.f32 %v1410, %v1567
          %v1691 = vadd.f32 %v1411, %v1566
          %v1692 = vadd.f32 %v1412, %v1570
          %v1693 = vadd.f32 %v1413, %v1572
          %v1694 = vadd.f32 %v1414, %v1571
          %v1695 = vadd.f32 %v1415, %v1575
          %v1696 = vadd.f32 %v1416, %v1577
          %v1697 = vadd.f32 %v1417, %v1576
          %v1698 = vadd.f32 %v1418, %v1580
          %v1699 = vadd.f32 %v1419, %v1582
          %v1700 = vadd.f32 %v1420, %v1581
          %v1701 = vadd.f32 %v1421, %v1585
          %v1702 = vadd.f32 %v1422, %v1587
          %v1703 = vadd.f32 %v1423, %v1586
          %v1704 = vadd.f32 %v1424, %v1590
          %v1705 = vadd.f32 %v1425, %v1592
          %v1706 = vadd.f32 %v1426, %v1591
          %v1707 = vadd.f32 %v1427, %v1595
          %v1708 = vadd.f32 %v1428, %v1597
          %v1709 = vadd.f32 %v1429, %v1596
          %v1710 = vadd.f32 %v1430, %v1600
          %v1711 = vadd.f32 %v1431, %v1602
          %v1712 = vadd.f32 %v1432, %v1601
          %v1713 = vadd.f32 %v1433, %v1605
          %v1714 = vadd.f32 %v1434, %v1607
          %v1715 = vadd.f32 %v1435, %v1606
          %v1716 = vadd.f32 %v1436, %v1610
          %v1717 = vadd.f32 %v1437, %v1612
          %v1718 = vadd.f32 %v1438, %v1611
          %v1719 = vadd.f32 %v1439, %v1615
          %v1720 = vadd.f32 %v1440, %v1617
          %v1721 = vadd.f32 %v1441, %v1616
          %v1722 = vadd.f32 %v1442, %v1620
          %v1723 = vadd.f32 %v1443, %v1622
          %v1724 = vadd.f32 %v1444, %v1621
          %v1725 = vadd.f32 %v1445, %v1625
          %v1726 = vadd.f32 %v1446, %v1627
          %v1727 = vadd.f32 %v1447, %v1626
          %v1728 = vadd.f32 %v1448, %v1630
          %v1729 = vadd.f32 %v1449, %v1632
          %v1730 = vadd.f32 %v1450, %v1631
          %v1731 = vadd.f32 %v1451, %v1635
          %v1732 = vadd.f32 %v1452, %v1637
          %v1733 = vadd.f32 %v1453, %v1636
          %s1734 = scalar_lea.vmem %s3, 5
          %v1735 = vld [vmem:[%s1734] sm:$0x1]
          %v1737 = vlaneseq
          %v1738 = vshrl.u32 %v1737, 7
          %v1739 = vsub.s32 0, %v1738
          %v1740 = vrot.slane %v1735, %v1739
          %v1742 = vmul.f32 %v449, %v1740
          %v1743 = vmul.f32 %v454, %v1740
          %v1744 = vmul.f32 %v459, %v1740
          %v1745 = vmul.f32 %v464, %v1740
          %v1746 = vmul.f32 %v469, %v1740
          %v1747 = vmul.f32 %v474, %v1740
          %v1748 = vmul.f32 %v479, %v1740
          %v1749 = vmul.f32 %v484, %v1740
          %v1750 = vmul.f32 %v489, %v1740
          %v1751 = vmul.f32 %v494, %v1740
          %v1752 = vmul.f32 %v499, %v1740
          %v1753 = vmul.f32 %v504, %v1740
          %v1754 = vmul.f32 %v509, %v1740
          %v1755 = vmul.f32 %v514, %v1740
          %v1756 = vmul.f32 %v519, %v1740
          %v1757 = vmul.f32 %v524, %v1740
          %v1758 = vmul.f32 %v529, %v1740
          %v1759 = vmul.f32 %v534, %v1740
          %v1760 = vmul.f32 %v539, %v1740
          %v1761 = vmul.f32 %v544, %v1740
          %v1762 = vmul.f32 %v549, %v1740
          %v1763 = vmul.f32 %v554, %v1740
          %v1764 = vmul.f32 %v559, %v1740
          %v1765 = vmul.f32 %v564, %v1740
          %v1766 = vmul.f32 %v569, %v1740
          %v1767 = vmul.f32 %v574, %v1740
          %v1768 = vmul.f32 %v579, %v1740
          %v1769 = vmul.f32 %v584, %v1740
          %v1770 = vmul.f32 %v589, %v1740
          %v1771 = vmul.f32 %v594, %v1740
          %v1772 = vmul.f32 %v599, %v1740
          %v1773 = vmul.f32 %v604, %v1740
          %v1774 = vmul.f32 %v609, %v1740
          %v1775 = vmul.f32 %v614, %v1740
          %v1776 = vmul.f32 %v619, %v1740
          %v1777 = vmul.f32 %v624, %v1740
          %v1778 = vmul.f32 %v629, %v1740
          %v1779 = vmul.f32 %v634, %v1740
          %v1780 = vmul.f32 %v639, %v1740
          %v1781 = vmul.f32 %v644, %v1740
          %v1782 = vmul.f32 %v649, %v1740
          %v1783 = vmul.f32 %v654, %v1740
          %v1784 = vmul.f32 %v659, %v1740
          %v1785 = vmul.f32 %v664, %v1740
          %v1786 = vmul.f32 %v669, %v1740
          %v1787 = vmul.f32 %v1340, %v1740
          %v1788 = vmul.f32 %v1345, %v1740
          %v1789 = vmul.f32 %v1350, %v1740
          %v1838 = vrot.slane %v1742, 2
          %v1839 = vrot.slane %v1743, 2
          %v1840 = vsel %vm1158, %v1838, %v1839
          %v1841 = vrot.slane %v1744, 2
          %v1842 = vsel %vm1158, %v1839, %v1841
          %v1843 = vrot.slane %v1745, 2
          %v1844 = vrot.slane %v1746, 2
          %v1845 = vsel %vm1158, %v1843, %v1844
          %v1846 = vrot.slane %v1747, 2
          %v1847 = vsel %vm1158, %v1844, %v1846
          %v1848 = vrot.slane %v1748, 2
          %v1849 = vrot.slane %v1749, 2
          %v1850 = vsel %vm1158, %v1848, %v1849
          %v1851 = vrot.slane %v1750, 2
          %v1852 = vsel %vm1158, %v1849, %v1851
          %v1853 = vrot.slane %v1751, 2
          %v1854 = vrot.slane %v1752, 2
          %v1855 = vsel %vm1158, %v1853, %v1854
          %v1856 = vrot.slane %v1753, 2
          %v1857 = vsel %vm1158, %v1854, %v1856
          %v1858 = vrot.slane %v1754, 2
          %v1859 = vrot.slane %v1755, 2
          %v1860 = vsel %vm1158, %v1858, %v1859
          %v1861 = vrot.slane %v1756, 2
          %v1862 = vsel %vm1158, %v1859, %v1861
          %v1863 = vrot.slane %v1757, 2
          %v1864 = vrot.slane %v1758, 2
          %v1865 = vsel %vm1158, %v1863, %v1864
          %v1866 = vrot.slane %v1759, 2
          %v1867 = vsel %vm1158, %v1864, %v1866
          %v1868 = vrot.slane %v1760, 2
          %v1869 = vrot.slane %v1761, 2
          %v1870 = vsel %vm1158, %v1868, %v1869
          %v1871 = vrot.slane %v1762, 2
          %v1872 = vsel %vm1158, %v1869, %v1871
          %v1873 = vrot.slane %v1763, 2
          %v1874 = vrot.slane %v1764, 2
          %v1875 = vsel %vm1158, %v1873, %v1874
          %v1876 = vrot.slane %v1765, 2
          %v1877 = vsel %vm1158, %v1874, %v1876
          %v1878 = vrot.slane %v1766, 2
          %v1879 = vrot.slane %v1767, 2
          %v1880 = vsel %vm1158, %v1878, %v1879
          %v1881 = vrot.slane %v1768, 2
          %v1882 = vsel %vm1158, %v1879, %v1881
          %v1883 = vrot.slane %v1769, 2
          %v1884 = vrot.slane %v1770, 2
          %v1885 = vsel %vm1158, %v1883, %v1884
          %v1886 = vrot.slane %v1771, 2
          %v1887 = vsel %vm1158, %v1884, %v1886
          %v1888 = vrot.slane %v1772, 2
          %v1889 = vrot.slane %v1773, 2
          %v1890 = vsel %vm1158, %v1888, %v1889
          %v1891 = vrot.slane %v1774, 2
          %v1892 = vsel %vm1158, %v1889, %v1891
          %v1893 = vrot.slane %v1775, 2
          %v1894 = vrot.slane %v1776, 2
          %v1895 = vsel %vm1158, %v1893, %v1894
          %v1896 = vrot.slane %v1777, 2
          %v1897 = vsel %vm1158, %v1894, %v1896
          %v1898 = vrot.slane %v1778, 2
          %v1899 = vrot.slane %v1779, 2
          %v1900 = vsel %vm1158, %v1898, %v1899
          %v1901 = vrot.slane %v1780, 2
          %v1902 = vsel %vm1158, %v1899, %v1901
          %v1903 = vrot.slane %v1781, 2
          %v1904 = vrot.slane %v1782, 2
          %v1905 = vsel %vm1158, %v1903, %v1904
          %v1906 = vrot.slane %v1783, 2
          %v1907 = vsel %vm1158, %v1904, %v1906
          %v1908 = vrot.slane %v1784, 2
          %v1909 = vrot.slane %v1785, 2
          %v1910 = vsel %vm1158, %v1908, %v1909
          %v1911 = vrot.slane %v1786, 2
          %v1912 = vsel %vm1158, %v1909, %v1911
          %v1913 = vrot.slane %v1787, 2
          %v1914 = vrot.slane %v1788, 2
          %v1915 = vsel %vm1158, %v1913, %v1914
          %v1916 = vrot.slane %v1789, 2
          %v1917 = vsel %vm1158, %v1914, %v1916
          %v1966 = vadd.f32 %v1686, %v1840
          %v1967 = vadd.f32 %v1687, %v1842
          %v1968 = vadd.f32 %v1688, %v1841
          %v1969 = vadd.f32 %v1689, %v1845
          %v1970 = vadd.f32 %v1690, %v1847
          %v1971 = vadd.f32 %v1691, %v1846
          %v1972 = vadd.f32 %v1692, %v1850
          %v1973 = vadd.f32 %v1693, %v1852
          %v1974 = vadd.f32 %v1694, %v1851
          %v1975 = vadd.f32 %v1695, %v1855
          %v1976 = vadd.f32 %v1696, %v1857
          %v1977 = vadd.f32 %v1697, %v1856
          %v1978 = vadd.f32 %v1698, %v1860
          %v1979 = vadd.f32 %v1699, %v1862
          %v1980 = vadd.f32 %v1700, %v1861
          %v1981 = vadd.f32 %v1701, %v1865
          %v1982 = vadd.f32 %v1702, %v1867
          %v1983 = vadd.f32 %v1703, %v1866
          %v1984 = vadd.f32 %v1704, %v1870
          %v1985 = vadd.f32 %v1705, %v1872
          %v1986 = vadd.f32 %v1706, %v1871
          %v1987 = vadd.f32 %v1707, %v1875
          %v1988 = vadd.f32 %v1708, %v1877
          %v1989 = vadd.f32 %v1709, %v1876
          %v1990 = vadd.f32 %v1710, %v1880
          %v1991 = vadd.f32 %v1711, %v1882
          %v1992 = vadd.f32 %v1712, %v1881
          %v1993 = vadd.f32 %v1713, %v1885
          %v1994 = vadd.f32 %v1714, %v1887
          %v1995 = vadd.f32 %v1715, %v1886
          %v1996 = vadd.f32 %v1716, %v1890
          %v1997 = vadd.f32 %v1717, %v1892
          %v1998 = vadd.f32 %v1718, %v1891
          %v1999 = vadd.f32 %v1719, %v1895
          %v2000 = vadd.f32 %v1720, %v1897
          %v2001 = vadd.f32 %v1721, %v1896
          %v2002 = vadd.f32 %v1722, %v1900
          %v2003 = vadd.f32 %v1723, %v1902
          %v2004 = vadd.f32 %v1724, %v1901
          %v2005 = vadd.f32 %v1725, %v1905
          %v2006 = vadd.f32 %v1726, %v1907
          %v2007 = vadd.f32 %v1727, %v1906
          %v2008 = vadd.f32 %v1728, %v1910
          %v2009 = vadd.f32 %v1729, %v1912
          %v2010 = vadd.f32 %v1730, %v1911
          %v2011 = vadd.f32 %v1731, %v1915
          %v2012 = vadd.f32 %v1732, %v1917
          %v2013 = vadd.f32 %v1733, %v1916
          %s2014 = scalar_lea.vmem %s3, 6
          %v2015 = vld [vmem:[%s2014] sm:$0x1]
          %2017 = vset.pattern.permute.xlu0 0
          %2018 = vperm.xlu0 %2017, %v427
          %v2019 = vpop.permute.xlu0 %2018
          %2022 = vset.pattern.permute.xlu0 0
          %2023 = vperm.xlu0 %2022, %v428
          %v2024 = vpop.permute.xlu0 %2023
          %2027 = vset.pattern.permute.xlu0 0
          %2028 = vperm.xlu0 %2027, %v429
          %v2029 = vpop.permute.xlu0 %2028
          %v2032 = vlaneseq
          %v2033 = vshrl.u32 %v2032, 7
          %v2034 = vsub.s32 0, %v2033
          %v2035 = vrot.slane %v2015, %v2034
          %v2037 = vmul.f32 %v464, %v2035
          %v2038 = vmul.f32 %v469, %v2035
          %v2039 = vmul.f32 %v474, %v2035
          %v2040 = vmul.f32 %v479, %v2035
          %v2041 = vmul.f32 %v484, %v2035
          %v2042 = vmul.f32 %v489, %v2035
          %v2043 = vmul.f32 %v494, %v2035
          %v2044 = vmul.f32 %v499, %v2035
          %v2045 = vmul.f32 %v504, %v2035
          %v2046 = vmul.f32 %v509, %v2035
          %v2047 = vmul.f32 %v514, %v2035
          %v2048 = vmul.f32 %v519, %v2035
          %v2049 = vmul.f32 %v524, %v2035
          %v2050 = vmul.f32 %v529, %v2035
          %v2051 = vmul.f32 %v534, %v2035
          %v2052 = vmul.f32 %v539, %v2035
          %v2053 = vmul.f32 %v544, %v2035
          %v2054 = vmul.f32 %v549, %v2035
          %v2055 = vmul.f32 %v554, %v2035
          %v2056 = vmul.f32 %v559, %v2035
          %v2057 = vmul.f32 %v564, %v2035
          %v2058 = vmul.f32 %v569, %v2035
          %v2059 = vmul.f32 %v574, %v2035
          %v2060 = vmul.f32 %v579, %v2035
          %v2061 = vmul.f32 %v584, %v2035
          %v2062 = vmul.f32 %v589, %v2035
          %v2063 = vmul.f32 %v594, %v2035
          %v2064 = vmul.f32 %v599, %v2035
          %v2065 = vmul.f32 %v604, %v2035
          %v2066 = vmul.f32 %v609, %v2035
          %v2067 = vmul.f32 %v614, %v2035
          %v2068 = vmul.f32 %v619, %v2035
          %v2069 = vmul.f32 %v624, %v2035
          %v2070 = vmul.f32 %v629, %v2035
          %v2071 = vmul.f32 %v634, %v2035
          %v2072 = vmul.f32 %v639, %v2035
          %v2073 = vmul.f32 %v644, %v2035
          %v2074 = vmul.f32 %v649, %v2035
          %v2075 = vmul.f32 %v654, %v2035
          %v2076 = vmul.f32 %v659, %v2035
          %v2077 = vmul.f32 %v664, %v2035
          %v2078 = vmul.f32 %v669, %v2035
          %v2079 = vmul.f32 %v1340, %v2035
          %v2080 = vmul.f32 %v1345, %v2035
          %v2081 = vmul.f32 %v1350, %v2035
          %v2082 = vmul.f32 %v2019, %v2035
          %v2083 = vmul.f32 %v2024, %v2035
          %v2084 = vmul.f32 %v2029, %v2035
          %v2085 = vadd.f32 %v1966, %v2037
          %v2086 = vadd.f32 %v1967, %v2038
          %v2087 = vadd.f32 %v1968, %v2039
          %v2088 = vadd.f32 %v1969, %v2040
          %v2089 = vadd.f32 %v1970, %v2041
          %v2090 = vadd.f32 %v1971, %v2042
          %v2091 = vadd.f32 %v1972, %v2043
          %v2092 = vadd.f32 %v1973, %v2044
          %v2093 = vadd.f32 %v1974, %v2045
          %v2094 = vadd.f32 %v1975, %v2046
          %v2095 = vadd.f32 %v1976, %v2047
          %v2096 = vadd.f32 %v1977, %v2048
          %v2097 = vadd.f32 %v1978, %v2049
          %v2098 = vadd.f32 %v1979, %v2050
          %v2099 = vadd.f32 %v1980, %v2051
          %v2100 = vadd.f32 %v1981, %v2052
          %v2101 = vadd.f32 %v1982, %v2053
          %v2102 = vadd.f32 %v1983, %v2054
          %v2103 = vadd.f32 %v1984, %v2055
          %v2104 = vadd.f32 %v1985, %v2056
          %v2105 = vadd.f32 %v1986, %v2057
          %v2106 = vadd.f32 %v1987, %v2058
          %v2107 = vadd.f32 %v1988, %v2059
          %v2108 = vadd.f32 %v1989, %v2060
          %v2109 = vadd.f32 %v1990, %v2061
          %v2110 = vadd.f32 %v1991, %v2062
          %v2111 = vadd.f32 %v1992, %v2063
          %v2112 = vadd.f32 %v1993, %v2064
          %v2113 = vadd.f32 %v1994, %v2065
          %v2114 = vadd.f32 %v1995, %v2066
          %v2115 = vadd.f32 %v1996, %v2067
          %v2116 = vadd.f32 %v1997, %v2068
          %v2117 = vadd.f32 %v1998, %v2069
          %v2118 = vadd.f32 %v1999, %v2070
          %v2119 = vadd.f32 %v2000, %v2071
          %v2120 = vadd.f32 %v2001, %v2072
          %v2121 = vadd.f32 %v2002, %v2073
          %v2122 = vadd.f32 %v2003, %v2074
          %v2123 = vadd.f32 %v2004, %v2075
          %v2124 = vadd.f32 %v2005, %v2076
          %v2125 = vadd.f32 %v2006, %v2077
          %v2126 = vadd.f32 %v2007, %v2078
          %v2127 = vadd.f32 %v2008, %v2079
          %v2128 = vadd.f32 %v2009, %v2080
          %v2129 = vadd.f32 %v2010, %v2081
          %v2130 = vadd.f32 %v2011, %v2082
          %v2131 = vadd.f32 %v2012, %v2083
          %v2132 = vadd.f32 %v2013, %v2084
          %s2133 = scalar_lea.vmem %s3, 7
          %v2134 = vld [vmem:[%s2133] sm:$0x1]
          %v2136 = vlaneseq
          %v2137 = vshrl.u32 %v2136, 7
          %v2138 = vsub.s32 0, %v2137
          %v2139 = vrot.slane %v2134, %v2138
          %v2141 = vmul.f32 %v464, %v2139
          %v2142 = vmul.f32 %v469, %v2139
          %v2143 = vmul.f32 %v474, %v2139
          %v2144 = vmul.f32 %v479, %v2139
          %v2145 = vmul.f32 %v484, %v2139
          %v2146 = vmul.f32 %v489, %v2139
          %v2147 = vmul.f32 %v494, %v2139
          %v2148 = vmul.f32 %v499, %v2139
          %v2149 = vmul.f32 %v504, %v2139
          %v2150 = vmul.f32 %v509, %v2139
          %v2151 = vmul.f32 %v514, %v2139
          %v2152 = vmul.f32 %v519, %v2139
          %v2153 = vmul.f32 %v524, %v2139
          %v2154 = vmul.f32 %v529, %v2139
          %v2155 = vmul.f32 %v534, %v2139
          %v2156 = vmul.f32 %v539, %v2139
          %v2157 = vmul.f32 %v544, %v2139
          %v2158 = vmul.f32 %v549, %v2139
          %v2159 = vmul.f32 %v554, %v2139
          %v2160 = vmul.f32 %v559, %v2139
          %v2161 = vmul.f32 %v564, %v2139
          %v2162 = vmul.f32 %v569, %v2139
          %v2163 = vmul.f32 %v574, %v2139
          %v2164 = vmul.f32 %v579, %v2139
          %v2165 = vmul.f32 %v584, %v2139
          %v2166 = vmul.f32 %v589, %v2139
          %v2167 = vmul.f32 %v594, %v2139
          %v2168 = vmul.f32 %v599, %v2139
          %v2169 = vmul.f32 %v604, %v2139
          %v2170 = vmul.f32 %v609, %v2139
          %v2171 = vmul.f32 %v614, %v2139
          %v2172 = vmul.f32 %v619, %v2139
          %v2173 = vmul.f32 %v624, %v2139
          %v2174 = vmul.f32 %v629, %v2139
          %v2175 = vmul.f32 %v634, %v2139
          %v2176 = vmul.f32 %v639, %v2139
          %v2177 = vmul.f32 %v644, %v2139
          %v2178 = vmul.f32 %v649, %v2139
          %v2179 = vmul.f32 %v654, %v2139
          %v2180 = vmul.f32 %v659, %v2139
          %v2181 = vmul.f32 %v664, %v2139
          %v2182 = vmul.f32 %v669, %v2139
          %v2183 = vmul.f32 %v1340, %v2139
          %v2184 = vmul.f32 %v1345, %v2139
          %v2185 = vmul.f32 %v1350, %v2139
          %v2186 = vmul.f32 %v2019, %v2139
          %v2187 = vmul.f32 %v2024, %v2139
          %v2188 = vmul.f32 %v2029, %v2139
          %v2237 = vrot.slane %v2141, 1
          %v2238 = vrot.slane %v2142, 1
          %v2239 = vsel %vm877, %v2237, %v2238
          %v2240 = vrot.slane %v2143, 1
          %v2241 = vsel %vm877, %v2238, %v2240
          %v2242 = vrot.slane %v2144, 1
          %v2243 = vrot.slane %v2145, 1
          %v2244 = vsel %vm877, %v2242, %v2243
          %v2245 = vrot.slane %v2146, 1
          %v2246 = vsel %vm877, %v2243, %v2245
          %v2247 = vrot.slane %v2147, 1
          %v2248 = vrot.slane %v2148, 1
          %v2249 = vsel %vm877, %v2247, %v2248
          %v2250 = vrot.slane %v2149, 1
          %v2251 = vsel %vm877, %v2248, %v2250
          %v2252 = vrot.slane %v2150, 1
          %v2253 = vrot.slane %v2151, 1
          %v2254 = vsel %vm877, %v2252, %v2253
          %v2255 = vrot.slane %v2152, 1
          %v2256 = vsel %vm877, %v2253, %v2255
          %v2257 = vrot.slane %v2153, 1
          %v2258 = vrot.slane %v2154, 1
          %v2259 = vsel %vm877, %v2257, %v2258
          %v2260 = vrot.slane %v2155, 1
          %v2261 = vsel %vm877, %v2258, %v2260
          %v2262 = vrot.slane %v2156, 1
          %v2263 = vrot.slane %v2157, 1
          %v2264 = vsel %vm877, %v2262, %v2263
          %v2265 = vrot.slane %v2158, 1
          %v2266 = vsel %vm877, %v2263, %v2265
          %v2267 = vrot.slane %v2159, 1
          %v2268 = vrot.slane %v2160, 1
          %v2269 = vsel %vm877, %v2267, %v2268
          %v2270 = vrot.slane %v2161, 1
          %v2271 = vsel %vm877, %v2268, %v2270
          %v2272 = vrot.slane %v2162, 1
          %v2273 = vrot.slane %v2163, 1
          %v2274 = vsel %vm877, %v2272, %v2273
          %v2275 = vrot.slane %v2164, 1
          %v2276 = vsel %vm877, %v2273, %v2275
          %v2277 = vrot.slane %v2165, 1
          %v2278 = vrot.slane %v2166, 1
          %v2279 = vsel %vm877, %v2277, %v2278
          %v2280 = vrot.slane %v2167, 1
          %v2281 = vsel %vm877, %v2278, %v2280
          %v2282 = vrot.slane %v2168, 1
          %v2283 = vrot.slane %v2169, 1
          %v2284 = vsel %vm877, %v2282, %v2283
          %v2285 = vrot.slane %v2170, 1
          %v2286 = vsel %vm877, %v2283, %v2285
          %v2287 = vrot.slane %v2171, 1
          %v2288 = vrot.slane %v2172, 1
          %v2289 = vsel %vm877, %v2287, %v2288
          %v2290 = vrot.slane %v2173, 1
          %v2291 = vsel %vm877, %v2288, %v2290
          %v2292 = vrot.slane %v2174, 1
          %v2293 = vrot.slane %v2175, 1
          %v2294 = vsel %vm877, %v2292, %v2293
          %v2295 = vrot.slane %v2176, 1
          %v2296 = vsel %vm877, %v2293, %v2295
          %v2297 = vrot.slane %v2177, 1
          %v2298 = vrot.slane %v2178, 1
          %v2299 = vsel %vm877, %v2297, %v2298
          %v2300 = vrot.slane %v2179, 1
          %v2301 = vsel %vm877, %v2298, %v2300
          %v2302 = vrot.slane %v2180, 1
          %v2303 = vrot.slane %v2181, 1
          %v2304 = vsel %vm877, %v2302, %v2303
          %v2305 = vrot.slane %v2182, 1
          %v2306 = vsel %vm877, %v2303, %v2305
          %v2307 = vrot.slane %v2183, 1
          %v2308 = vrot.slane %v2184, 1
          %v2309 = vsel %vm877, %v2307, %v2308
          %v2310 = vrot.slane %v2185, 1
          %v2311 = vsel %vm877, %v2308, %v2310
          %v2312 = vrot.slane %v2186, 1
          %v2313 = vrot.slane %v2187, 1
          %v2314 = vsel %vm877, %v2312, %v2313
          %v2315 = vrot.slane %v2188, 1
          %v2316 = vsel %vm877, %v2313, %v2315
          %v2365 = vadd.f32 %v2085, %v2239
          %v2366 = vadd.f32 %v2086, %v2241
          %v2367 = vadd.f32 %v2087, %v2240
          %v2368 = vadd.f32 %v2088, %v2244
          %v2369 = vadd.f32 %v2089, %v2246
          %v2370 = vadd.f32 %v2090, %v2245
          %v2371 = vadd.f32 %v2091, %v2249
          %v2372 = vadd.f32 %v2092, %v2251
          %v2373 = vadd.f32 %v2093, %v2250
          %v2374 = vadd.f32 %v2094, %v2254
          %v2375 = vadd.f32 %v2095, %v2256
          %v2376 = vadd.f32 %v2096, %v2255
          %v2377 = vadd.f32 %v2097, %v2259
          %v2378 = vadd.f32 %v2098, %v2261
          %v2379 = vadd.f32 %v2099, %v2260
          %v2380 = vadd.f32 %v2100, %v2264
          %v2381 = vadd.f32 %v2101, %v2266
          %v2382 = vadd.f32 %v2102, %v2265
          %v2383 = vadd.f32 %v2103, %v2269
          %v2384 = vadd.f32 %v2104, %v2271
          %v2385 = vadd.f32 %v2105, %v2270
          %v2386 = vadd.f32 %v2106, %v2274
          %v2387 = vadd.f32 %v2107, %v2276
          %v2388 = vadd.f32 %v2108, %v2275
          %v2389 = vadd.f32 %v2109, %v2279
          %v2390 = vadd.f32 %v2110, %v2281
          %v2391 = vadd.f32 %v2111, %v2280
          %v2392 = vadd.f32 %v2112, %v2284
          %v2393 = vadd.f32 %v2113, %v2286
          %v2394 = vadd.f32 %v2114, %v2285
          %v2395 = vadd.f32 %v2115, %v2289
          %v2396 = vadd.f32 %v2116, %v2291
          %v2397 = vadd.f32 %v2117, %v2290
          %v2398 = vadd.f32 %v2118, %v2294
          %v2399 = vadd.f32 %v2119, %v2296
          %v2400 = vadd.f32 %v2120, %v2295
          %v2401 = vadd.f32 %v2121, %v2299
          %v2402 = vadd.f32 %v2122, %v2301
          %v2403 = vadd.f32 %v2123, %v2300
          %v2404 = vadd.f32 %v2124, %v2304
          %v2405 = vadd.f32 %v2125, %v2306
          %v2406 = vadd.f32 %v2126, %v2305
          %v2407 = vadd.f32 %v2127, %v2309
          %v2408 = vadd.f32 %v2128, %v2311
          %v2409 = vadd.f32 %v2129, %v2310
          %v2410 = vadd.f32 %v2130, %v2314
          %v2411 = vadd.f32 %v2131, %v2316
          %v2412 = vadd.f32 %v2132, %v2315
          %s2413 = scalar_lea.vmem %s3, 8
          %v2414 = vld [vmem:[%s2413] sm:$0x1]
          %v2416 = vlaneseq
          %v2417 = vshrl.u32 %v2416, 7
          %v2418 = vsub.s32 0, %v2417
          %v2419 = vrot.slane %v2414, %v2418
          %v2421 = vmul.f32 %v464, %v2419
          %v2422 = vmul.f32 %v469, %v2419
          %v2423 = vmul.f32 %v474, %v2419
          %v2424 = vmul.f32 %v479, %v2419
          %v2425 = vmul.f32 %v484, %v2419
          %v2426 = vmul.f32 %v489, %v2419
          %v2427 = vmul.f32 %v494, %v2419
          %v2428 = vmul.f32 %v499, %v2419
          %v2429 = vmul.f32 %v504, %v2419
          %v2430 = vmul.f32 %v509, %v2419
          %v2431 = vmul.f32 %v514, %v2419
          %v2432 = vmul.f32 %v519, %v2419
          %v2433 = vmul.f32 %v524, %v2419
          %v2434 = vmul.f32 %v529, %v2419
          %v2435 = vmul.f32 %v534, %v2419
          %v2436 = vmul.f32 %v539, %v2419
          %v2437 = vmul.f32 %v544, %v2419
          %v2438 = vmul.f32 %v549, %v2419
          %v2439 = vmul.f32 %v554, %v2419
          %v2440 = vmul.f32 %v559, %v2419
          %v2441 = vmul.f32 %v564, %v2419
          %v2442 = vmul.f32 %v569, %v2419
          %v2443 = vmul.f32 %v574, %v2419
          %v2444 = vmul.f32 %v579, %v2419
          %v2445 = vmul.f32 %v584, %v2419
          %v2446 = vmul.f32 %v589, %v2419
          %v2447 = vmul.f32 %v594, %v2419
          %v2448 = vmul.f32 %v599, %v2419
          %v2449 = vmul.f32 %v604, %v2419
          %v2450 = vmul.f32 %v609, %v2419
          %v2451 = vmul.f32 %v614, %v2419
          %v2452 = vmul.f32 %v619, %v2419
          %v2453 = vmul.f32 %v624, %v2419
          %v2454 = vmul.f32 %v629, %v2419
          %v2455 = vmul.f32 %v634, %v2419
          %v2456 = vmul.f32 %v639, %v2419
          %v2457 = vmul.f32 %v644, %v2419
          %v2458 = vmul.f32 %v649, %v2419
          %v2459 = vmul.f32 %v654, %v2419
          %v2460 = vmul.f32 %v659, %v2419
          %v2461 = vmul.f32 %v664, %v2419
          %v2462 = vmul.f32 %v669, %v2419
          %v2463 = vmul.f32 %v1340, %v2419
          %v2464 = vmul.f32 %v1345, %v2419
          %v2465 = vmul.f32 %v1350, %v2419
          %v2466 = vmul.f32 %v2019, %v2419
          %v2467 = vmul.f32 %v2024, %v2419
          %v2468 = vmul.f32 %v2029, %v2419
          %v2517 = vrot.slane %v2421, 2
          %v2518 = vrot.slane %v2422, 2
          %v2519 = vsel %vm1158, %v2517, %v2518
          %v2520 = vrot.slane %v2423, 2
          %v2521 = vsel %vm1158, %v2518, %v2520
          %v2522 = vrot.slane %v2424, 2
          %v2523 = vrot.slane %v2425, 2
          %v2524 = vsel %vm1158, %v2522, %v2523
          %v2525 = vrot.slane %v2426, 2
          %v2526 = vsel %vm1158, %v2523, %v2525
          %v2527 = vrot.slane %v2427, 2
          %v2528 = vrot.slane %v2428, 2
          %v2529 = vsel %vm1158, %v2527, %v2528
          %v2530 = vrot.slane %v2429, 2
          %v2531 = vsel %vm1158, %v2528, %v2530
          %v2532 = vrot.slane %v2430, 2
          %v2533 = vrot.slane %v2431, 2
          %v2534 = vsel %vm1158, %v2532, %v2533
          %v2535 = vrot.slane %v2432, 2
          %v2536 = vsel %vm1158, %v2533, %v2535
          %v2537 = vrot.slane %v2433, 2
          %v2538 = vrot.slane %v2434, 2
          %v2539 = vsel %vm1158, %v2537, %v2538
          %v2540 = vrot.slane %v2435, 2
          %v2541 = vsel %vm1158, %v2538, %v2540
          %v2542 = vrot.slane %v2436, 2
          %v2543 = vrot.slane %v2437, 2
          %v2544 = vsel %vm1158, %v2542, %v2543
          %v2545 = vrot.slane %v2438, 2
          %v2546 = vsel %vm1158, %v2543, %v2545
          %v2547 = vrot.slane %v2439, 2
          %v2548 = vrot.slane %v2440, 2
          %v2549 = vsel %vm1158, %v2547, %v2548
          %v2550 = vrot.slane %v2441, 2
          %v2551 = vsel %vm1158, %v2548, %v2550
          %v2552 = vrot.slane %v2442, 2
          %v2553 = vrot.slane %v2443, 2
          %v2554 = vsel %vm1158, %v2552, %v2553
          %v2555 = vrot.slane %v2444, 2
          %v2556 = vsel %vm1158, %v2553, %v2555
          %v2557 = vrot.slane %v2445, 2
          %v2558 = vrot.slane %v2446, 2
          %v2559 = vsel %vm1158, %v2557, %v2558
          %v2560 = vrot.slane %v2447, 2
          %v2561 = vsel %vm1158, %v2558, %v2560
          %v2562 = vrot.slane %v2448, 2
          %v2563 = vrot.slane %v2449, 2
          %v2564 = vsel %vm1158, %v2562, %v2563
          %v2565 = vrot.slane %v2450, 2
          %v2566 = vsel %vm1158, %v2563, %v2565
          %v2567 = vrot.slane %v2451, 2
          %v2568 = vrot.slane %v2452, 2
          %v2569 = vsel %vm1158, %v2567, %v2568
          %v2570 = vrot.slane %v2453, 2
          %v2571 = vsel %vm1158, %v2568, %v2570
          %v2572 = vrot.slane %v2454, 2
          %v2573 = vrot.slane %v2455, 2
          %v2574 = vsel %vm1158, %v2572, %v2573
          %v2575 = vrot.slane %v2456, 2
          %v2576 = vsel %vm1158, %v2573, %v2575
          %v2577 = vrot.slane %v2457, 2
          %v2578 = vrot.slane %v2458, 2
          %v2579 = vsel %vm1158, %v2577, %v2578
          %v2580 = vrot.slane %v2459, 2
          %v2581 = vsel %vm1158, %v2578, %v2580
          %v2582 = vrot.slane %v2460, 2
          %v2583 = vrot.slane %v2461, 2
          %v2584 = vsel %vm1158, %v2582, %v2583
          %v2585 = vrot.slane %v2462, 2
          %v2586 = vsel %vm1158, %v2583, %v2585
          %v2587 = vrot.slane %v2463, 2
          %v2588 = vrot.slane %v2464, 2
          %v2589 = vsel %vm1158, %v2587, %v2588
          %v2590 = vrot.slane %v2465, 2
          %v2591 = vsel %vm1158, %v2588, %v2590
          %v2592 = vrot.slane %v2466, 2
          %v2593 = vrot.slane %v2467, 2
          %v2594 = vsel %vm1158, %v2592, %v2593
          %v2595 = vrot.slane %v2468, 2
          %v2596 = vsel %vm1158, %v2593, %v2595
          %v2645 = vadd.f32 %v2365, %v2519
          %v2646 = vadd.f32 %v2366, %v2521
          %v2647 = vadd.f32 %v2367, %v2520
          %v2648 = vadd.f32 %v2368, %v2524
          %v2649 = vadd.f32 %v2369, %v2526
          %v2650 = vadd.f32 %v2370, %v2525
          %v2651 = vadd.f32 %v2371, %v2529
          %v2652 = vadd.f32 %v2372, %v2531
          %v2653 = vadd.f32 %v2373, %v2530
          %v2654 = vadd.f32 %v2374, %v2534
          %v2655 = vadd.f32 %v2375, %v2536
          %v2656 = vadd.f32 %v2376, %v2535
          %v2657 = vadd.f32 %v2377, %v2539
          %v2658 = vadd.f32 %v2378, %v2541
          %v2659 = vadd.f32 %v2379, %v2540
          %v2660 = vadd.f32 %v2380, %v2544
          %v2661 = vadd.f32 %v2381, %v2546
          %v2662 = vadd.f32 %v2382, %v2545
          %v2663 = vadd.f32 %v2383, %v2549
          %v2664 = vadd.f32 %v2384, %v2551
          %v2665 = vadd.f32 %v2385, %v2550
          %v2666 = vadd.f32 %v2386, %v2554
          %v2667 = vadd.f32 %v2387, %v2556
          %v2668 = vadd.f32 %v2388, %v2555
          %v2669 = vadd.f32 %v2389, %v2559
          %v2670 = vadd.f32 %v2390, %v2561
          %v2671 = vadd.f32 %v2391, %v2560
          %v2672 = vadd.f32 %v2392, %v2564
          %v2673 = vadd.f32 %v2393, %v2566
          %v2674 = vadd.f32 %v2394, %v2565
          %v2675 = vadd.f32 %v2395, %v2569
          %v2676 = vadd.f32 %v2396, %v2571
          %v2677 = vadd.f32 %v2397, %v2570
          %v2678 = vadd.f32 %v2398, %v2574
          %v2679 = vadd.f32 %v2399, %v2576
          %v2680 = vadd.f32 %v2400, %v2575
          %v2681 = vadd.f32 %v2401, %v2579
          %v2682 = vadd.f32 %v2402, %v2581
          %v2683 = vadd.f32 %v2403, %v2580
          %v2684 = vadd.f32 %v2404, %v2584
          %v2685 = vadd.f32 %v2405, %v2586
          %v2686 = vadd.f32 %v2406, %v2585
          %v2687 = vadd.f32 %v2407, %v2589
          %v2688 = vadd.f32 %v2408, %v2591
          %v2689 = vadd.f32 %v2409, %v2590
          %v2690 = vadd.f32 %v2410, %v2594
          %v2691 = vadd.f32 %v2411, %v2596
          %v2692 = vadd.f32 %v2412, %v2595
          %v2693 = vld [vmem:[%s4] sm:$0x1]
          %v2695 = vlaneseq
          %v2696 = vshrl.u32 %v2695, 7
          %v2697 = vsub.s32 0, %v2696
          %v2698 = vrot.slane %v2693, %v2697
          %v2700 = vadd.f32 %v2645, %v2698
          %v2701 = vadd.f32 %v2646, %v2698
          %v2702 = vadd.f32 %v2647, %v2698
          %v2703 = vadd.f32 %v2648, %v2698
          %v2704 = vadd.f32 %v2649, %v2698
          %v2705 = vadd.f32 %v2650, %v2698
          %v2706 = vadd.f32 %v2651, %v2698
          %v2707 = vadd.f32 %v2652, %v2698
          %v2708 = vadd.f32 %v2653, %v2698
          %v2709 = vadd.f32 %v2654, %v2698
          %v2710 = vadd.f32 %v2655, %v2698
          %v2711 = vadd.f32 %v2656, %v2698
          %v2712 = vadd.f32 %v2657, %v2698
          %v2713 = vadd.f32 %v2658, %v2698
          %v2714 = vadd.f32 %v2659, %v2698
          %v2715 = vadd.f32 %v2660, %v2698
          %v2716 = vadd.f32 %v2661, %v2698
          %v2717 = vadd.f32 %v2662, %v2698
          %v2718 = vadd.f32 %v2663, %v2698
          %v2719 = vadd.f32 %v2664, %v2698
          %v2720 = vadd.f32 %v2665, %v2698
          %v2721 = vadd.f32 %v2666, %v2698
          %v2722 = vadd.f32 %v2667, %v2698
          %v2723 = vadd.f32 %v2668, %v2698
          %v2724 = vadd.f32 %v2669, %v2698
          %v2725 = vadd.f32 %v2670, %v2698
          %v2726 = vadd.f32 %v2671, %v2698
          %v2727 = vadd.f32 %v2672, %v2698
          %v2728 = vadd.f32 %v2673, %v2698
          %v2729 = vadd.f32 %v2674, %v2698
          %v2730 = vadd.f32 %v2675, %v2698
          %v2731 = vadd.f32 %v2676, %v2698
          %v2732 = vadd.f32 %v2677, %v2698
          %v2733 = vadd.f32 %v2678, %v2698
          %v2734 = vadd.f32 %v2679, %v2698
          %v2735 = vadd.f32 %v2680, %v2698
          %v2736 = vadd.f32 %v2681, %v2698
          %v2737 = vadd.f32 %v2682, %v2698
          %v2738 = vadd.f32 %v2683, %v2698
          %v2739 = vadd.f32 %v2684, %v2698
          %v2740 = vadd.f32 %v2685, %v2698
          %v2741 = vadd.f32 %v2686, %v2698
          %v2742 = vadd.f32 %v2687, %v2698
          %v2743 = vadd.f32 %v2688, %v2698
          %v2744 = vadd.f32 %v2689, %v2698
          %v2745 = vadd.f32 %v2690, %v2698
          %v2746 = vadd.f32 %v2691, %v2698
          %v2747 = vadd.f32 %v2692, %v2698
          %v2748 = vmax.f32 %v2700, 0.0
          %v2749 = vmax.f32 %v2701, 0.0
          %v2750 = vmax.f32 %v2702, 0.0
          %v2751 = vmax.f32 %v2703, 0.0
          %v2752 = vmax.f32 %v2704, 0.0
          %v2753 = vmax.f32 %v2705, 0.0
          %v2754 = vmax.f32 %v2706, 0.0
          %v2755 = vmax.f32 %v2707, 0.0
          %v2756 = vmax.f32 %v2708, 0.0
          %v2757 = vmax.f32 %v2709, 0.0
          %v2758 = vmax.f32 %v2710, 0.0
          %v2759 = vmax.f32 %v2711, 0.0
          %v2760 = vmax.f32 %v2712, 0.0
          %v2761 = vmax.f32 %v2713, 0.0
          %v2762 = vmax.f32 %v2714, 0.0
          %v2763 = vmax.f32 %v2715, 0.0
          %v2764 = vmax.f32 %v2716, 0.0
          %v2765 = vmax.f32 %v2717, 0.0
          %v2766 = vmax.f32 %v2718, 0.0
          %v2767 = vmax.f32 %v2719, 0.0
          %v2768 = vmax.f32 %v2720, 0.0
          %v2769 = vmax.f32 %v2721, 0.0
          %v2770 = vmax.f32 %v2722, 0.0
          %v2771 = vmax.f32 %v2723, 0.0
          %v2772 = vmax.f32 %v2724, 0.0
          %v2773 = vmax.f32 %v2725, 0.0
          %v2774 = vmax.f32 %v2726, 0.0
          %v2775 = vmax.f32 %v2727, 0.0
          %v2776 = vmax.f32 %v2728, 0.0
          %v2777 = vmax.f32 %v2729, 0.0
          %v2778 = vmax.f32 %v2730, 0.0
          %v2779 = vmax.f32 %v2731, 0.0
          %v2780 = vmax.f32 %v2732, 0.0
          %v2781 = vmax.f32 %v2733, 0.0
          %v2782 = vmax.f32 %v2734, 0.0
          %v2783 = vmax.f32 %v2735, 0.0
          %v2784 = vmax.f32 %v2736, 0.0
          %v2785 = vmax.f32 %v2737, 0.0
          %v2786 = vmax.f32 %v2738, 0.0
          %v2787 = vmax.f32 %v2739, 0.0
          %v2788 = vmax.f32 %v2740, 0.0
          %v2789 = vmax.f32 %v2741, 0.0
          %v2790 = vmax.f32 %v2742, 0.0
          %v2791 = vmax.f32 %v2743, 0.0
          %v2792 = vmax.f32 %v2744, 0.0
          %v2793 = vmax.f32 %v2745, 0.0
          %v2794 = vmax.f32 %v2746, 0.0
          %v2795 = vmax.f32 %v2747, 0.0
          %v2796 = vld [vmem:[%s2] sm:$0xff]
          %v2797 = vld [vmem:[%s2 + $0x8] sm:$0xff]
          %v2798 = vld [vmem:[%s2 + $0x10] sm:$0x3]
          %2800 = vset.pattern.permute.xlu0 0
          %2801 = vperm.xlu0 %2800, %v2796
          %v2802 = vpop.permute.xlu0 %2801
          %2805 = vset.pattern.permute.xlu0 0
          %2806 = vperm.xlu0 %2805, %v2797
          %v2807 = vpop.permute.xlu0 %2806
          %2810 = vset.pattern.permute.xlu0 0
          %2811 = vperm.xlu0 %2810, %v2798
          %v2812 = vpop.permute.xlu0 %2811
          %v2814 = vmul.f32 %v2748, %v2802
          %v2815 = vmul.f32 %v2749, %v2807
          %v2816 = vmul.f32 %v2750, %v2812
          %v2817 = vmul.f32 %v2751, %v2802
          %v2818 = vmul.f32 %v2752, %v2807
          %v2819 = vmul.f32 %v2753, %v2812
          %v2820 = vmul.f32 %v2754, %v2802
          %v2821 = vmul.f32 %v2755, %v2807
          %v2822 = vmul.f32 %v2756, %v2812
          %v2823 = vmul.f32 %v2757, %v2802
          %v2824 = vmul.f32 %v2758, %v2807
          %v2825 = vmul.f32 %v2759, %v2812
          %v2826 = vmul.f32 %v2760, %v2802
          %v2827 = vmul.f32 %v2761, %v2807
          %v2828 = vmul.f32 %v2762, %v2812
          %v2829 = vmul.f32 %v2763, %v2802
          %v2830 = vmul.f32 %v2764, %v2807
          %v2831 = vmul.f32 %v2765, %v2812
          %v2832 = vmul.f32 %v2766, %v2802
          %v2833 = vmul.f32 %v2767, %v2807
          %v2834 = vmul.f32 %v2768, %v2812
          %v2835 = vmul.f32 %v2769, %v2802
          %v2836 = vmul.f32 %v2770, %v2807
          %v2837 = vmul.f32 %v2771, %v2812
          %v2838 = vmul.f32 %v2772, %v2802
          %v2839 = vmul.f32 %v2773, %v2807
          %v2840 = vmul.f32 %v2774, %v2812
          %v2841 = vmul.f32 %v2775, %v2802
          %v2842 = vmul.f32 %v2776, %v2807
          %v2843 = vmul.f32 %v2777, %v2812
          %v2844 = vmul.f32 %v2778, %v2802
          %v2845 = vmul.f32 %v2779, %v2807
          %v2846 = vmul.f32 %v2780, %v2812
          %v2847 = vmul.f32 %v2781, %v2802
          %v2848 = vmul.f32 %v2782, %v2807
          %v2849 = vmul.f32 %v2783, %v2812
          %v2850 = vmul.f32 %v2784, %v2802
          %v2851 = vmul.f32 %v2785, %v2807
          %v2852 = vmul.f32 %v2786, %v2812
          %v2853 = vmul.f32 %v2787, %v2802
          %v2854 = vmul.f32 %v2788, %v2807
          %v2855 = vmul.f32 %v2789, %v2812
          %v2856 = vmul.f32 %v2790, %v2802
          %v2857 = vmul.f32 %v2791, %v2807
          %v2858 = vmul.f32 %v2792, %v2812
          %v2859 = vmul.f32 %v2793, %v2802
          %v2860 = vmul.f32 %v2794, %v2807
          %v2861 = vmul.f32 %v2795, %v2812
          %v2862 = vpack.c.bf16 %v2815, %v2814
          %v2863 = vpack.c.bf16 %v2816, %v2816
          %v2864 = vpack.c.bf16 %v2818, %v2817
          %v2865 = vpack.c.bf16 %v2819, %v2819
          %v2866 = vpack.c.bf16 %v2821, %v2820
          %v2867 = vpack.c.bf16 %v2822, %v2822
          %v2868 = vpack.c.bf16 %v2824, %v2823
          %v2869 = vpack.c.bf16 %v2825, %v2825
          %v2870 = vpack.c.bf16 %v2827, %v2826
          %v2871 = vpack.c.bf16 %v2828, %v2828
          %v2872 = vpack.c.bf16 %v2830, %v2829
          %v2873 = vpack.c.bf16 %v2831, %v2831
          %v2874 = vpack.c.bf16 %v2833, %v2832
          %v2875 = vpack.c.bf16 %v2834, %v2834
          %v2876 = vpack.c.bf16 %v2836, %v2835
          %v2877 = vpack.c.bf16 %v2837, %v2837
          %v2878 = vpack.c.bf16 %v2839, %v2838
          %v2879 = vpack.c.bf16 %v2840, %v2840
          %v2880 = vpack.c.bf16 %v2842, %v2841
          %v2881 = vpack.c.bf16 %v2843, %v2843
          %v2882 = vpack.c.bf16 %v2845, %v2844
          %v2883 = vpack.c.bf16 %v2846, %v2846
          %v2884 = vpack.c.bf16 %v2848, %v2847
          %v2885 = vpack.c.bf16 %v2849, %v2849
          %v2886 = vpack.c.bf16 %v2851, %v2850
          %v2887 = vpack.c.bf16 %v2852, %v2852
          %v2888 = vpack.c.bf16 %v2854, %v2853
          %v2889 = vpack.c.bf16 %v2855, %v2855
          %v2890 = vpack.c.bf16 %v2857, %v2856
          %v2891 = vpack.c.bf16 %v2858, %v2858
          %v2892 = vpack.c.bf16 %v2860, %v2859
          %v2893 = vpack.c.bf16 %v2861, %v2861
          %2894 = vst [vmem:[#allocation2] sm:$0xf] 0
          %2895 = vst [vmem:[#allocation2 + $0x4] sm:$0xf] 0
          %vm2896 = vcmask 1041408
          %vm2897 = vsmask.f32 1280
          %vm2898 = vmand %vm2896, %vm2897
          %v2899 = vld [vmem:[#allocation2 + $0x8] sm:$0x3]
          %v2900 = vsel %vm2898, 0, %v2899
          %2901 = vst [vmem:[#allocation2 + $0x8] sm:$0x3] %v2900
          %vm2902 = vcmask 1043457
          %vm2903 = vsmask.f32 7942
          %vm2904 = vmand %vm2902, %vm2903
          %v2905 = vld [vmem:[#allocation2 + $0x98] sm:$0xe]
          %v2906 = vsel %vm2904, 0, %v2905
          %2907 = vst [vmem:[#allocation2 + $0x98] sm:$0xe] %v2906
          %2908 = vst [vmem:[#allocation2 + $0x9c] sm:$0xf] 0
          %2909 = vst [vmem:[#allocation2 + $0xa0] sm:$0xf] 0
          %v2912 = vunpack.c.l.b16 %v2862
          %v2913 = vunpack.c.h.b16 %v2862
          %v2914 = vunpack.c.l.b16 %v2863
          %v2915 = vpack.c.b16 %v2912, %v2912
          %v2916 = vpack.c.b16 %v2913, %v2913
          %v2917 = vpack.c.b16 %v2914, %v2914
          %vm2918 = vsmask.f32 5392
          %vm2919 = vmor %vm2897, %vm2918
          %v2921 = vshrl.u32 %v2915, 16
          %v2923 = vrot.slane %v2921, 6
          %v2924 = vshll.u32 %v2915, 16
          %v2926 = vrot.slane %v2924, 7
          %v2927 = vor.u32 %v2923, %v2926
          %v2928 = vrot.slane %v2927, 4
          %v2930 = vshrl.u32 %v2916, 16
          %v2932 = vrot.slane %v2930, 6
          %v2933 = vshll.u32 %v2916, 16
          %v2935 = vrot.slane %v2933, 7
          %v2936 = vor.u32 %v2932, %v2935
          %v2937 = vsel %vm2919, %v2928, %v2936
          %v2938 = vrot.slane %v2936, 4
          %v2940 = vshrl.u32 %v2917, 16
          %v2942 = vrot.slane %v2940, 6
          %v2943 = vshll.u32 %v2917, 16
          %v2945 = vrot.slane %v2943, 7
          %v2946 = vor.u32 %v2942, %v2945
          %v2947 = vsel %vm2919, %v2938, %v2946
          %v2951 = vld [vmem:[#allocation2 + $0x8] sm:$0xe]
          %v2952 = vsel %vm2904, %v2927, %v2951
          %2953 = vst [vmem:[#allocation2 + $0x8] sm:$0xe] %v2952
          %2954 = vst [vmem:[#allocation2 + $0xc] sm:$0xf] %v2937
          %vm2955 = vcmask 1042432
          %vm2956 = vsmask.f32 2304
          %vm2957 = vmand %vm2955, %vm2956
          %v2958 = vld [vmem:[#allocation2 + $0x10] sm:$0x7]
          %v2959 = vsel %vm2957, %v2947, %v2958
          %2960 = vst [vmem:[#allocation2 + $0x10] sm:$0x7] %v2959
          %v2963 = vunpack.c.l.b16 %v2864
          %v2964 = vunpack.c.h.b16 %v2864
          %v2965 = vunpack.c.l.b16 %v2865
          %v2966 = vpack.c.b16 %v2963, %v2963
          %v2967 = vpack.c.b16 %v2964, %v2964
          %v2968 = vpack.c.b16 %v2965, %v2965
          %vm2969 = vsmask.f32 6416
          %vm2970 = vmor %vm2956, %vm2969
          %v2972 = vshrl.u32 %v2966, 16
          %v2974 = vrot.slane %v2972, 5
          %v2975 = vshll.u32 %v2966, 16
          %v2977 = vrot.slane %v2975, 6
          %v2978 = vor.u32 %v2974, %v2977
          %v2979 = vrot.slane %v2978, 4
          %v2981 = vshrl.u32 %v2967, 16
          %v2983 = vrot.slane %v2981, 5
          %v2984 = vshll.u32 %v2967, 16
          %v2986 = vrot.slane %v2984, 6
          %v2987 = vor.u32 %v2983, %v2986
          %v2988 = vsel %vm2970, %v2979, %v2987
          %v2989 = vrot.slane %v2987, 4
          %v2991 = vshrl.u32 %v2968, 16
          %v2993 = vrot.slane %v2991, 5
          %v2994 = vshll.u32 %v2968, 16
          %v2996 = vrot.slane %v2994, 6
          %v2997 = vor.u32 %v2993, %v2996
          %v2998 = vsel %vm2970, %v2989, %v2997
          %vm3002 = vcmask 1043458
          %vm3003 = vsmask.f32 7946
          %vm3004 = vmand %vm3002, %vm3003
          %v3005 = vld [vmem:[#allocation2 + $0x10] sm:$0xc]
          %v3006 = vsel %vm3004, %v2978, %v3005
          %3007 = vst [vmem:[#allocation2 + $0x10] sm:$0xc] %v3006
          %3008 = vst [vmem:[#allocation2 + $0x14] sm:$0xf] %v2988
          %vm3009 = vcmask 1043456
          %vm3010 = vsmask.f32 3328
          %vm3011 = vmand %vm3009, %vm3010
          %v3012 = vld [vmem:[#allocation2 + $0x18] sm:$0xf]
          %v3013 = vsel %vm3011, %v2998, %v3012
          %3014 = vst [vmem:[#allocation2 + $0x18] sm:$0xf] %v3013
          %v3017 = vunpack.c.l.b16 %v2866
          %v3018 = vunpack.c.h.b16 %v2866
          %v3019 = vunpack.c.l.b16 %v2867
          %v3020 = vpack.c.b16 %v3017, %v3017
          %v3021 = vpack.c.b16 %v3018, %v3018
          %v3022 = vpack.c.b16 %v3019, %v3019
          %vm3023 = vsmask.f32 7440
          %vm3024 = vmor %vm3010, %vm3023
          %v3026 = vshll.u32 %v3020, 16
          %v3028 = vrot.slane %v3026, 5
          %v3029 = vshrl.u32 %v3020, 16
          %v3031 = vrot.slane %v3029, 4
          %v3032 = vor.u32 %v3031, %v3028
          %v3033 = vrot.slane %v3032, 4
          %v3035 = vshll.u32 %v3021, 16
          %v3037 = vrot.slane %v3035, 5
          %v3038 = vsel %vm3024, %v3033, %v3037
          %v3039 = vshrl.u32 %v3021, 16
          %v3041 = vrot.slane %v3039, 4
          %v3042 = vor.u32 %v3041, %v3037
          %v3043 = vrot.slane %v3042, 4
          %v3045 = vshll.u32 %v3022, 16
          %v3047 = vrot.slane %v3045, 5
          %v3048 = vsel %vm3024, %v3043, %v3047
          %v3049 = vshrl.u32 %v3022, 16
          %v3051 = vrot.slane %v3049, 4
          %v3052 = vrot.slane %v3051, 4
          %vm3057 = vcmask 1043459
          %vm3058 = vsmask.f32 7950
          %vm3059 = vmand %vm3057, %vm3058
          %v3060 = vld [vmem:[#allocation2 + $0x18] sm:$0x8]
          %v3061 = vsel %vm3059, %v3028, %v3060
          %3062 = vst [vmem:[#allocation2 + $0x18] sm:$0x8] %v3061
          %3063 = vst [vmem:[#allocation2 + $0x1c] sm:$0xf] %v3038
          %3064 = vst [vmem:[#allocation2 + $0x20] sm:$0xf] %v3048
          %vm3065 = vcmask 1040384
          %vm3066 = vsmask.f32 256
          %vm3067 = vmand %vm3065, %vm3066
          %v3068 = vld [vmem:[#allocation2 + $0x24] sm:$0x1]
          %v3069 = vsel %vm3067, %v3052, %v3068
          %3070 = vst [vmem:[#allocation2 + $0x24] sm:$0x1] %v3069
          %v3073 = vunpack.c.l.b16 %v2868
          %v3074 = vunpack.c.h.b16 %v2868
          %v3075 = vunpack.c.l.b16 %v2869
          %v3076 = vpack.c.b16 %v3073, %v3073
          %v3077 = vpack.c.b16 %v3074, %v3074
          %v3078 = vpack.c.b16 %v3075, %v3075
          %vm3079 = vsmask.f32 4368
          %vm3080 = vmor %vm3066, %vm3079
          %v3082 = vshrl.u32 %v3076, 16
          %v3084 = vrot.slane %v3082, 7
          %v3085 = vshll.u32 %v3076, 16
          %v3087 = vor.u32 %v3084, %v3085
          %v3088 = vrot.slane %v3084, 4
          %v3090 = vshrl.u32 %v3077, 16
          %v3092 = vrot.slane %v3090, 7
          %v3093 = vshll.u32 %v3077, 16
          %v3095 = vor.u32 %v3092, %v3093
          %v3096 = vsel %vm3080, %v3088, %v3095
          %v3097 = vrot.slane %v3092, 4
          %v3099 = vshrl.u32 %v3078, 16
          %v3101 = vrot.slane %v3099, 7
          %v3102 = vshll.u32 %v3078, 16
          %v3104 = vor.u32 %v3101, %v3102
          %v3105 = vsel %vm3080, %v3097, %v3104
          %vm3109 = vsmask.f32 7938
          %vm3110 = vmand %vm3009, %vm3109
          %v3111 = vld [vmem:[#allocation2 + $0x24] sm:$0xf]
          %v3112 = vsel %vm3110, %v3087, %v3111
          %3113 = vst [vmem:[#allocation2 + $0x24] sm:$0xf] %v3112
          %3114 = vst [vmem:[#allocation2 + $0x28] sm:$0xf] %v3096
          %v3115 = vld [vmem:[#allocation2 + $0x2c] sm:$0x3]
          %v3116 = vsel %vm2898, %v3105, %v3115
          %3117 = vst [vmem:[#allocation2 + $0x2c] sm:$0x3] %v3116
          %v3120 = vunpack.c.l.b16 %v2870
          %v3121 = vunpack.c.h.b16 %v2870
          %v3122 = vunpack.c.l.b16 %v2871
          %v3123 = vpack.c.b16 %v3120, %v3120
          %v3124 = vpack.c.b16 %v3121, %v3121
          %v3125 = vpack.c.b16 %v3122, %v3122
          %v3127 = vshrl.u32 %v3123, 16
          %v3129 = vrot.slane %v3127, 6
          %v3130 = vshll.u32 %v3123, 16
          %v3132 = vrot.slane %v3130, 7
          %v3133 = vor.u32 %v3129, %v3132
          %v3134 = vrot.slane %v3133, 4
          %v3136 = vshrl.u32 %v3124, 16
          %v3138 = vrot.slane %v3136, 6
          %v3139 = vshll.u32 %v3124, 16
          %v3141 = vrot.slane %v3139, 7
          %v3142 = vor.u32 %v3138, %v3141
          %v3143 = vsel %vm2919, %v3134, %v3142
          %v3144 = vrot.slane %v3142, 4
          %v3146 = vshrl.u32 %v3125, 16
          %v3148 = vrot.slane %v3146, 6
          %v3149 = vshll.u32 %v3125, 16
          %v3151 = vrot.slane %v3149, 7
          %v3152 = vor.u32 %v3148, %v3151
          %v3153 = vsel %vm2919, %v3144, %v3152
          %v3157 = vld [vmem:[#allocation2 + $0x2c] sm:$0xe]
          %v3158 = vsel %vm2904, %v3133, %v3157
          %3159 = vst [vmem:[#allocation2 + $0x2c] sm:$0xe] %v3158
          %3160 = vst [vmem:[#allocation2 + $0x30] sm:$0xf] %v3143
          %v3161 = vld [vmem:[#allocation2 + $0x34] sm:$0x7]
          %v3162 = vsel %vm2957, %v3153, %v3161
          %3163 = vst [vmem:[#allocation2 + $0x34] sm:$0x7] %v3162
          %v3166 = vunpack.c.l.b16 %v2872
          %v3167 = vunpack.c.h.b16 %v2872
          %v3168 = vunpack.c.l.b16 %v2873
          %v3169 = vpack.c.b16 %v3166, %v3166
          %v3170 = vpack.c.b16 %v3167, %v3167
          %v3171 = vpack.c.b16 %v3168, %v3168
          %v3173 = vshrl.u32 %v3169, 16
          %v3175 = vrot.slane %v3173, 5
          %v3176 = vshll.u32 %v3169, 16
          %v3178 = vrot.slane %v3176, 6
          %v3179 = vor.u32 %v3175, %v3178
          %v3180 = vrot.slane %v3179, 4
          %v3182 = vshrl.u32 %v3170, 16
          %v3184 = vrot.slane %v3182, 5
          %v3185 = vshll.u32 %v3170, 16
          %v3187 = vrot.slane %v3185, 6
          %v3188 = vor.u32 %v3184, %v3187
          %v3189 = vsel %vm2970, %v3180, %v3188
          %v3190 = vrot.slane %v3188, 4
          %v3192 = vshrl.u32 %v3171, 16
          %v3194 = vrot.slane %v3192, 5
          %v3195 = vshll.u32 %v3171, 16
          %v3197 = vrot.slane %v3195, 6
          %v3198 = vor.u32 %v3194, %v3197
          %v3199 = vsel %vm2970, %v3190, %v3198
          %v3203 = vld [vmem:[#allocation2 + $0x34] sm:$0xc]
          %v3204 = vsel %vm3004, %v3179, %v3203
          %3205 = vst [vmem:[#allocation2 + $0x34] sm:$0xc] %v3204
          %3206 = vst [vmem:[#allocation2 + $0x38] sm:$0xf] %v3189
          %v3207 = vld [vmem:[#allocation2 + $0x3c] sm:$0xf]
          %v3208 = vsel %vm3011, %v3199, %v3207
          %3209 = vst [vmem:[#allocation2 + $0x3c] sm:$0xf] %v3208
          %v3212 = vunpack.c.l.b16 %v2874
          %v3213 = vunpack.c.h.b16 %v2874
          %v3214 = vunpack.c.l.b16 %v2875
          %v3215 = vpack.c.b16 %v3212, %v3212
          %v3216 = vpack.c.b16 %v3213, %v3213
          %v3217 = vpack.c.b16 %v3214, %v3214
          %v3219 = vshll.u32 %v3215, 16
          %v3221 = vrot.slane %v3219, 5
          %v3222 = vshrl.u32 %v3215, 16
          %v3224 = vrot.slane %v3222, 4
          %v3225 = vor.u32 %v3224, %v3221
          %v3226 = vrot.slane %v3225, 4
          %v3228 = vshll.u32 %v3216, 16
          %v3230 = vrot.slane %v3228, 5
          %v3231 = vsel %vm3024, %v3226, %v3230
          %v3232 = vshrl.u32 %v3216, 16
          %v3234 = vrot.slane %v3232, 4
          %v3235 = vor.u32 %v3234, %v3230
          %v3236 = vrot.slane %v3235, 4
          %v3238 = vshll.u32 %v3217, 16
          %v3240 = vrot.slane %v3238, 5
          %v3241 = vsel %vm3024, %v3236, %v3240
          %v3242 = vshrl.u32 %v3217, 16
          %v3244 = vrot.slane %v3242, 4
          %v3245 = vrot.slane %v3244, 4
          %v3250 = vld [vmem:[#allocation2 + $0x3c] sm:$0x8]
          %v3251 = vsel %vm3059, %v3221, %v3250
          %3252 = vst [vmem:[#allocation2 + $0x3c] sm:$0x8] %v3251
          %3253 = vst [vmem:[#allocation2 + $0x40] sm:$0xf] %v3231
          %3254 = vst [vmem:[#allocation2 + $0x44] sm:$0xf] %v3241
          %v3255 = vld [vmem:[#allocation2 + $0x48] sm:$0x1]
          %v3256 = vsel %vm3067, %v3245, %v3255
          %3257 = vst [vmem:[#allocation2 + $0x48] sm:$0x1] %v3256
          %v3260 = vunpack.c.l.b16 %v2876
          %v3261 = vunpack.c.h.b16 %v2876
          %v3262 = vunpack.c.l.b16 %v2877
          %v3263 = vpack.c.b16 %v3260, %v3260
          %v3264 = vpack.c.b16 %v3261, %v3261
          %v3265 = vpack.c.b16 %v3262, %v3262
          %v3267 = vshrl.u32 %v3263, 16
          %v3269 = vrot.slane %v3267, 7
          %v3270 = vshll.u32 %v3263, 16
          %v3272 = vor.u32 %v3269, %v3270
          %v3273 = vrot.slane %v3269, 4
          %v3275 = vshrl.u32 %v3264, 16
          %v3277 = vrot.slane %v3275, 7
          %v3278 = vshll.u32 %v3264, 16
          %v3280 = vor.u32 %v3277, %v3278
          %v3281 = vsel %vm3080, %v3273, %v3280
          %v3282 = vrot.slane %v3277, 4
          %v3284 = vshrl.u32 %v3265, 16
          %v3286 = vrot.slane %v3284, 7
          %v3287 = vshll.u32 %v3265, 16
          %v3289 = vor.u32 %v3286, %v3287
          %v3290 = vsel %vm3080, %v3282, %v3289
          %v3294 = vld [vmem:[#allocation2 + $0x48] sm:$0xf]
          %v3295 = vsel %vm3110, %v3272, %v3294
          %3296 = vst [vmem:[#allocation2 + $0x48] sm:$0xf] %v3295
          %3297 = vst [vmem:[#allocation2 + $0x4c] sm:$0xf] %v3281
          %v3298 = vld [vmem:[#allocation2 + $0x50] sm:$0x3]
          %v3299 = vsel %vm2898, %v3290, %v3298
          %3300 = vst [vmem:[#allocation2 + $0x50] sm:$0x3] %v3299
          %v3303 = vunpack.c.l.b16 %v2878
          %v3304 = vunpack.c.h.b16 %v2878
          %v3305 = vunpack.c.l.b16 %v2879
          %v3306 = vpack.c.b16 %v3303, %v3303
          %v3307 = vpack.c.b16 %v3304, %v3304
          %v3308 = vpack.c.b16 %v3305, %v3305
          %v3310 = vshrl.u32 %v3306, 16
          %v3312 = vrot.slane %v3310, 6
          %v3313 = vshll.u32 %v3306, 16
          %v3315 = vrot.slane %v3313, 7
          %v3316 = vor.u32 %v3312, %v3315
          %v3317 = vrot.slane %v3316, 4
          %v3319 = vshrl.u32 %v3307, 16
          %v3321 = vrot.slane %v3319, 6
          %v3322 = vshll.u32 %v3307, 16
          %v3324 = vrot.slane %v3322, 7
          %v3325 = vor.u32 %v3321, %v3324
          %v3326 = vsel %vm2919, %v3317, %v3325
          %v3327 = vrot.slane %v3325, 4
          %v3329 = vshrl.u32 %v3308, 16
          %v3331 = vrot.slane %v3329, 6
          %v3332 = vshll.u32 %v3308, 16
          %v3334 = vrot.slane %v3332, 7
          %v3335 = vor.u32 %v3331, %v3334
          %v3336 = vsel %vm2919, %v3327, %v3335
          %v3340 = vld [vmem:[#allocation2 + $0x50] sm:$0xe]
          %v3341 = vsel %vm2904, %v3316, %v3340
          %3342 = vst [vmem:[#allocation2 + $0x50] sm:$0xe] %v3341
          %3343 = vst [vmem:[#allocation2 + $0x54] sm:$0xf] %v3326
          %v3344 = vld [vmem:[#allocation2 + $0x58] sm:$0x7]
          %v3345 = vsel %vm2957, %v3336, %v3344
          %3346 = vst [vmem:[#allocation2 + $0x58] sm:$0x7] %v3345
          %v3349 = vunpack.c.l.b16 %v2880
          %v3350 = vunpack.c.h.b16 %v2880
          %v3351 = vunpack.c.l.b16 %v2881
          %v3352 = vpack.c.b16 %v3349, %v3349
          %v3353 = vpack.c.b16 %v3350, %v3350
          %v3354 = vpack.c.b16 %v3351, %v3351
          %v3356 = vshrl.u32 %v3352, 16
          %v3358 = vrot.slane %v3356, 5
          %v3359 = vshll.u32 %v3352, 16
          %v3361 = vrot.slane %v3359, 6
          %v3362 = vor.u32 %v3358, %v3361
          %v3363 = vrot.slane %v3362, 4
          %v3365 = vshrl.u32 %v3353, 16
          %v3367 = vrot.slane %v3365, 5
          %v3368 = vshll.u32 %v3353, 16
          %v3370 = vrot.slane %v3368, 6
          %v3371 = vor.u32 %v3367, %v3370
          %v3372 = vsel %vm2970, %v3363, %v3371
          %v3373 = vrot.slane %v3371, 4
          %v3375 = vshrl.u32 %v3354, 16
          %v3377 = vrot.slane %v3375, 5
          %v3378 = vshll.u32 %v3354, 16
          %v3380 = vrot.slane %v3378, 6
          %v3381 = vor.u32 %v3377, %v3380
          %v3382 = vsel %vm2970, %v3373, %v3381
          %v3386 = vld [vmem:[#allocation2 + $0x58] sm:$0xc]
          %v3387 = vsel %vm3004, %v3362, %v3386
          %3388 = vst [vmem:[#allocation2 + $0x58] sm:$0xc] %v3387
          %3389 = vst [vmem:[#allocation2 + $0x5c] sm:$0xf] %v3372
          %v3390 = vld [vmem:[#allocation2 + $0x60] sm:$0xf]
          %v3391 = vsel %vm3011, %v3382, %v3390
          %3392 = vst [vmem:[#allocation2 + $0x60] sm:$0xf] %v3391
          %v3395 = vunpack.c.l.b16 %v2882
          %v3396 = vunpack.c.h.b16 %v2882
          %v3397 = vunpack.c.l.b16 %v2883
          %v3398 = vpack.c.b16 %v3395, %v3395
          %v3399 = vpack.c.b16 %v3396, %v3396
          %v3400 = vpack.c.b16 %v3397, %v3397
          %v3402 = vshll.u32 %v3398, 16
          %v3404 = vrot.slane %v3402, 5
          %v3405 = vshrl.u32 %v3398, 16
          %v3407 = vrot.slane %v3405, 4
          %v3408 = vor.u32 %v3407, %v3404
          %v3409 = vrot.slane %v3408, 4
          %v3411 = vshll.u32 %v3399, 16
          %v3413 = vrot.slane %v3411, 5
          %v3414 = vsel %vm3024, %v3409, %v3413
          %v3415 = vshrl.u32 %v3399, 16
          %v3417 = vrot.slane %v3415, 4
          %v3418 = vor.u32 %v3417, %v3413
          %v3419 = vrot.slane %v3418, 4
          %v3421 = vshll.u32 %v3400, 16
          %v3423 = vrot.slane %v3421, 5
          %v3424 = vsel %vm3024, %v3419, %v3423
          %v3425 = vshrl.u32 %v3400, 16
          %v3427 = vrot.slane %v3425, 4
          %v3428 = vrot.slane %v3427, 4
          %v3433 = vld [vmem:[#allocation2 + $0x60] sm:$0x8]
          %v3434 = vsel %vm3059, %v3404, %v3433
          %3435 = vst [vmem:[#allocation2 + $0x60] sm:$0x8] %v3434
          %3436 = vst [vmem:[#allocation2 + $0x64] sm:$0xf] %v3414
          %3437 = vst [vmem:[#allocation2 + $0x68] sm:$0xf] %v3424
          %v3438 = vld [vmem:[#allocation2 + $0x6c] sm:$0x1]
          %v3439 = vsel %vm3067, %v3428, %v3438
          %3440 = vst [vmem:[#allocation2 + $0x6c] sm:$0x1] %v3439
          %v3443 = vunpack.c.l.b16 %v2884
          %v3444 = vunpack.c.h.b16 %v2884
          %v3445 = vunpack.c.l.b16 %v2885
          %v3446 = vpack.c.b16 %v3443, %v3443
          %v3447 = vpack.c.b16 %v3444, %v3444
          %v3448 = vpack.c.b16 %v3445, %v3445
          %v3450 = vshrl.u32 %v3446, 16
          %v3452 = vrot.slane %v3450, 7
          %v3453 = vshll.u32 %v3446, 16
          %v3455 = vor.u32 %v3452, %v3453
          %v3456 = vrot.slane %v3452, 4
          %v3458 = vshrl.u32 %v3447, 16
          %v3460 = vrot.slane %v3458, 7
          %v3461 = vshll.u32 %v3447, 16
          %v3463 = vor.u32 %v3460, %v3461
          %v3464 = vsel %vm3080, %v3456, %v3463
          %v3465 = vrot.slane %v3460, 4
          %v3467 = vshrl.u32 %v3448, 16
          %v3469 = vrot.slane %v3467, 7
          %v3470 = vshll.u32 %v3448, 16
          %v3472 = vor.u32 %v3469, %v3470
          %v3473 = vsel %vm3080, %v3465, %v3472
          %v3477 = vld [vmem:[#allocation2 + $0x6c] sm:$0xf]
          %v3478 = vsel %vm3110, %v3455, %v3477
          %3479 = vst [vmem:[#allocation2 + $0x6c] sm:$0xf] %v3478
          %3480 = vst [vmem:[#allocation2 + $0x70] sm:$0xf] %v3464
          %v3481 = vld [vmem:[#allocation2 + $0x74] sm:$0x3]
          %v3482 = vsel %vm2898, %v3473, %v3481
          %3483 = vst [vmem:[#allocation2 + $0x74] sm:$0x3] %v3482
          %v3486 = vunpack.c.l.b16 %v2886
          %v3487 = vunpack.c.h.b16 %v2886
          %v3488 = vunpack.c.l.b16 %v2887
          %v3489 = vpack.c.b16 %v3486, %v3486
          %v3490 = vpack.c.b16 %v3487, %v3487
          %v3491 = vpack.c.b16 %v3488, %v3488
          %v3493 = vshrl.u32 %v3489, 16
          %v3495 = vrot.slane %v3493, 6
          %v3496 = vshll.u32 %v3489, 16
          %v3498 = vrot.slane %v3496, 7
          %v3499 = vor.u32 %v3495, %v3498
          %v3500 = vrot.slane %v3499, 4
          %v3502 = vshrl.u32 %v3490, 16
          %v3504 = vrot.slane %v3502, 6
          %v3505 = vshll.u32 %v3490, 16
          %v3507 = vrot.slane %v3505, 7
          %v3508 = vor.u32 %v3504, %v3507
          %v3509 = vsel %vm2919, %v3500, %v3508
          %v3510 = vrot.slane %v3508, 4
          %v3512 = vshrl.u32 %v3491, 16
          %v3514 = vrot.slane %v3512, 6
          %v3515 = vshll.u32 %v3491, 16
          %v3517 = vrot.slane %v3515, 7
          %v3518 = vor.u32 %v3514, %v3517
          %v3519 = vsel %vm2919, %v3510, %v3518
          %v3523 = vld [vmem:[#allocation2 + $0x74] sm:$0xe]
          %v3524 = vsel %vm2904, %v3499, %v3523
          %3525 = vst [vmem:[#allocation2 + $0x74] sm:$0xe] %v3524
          %3526 = vst [vmem:[#allocation2 + $0x78] sm:$0xf] %v3509
          %v3527 = vld [vmem:[#allocation2 + $0x7c] sm:$0x7]
          %v3528 = vsel %vm2957, %v3519, %v3527
          %3529 = vst [vmem:[#allocation2 + $0x7c] sm:$0x7] %v3528
          %v3532 = vunpack.c.l.b16 %v2888
          %v3533 = vunpack.c.h.b16 %v2888
          %v3534 = vunpack.c.l.b16 %v2889
          %v3535 = vpack.c.b16 %v3532, %v3532
          %v3536 = vpack.c.b16 %v3533, %v3533
          %v3537 = vpack.c.b16 %v3534, %v3534
          %v3539 = vshrl.u32 %v3535, 16
          %v3541 = vrot.slane %v3539, 5
          %v3542 = vshll.u32 %v3535, 16
          %v3544 = vrot.slane %v3542, 6
          %v3545 = vor.u32 %v3541, %v3544
          %v3546 = vrot.slane %v3545, 4
          %v3548 = vshrl.u32 %v3536, 16
          %v3550 = vrot.slane %v3548, 5
          %v3551 = vshll.u32 %v3536, 16
          %v3553 = vrot.slane %v3551, 6
          %v3554 = vor.u32 %v3550, %v3553
          %v3555 = vsel %vm2970, %v3546, %v3554
          %v3556 = vrot.slane %v3554, 4
          %v3558 = vshrl.u32 %v3537, 16
          %v3560 = vrot.slane %v3558, 5
          %v3561 = vshll.u32 %v3537, 16
          %v3563 = vrot.slane %v3561, 6
          %v3564 = vor.u32 %v3560, %v3563
          %v3565 = vsel %vm2970, %v3556, %v3564
          %v3569 = vld [vmem:[#allocation2 + $0x7c] sm:$0xc]
          %v3570 = vsel %vm3004, %v3545, %v3569
          %3571 = vst [vmem:[#allocation2 + $0x7c] sm:$0xc] %v3570
          %3572 = vst [vmem:[#allocation2 + $0x80] sm:$0xf] %v3555
          %v3573 = vld [vmem:[#allocation2 + $0x84] sm:$0xf]
          %v3574 = vsel %vm3011, %v3565, %v3573
          %3575 = vst [vmem:[#allocation2 + $0x84] sm:$0xf] %v3574
          %v3578 = vunpack.c.l.b16 %v2890
          %v3579 = vunpack.c.h.b16 %v2890
          %v3580 = vunpack.c.l.b16 %v2891
          %v3581 = vpack.c.b16 %v3578, %v3578
          %v3582 = vpack.c.b16 %v3579, %v3579
          %v3583 = vpack.c.b16 %v3580, %v3580
          %v3585 = vshll.u32 %v3581, 16
          %v3587 = vrot.slane %v3585, 5
          %v3588 = vshrl.u32 %v3581, 16
          %v3590 = vrot.slane %v3588, 4
          %v3591 = vor.u32 %v3590, %v3587
          %v3592 = vrot.slane %v3591, 4
          %v3594 = vshll.u32 %v3582, 16
          %v3596 = vrot.slane %v3594, 5
          %v3597 = vsel %vm3024, %v3592, %v3596
          %v3598 = vshrl.u32 %v3582, 16
          %v3600 = vrot.slane %v3598, 4
          %v3601 = vor.u32 %v3600, %v3596
          %v3602 = vrot.slane %v3601, 4
          %v3604 = vshll.u32 %v3583, 16
          %v3606 = vrot.slane %v3604, 5
          %v3607 = vsel %vm3024, %v3602, %v3606
          %v3608 = vshrl.u32 %v3583, 16
          %v3610 = vrot.slane %v3608, 4
          %v3611 = vrot.slane %v3610, 4
          %v3616 = vld [vmem:[#allocation2 + $0x84] sm:$0x8]
          %v3617 = vsel %vm3059, %v3587, %v3616
          %3618 = vst [vmem:[#allocation2 + $0x84] sm:$0x8] %v3617
          %3619 = vst [vmem:[#allocation2 + $0x88] sm:$0xf] %v3597
          %3620 = vst [vmem:[#allocation2 + $0x8c] sm:$0xf] %v3607
          %v3621 = vld [vmem:[#allocation2 + $0x90] sm:$0x1]
          %v3622 = vsel %vm3067, %v3611, %v3621
          %3623 = vst [vmem:[#allocation2 + $0x90] sm:$0x1] %v3622
          %v3626 = vunpack.c.l.b16 %v2892
          %v3627 = vunpack.c.h.b16 %v2892
          %v3628 = vunpack.c.l.b16 %v2893
          %v3629 = vpack.c.b16 %v3626, %v3626
          %v3630 = vpack.c.b16 %v3627, %v3627
          %v3631 = vpack.c.b16 %v3628, %v3628
          %v3633 = vshrl.u32 %v3629, 16
          %v3635 = vrot.slane %v3633, 7
          %v3636 = vshll.u32 %v3629, 16
          %v3638 = vor.u32 %v3635, %v3636
          %v3639 = vrot.slane %v3635, 4
          %v3641 = vshrl.u32 %v3630, 16
          %v3643 = vrot.slane %v3641, 7
          %v3644 = vshll.u32 %v3630, 16
          %v3646 = vor.u32 %v3643, %v3644
          %v3647 = vsel %vm3080, %v3639, %v3646
          %v3648 = vrot.slane %v3643, 4
          %v3650 = vshrl.u32 %v3631, 16
          %v3652 = vrot.slane %v3650, 7
          %v3653 = vshll.u32 %v3631, 16
          %v3655 = vor.u32 %v3652, %v3653
          %v3656 = vsel %vm3080, %v3648, %v3655
          %v3660 = vld [vmem:[#allocation2 + $0x90] sm:$0xf]
          %v3661 = vsel %vm3110, %v3638, %v3660
          %3662 = vst [vmem:[#allocation2 + $0x90] sm:$0xf] %v3661
          %3663 = vst [vmem:[#allocation2 + $0x94] sm:$0xf] %v3647
          %v3664 = vld [vmem:[#allocation2 + $0x98] sm:$0x3]
          %v3665 = vsel %vm2898, %v3656, %v3664
          %3666 = vst [vmem:[#allocation2 + $0x98] sm:$0x3] %v3665
        $region56: #{tpu_custom_call.1} parent=47 // pred_fallthru
          _
        %v3667 = vld [vmem:[#allocation2] sm:$0xf]
        %v3668 = vld [vmem:[#allocation2 + $0x4] sm:$0xf]
        %v3669 = vld [vmem:[#allocation2 + $0x8] sm:$0xf]
        %v3670 = vld [vmem:[#allocation2 + $0xc] sm:$0xf]
        %v3671 = vld [vmem:[#allocation2 + $0x10] sm:$0xf]
        %v3672 = vld [vmem:[#allocation2 + $0x14] sm:$0xf]
        %v3673 = vld [vmem:[#allocation2 + $0x18] sm:$0xf]
        %v3674 = vld [vmem:[#allocation2 + $0x1c] sm:$0xf]
        %v3675 = vld [vmem:[#allocation2 + $0x20] sm:$0xf]
        %v3676 = vld [vmem:[#allocation2 + $0x24] sm:$0xf]
        %v3677 = vld [vmem:[#allocation2 + $0x28] sm:$0xf]
        %v3678 = vld [vmem:[#allocation2 + $0x2c] sm:$0xf]
        %v3679 = vld [vmem:[#allocation2 + $0x30] sm:$0xf]
        %v3680 = vld [vmem:[#allocation2 + $0x34] sm:$0xf]
        %v3681 = vld [vmem:[#allocation2 + $0x38] sm:$0xf]
        %v3682 = vld [vmem:[#allocation2 + $0x3c] sm:$0xf]
        %v3683 = vld [vmem:[#allocation2 + $0x40] sm:$0xf]
        %v3684 = vld [vmem:[#allocation2 + $0x44] sm:$0xf]
        %v3685 = vld [vmem:[#allocation2 + $0x48] sm:$0xf]
        %v3686 = vld [vmem:[#allocation2 + $0x4c] sm:$0xf]
        %v3687 = vld [vmem:[#allocation2 + $0x50] sm:$0xf]
        %v3688 = vld [vmem:[#allocation2 + $0x54] sm:$0xf]
        %v3689 = vld [vmem:[#allocation2 + $0x58] sm:$0xf]
        %v3690 = vld [vmem:[#allocation2 + $0x5c] sm:$0xf]
        %v3691 = vld [vmem:[#allocation2 + $0x60] sm:$0xf]
        %v3692 = vld [vmem:[#allocation2 + $0x64] sm:$0xf]
        %v3693 = vld [vmem:[#allocation2 + $0x68] sm:$0xf]
        %v3694 = vld [vmem:[#allocation2 + $0x6c] sm:$0xf]
        %v3695 = vld [vmem:[#allocation2 + $0x70] sm:$0xf]
        %v3696 = vld [vmem:[#allocation2 + $0x74] sm:$0xf]
        %v3697 = vld [vmem:[#allocation2 + $0x78] sm:$0xf]
        %v3698 = vld [vmem:[#allocation2 + $0x7c] sm:$0xf]
        %v3699 = vld [vmem:[#allocation2 + $0x80] sm:$0xf]
        %v3700 = vld [vmem:[#allocation2 + $0x84] sm:$0xf]
        %v3701 = vld [vmem:[#allocation2 + $0x88] sm:$0xf]
        %v3702 = vld [vmem:[#allocation2 + $0x8c] sm:$0xf]
        %v3703 = vld [vmem:[%s366] sm:$0xff]
        %v3704 = vld [vmem:[%s366 + $0x8] sm:$0xff]
        %v3705 = vld [vmem:[%s366 + $0x10] sm:$0xff]
        %v3706 = vld [vmem:[%s366 + $0x18] sm:$0xff]
        %v3707 = vld [vmem:[%s366 + $0x20] sm:$0xff]
        %v3708 = vld [vmem:[%s366 + $0x28] sm:$0xff]
        %v3709 = vld [vmem:[%s366 + $0x30] sm:$0xff]
        %v3710 = vld [vmem:[%s366 + $0x38] sm:$0xff]
        %v3711 = vld [vmem:[%s366 + $0x40] sm:$0xff]
        %v3712 = vld [vmem:[%s366 + $0x48] sm:$0xff]
        %v3713 = vld [vmem:[%s366 + $0x50] sm:$0xff]
        %v3714 = vld [vmem:[%s366 + $0x58] sm:$0xff]
        %v3715 = vld [vmem:[%s366 + $0x60] sm:$0xff]
        %v3716 = vld [vmem:[%s366 + $0x68] sm:$0xff]
        %v3717 = vld [vmem:[%s366 + $0x70] sm:$0xff]
        %v3718 = vld [vmem:[%s366 + $0x78] sm:$0xff]
        %v3719 = vld [vmem:[#allocation2 + $0x90] sm:$0x1]
        %s3720 = scalar_lea.vmem %s366, 128
        %v3721 = vld [vmem:[%s3720] sm:$0xff]
        %v3722 = vld [vmem:[%s3720 + $0x8] sm:$0xff]
        %v3723 = vld [vmem:[%s3720 + $0x10] sm:$0xff]
        %v3724 = vld [vmem:[%s3720 + $0x18] sm:$0xff]
        %v3725 = vld [vmem:[%s3720 + $0x20] sm:$0xff]
        %v3726 = vld [vmem:[%s3720 + $0x28] sm:$0xff]
        %v3727 = vld [vmem:[%s3720 + $0x30] sm:$0xff]
        %v3728 = vld [vmem:[%s3720 + $0x38] sm:$0xff]
        %v3729 = vld [vmem:[%s3720 + $0x40] sm:$0xff]
        %v3730 = vld [vmem:[%s3720 + $0x48] sm:$0xff]
        %v3731 = vld [vmem:[%s3720 + $0x50] sm:$0xff]
        %v3732 = vld [vmem:[%s3720 + $0x58] sm:$0xff]
        %v3733 = vld [vmem:[%s3720 + $0x60] sm:$0xff]
        %v3734 = vld [vmem:[%s3720 + $0x68] sm:$0xff]
        %v3735 = vld [vmem:[%s3720 + $0x70] sm:$0xff]
        %v3736 = vld [vmem:[%s3720 + $0x78] sm:$0xff]
        %v3774 = vunpack.c.l.b16 %v3667
        %v3775 = vunpack.c.l.b16 %v3668
        %v3776 = vunpack.c.l.b16 %v3669
        %v3777 = vunpack.c.l.b16 %v3670
        %v3778 = vunpack.c.l.b16 %v3671
        %v3779 = vunpack.c.l.b16 %v3672
        %v3780 = vunpack.c.l.b16 %v3673
        %v3781 = vunpack.c.l.b16 %v3674
        %v3782 = vunpack.c.l.b16 %v3675
        %v3783 = vunpack.c.l.b16 %v3676
        %v3784 = vunpack.c.l.b16 %v3677
        %v3785 = vunpack.c.l.b16 %v3678
        %v3786 = vunpack.c.l.b16 %v3679
        %v3787 = vunpack.c.l.b16 %v3680
        %v3788 = vunpack.c.l.b16 %v3681
        %v3789 = vunpack.c.l.b16 %v3682
        %v3790 = vunpack.c.l.b16 %v3683
        %v3791 = vunpack.c.l.b16 %v3684
        %v3792 = vunpack.c.l.b16 %v3685
        %v3793 = vunpack.c.l.b16 %v3686
        %v3794 = vunpack.c.l.b16 %v3687
        %v3795 = vunpack.c.l.b16 %v3688
        %v3796 = vunpack.c.l.b16 %v3689
        %v3797 = vunpack.c.l.b16 %v3690
        %v3798 = vunpack.c.l.b16 %v3691
        %v3799 = vunpack.c.l.b16 %v3692
        %v3800 = vunpack.c.l.b16 %v3693
        %v3801 = vunpack.c.l.b16 %v3694
        %v3802 = vunpack.c.l.b16 %v3695
        %v3803 = vunpack.c.l.b16 %v3696
        %v3804 = vunpack.c.l.b16 %v3697
        %v3805 = vunpack.c.l.b16 %v3698
        %v3806 = vunpack.c.l.b16 %v3699
        %v3807 = vunpack.c.l.b16 %v3700
        %v3808 = vunpack.c.l.b16 %v3701
        %v3809 = vunpack.c.l.b16 %v3702
        %v3810 = vunpack.c.l.b16 %v3719
        %v3811 = vpack.c.b16 %v3775, %v3774
        %v3812 = vpack.c.b16 %v3777, %v3776
        %v3813 = vpack.c.b16 %v3779, %v3778
        %v3814 = vpack.c.b16 %v3781, %v3780
        %v3815 = vpack.c.b16 %v3783, %v3782
        %v3816 = vpack.c.b16 %v3785, %v3784
        %v3817 = vpack.c.b16 %v3787, %v3786
        %v3818 = vpack.c.b16 %v3789, %v3788
        %v3819 = vpack.c.b16 %v3791, %v3790
        %v3820 = vpack.c.b16 %v3793, %v3792
        %v3821 = vpack.c.b16 %v3795, %v3794
        %v3822 = vpack.c.b16 %v3797, %v3796
        %v3823 = vpack.c.b16 %v3799, %v3798
        %v3824 = vpack.c.b16 %v3801, %v3800
        %v3825 = vpack.c.b16 %v3803, %v3802
        %v3826 = vpack.c.b16 %v3805, %v3804
        %v3827 = vpack.c.b16 %v3807, %v3806
        %v3828 = vpack.c.b16 %v3809, %v3808
        %v3829 = vpack.c.b16 %v3810, %v3810
        %vm3830 = vsmask.f32 7424
        %v3832 = vshrl.u32 %v3811, 16
        %v3834 = vshll.u32 %v3811, 16
        %v3836 = vrot.slane %v3834, 1
        %v3837 = vor.u32 %v3832, %v3836
        %v3839 = vshll.u32 %v3812, 16
        %v3841 = vrot.slane %v3839, 1
        %v3842 = vsel %vm3830, %v3837, %v3841
        %v3843 = vshrl.u32 %v3812, 16
        %v3845 = vor.u32 %v3843, %v3841
        %v3847 = vshll.u32 %v3813, 16
        %v3849 = vrot.slane %v3847, 1
        %v3850 = vsel %vm3830, %v3845, %v3849
        %v3851 = vshrl.u32 %v3813, 16
        %v3853 = vor.u32 %v3851, %v3849
        %v3855 = vshll.u32 %v3814, 16
        %v3857 = vrot.slane %v3855, 1
        %v3858 = vsel %vm3830, %v3853, %v3857
        %v3859 = vshrl.u32 %v3814, 16
        %v3861 = vor.u32 %v3859, %v3857
        %v3863 = vshll.u32 %v3815, 16
        %v3865 = vrot.slane %v3863, 1
        %v3866 = vsel %vm3830, %v3861, %v3865
        %v3867 = vshrl.u32 %v3815, 16
        %v3869 = vor.u32 %v3867, %v3865
        %v3871 = vshll.u32 %v3816, 16
        %v3873 = vrot.slane %v3871, 1
        %v3874 = vsel %vm3830, %v3869, %v3873
        %v3875 = vshrl.u32 %v3816, 16
        %v3877 = vor.u32 %v3875, %v3873
        %v3879 = vshll.u32 %v3817, 16
        %v3881 = vrot.slane %v3879, 1
        %v3882 = vsel %vm3830, %v3877, %v3881
        %v3883 = vshrl.u32 %v3817, 16
        %v3885 = vor.u32 %v3883, %v3881
        %v3887 = vshll.u32 %v3818, 16
        %v3889 = vrot.slane %v3887, 1
        %v3890 = vsel %vm3830, %v3885, %v3889
        %v3891 = vshrl.u32 %v3818, 16
        %v3893 = vor.u32 %v3891, %v3889
        %v3895 = vshll.u32 %v3819, 16
        %v3897 = vrot.slane %v3895, 1
        %v3898 = vsel %vm3830, %v3893, %v3897
        %v3899 = vshrl.u32 %v3819, 16
        %v3901 = vor.u32 %v3899, %v3897
        %v3903 = vshll.u32 %v3820, 16
        %v3905 = vrot.slane %v3903, 1
        %v3906 = vsel %vm3830, %v3901, %v3905
        %v3907 = vshrl.u32 %v3820, 16
        %v3909 = vor.u32 %v3907, %v3905
        %v3911 = vshll.u32 %v3821, 16
        %v3913 = vrot.slane %v3911, 1
        %v3914 = vsel %vm3830, %v3909, %v3913
        %v3915 = vshrl.u32 %v3821, 16
        %v3917 = vor.u32 %v3915, %v3913
        %v3919 = vshll.u32 %v3822, 16
        %v3921 = vrot.slane %v3919, 1
        %v3922 = vsel %vm3830, %v3917, %v3921
        %v3923 = vshrl.u32 %v3822, 16
        %v3925 = vor.u32 %v3923, %v3921
        %v3927 = vshll.u32 %v3823, 16
        %v3929 = vrot.slane %v3927, 1
        %v3930 = vsel %vm3830, %v3925, %v3929
        %v3931 = vshrl.u32 %v3823, 16
        %v3933 = vor.u32 %v3931, %v3929
        %v3935 = vshll.u32 %v3824, 16
        %v3937 = vrot.slane %v3935, 1
        %v3938 = vsel %vm3830, %v3933, %v3937
        %v3939 = vshrl.u32 %v3824, 16
        %v3941 = vor.u32 %v3939, %v3937
        %v3943 = vshll.u32 %v3825, 16
        %v3945 = vrot.slane %v3943, 1
        %v3946 = vsel %vm3830, %v3941, %v3945
        %v3947 = vshrl.u32 %v3825, 16
        %v3949 = vor.u32 %v3947, %v3945
        %v3951 = vshll.u32 %v3826, 16
        %v3953 = vrot.slane %v3951, 1
        %v3954 = vsel %vm3830, %v3949, %v3953
        %v3955 = vshrl.u32 %v3826, 16
        %v3957 = vor.u32 %v3955, %v3953
        %v3959 = vshll.u32 %v3827, 16
        %v3961 = vrot.slane %v3959, 1
        %v3962 = vsel %vm3830, %v3957, %v3961
        %v3963 = vshrl.u32 %v3827, 16
        %v3965 = vor.u32 %v3963, %v3961
        %v3967 = vshll.u32 %v3828, 16
        %v3969 = vrot.slane %v3967, 1
        %v3970 = vsel %vm3830, %v3965, %v3969
        %v3971 = vshrl.u32 %v3828, 16
        %v3973 = vor.u32 %v3971, %v3969
        %v3975 = vshll.u32 %v3829, 16
        %v3977 = vrot.slane %v3975, 1
        %v3978 = vsel %vm3830, %v3973, %v3977
        %v4013 = vunpack.c.l.b16 %v3721
        %v4014 = vunpack.c.h.b16 %v3721
        %v4015 = vunpack.c.l.b16 %v3722
        %v4016 = vunpack.c.h.b16 %v3722
        %v4017 = vunpack.c.l.b16 %v3723
        %v4018 = vunpack.c.h.b16 %v3723
        %v4019 = vunpack.c.l.b16 %v3724
        %v4020 = vunpack.c.h.b16 %v3724
        %v4021 = vunpack.c.l.b16 %v3725
        %v4022 = vunpack.c.h.b16 %v3725
        %v4023 = vunpack.c.l.b16 %v3726
        %v4024 = vunpack.c.h.b16 %v3726
        %v4025 = vunpack.c.l.b16 %v3727
        %v4026 = vunpack.c.h.b16 %v3727
        %v4027 = vunpack.c.l.b16 %v3728
        %v4028 = vunpack.c.h.b16 %v3728
        %v4029 = vunpack.c.l.b16 %v3729
        %v4030 = vunpack.c.h.b16 %v3729
        %v4031 = vunpack.c.l.b16 %v3730
        %v4032 = vunpack.c.h.b16 %v3730
        %v4033 = vunpack.c.l.b16 %v3731
        %v4034 = vunpack.c.h.b16 %v3731
        %v4035 = vunpack.c.l.b16 %v3732
        %v4036 = vunpack.c.h.b16 %v3732
        %v4037 = vunpack.c.l.b16 %v3733
        %v4038 = vunpack.c.h.b16 %v3733
        %v4039 = vunpack.c.l.b16 %v3734
        %v4040 = vunpack.c.h.b16 %v3734
        %v4041 = vunpack.c.l.b16 %v3735
        %v4042 = vunpack.c.h.b16 %v3735
        %v4043 = vunpack.c.l.b16 %v3736
        %v4044 = vunpack.c.h.b16 %v3736
        %v4045 = vpack.c.b16 %v4015, %v4013
        %v4046 = vpack.c.b16 %v4016, %v4014
        %v4047 = vpack.c.b16 %v4019, %v4017
        %v4048 = vpack.c.b16 %v4020, %v4018
        %v4049 = vpack.c.b16 %v4023, %v4021
        %v4050 = vpack.c.b16 %v4024, %v4022
        %v4051 = vpack.c.b16 %v4027, %v4025
        %v4052 = vpack.c.b16 %v4028, %v4026
        %v4053 = vpack.c.b16 %v4031, %v4029
        %v4054 = vpack.c.b16 %v4032, %v4030
        %v4055 = vpack.c.b16 %v4035, %v4033
        %v4056 = vpack.c.b16 %v4036, %v4034
        %v4057 = vpack.c.b16 %v4039, %v4037
        %v4058 = vpack.c.b16 %v4040, %v4038
        %v4059 = vpack.c.b16 %v4043, %v4041
        %v4060 = vpack.c.b16 %v4044, %v4042
        %4077 = vmatprep.subr.bf16.mxu0 %v4046
        %4078 = vmatpush1.bf16.msra.mxu0 %v4045
        %4079 = vmatprep.subr.bf16.mxu0 %v4048
        %4080 = vmatpush1.bf16.msra.mxu0 %v4047
        %4081 = vmatprep.subr.bf16.mxu0 %v4050
        %4082 = vmatpush1.bf16.msra.mxu0 %v4049
        %4083 = vmatprep.subr.bf16.mxu0 %v4052
        %4084 = vmatpush1.bf16.msra.mxu0 %v4051
        %4085 = vmatprep.subr.bf16.mxu0 %v4054
        %4086 = vmatpush1.bf16.msra.mxu0 %v4053
        %4087 = vmatprep.subr.bf16.mxu0 %v4056
        %4088 = vmatpush1.bf16.msra.mxu0 %v4055
        %4089 = vmatprep.subr.bf16.mxu0 %v4058
        %4090 = vmatpush1.bf16.msra.mxu0 %v4057
        %4091 = vmatprep.subr.bf16.mxu0 %v4060
        %4092 = vmatpush1.bf16.msra.mxu0 %v4059
        %4093 = vmatprep.subr.bf16.mxu0 0
        %4094 = vmatpush1.bf16.msra.mxu0 0
        %4095 = vmatprep.subr.bf16.mxu0 0
        %4096 = vmatpush1.bf16.msra.mxu0 0
        %4097 = vmatprep.subr.bf16.mxu0 0
        %4098 = vmatpush1.bf16.msra.mxu0 0
        %4099 = vmatprep.subr.bf16.mxu0 0
        %4100 = vmatpush1.bf16.msra.mxu0 0
        %4101 = vmatprep.subr.bf16.mxu0 0
        %4102 = vmatpush1.bf16.msra.mxu0 0
        %4103 = vmatprep.subr.bf16.mxu0 0
        %4104 = vmatpush1.bf16.msra.mxu0 0
        %4105 = vmatprep.subr.bf16.mxu0 0
        %4106 = vmatpush1.bf16.msra.mxu0 0
        %4107 = vmatprep.subr.bf16.mxu0 0
        %4108 = vmatpush1.bf16.msra.mxu0 0
        %4109 = vmatprep.mubr.bf16.mxu0 0
        %4110 = vmatmul.mubr.bf16.gmra.mrb[0].mxu0 %v3842
        %v4111 = vpop.f32.mrb[0].mxu0
        %v4112 = vadd.f32 0.0, %v4111
        %v4113 = vpop.f32.mrb[0].mxu0
        %v4114 = vadd.f32 0.0, %v4113
        %v4115 = vpop.f32.mrb[0].mxu0
        %v4116 = vadd.f32 0.0, %v4115
        %v4117 = vpop.f32.mrb[0].mxu0
        %v4118 = vadd.f32 0.0, %v4117
        %4119 = vmatprep.mubr.bf16.mxu0 0
        %4120 = vmatmul.mubr.bf16.gmra.mrb[0].mxu0 %v3850
        %v4121 = vpop.f32.mrb[0].mxu0
        %v4122 = vadd.f32 0.0, %v4121
        %v4123 = vpop.f32.mrb[0].mxu0
        %v4124 = vadd.f32 0.0, %v4123
        %v4125 = vpop.f32.mrb[0].mxu0
        %v4126 = vadd.f32 0.0, %v4125
        %v4127 = vpop.f32.mrb[0].mxu0
        %v4128 = vadd.f32 0.0, %v4127
        %4129 = vmatprep.mubr.bf16.mxu0 0
        %4130 = vmatmul.mubr.bf16.gmra.mrb[0].mxu0 %v3858
        %v4131 = vpop.f32.mrb[0].mxu0
        %v4132 = vadd.f32 0.0, %v4131
        %v4133 = vpop.f32.mrb[0].mxu0
        %v4134 = vadd.f32 0.0, %v4133
        %v4135 = vpop.f32.mrb[0].mxu0
        %v4136 = vadd.f32 0.0, %v4135
        %v4137 = vpop.f32.mrb[0].mxu0
        %v4138 = vadd.f32 0.0, %v4137
        %4139 = vmatprep.mubr.bf16.mxu0 0
        %4140 = vmatmul.mubr.bf16.gmra.mrb[0].mxu0 %v3866
        %v4141 = vpop.f32.mrb[0].mxu0
        %v4142 = vadd.f32 0.0, %v4141
        %v4143 = vpop.f32.mrb[0].mxu0
        %v4144 = vadd.f32 0.0, %v4143
        %v4145 = vpop.f32.mrb[0].mxu0
        %v4146 = vadd.f32 0.0, %v4145
        %v4147 = vpop.f32.mrb[0].mxu0
        %v4148 = vadd.f32 0.0, %v4147
        %4149 = vmatprep.mubr.bf16.mxu0 0
        %4150 = vmatmul.mubr.bf16.gmra.mrb[0].mxu0 %v3874
        %v4151 = vpop.f32.mrb[0].mxu0
        %v4152 = vadd.f32 0.0, %v4151
        %v4153 = vpop.f32.mrb[0].mxu0
        %v4154 = vadd.f32 0.0, %v4153
        %v4155 = vpop.f32.mrb[0].mxu0
        %v4156 = vadd.f32 0.0, %v4155
        %v4157 = vpop.f32.mrb[0].mxu0
        %v4158 = vadd.f32 0.0, %v4157
        %4159 = vmatprep.mubr.bf16.mxu0 0
        %4160 = vmatmul.mubr.bf16.gmra.mrb[0].mxu0 %v3882
        %v4161 = vpop.f32.mrb[0].mxu0
        %v4162 = vadd.f32 0.0, %v4161
        %v4163 = vpop.f32.mrb[0].mxu0
        %v4164 = vadd.f32 0.0, %v4163
        %v4165 = vpop.f32.mrb[0].mxu0
        %v4166 = vadd.f32 0.0, %v4165
        %v4167 = vpop.f32.mrb[0].mxu0
        %v4168 = vadd.f32 0.0, %v4167
        %4169 = vmatprep.mubr.bf16.mxu0 0
        %4170 = vmatmul.mubr.bf16.gmra.mrb[0].mxu0 %v3890
        %v4171 = vpop.f32.mrb[0].mxu0
        %v4172 = vadd.f32 0.0, %v4171
        %v4173 = vpop.f32.mrb[0].mxu0
        %v4174 = vadd.f32 0.0, %v4173
        %v4175 = vpop.f32.mrb[0].mxu0
        %v4176 = vadd.f32 0.0, %v4175
        %v4177 = vpop.f32.mrb[0].mxu0
        %v4178 = vadd.f32 0.0, %v4177
        %4179 = vmatprep.mubr.bf16.mxu0 0
        %4180 = vmatmul.mubr.bf16.gmra.mrb[0].mxu0 %v3898
        %v4181 = vpop.f32.mrb[0].mxu0
        %v4182 = vadd.f32 0.0, %v4181
        %v4183 = vpop.f32.mrb[0].mxu0
        %v4184 = vadd.f32 0.0, %v4183
        %v4185 = vpop.f32.mrb[0].mxu0
        %v4186 = vadd.f32 0.0, %v4185
        %v4187 = vpop.f32.mrb[0].mxu0
        %v4188 = vadd.f32 0.0, %v4187
        %4189 = vmatprep.mubr.bf16.mxu0 0
        %4190 = vmatmul.mubr.bf16.gmra.mrb[0].mxu0 %v3906
        %v4191 = vpop.f32.mrb[0].mxu0
        %v4192 = vadd.f32 0.0, %v4191
        %v4193 = vpop.f32.mrb[0].mxu0
        %v4194 = vadd.f32 0.0, %v4193
        %v4195 = vpop.f32.mrb[0].mxu0
        %v4196 = vadd.f32 0.0, %v4195
        %v4197 = vpop.f32.mrb[0].mxu0
        %v4198 = vadd.f32 0.0, %v4197
        %4199 = vmatprep.mubr.bf16.mxu0 0
        %4200 = vmatmul.mubr.bf16.gmra.mrb[0].mxu0 %v3914
        %v4201 = vpop.f32.mrb[0].mxu0
        %v4202 = vadd.f32 0.0, %v4201
        %v4203 = vpop.f32.mrb[0].mxu0
        %v4204 = vadd.f32 0.0, %v4203
        %v4205 = vpop.f32.mrb[0].mxu0
        %v4206 = vadd.f32 0.0, %v4205
        %v4207 = vpop.f32.mrb[0].mxu0
        %v4208 = vadd.f32 0.0, %v4207
        %4209 = vmatprep.mubr.bf16.mxu0 0
        %4210 = vmatmul.mubr.bf16.gmra.mrb[0].mxu0 %v3922
        %v4211 = vpop.f32.mrb[0].mxu0
        %v4212 = vadd.f32 0.0, %v4211
        %v4213 = vpop.f32.mrb[0].mxu0
        %v4214 = vadd.f32 0.0, %v4213
        %v4215 = vpop.f32.mrb[0].mxu0
        %v4216 = vadd.f32 0.0, %v4215
        %v4217 = vpop.f32.mrb[0].mxu0
        %v4218 = vadd.f32 0.0, %v4217
        %4219 = vmatprep.mubr.bf16.mxu0 0
        %4220 = vmatmul.mubr.bf16.gmra.mrb[0].mxu0 %v3930
        %v4221 = vpop.f32.mrb[0].mxu0
        %v4222 = vadd.f32 0.0, %v4221
        %v4223 = vpop.f32.mrb[0].mxu0
        %v4224 = vadd.f32 0.0, %v4223
        %v4225 = vpop.f32.mrb[0].mxu0
        %v4226 = vadd.f32 0.0, %v4225
        %v4227 = vpop.f32.mrb[0].mxu0
        %v4228 = vadd.f32 0.0, %v4227
        %4229 = vmatprep.mubr.bf16.mxu0 0
        %4230 = vmatmul.mubr.bf16.gmra.mrb[0].mxu0 %v3938
        %v4231 = vpop.f32.mrb[0].mxu0
        %v4232 = vadd.f32 0.0, %v4231
        %v4233 = vpop.f32.mrb[0].mxu0
        %v4234 = vadd.f32 0.0, %v4233
        %v4235 = vpop.f32.mrb[0].mxu0
        %v4236 = vadd.f32 0.0, %v4235
        %v4237 = vpop.f32.mrb[0].mxu0
        %v4238 = vadd.f32 0.0, %v4237
        %4239 = vmatprep.mubr.bf16.mxu0 0
        %4240 = vmatmul.mubr.bf16.gmra.mrb[0].mxu0 %v3946
        %v4241 = vpop.f32.mrb[0].mxu0
        %v4242 = vadd.f32 0.0, %v4241
        %v4243 = vpop.f32.mrb[0].mxu0
        %v4244 = vadd.f32 0.0, %v4243
        %v4245 = vpop.f32.mrb[0].mxu0
        %v4246 = vadd.f32 0.0, %v4245
        %v4247 = vpop.f32.mrb[0].mxu0
        %v4248 = vadd.f32 0.0, %v4247
        %4249 = vmatprep.mubr.bf16.mxu0 0
        %4250 = vmatmul.mubr.bf16.gmra.mrb[0].mxu0 %v3954
        %v4251 = vpop.f32.mrb[0].mxu0
        %v4252 = vadd.f32 0.0, %v4251
        %v4253 = vpop.f32.mrb[0].mxu0
        %v4254 = vadd.f32 0.0, %v4253
        %v4255 = vpop.f32.mrb[0].mxu0
        %v4256 = vadd.f32 0.0, %v4255
        %v4257 = vpop.f32.mrb[0].mxu0
        %v4258 = vadd.f32 0.0, %v4257
        %4259 = vmatprep.mubr.bf16.mxu0 0
        %4260 = vmatmul.mubr.bf16.gmra.mrb[0].mxu0 %v3962
        %v4261 = vpop.f32.mrb[0].mxu0
        %v4262 = vadd.f32 0.0, %v4261
        %v4263 = vpop.f32.mrb[0].mxu0
        %v4264 = vadd.f32 0.0, %v4263
        %v4265 = vpop.f32.mrb[0].mxu0
        %v4266 = vadd.f32 0.0, %v4265
        %v4267 = vpop.f32.mrb[0].mxu0
        %v4268 = vadd.f32 0.0, %v4267
        %4269 = vmatprep.mubr.bf16.mxu0 0
        %4270 = vmatmul.mubr.bf16.gmra.mrb[0].mxu0 %v3970
        %v4271 = vpop.f32.mrb[0].mxu0
        %v4272 = vadd.f32 0.0, %v4271
        %v4273 = vpop.f32.mrb[0].mxu0
        %v4274 = vadd.f32 0.0, %v4273
        %v4275 = vpop.f32.mrb[0].mxu0
        %v4276 = vadd.f32 0.0, %v4275
        %v4277 = vpop.f32.mrb[0].mxu0
        %v4278 = vadd.f32 0.0, %v4277
        %4279 = vmatprep.mubr.bf16.mxu0 0
        %4280 = vmatmul.mubr.bf16.gmra.mrb[0].mxu0 %v3978
        %v4281 = vpop.f32.mrb[0].mxu0
        %v4282 = vadd.f32 0.0, %v4281
        %v4283 = vpop.f32.mrb[0].mxu0
        %v4284 = vadd.f32 0.0, %v4283
        %v4285 = vpop.f32.mrb[0].mxu0
        %v4286 = vadd.f32 0.0, %v4285
        %v4287 = vpop.f32.mrb[0].mxu0
        %v4288 = vadd.f32 0.0, %v4287
        %4289 = vdwg.mxu0
        %v4324 = vunpack.c.l.b16 %v3703
        %v4325 = vunpack.c.h.b16 %v3703
        %v4326 = vunpack.c.l.b16 %v3704
        %v4327 = vunpack.c.h.b16 %v3704
        %v4328 = vunpack.c.l.b16 %v3705
        %v4329 = vunpack.c.h.b16 %v3705
        %v4330 = vunpack.c.l.b16 %v3706
        %v4331 = vunpack.c.h.b16 %v3706
        %v4332 = vunpack.c.l.b16 %v3707
        %v4333 = vunpack.c.h.b16 %v3707
        %v4334 = vunpack.c.l.b16 %v3708
        %v4335 = vunpack.c.h.b16 %v3708
        %v4336 = vunpack.c.l.b16 %v3709
        %v4337 = vunpack.c.h.b16 %v3709
        %v4338 = vunpack.c.l.b16 %v3710
        %v4339 = vunpack.c.h.b16 %v3710
        %v4340 = vunpack.c.l.b16 %v3711
        %v4341 = vunpack.c.h.b16 %v3711
        %v4342 = vunpack.c.l.b16 %v3712
        %v4343 = vunpack.c.h.b16 %v3712
        %v4344 = vunpack.c.l.b16 %v3713
        %v4345 = vunpack.c.h.b16 %v3713
        %v4346 = vunpack.c.l.b16 %v3714
        %v4347 = vunpack.c.h.b16 %v3714
        %v4348 = vunpack.c.l.b16 %v3715
        %v4349 = vunpack.c.h.b16 %v3715
        %v4350 = vunpack.c.l.b16 %v3716
        %v4351 = vunpack.c.h.b16 %v3716
        %v4352 = vunpack.c.l.b16 %v3717
        %v4353 = vunpack.c.h.b16 %v3717
        %v4354 = vunpack.c.l.b16 %v3718
        %v4355 = vunpack.c.h.b16 %v3718
        %v4356 = vpack.c.b16 %v4326, %v4324
        %v4357 = vpack.c.b16 %v4327, %v4325
        %v4358 = vpack.c.b16 %v4330, %v4328
        %v4359 = vpack.c.b16 %v4331, %v4329
        %v4360 = vpack.c.b16 %v4334, %v4332
        %v4361 = vpack.c.b16 %v4335, %v4333
        %v4362 = vpack.c.b16 %v4338, %v4336
        %v4363 = vpack.c.b16 %v4339, %v4337
        %v4364 = vpack.c.b16 %v4342, %v4340
        %v4365 = vpack.c.b16 %v4343, %v4341
        %v4366 = vpack.c.b16 %v4346, %v4344
        %v4367 = vpack.c.b16 %v4347, %v4345
        %v4368 = vpack.c.b16 %v4350, %v4348
        %v4369 = vpack.c.b16 %v4351, %v4349
        %v4370 = vpack.c.b16 %v4354, %v4352
        %v4371 = vpack.c.b16 %v4355, %v4353
        %4388 = vmatprep.subr.bf16.mxu0 %v4357
        %4389 = vmatpush1.bf16.msra.mxu0 %v4356
        %4390 = vmatprep.subr.bf16.mxu0 %v4359
        %4391 = vmatpush1.bf16.msra.mxu0 %v4358
        %4392 = vmatprep.subr.bf16.mxu0 %v4361
        %4393 = vmatpush1.bf16.msra.mxu0 %v4360
        %4394 = vmatprep.subr.bf16.mxu0 %v4363
        %4395 = vmatpush1.bf16.msra.mxu0 %v4362
        %4396 = vmatprep.subr.bf16.mxu0 %v4365
        %4397 = vmatpush1.bf16.msra.mxu0 %v4364
        %4398 = vmatprep.subr.bf16.mxu0 %v4367
        %4399 = vmatpush1.bf16.msra.mxu0 %v4366
        %4400 = vmatprep.subr.bf16.mxu0 %v4369
        %4401 = vmatpush1.bf16.msra.mxu0 %v4368
        %4402 = vmatprep.subr.bf16.mxu0 %v4371
        %4403 = vmatpush1.bf16.msra.mxu0 %v4370
        %4404 = vmatprep.subr.bf16.mxu0 0
        %4405 = vmatpush1.bf16.msra.mxu0 0
        %4406 = vmatprep.subr.bf16.mxu0 0
        %4407 = vmatpush1.bf16.msra.mxu0 0
        %4408 = vmatprep.subr.bf16.mxu0 0
        %4409 = vmatpush1.bf16.msra.mxu0 0
        %4410 = vmatprep.subr.bf16.mxu0 0
        %4411 = vmatpush1.bf16.msra.mxu0 0
        %4412 = vmatprep.subr.bf16.mxu0 0
        %4413 = vmatpush1.bf16.msra.mxu0 0
        %4414 = vmatprep.subr.bf16.mxu0 0
        %4415 = vmatpush1.bf16.msra.mxu0 0
        %4416 = vmatprep.subr.bf16.mxu0 0
        %4417 = vmatpush1.bf16.msra.mxu0 0
        %4418 = vmatprep.subr.bf16.mxu0 0
        %4419 = vmatpush1.bf16.msra.mxu0 0
        %4420 = vmatprep.mubr.bf16.mxu0 0
        %4421 = vmatmul.mubr.bf16.gmra.mrb[0].mxu0 %v3811
        %v4422 = vpop.f32.mrb[0].mxu0
        %v4423 = vadd.f32 %v4112, %v4422
        %v4424 = vpop.f32.mrb[0].mxu0
        %v4425 = vadd.f32 %v4114, %v4424
        %v4426 = vpop.f32.mrb[0].mxu0
        %v4427 = vadd.f32 %v4116, %v4426
        %v4428 = vpop.f32.mrb[0].mxu0
        %v4429 = vadd.f32 %v4118, %v4428
        %4430 = vmatprep.mubr.bf16.mxu0 0
        %4431 = vmatmul.mubr.bf16.gmra.mrb[0].mxu0 %v3812
        %v4432 = vpop.f32.mrb[0].mxu0
        %v4433 = vadd.f32 %v4122, %v4432
        %v4434 = vpop.f32.mrb[0].mxu0
        %v4435 = vadd.f32 %v4124, %v4434
        %v4436 = vpop.f32.mrb[0].mxu0
        %v4437 = vadd.f32 %v4126, %v4436
        %v4438 = vpop.f32.mrb[0].mxu0
        %v4439 = vadd.f32 %v4128, %v4438
        %4440 = vmatprep.mubr.bf16.mxu0 0
        %4441 = vmatmul.mubr.bf16.gmra.mrb[0].mxu0 %v3813
        %v4442 = vpop.f32.mrb[0].mxu0
        %v4443 = vadd.f32 %v4132, %v4442
        %v4444 = vpop.f32.mrb[0].mxu0
        %v4445 = vadd.f32 %v4134, %v4444
        %v4446 = vpop.f32.mrb[0].mxu0
        %v4447 = vadd.f32 %v4136, %v4446
        %v4448 = vpop.f32.mrb[0].mxu0
        %v4449 = vadd.f32 %v4138, %v4448
        %4450 = vmatprep.mubr.bf16.mxu0 0
        %4451 = vmatmul.mubr.bf16.gmra.mrb[0].mxu0 %v3814
        %v4452 = vpop.f32.mrb[0].mxu0
        %v4453 = vadd.f32 %v4142, %v4452
        %v4454 = vpop.f32.mrb[0].mxu0
        %v4455 = vadd.f32 %v4144, %v4454
        %v4456 = vpop.f32.mrb[0].mxu0
        %v4457 = vadd.f32 %v4146, %v4456
        %v4458 = vpop.f32.mrb[0].mxu0
        %v4459 = vadd.f32 %v4148, %v4458
        %4460 = vmatprep.mubr.bf16.mxu0 0
        %4461 = vmatmul.mubr.bf16.gmra.mrb[0].mxu0 %v3815
        %v4462 = vpop.f32.mrb[0].mxu0
        %v4463 = vadd.f32 %v4152, %v4462
        %v4464 = vpop.f32.mrb[0].mxu0
        %v4465 = vadd.f32 %v4154, %v4464
        %v4466 = vpop.f32.mrb[0].mxu0
        %v4467 = vadd.f32 %v4156, %v4466
        %v4468 = vpop.f32.mrb[0].mxu0
        %v4469 = vadd.f32 %v4158, %v4468
        %4470 = vmatprep.mubr.bf16.mxu0 0
        %4471 = vmatmul.mubr.bf16.gmra.mrb[0].mxu0 %v3816
        %v4472 = vpop.f32.mrb[0].mxu0
        %v4473 = vadd.f32 %v4162, %v4472
        %v4474 = vpop.f32.mrb[0].mxu0
        %v4475 = vadd.f32 %v4164, %v4474
        %v4476 = vpop.f32.mrb[0].mxu0
        %v4477 = vadd.f32 %v4166, %v4476
        %v4478 = vpop.f32.mrb[0].mxu0
        %v4479 = vadd.f32 %v4168, %v4478
        %4480 = vmatprep.mubr.bf16.mxu0 0
        %4481 = vmatmul.mubr.bf16.gmra.mrb[0].mxu0 %v3817
        %v4482 = vpop.f32.mrb[0].mxu0
        %v4483 = vadd.f32 %v4172, %v4482
        %v4484 = vpop.f32.mrb[0].mxu0
        %v4485 = vadd.f32 %v4174, %v4484
        %v4486 = vpop.f32.mrb[0].mxu0
        %v4487 = vadd.f32 %v4176, %v4486
        %v4488 = vpop.f32.mrb[0].mxu0
        %v4489 = vadd.f32 %v4178, %v4488
        %4490 = vmatprep.mubr.bf16.mxu0 0
        %4491 = vmatmul.mubr.bf16.gmra.mrb[0].mxu0 %v3818
        %v4492 = vpop.f32.mrb[0].mxu0
        %v4493 = vadd.f32 %v4182, %v4492
        %v4494 = vpop.f32.mrb[0].mxu0
        %v4495 = vadd.f32 %v4184, %v4494
        %v4496 = vpop.f32.mrb[0].mxu0
        %v4497 = vadd.f32 %v4186, %v4496
        %v4498 = vpop.f32.mrb[0].mxu0
        %v4499 = vadd.f32 %v4188, %v4498
        %4500 = vmatprep.mubr.bf16.mxu0 0
        %4501 = vmatmul.mubr.bf16.gmra.mrb[0].mxu0 %v3819
        %v4502 = vpop.f32.mrb[0].mxu0
        %v4503 = vadd.f32 %v4192, %v4502
        %v4504 = vpop.f32.mrb[0].mxu0
        %v4505 = vadd.f32 %v4194, %v4504
        %v4506 = vpop.f32.mrb[0].mxu0
        %v4507 = vadd.f32 %v4196, %v4506
        %v4508 = vpop.f32.mrb[0].mxu0
        %v4509 = vadd.f32 %v4198, %v4508
        %4510 = vmatprep.mubr.bf16.mxu0 0
        %4511 = vmatmul.mubr.bf16.gmra.mrb[0].mxu0 %v3820
        %v4512 = vpop.f32.mrb[0].mxu0
        %v4513 = vadd.f32 %v4202, %v4512
        %v4514 = vpop.f32.mrb[0].mxu0
        %v4515 = vadd.f32 %v4204, %v4514
        %v4516 = vpop.f32.mrb[0].mxu0
        %v4517 = vadd.f32 %v4206, %v4516
        %v4518 = vpop.f32.mrb[0].mxu0
        %v4519 = vadd.f32 %v4208, %v4518
        %4520 = vmatprep.mubr.bf16.mxu0 0
        %4521 = vmatmul.mubr.bf16.gmra.mrb[0].mxu0 %v3821
        %v4522 = vpop.f32.mrb[0].mxu0
        %v4523 = vadd.f32 %v4212, %v4522
        %v4524 = vpop.f32.mrb[0].mxu0
        %v4525 = vadd.f32 %v4214, %v4524
        %v4526 = vpop.f32.mrb[0].mxu0
        %v4527 = vadd.f32 %v4216, %v4526
        %v4528 = vpop.f32.mrb[0].mxu0
        %v4529 = vadd.f32 %v4218, %v4528
        %4530 = vmatprep.mubr.bf16.mxu0 0
        %4531 = vmatmul.mubr.bf16.gmra.mrb[0].mxu0 %v3822
        %v4532 = vpop.f32.mrb[0].mxu0
        %v4533 = vadd.f32 %v4222, %v4532
        %v4534 = vpop.f32.mrb[0].mxu0
        %v4535 = vadd.f32 %v4224, %v4534
        %v4536 = vpop.f32.mrb[0].mxu0
        %v4537 = vadd.f32 %v4226, %v4536
        %v4538 = vpop.f32.mrb[0].mxu0
        %v4539 = vadd.f32 %v4228, %v4538
        %4540 = vmatprep.mubr.bf16.mxu0 0
        %4541 = vmatmul.mubr.bf16.gmra.mrb[0].mxu0 %v3823
        %v4542 = vpop.f32.mrb[0].mxu0
        %v4543 = vadd.f32 %v4232, %v4542
        %v4544 = vpop.f32.mrb[0].mxu0
        %v4545 = vadd.f32 %v4234, %v4544
        %v4546 = vpop.f32.mrb[0].mxu0
        %v4547 = vadd.f32 %v4236, %v4546
        %v4548 = vpop.f32.mrb[0].mxu0
        %v4549 = vadd.f32 %v4238, %v4548
        %4550 = vmatprep.mubr.bf16.mxu0 0
        %4551 = vmatmul.mubr.bf16.gmra.mrb[0].mxu0 %v3824
        %v4552 = vpop.f32.mrb[0].mxu0
        %v4553 = vadd.f32 %v4242, %v4552
        %v4554 = vpop.f32.mrb[0].mxu0
        %v4555 = vadd.f32 %v4244, %v4554
        %v4556 = vpop.f32.mrb[0].mxu0
        %v4557 = vadd.f32 %v4246, %v4556
        %v4558 = vpop.f32.mrb[0].mxu0
        %v4559 = vadd.f32 %v4248, %v4558
        %4560 = vmatprep.mubr.bf16.mxu0 0
        %4561 = vmatmul.mubr.bf16.gmra.mrb[0].mxu0 %v3825
        %v4562 = vpop.f32.mrb[0].mxu0
        %v4563 = vadd.f32 %v4252, %v4562
        %v4564 = vpop.f32.mrb[0].mxu0
        %v4565 = vadd.f32 %v4254, %v4564
        %v4566 = vpop.f32.mrb[0].mxu0
        %v4567 = vadd.f32 %v4256, %v4566
        %v4568 = vpop.f32.mrb[0].mxu0
        %v4569 = vadd.f32 %v4258, %v4568
        %4570 = vmatprep.mubr.bf16.mxu0 0
        %4571 = vmatmul.mubr.bf16.gmra.mrb[0].mxu0 %v3826
        %v4572 = vpop.f32.mrb[0].mxu0
        %v4573 = vadd.f32 %v4262, %v4572
        %v4574 = vpop.f32.mrb[0].mxu0
        %v4575 = vadd.f32 %v4264, %v4574
        %v4576 = vpop.f32.mrb[0].mxu0
        %v4577 = vadd.f32 %v4266, %v4576
        %v4578 = vpop.f32.mrb[0].mxu0
        %v4579 = vadd.f32 %v4268, %v4578
        %4580 = vmatprep.mubr.bf16.mxu0 0
        %4581 = vmatmul.mubr.bf16.gmra.mrb[0].mxu0 %v3827
        %v4582 = vpop.f32.mrb[0].mxu0
        %v4583 = vadd.f32 %v4272, %v4582
        %v4584 = vpop.f32.mrb[0].mxu0
        %v4585 = vadd.f32 %v4274, %v4584
        %v4586 = vpop.f32.mrb[0].mxu0
        %v4587 = vadd.f32 %v4276, %v4586
        %v4588 = vpop.f32.mrb[0].mxu0
        %v4589 = vadd.f32 %v4278, %v4588
        %4590 = vmatprep.mubr.bf16.mxu0 0
        %4591 = vmatmul.mubr.bf16.gmra.mrb[0].mxu0 %v3828
        %v4592 = vpop.f32.mrb[0].mxu0
        %v4593 = vadd.f32 %v4282, %v4592
        %v4594 = vpop.f32.mrb[0].mxu0
        %v4595 = vadd.f32 %v4284, %v4594
        %v4596 = vpop.f32.mrb[0].mxu0
        %v4597 = vadd.f32 %v4286, %v4596
        %v4598 = vpop.f32.mrb[0].mxu0
        %v4599 = vadd.f32 %v4288, %v4598
        %4600 = vdwg.mxu0
        %v4601 = vld [vmem:[#allocation2] sm:$0xe]
        %s4602 = scalar_lea.vmem %s366, 256
        %v4603 = vld [vmem:[%s4602] sm:$0xff]
        %v4604 = vld [vmem:[%s4602 + $0x8] sm:$0xff]
        %v4605 = vld [vmem:[%s4602 + $0x10] sm:$0xff]
        %v4606 = vld [vmem:[%s4602 + $0x18] sm:$0xff]
        %v4607 = vld [vmem:[%s4602 + $0x20] sm:$0xff]
        %v4608 = vld [vmem:[%s4602 + $0x28] sm:$0xff]
        %v4609 = vld [vmem:[%s4602 + $0x30] sm:$0xff]
        %v4610 = vld [vmem:[%s4602 + $0x38] sm:$0xff]
        %v4611 = vld [vmem:[%s4602 + $0x40] sm:$0xff]
        %v4612 = vld [vmem:[%s4602 + $0x48] sm:$0xff]
        %v4613 = vld [vmem:[%s4602 + $0x50] sm:$0xff]
        %v4614 = vld [vmem:[%s4602 + $0x58] sm:$0xff]
        %v4615 = vld [vmem:[%s4602 + $0x60] sm:$0xff]
        %v4616 = vld [vmem:[%s4602 + $0x68] sm:$0xff]
        %v4617 = vld [vmem:[%s4602 + $0x70] sm:$0xff]
        %v4618 = vld [vmem:[%s4602 + $0x78] sm:$0xff]
        %v4620 = vunpack.c.l.b16 %v4601
        %v4621 = vpack.c.b16 %v3775, %v4620
        %vm4622 = vcmask 1046528
        %v4623 = vrot.slane %v4621, 1
        %v4624 = vrot.slane %v3812, 1
        %v4625 = vsel %vm4622, %v4623, %v4624
        %v4626 = vrot.slane %v3813, 1
        %v4627 = vsel %vm4622, %v4624, %v4626
        %v4628 = vrot.slane %v3814, 1
        %v4629 = vsel %vm4622, %v4626, %v4628
        %v4630 = vrot.slane %v3815, 1
        %v4631 = vsel %vm4622, %v4628, %v4630
        %v4632 = vrot.slane %v3816, 1
        %v4633 = vsel %vm4622, %v4630, %v4632
        %v4634 = vrot.slane %v3817, 1
        %v4635 = vsel %vm4622, %v4632, %v4634
        %v4636 = vrot.slane %v3818, 1
        %v4637 = vsel %vm4622, %v4634, %v4636
        %v4638 = vrot.slane %v3819, 1
        %v4639 = vsel %vm4622, %v4636, %v4638
        %v4640 = vrot.slane %v3820, 1
        %v4641 = vsel %vm4622, %v4638, %v4640
        %v4642 = vrot.slane %v3821, 1
        %v4643 = vsel %vm4622, %v4640, %v4642
        %v4644 = vrot.slane %v3822, 1
        %v4645 = vsel %vm4622, %v4642, %v4644
        %v4646 = vrot.slane %v3823, 1
        %v4647 = vsel %vm4622, %v4644, %v4646
        %v4648 = vrot.slane %v3824, 1
        %v4649 = vsel %vm4622, %v4646, %v4648
        %v4650 = vrot.slane %v3825, 1
        %v4651 = vsel %vm4622, %v4648, %v4650
        %v4652 = vrot.slane %v3826, 1
        %v4653 = vsel %vm4622, %v4650, %v4652
        %v4654 = vrot.slane %v3827, 1
        %v4655 = vsel %vm4622, %v4652, %v4654
        %v4656 = vrot.slane %v3828, 1
        %v4657 = vsel %vm4622, %v4654, %v4656
        %v4658 = vrot.slane %v3829, 1
        %v4659 = vsel %vm4622, %v4656, %v4658
        %v4694 = vunpack.c.l.b16 %v4603
        %v4695 = vunpack.c.h.b16 %v4603
        %v4696 = vunpack.c.l.b16 %v4604
        %v4697 = vunpack.c.h.b16 %v4604
        %v4698 = vunpack.c.l.b16 %v4605
        %v4699 = vunpack.c.h.b16 %v4605
        %v4700 = vunpack.c.l.b16 %v4606
        %v4701 = vunpack.c.h.b16 %v4606
        %v4702 = vunpack.c.l.b16 %v4607
        %v4703 = vunpack.c.h.b16 %v4607
        %v4704 = vunpack.c.l.b16 %v4608
        %v4705 = vunpack.c.h.b16 %v4608
        %v4706 = vunpack.c.l.b16 %v4609
        %v4707 = vunpack.c.h.b16 %v4609
        %v4708 = vunpack.c.l.b16 %v4610
        %v4709 = vunpack.c.h.b16 %v4610
        %v4710 = vunpack.c.l.b16 %v4611
        %v4711 = vunpack.c.h.b16 %v4611
        %v4712 = vunpack.c.l.b16 %v4612
        %v4713 = vunpack.c.h.b16 %v4612
        %v4714 = vunpack.c.l.b16 %v4613
        %v4715 = vunpack.c.h.b16 %v4613
        %v4716 = vunpack.c.l.b16 %v4614
        %v4717 = vunpack.c.h.b16 %v4614
        %v4718 = vunpack.c.l.b16 %v4615
        %v4719 = vunpack.c.h.b16 %v4615
        %v4720 = vunpack.c.l.b16 %v4616
        %v4721 = vunpack.c.h.b16 %v4616
        %v4722 = vunpack.c.l.b16 %v4617
        %v4723 = vunpack.c.h.b16 %v4617
        %v4724 = vunpack.c.l.b16 %v4618
        %v4725 = vunpack.c.h.b16 %v4618
        %v4726 = vpack.c.b16 %v4696, %v4694
        %v4727 = vpack.c.b16 %v4697, %v4695
        %v4728 = vpack.c.b16 %v4700, %v4698
        %v4729 = vpack.c.b16 %v4701, %v4699
        %v4730 = vpack.c.b16 %v4704, %v4702
        %v4731 = vpack.c.b16 %v4705, %v4703
        %v4732 = vpack.c.b16 %v4708, %v4706
        %v4733 = vpack.c.b16 %v4709, %v4707
        %v4734 = vpack.c.b16 %v4712, %v4710
        %v4735 = vpack.c.b16 %v4713, %v4711
        %v4736 = vpack.c.b16 %v4716, %v4714
        %v4737 = vpack.c.b16 %v4717, %v4715
        %v4738 = vpack.c.b16 %v4720, %v4718
        %v4739 = vpack.c.b16 %v4721, %v4719
        %v4740 = vpack.c.b16 %v4724, %v4722
        %v4741 = vpack.c.b16 %v4725, %v4723
        %4758 = vmatprep.subr.bf16.mxu0 %v4727
        %4759 = vmatpush1.bf16.msra.mxu0 %v4726
        %4760 = vmatprep.subr.bf16.mxu0 %v4729
        %4761 = vmatpush1.bf16.msra.mxu0 %v4728
        %4762 = vmatprep.subr.bf16.mxu0 %v4731
        %4763 = vmatpush1.bf16.msra.mxu0 %v4730
        %4764 = vmatprep.subr.bf16.mxu0 %v4733
        %4765 = vmatpush1.bf16.msra.mxu0 %v4732
        %4766 = vmatprep.subr.bf16.mxu0 %v4735
        %4767 = vmatpush1.bf16.msra.mxu0 %v4734
        %4768 = vmatprep.subr.bf16.mxu0 %v4737
        %4769 = vmatpush1.bf16.msra.mxu0 %v4736
        %4770 = vmatprep.subr.bf16.mxu0 %v4739
        %4771 = vmatpush1.bf16.msra.mxu0 %v4738
        %4772 = vmatprep.subr.bf16.mxu0 %v4741
        %4773 = vmatpush1.bf16.msra.mxu0 %v4740
        %4774 = vmatprep.subr.bf16.mxu0 0
        %4775 = vmatpush1.bf16.msra.mxu0 0
        %4776 = vmatprep.subr.bf16.mxu0 0
        %4777 = vmatpush1.bf16.msra.mxu0 0
        %4778 = vmatprep.subr.bf16.mxu0 0
        %4779 = vmatpush1.bf16.msra.mxu0 0
        %4780 = vmatprep.subr.bf16.mxu0 0
        %4781 = vmatpush1.bf16.msra.mxu0 0
        %4782 = vmatprep.subr.bf16.mxu0 0
        %4783 = vmatpush1.bf16.msra.mxu0 0
        %4784 = vmatprep.subr.bf16.mxu0 0
        %4785 = vmatpush1.bf16.msra.mxu0 0
        %4786 = vmatprep.subr.bf16.mxu0 0
        %4787 = vmatpush1.bf16.msra.mxu0 0
        %4788 = vmatprep.subr.bf16.mxu0 0
        %4789 = vmatpush1.bf16.msra.mxu0 0
        %4790 = vmatprep.mubr.bf16.mxu0 0
        %4791 = vmatmul.mubr.bf16.gmra.mrb[0].mxu0 %v4625
        %v4792 = vpop.f32.mrb[0].mxu0
        %v4793 = vadd.f32 0.0, %v4792
        %v4794 = vpop.f32.mrb[0].mxu0
        %v4795 = vadd.f32 0.0, %v4794
        %v4796 = vpop.f32.mrb[0].mxu0
        %v4797 = vadd.f32 0.0, %v4796
        %v4798 = vpop.f32.mrb[0].mxu0
        %v4799 = vadd.f32 0.0, %v4798
        %4800 = vmatprep.mubr.bf16.mxu0 0
        %4801 = vmatmul.mubr.bf16.gmra.mrb[0].mxu0 %v4627
        %v4802 = vpop.f32.mrb[0].mxu0
        %v4803 = vadd.f32 0.0, %v4802
        %v4804 = vpop.f32.mrb[0].mxu0
        %v4805 = vadd.f32 0.0, %v4804
        %v4806 = vpop.f32.mrb[0].mxu0
        %v4807 = vadd.f32 0.0, %v4806
        %v4808 = vpop.f32.mrb[0].mxu0
        %v4809 = vadd.f32 0.0, %v4808
        %4810 = vmatprep.mubr.bf16.mxu0 0
        %4811 = vmatmul.mubr.bf16.gmra.mrb[0].mxu0 %v4629
        %v4812 = vpop.f32.mrb[0].mxu0
        %v4813 = vadd.f32 0.0, %v4812
        %v4814 = vpop.f32.mrb[0].mxu0
        %v4815 = vadd.f32 0.0, %v4814
        %v4816 = vpop.f32.mrb[0].mxu0
        %v4817 = vadd.f32 0.0, %v4816
        %v4818 = vpop.f32.mrb[0].mxu0
        %v4819 = vadd.f32 0.0, %v4818
        %4820 = vmatprep.mubr.bf16.mxu0 0
        %4821 = vmatmul.mubr.bf16.gmra.mrb[0].mxu0 %v4631
        %v4822 = vpop.f32.mrb[0].mxu0
        %v4823 = vadd.f32 0.0, %v4822
        %v4824 = vpop.f32.mrb[0].mxu0
        %v4825 = vadd.f32 0.0, %v4824
        %v4826 = vpop.f32.mrb[0].mxu0
        %v4827 = vadd.f32 0.0, %v4826
        %v4828 = vpop.f32.mrb[0].mxu0
        %v4829 = vadd.f32 0.0, %v4828
        %4830 = vmatprep.mubr.bf16.mxu0 0
        %4831 = vmatmul.mubr.bf16.gmra.mrb[0].mxu0 %v4633
        %v4832 = vpop.f32.mrb[0].mxu0
        %v4833 = vadd.f32 0.0, %v4832
        %v4834 = vpop.f32.mrb[0].mxu0
        %v4835 = vadd.f32 0.0, %v4834
        %v4836 = vpop.f32.mrb[0].mxu0
        %v4837 = vadd.f32 0.0, %v4836
        %v4838 = vpop.f32.mrb[0].mxu0
        %v4839 = vadd.f32 0.0, %v4838
        %4840 = vmatprep.mubr.bf16.mxu0 0
        %4841 = vmatmul.mubr.bf16.gmra.mrb[0].mxu0 %v4635
        %v4842 = vpop.f32.mrb[0].mxu0
        %v4843 = vadd.f32 0.0, %v4842
        %v4844 = vpop.f32.mrb[0].mxu0
        %v4845 = vadd.f32 0.0, %v4844
        %v4846 = vpop.f32.mrb[0].mxu0
        %v4847 = vadd.f32 0.0, %v4846
        %v4848 = vpop.f32.mrb[0].mxu0
        %v4849 = vadd.f32 0.0, %v4848
        %4850 = vmatprep.mubr.bf16.mxu0 0
        %4851 = vmatmul.mubr.bf16.gmra.mrb[0].mxu0 %v4637
        %v4852 = vpop.f32.mrb[0].mxu0
        %v4853 = vadd.f32 0.0, %v4852
        %v4854 = vpop.f32.mrb[0].mxu0
        %v4855 = vadd.f32 0.0, %v4854
        %v4856 = vpop.f32.mrb[0].mxu0
        %v4857 = vadd.f32 0.0, %v4856
        %v4858 = vpop.f32.mrb[0].mxu0
        %v4859 = vadd.f32 0.0, %v4858
        %4860 = vmatprep.mubr.bf16.mxu0 0
        %4861 = vmatmul.mubr.bf16.gmra.mrb[0].mxu0 %v4639
        %v4862 = vpop.f32.mrb[0].mxu0
        %v4863 = vadd.f32 0.0, %v4862
        %v4864 = vpop.f32.mrb[0].mxu0
        %v4865 = vadd.f32 0.0, %v4864
        %v4866 = vpop.f32.mrb[0].mxu0
        %v4867 = vadd.f32 0.0, %v4866
        %v4868 = vpop.f32.mrb[0].mxu0
        %v4869 = vadd.f32 0.0, %v4868
        %4870 = vmatprep.mubr.bf16.mxu0 0
        %4871 = vmatmul.mubr.bf16.gmra.mrb[0].mxu0 %v4641
        %v4872 = vpop.f32.mrb[0].mxu0
        %v4873 = vadd.f32 0.0, %v4872
        %v4874 = vpop.f32.mrb[0].mxu0
        %v4875 = vadd.f32 0.0, %v4874
        %v4876 = vpop.f32.mrb[0].mxu0
        %v4877 = vadd.f32 0.0, %v4876
        %v4878 = vpop.f32.mrb[0].mxu0
        %v4879 = vadd.f32 0.0, %v4878
        %4880 = vmatprep.mubr.bf16.mxu0 0
        %4881 = vmatmul.mubr.bf16.gmra.mrb[0].mxu0 %v4643
        %v4882 = vpop.f32.mrb[0].mxu0
        %v4883 = vadd.f32 0.0, %v4882
        %v4884 = vpop.f32.mrb[0].mxu0
        %v4885 = vadd.f32 0.0, %v4884
        %v4886 = vpop.f32.mrb[0].mxu0
        %v4887 = vadd.f32 0.0, %v4886
        %v4888 = vpop.f32.mrb[0].mxu0
        %v4889 = vadd.f32 0.0, %v4888
        %4890 = vmatprep.mubr.bf16.mxu0 0
        %4891 = vmatmul.mubr.bf16.gmra.mrb[0].mxu0 %v4645
        %v4892 = vpop.f32.mrb[0].mxu0
        %v4893 = vadd.f32 0.0, %v4892
        %v4894 = vpop.f32.mrb[0].mxu0
        %v4895 = vadd.f32 0.0, %v4894
        %v4896 = vpop.f32.mrb[0].mxu0
        %v4897 = vadd.f32 0.0, %v4896
        %v4898 = vpop.f32.mrb[0].mxu0
        %v4899 = vadd.f32 0.0, %v4898
        %4900 = vmatprep.mubr.bf16.mxu0 0
        %4901 = vmatmul.mubr.bf16.gmra.mrb[0].mxu0 %v4647
        %v4902 = vpop.f32.mrb[0].mxu0
        %v4903 = vadd.f32 0.0, %v4902
        %v4904 = vpop.f32.mrb[0].mxu0
        %v4905 = vadd.f32 0.0, %v4904
        %v4906 = vpop.f32.mrb[0].mxu0
        %v4907 = vadd.f32 0.0, %v4906
        %v4908 = vpop.f32.mrb[0].mxu0
        %v4909 = vadd.f32 0.0, %v4908
        %4910 = vmatprep.mubr.bf16.mxu0 0
        %4911 = vmatmul.mubr.bf16.gmra.mrb[0].mxu0 %v4649
        %v4912 = vpop.f32.mrb[0].mxu0
        %v4913 = vadd.f32 0.0, %v4912
        %v4914 = vpop.f32.mrb[0].mxu0
        %v4915 = vadd.f32 0.0, %v4914
        %v4916 = vpop.f32.mrb[0].mxu0
        %v4917 = vadd.f32 0.0, %v4916
        %v4918 = vpop.f32.mrb[0].mxu0
        %v4919 = vadd.f32 0.0, %v4918
        %4920 = vmatprep.mubr.bf16.mxu0 0
        %4921 = vmatmul.mubr.bf16.gmra.mrb[0].mxu0 %v4651
        %v4922 = vpop.f32.mrb[0].mxu0
        %v4923 = vadd.f32 0.0, %v4922
        %v4924 = vpop.f32.mrb[0].mxu0
        %v4925 = vadd.f32 0.0, %v4924
        %v4926 = vpop.f32.mrb[0].mxu0
        %v4927 = vadd.f32 0.0, %v4926
        %v4928 = vpop.f32.mrb[0].mxu0
        %v4929 = vadd.f32 0.0, %v4928
        %4930 = vmatprep.mubr.bf16.mxu0 0
        %4931 = vmatmul.mubr.bf16.gmra.mrb[0].mxu0 %v4653
        %v4932 = vpop.f32.mrb[0].mxu0
        %v4933 = vadd.f32 0.0, %v4932
        %v4934 = vpop.f32.mrb[0].mxu0
        %v4935 = vadd.f32 0.0, %v4934
        %v4936 = vpop.f32.mrb[0].mxu0
        %v4937 = vadd.f32 0.0, %v4936
        %v4938 = vpop.f32.mrb[0].mxu0
        %v4939 = vadd.f32 0.0, %v4938
        %4940 = vmatprep.mubr.bf16.mxu0 0
        %4941 = vmatmul.mubr.bf16.gmra.mrb[0].mxu0 %v4655
        %v4942 = vpop.f32.mrb[0].mxu0
        %v4943 = vadd.f32 0.0, %v4942
        %v4944 = vpop.f32.mrb[0].mxu0
        %v4945 = vadd.f32 0.0, %v4944
        %v4946 = vpop.f32.mrb[0].mxu0
        %v4947 = vadd.f32 0.0, %v4946
        %v4948 = vpop.f32.mrb[0].mxu0
        %v4949 = vadd.f32 0.0, %v4948
        %4950 = vmatprep.mubr.bf16.mxu0 0
        %4951 = vmatmul.mubr.bf16.gmra.mrb[0].mxu0 %v4657
        %v4952 = vpop.f32.mrb[0].mxu0
        %v4953 = vadd.f32 0.0, %v4952
        %v4954 = vpop.f32.mrb[0].mxu0
        %v4955 = vadd.f32 0.0, %v4954
        %v4956 = vpop.f32.mrb[0].mxu0
        %v4957 = vadd.f32 0.0, %v4956
        %v4958 = vpop.f32.mrb[0].mxu0
        %v4959 = vadd.f32 0.0, %v4958
        %4960 = vmatprep.mubr.bf16.mxu0 0
        %4961 = vmatmul.mubr.bf16.gmra.mrb[0].mxu0 %v4659
        %v4962 = vpop.f32.mrb[0].mxu0
        %v4963 = vadd.f32 0.0, %v4962
        %v4964 = vpop.f32.mrb[0].mxu0
        %v4965 = vadd.f32 0.0, %v4964
        %v4966 = vpop.f32.mrb[0].mxu0
        %v4967 = vadd.f32 0.0, %v4966
        %v4968 = vpop.f32.mrb[0].mxu0
        %v4969 = vadd.f32 0.0, %v4968
        %4970 = vdwg.mxu0
        %v4971 = vadd.f32 %v4423, %v4793
        %v4972 = vadd.f32 %v4425, %v4795
        %v4973 = vadd.f32 %v4427, %v4797
        %v4974 = vadd.f32 %v4429, %v4799
        %v4975 = vadd.f32 %v4433, %v4803
        %v4976 = vadd.f32 %v4435, %v4805
        %v4977 = vadd.f32 %v4437, %v4807
        %v4978 = vadd.f32 %v4439, %v4809
        %v4979 = vadd.f32 %v4443, %v4813
        %v4980 = vadd.f32 %v4445, %v4815
        %v4981 = vadd.f32 %v4447, %v4817
        %v4982 = vadd.f32 %v4449, %v4819
        %v4983 = vadd.f32 %v4453, %v4823
        %v4984 = vadd.f32 %v4455, %v4825
        %v4985 = vadd.f32 %v4457, %v4827
        %v4986 = vadd.f32 %v4459, %v4829
        %v4987 = vadd.f32 %v4463, %v4833
        %v4988 = vadd.f32 %v4465, %v4835
        %v4989 = vadd.f32 %v4467, %v4837
        %v4990 = vadd.f32 %v4469, %v4839
        %v4991 = vadd.f32 %v4473, %v4843
        %v4992 = vadd.f32 %v4475, %v4845
        %v4993 = vadd.f32 %v4477, %v4847
        %v4994 = vadd.f32 %v4479, %v4849
        %v4995 = vadd.f32 %v4483, %v4853
        %v4996 = vadd.f32 %v4485, %v4855
        %v4997 = vadd.f32 %v4487, %v4857
        %v4998 = vadd.f32 %v4489, %v4859
        %v4999 = vadd.f32 %v4493, %v4863
        %v5000 = vadd.f32 %v4495, %v4865
        %v5001 = vadd.f32 %v4497, %v4867
        %v5002 = vadd.f32 %v4499, %v4869
        %v5003 = vadd.f32 %v4503, %v4873
        %v5004 = vadd.f32 %v4505, %v4875
        %v5005 = vadd.f32 %v4507, %v4877
        %v5006 = vadd.f32 %v4509, %v4879
        %v5007 = vadd.f32 %v4513, %v4883
        %v5008 = vadd.f32 %v4515, %v4885
        %v5009 = vadd.f32 %v4517, %v4887
        %v5010 = vadd.f32 %v4519, %v4889
        %v5011 = vadd.f32 %v4523, %v4893
        %v5012 = vadd.f32 %v4525, %v4895
        %v5013 = vadd.f32 %v4527, %v4897
        %v5014 = vadd.f32 %v4529, %v4899
        %v5015 = vadd.f32 %v4533, %v4903
        %v5016 = vadd.f32 %v4535, %v4905
        %v5017 = vadd.f32 %v4537, %v4907
        %v5018 = vadd.f32 %v4539, %v4909
        %v5019 = vadd.f32 %v4543, %v4913
        %v5020 = vadd.f32 %v4545, %v4915
        %v5021 = vadd.f32 %v4547, %v4917
        %v5022 = vadd.f32 %v4549, %v4919
        %v5023 = vadd.f32 %v4553, %v4923
        %v5024 = vadd.f32 %v4555, %v4925
        %v5025 = vadd.f32 %v4557, %v4927
        %v5026 = vadd.f32 %v4559, %v4929
        %v5027 = vadd.f32 %v4563, %v4933
        %v5028 = vadd.f32 %v4565, %v4935
        %v5029 = vadd.f32 %v4567, %v4937
        %v5030 = vadd.f32 %v4569, %v4939
        %v5031 = vadd.f32 %v4573, %v4943
        %v5032 = vadd.f32 %v4575, %v4945
        %v5033 = vadd.f32 %v4577, %v4947
        %v5034 = vadd.f32 %v4579, %v4949
        %v5035 = vadd.f32 %v4583, %v4953
        %v5036 = vadd.f32 %v4585, %v4955
        %v5037 = vadd.f32 %v4587, %v4957
        %v5038 = vadd.f32 %v4589, %v4959
        %v5039 = vadd.f32 %v4593, %v4963
        %v5040 = vadd.f32 %v4595, %v4965
        %v5041 = vadd.f32 %v4597, %v4967
        %v5042 = vadd.f32 %v4599, %v4969
        %v5043 = vld [vmem:[#allocation2 + $0x8] sm:$0xe]
        %v5044 = vld [vmem:[#allocation2 + $0xc] sm:$0xf]
        %v5045 = vld [vmem:[#allocation2 + $0x10] sm:$0xf]
        %v5046 = vld [vmem:[#allocation2 + $0x14] sm:$0xf]
        %v5047 = vld [vmem:[#allocation2 + $0x18] sm:$0xf]
        %v5048 = vld [vmem:[#allocation2 + $0x1c] sm:$0xf]
        %v5049 = vld [vmem:[#allocation2 + $0x20] sm:$0xf]
        %v5050 = vld [vmem:[#allocation2 + $0x24] sm:$0xf]
        %v5051 = vld [vmem:[#allocation2 + $0x28] sm:$0xf]
        %v5052 = vld [vmem:[#allocation2 + $0x2c] sm:$0xf]
        %v5053 = vld [vmem:[#allocation2 + $0x30] sm:$0xf]
        %v5054 = vld [vmem:[#allocation2 + $0x34] sm:$0xf]
        %v5055 = vld [vmem:[#allocation2 + $0x38] sm:$0xf]
        %v5056 = vld [vmem:[#allocation2 + $0x3c] sm:$0xf]
        %v5057 = vld [vmem:[#allocation2 + $0x40] sm:$0xf]
        %v5058 = vld [vmem:[#allocation2 + $0x44] sm:$0xf]
        %v5059 = vld [vmem:[#allocation2 + $0x48] sm:$0xf]
        %v5060 = vld [vmem:[#allocation2 + $0x4c] sm:$0xf]
        %v5061 = vld [vmem:[#allocation2 + $0x50] sm:$0xf]
        %v5062 = vld [vmem:[#allocation2 + $0x54] sm:$0xf]
        %v5063 = vld [vmem:[#allocation2 + $0x58] sm:$0xf]
        %v5064 = vld [vmem:[#allocation2 + $0x5c] sm:$0xf]
        %v5065 = vld [vmem:[#allocation2 + $0x60] sm:$0xf]
        %v5066 = vld [vmem:[#allocation2 + $0x64] sm:$0xf]
        %v5067 = vld [vmem:[#allocation2 + $0x68] sm:$0xf]
        %v5068 = vld [vmem:[#allocation2 + $0x6c] sm:$0xf]
        %v5069 = vld [vmem:[#allocation2 + $0x70] sm:$0xf]
        %v5070 = vld [vmem:[#allocation2 + $0x74] sm:$0xf]
        %v5071 = vld [vmem:[#allocation2 + $0x78] sm:$0xf]
        %v5072 = vld [vmem:[#allocation2 + $0x7c] sm:$0xf]
        %v5073 = vld [vmem:[#allocation2 + $0x80] sm:$0xf]
        %v5074 = vld [vmem:[#allocation2 + $0x84] sm:$0xf]
        %v5075 = vld [vmem:[#allocation2 + $0x88] sm:$0xf]
        %v5076 = vld [vmem:[#allocation2 + $0x8c] sm:$0xf]
        %v5077 = vld [vmem:[#allocation2 + $0x90] sm:$0xf]
        %v5078 = vld [vmem:[#allocation2 + $0x94] sm:$0xf]
        %v5079 = vld [vmem:[#allocation2 + $0x98] sm:$0x1]
        %s5080 = scalar_lea.vmem %s366, 384
        %v5081 = vld [vmem:[%s5080] sm:$0xff]
        %v5082 = vld [vmem:[%s5080 + $0x8] sm:$0xff]
        %v5083 = vld [vmem:[%s5080 + $0x10] sm:$0xff]
        %v5084 = vld [vmem:[%s5080 + $0x18] sm:$0xff]
        %v5085 = vld [vmem:[%s5080 + $0x20] sm:$0xff]
        %v5086 = vld [vmem:[%s5080 + $0x28] sm:$0xff]
        %v5087 = vld [vmem:[%s5080 + $0x30] sm:$0xff]
        %v5088 = vld [vmem:[%s5080 + $0x38] sm:$0xff]
        %v5089 = vld [vmem:[%s5080 + $0x40] sm:$0xff]
        %v5090 = vld [vmem:[%s5080 + $0x48] sm:$0xff]
        %v5091 = vld [vmem:[%s5080 + $0x50] sm:$0xff]
        %v5092 = vld [vmem:[%s5080 + $0x58] sm:$0xff]
        %v5093 = vld [vmem:[%s5080 + $0x60] sm:$0xff]
        %v5094 = vld [vmem:[%s5080 + $0x68] sm:$0xff]
        %v5095 = vld [vmem:[%s5080 + $0x70] sm:$0xff]
        %v5096 = vld [vmem:[%s5080 + $0x78] sm:$0xff]
        %v5134 = vunpack.c.l.b16 %v5043
        %v5135 = vunpack.c.l.b16 %v5044
        %v5136 = vunpack.c.l.b16 %v5045
        %v5137 = vunpack.c.l.b16 %v5046
        %v5138 = vunpack.c.l.b16 %v5047
        %v5139 = vunpack.c.l.b16 %v5048
        %v5140 = vunpack.c.l.b16 %v5049
        %v5141 = vunpack.c.l.b16 %v5050
        %v5142 = vunpack.c.l.b16 %v5051
        %v5143 = vunpack.c.l.b16 %v5052
        %v5144 = vunpack.c.l.b16 %v5053
        %v5145 = vunpack.c.l.b16 %v5054
        %v5146 = vunpack.c.l.b16 %v5055
        %v5147 = vunpack.c.l.b16 %v5056
        %v5148 = vunpack.c.l.b16 %v5057
        %v5149 = vunpack.c.l.b16 %v5058
        %v5150 = vunpack.c.l.b16 %v5059
        %v5151 = vunpack.c.l.b16 %v5060
        %v5152 = vunpack.c.l.b16 %v5061
        %v5153 = vunpack.c.l.b16 %v5062
        %v5154 = vunpack.c.l.b16 %v5063
        %v5155 = vunpack.c.l.b16 %v5064
        %v5156 = vunpack.c.l.b16 %v5065
        %v5157 = vunpack.c.l.b16 %v5066
        %v5158 = vunpack.c.l.b16 %v5067
        %v5159 = vunpack.c.l.b16 %v5068
        %v5160 = vunpack.c.l.b16 %v5069
        %v5161 = vunpack.c.l.b16 %v5070
        %v5162 = vunpack.c.l.b16 %v5071
        %v5163 = vunpack.c.l.b16 %v5072
        %v5164 = vunpack.c.l.b16 %v5073
        %v5165 = vunpack.c.l.b16 %v5074
        %v5166 = vunpack.c.l.b16 %v5075
        %v5167 = vunpack.c.l.b16 %v5076
        %v5168 = vunpack.c.l.b16 %v5077
        %v5169 = vunpack.c.l.b16 %v5078
        %v5170 = vunpack.c.l.b16 %v5079
        %v5171 = vpack.c.b16 %v5135, %v5134
        %v5172 = vpack.c.b16 %v5137, %v5136
        %v5173 = vpack.c.b16 %v5139, %v5138
        %v5174 = vpack.c.b16 %v5141, %v5140
        %v5175 = vpack.c.b16 %v5143, %v5142
        %v5176 = vpack.c.b16 %v5145, %v5144
        %v5177 = vpack.c.b16 %v5147, %v5146
        %v5178 = vpack.c.b16 %v5149, %v5148
        %v5179 = vpack.c.b16 %v5151, %v5150
        %v5180 = vpack.c.b16 %v5153, %v5152
        %v5181 = vpack.c.b16 %v5155, %v5154
        %v5182 = vpack.c.b16 %v5157, %v5156
        %v5183 = vpack.c.b16 %v5159, %v5158
        %v5184 = vpack.c.b16 %v5161, %v5160
        %v5185 = vpack.c.b16 %v5163, %v5162
        %v5186 = vpack.c.b16 %v5165, %v5164
        %v5187 = vpack.c.b16 %v5167, %v5166
        %v5188 = vpack.c.b16 %v5169, %v5168
        %v5189 = vpack.c.b16 %v5170, %v5170
        %v5190 = vrot.slane %v5171, 1
        %v5191 = vrot.slane %v5172, 1
        %v5192 = vsel %vm4622, %v5190, %v5191
        %v5193 = vrot.slane %v5173, 1
        %v5194 = vsel %vm4622, %v5191, %v5193
        %v5195 = vrot.slane %v5174, 1
        %v5196 = vsel %vm4622, %v5193, %v5195
        %v5197 = vrot.slane %v5175, 1
        %v5198 = vsel %vm4622, %v5195, %v5197
        %v5199 = vrot.slane %v5176, 1
        %v5200 = vsel %vm4622, %v5197, %v5199
        %v5201 = vrot.slane %v5177, 1
        %v5202 = vsel %vm4622, %v5199, %v5201
        %v5203 = vrot.slane %v5178, 1
        %v5204 = vsel %vm4622, %v5201, %v5203
        %v5205 = vrot.slane %v5179, 1
        %v5206 = vsel %vm4622, %v5203, %v5205
        %v5207 = vrot.slane %v5180, 1
        %v5208 = vsel %vm4622, %v5205, %v5207
        %v5209 = vrot.slane %v5181, 1
        %v5210 = vsel %vm4622, %v5207, %v5209
        %v5211 = vrot.slane %v5182, 1
        %v5212 = vsel %vm4622, %v5209, %v5211
        %v5213 = vrot.slane %v5183, 1
        %v5214 = vsel %vm4622, %v5211, %v5213
        %v5215 = vrot.slane %v5184, 1
        %v5216 = vsel %vm4622, %v5213, %v5215
        %v5217 = vrot.slane %v5185, 1
        %v5218 = vsel %vm4622, %v5215, %v5217
        %v5219 = vrot.slane %v5186, 1
        %v5220 = vsel %vm4622, %v5217, %v5219
        %v5221 = vrot.slane %v5187, 1
        %v5222 = vsel %vm4622, %v5219, %v5221
        %v5223 = vrot.slane %v5188, 1
        %v5224 = vsel %vm4622, %v5221, %v5223
        %v5225 = vrot.slane %v5189, 1
        %v5226 = vsel %vm4622, %v5223, %v5225
        %v5261 = vunpack.c.l.b16 %v5081
        %v5262 = vunpack.c.h.b16 %v5081
        %v5263 = vunpack.c.l.b16 %v5082
        %v5264 = vunpack.c.h.b16 %v5082
        %v5265 = vunpack.c.l.b16 %v5083
        %v5266 = vunpack.c.h.b16 %v5083
        %v5267 = vunpack.c.l.b16 %v5084
        %v5268 = vunpack.c.h.b16 %v5084
        %v5269 = vunpack.c.l.b16 %v5085
        %v5270 = vunpack.c.h.b16 %v5085
        %v5271 = vunpack.c.l.b16 %v5086
        %v5272 = vunpack.c.h.b16 %v5086
        %v5273 = vunpack.c.l.b16 %v5087
        %v5274 = vunpack.c.h.b16 %v5087
        %v5275 = vunpack.c.l.b16 %v5088
        %v5276 = vunpack.c.h.b16 %v5088
        %v5277 = vunpack.c.l.b16 %v5089
        %v5278 = vunpack.c.h.b16 %v5089
        %v5279 = vunpack.c.l.b16 %v5090
        %v5280 = vunpack.c.h.b16 %v5090
        %v5281 = vunpack.c.l.b16 %v5091
        %v5282 = vunpack.c.h.b16 %v5091
        %v5283 = vunpack.c.l.b16 %v5092
        %v5284 = vunpack.c.h.b16 %v5092
        %v5285 = vunpack.c.l.b16 %v5093
        %v5286 = vunpack.c.h.b16 %v5093
        %v5287 = vunpack.c.l.b16 %v5094
        %v5288 = vunpack.c.h.b16 %v5094
        %v5289 = vunpack.c.l.b16 %v5095
        %v5290 = vunpack.c.h.b16 %v5095
        %v5291 = vunpack.c.l.b16 %v5096
        %v5292 = vunpack.c.h.b16 %v5096
        %v5293 = vpack.c.b16 %v5263, %v5261
        %v5294 = vpack.c.b16 %v5264, %v5262
        %v5295 = vpack.c.b16 %v5267, %v5265
        %v5296 = vpack.c.b16 %v5268, %v5266
        %v5297 = vpack.c.b16 %v5271, %v5269
        %v5298 = vpack.c.b16 %v5272, %v5270
        %v5299 = vpack.c.b16 %v5275, %v5273
        %v5300 = vpack.c.b16 %v5276, %v5274
        %v5301 = vpack.c.b16 %v5279, %v5277
        %v5302 = vpack.c.b16 %v5280, %v5278
        %v5303 = vpack.c.b16 %v5283, %v5281
        %v5304 = vpack.c.b16 %v5284, %v5282
        %v5305 = vpack.c.b16 %v5287, %v5285
        %v5306 = vpack.c.b16 %v5288, %v5286
        %v5307 = vpack.c.b16 %v5291, %v5289
        %v5308 = vpack.c.b16 %v5292, %v5290
        %5325 = vmatprep.subr.bf16.mxu0 %v5294
        %5326 = vmatpush1.bf16.msra.mxu0 %v5293
        %5327 = vmatprep.subr.bf16.mxu0 %v5296
        %5328 = vmatpush1.bf16.msra.mxu0 %v5295
        %5329 = vmatprep.subr.bf16.mxu0 %v5298
        %5330 = vmatpush1.bf16.msra.mxu0 %v5297
        %5331 = vmatprep.subr.bf16.mxu0 %v5300
        %5332 = vmatpush1.bf16.msra.mxu0 %v5299
        %5333 = vmatprep.subr.bf16.mxu0 %v5302
        %5334 = vmatpush1.bf16.msra.mxu0 %v5301
        %5335 = vmatprep.subr.bf16.mxu0 %v5304
        %5336 = vmatpush1.bf16.msra.mxu0 %v5303
        %5337 = vmatprep.subr.bf16.mxu0 %v5306
        %5338 = vmatpush1.bf16.msra.mxu0 %v5305
        %5339 = vmatprep.subr.bf16.mxu0 %v5308
        %5340 = vmatpush1.bf16.msra.mxu0 %v5307
        %5341 = vmatprep.subr.bf16.mxu0 0
        %5342 = vmatpush1.bf16.msra.mxu0 0
        %5343 = vmatprep.subr.bf16.mxu0 0
        %5344 = vmatpush1.bf16.msra.mxu0 0
        %5345 = vmatprep.subr.bf16.mxu0 0
        %5346 = vmatpush1.bf16.msra.mxu0 0
        %5347 = vmatprep.subr.bf16.mxu0 0
        %5348 = vmatpush1.bf16.msra.mxu0 0
        %5349 = vmatprep.subr.bf16.mxu0 0
        %5350 = vmatpush1.bf16.msra.mxu0 0
        %5351 = vmatprep.subr.bf16.mxu0 0
        %5352 = vmatpush1.bf16.msra.mxu0 0
        %5353 = vmatprep.subr.bf16.mxu0 0
        %5354 = vmatpush1.bf16.msra.mxu0 0
        %5355 = vmatprep.subr.bf16.mxu0 0
        %5356 = vmatpush1.bf16.msra.mxu0 0
        %5357 = vmatprep.mubr.bf16.mxu0 0
        %5358 = vmatmul.mubr.bf16.gmra.mrb[0].mxu0 %v5192
        %v5359 = vpop.f32.mrb[0].mxu0
        %v5360 = vadd.f32 0.0, %v5359
        %v5361 = vpop.f32.mrb[0].mxu0
        %v5362 = vadd.f32 0.0, %v5361
        %v5363 = vpop.f32.mrb[0].mxu0
        %v5364 = vadd.f32 0.0, %v5363
        %v5365 = vpop.f32.mrb[0].mxu0
        %v5366 = vadd.f32 0.0, %v5365
        %5367 = vmatprep.mubr.bf16.mxu0 0
        %5368 = vmatmul.mubr.bf16.gmra.mrb[0].mxu0 %v5194
        %v5369 = vpop.f32.mrb[0].mxu0
        %v5370 = vadd.f32 0.0, %v5369
        %v5371 = vpop.f32.mrb[0].mxu0
        %v5372 = vadd.f32 0.0, %v5371
        %v5373 = vpop.f32.mrb[0].mxu0
        %v5374 = vadd.f32 0.0, %v5373
        %v5375 = vpop.f32.mrb[0].mxu0
        %v5376 = vadd.f32 0.0, %v5375
        %5377 = vmatprep.mubr.bf16.mxu0 0
        %5378 = vmatmul.mubr.bf16.gmra.mrb[0].mxu0 %v5196
        %v5379 = vpop.f32.mrb[0].mxu0
        %v5380 = vadd.f32 0.0, %v5379
        %v5381 = vpop.f32.mrb[0].mxu0
        %v5382 = vadd.f32 0.0, %v5381
        %v5383 = vpop.f32.mrb[0].mxu0
        %v5384 = vadd.f32 0.0, %v5383
        %v5385 = vpop.f32.mrb[0].mxu0
        %v5386 = vadd.f32 0.0, %v5385
        %5387 = vmatprep.mubr.bf16.mxu0 0
        %5388 = vmatmul.mubr.bf16.gmra.mrb[0].mxu0 %v5198
        %v5389 = vpop.f32.mrb[0].mxu0
        %v5390 = vadd.f32 0.0, %v5389
        %v5391 = vpop.f32.mrb[0].mxu0
        %v5392 = vadd.f32 0.0, %v5391
        %v5393 = vpop.f32.mrb[0].mxu0
        %v5394 = vadd.f32 0.0, %v5393
        %v5395 = vpop.f32.mrb[0].mxu0
        %v5396 = vadd.f32 0.0, %v5395
        %5397 = vmatprep.mubr.bf16.mxu0 0
        %5398 = vmatmul.mubr.bf16.gmra.mrb[0].mxu0 %v5200
        %v5399 = vpop.f32.mrb[0].mxu0
        %v5400 = vadd.f32 0.0, %v5399
        %v5401 = vpop.f32.mrb[0].mxu0
        %v5402 = vadd.f32 0.0, %v5401
        %v5403 = vpop.f32.mrb[0].mxu0
        %v5404 = vadd.f32 0.0, %v5403
        %v5405 = vpop.f32.mrb[0].mxu0
        %v5406 = vadd.f32 0.0, %v5405
        %5407 = vmatprep.mubr.bf16.mxu0 0
        %5408 = vmatmul.mubr.bf16.gmra.mrb[0].mxu0 %v5202
        %v5409 = vpop.f32.mrb[0].mxu0
        %v5410 = vadd.f32 0.0, %v5409
        %v5411 = vpop.f32.mrb[0].mxu0
        %v5412 = vadd.f32 0.0, %v5411
        %v5413 = vpop.f32.mrb[0].mxu0
        %v5414 = vadd.f32 0.0, %v5413
        %v5415 = vpop.f32.mrb[0].mxu0
        %v5416 = vadd.f32 0.0, %v5415
        %5417 = vmatprep.mubr.bf16.mxu0 0
        %5418 = vmatmul.mubr.bf16.gmra.mrb[0].mxu0 %v5204
        %v5419 = vpop.f32.mrb[0].mxu0
        %v5420 = vadd.f32 0.0, %v5419
        %v5421 = vpop.f32.mrb[0].mxu0
        %v5422 = vadd.f32 0.0, %v5421
        %v5423 = vpop.f32.mrb[0].mxu0
        %v5424 = vadd.f32 0.0, %v5423
        %v5425 = vpop.f32.mrb[0].mxu0
        %v5426 = vadd.f32 0.0, %v5425
        %5427 = vmatprep.mubr.bf16.mxu0 0
        %5428 = vmatmul.mubr.bf16.gmra.mrb[0].mxu0 %v5206
        %v5429 = vpop.f32.mrb[0].mxu0
        %v5430 = vadd.f32 0.0, %v5429
        %v5431 = vpop.f32.mrb[0].mxu0
        %v5432 = vadd.f32 0.0, %v5431
        %v5433 = vpop.f32.mrb[0].mxu0
        %v5434 = vadd.f32 0.0, %v5433
        %v5435 = vpop.f32.mrb[0].mxu0
        %v5436 = vadd.f32 0.0, %v5435
        %5437 = vmatprep.mubr.bf16.mxu0 0
        %5438 = vmatmul.mubr.bf16.gmra.mrb[0].mxu0 %v5208
        %v5439 = vpop.f32.mrb[0].mxu0
        %v5440 = vadd.f32 0.0, %v5439
        %v5441 = vpop.f32.mrb[0].mxu0
        %v5442 = vadd.f32 0.0, %v5441
        %v5443 = vpop.f32.mrb[0].mxu0
        %v5444 = vadd.f32 0.0, %v5443
        %v5445 = vpop.f32.mrb[0].mxu0
        %v5446 = vadd.f32 0.0, %v5445
        %5447 = vmatprep.mubr.bf16.mxu0 0
        %5448 = vmatmul.mubr.bf16.gmra.mrb[0].mxu0 %v5210
        %v5449 = vpop.f32.mrb[0].mxu0
        %v5450 = vadd.f32 0.0, %v5449
        %v5451 = vpop.f32.mrb[0].mxu0
        %v5452 = vadd.f32 0.0, %v5451
        %v5453 = vpop.f32.mrb[0].mxu0
        %v5454 = vadd.f32 0.0, %v5453
        %v5455 = vpop.f32.mrb[0].mxu0
        %v5456 = vadd.f32 0.0, %v5455
        %5457 = vmatprep.mubr.bf16.mxu0 0
        %5458 = vmatmul.mubr.bf16.gmra.mrb[0].mxu0 %v5212
        %v5459 = vpop.f32.mrb[0].mxu0
        %v5460 = vadd.f32 0.0, %v5459
        %v5461 = vpop.f32.mrb[0].mxu0
        %v5462 = vadd.f32 0.0, %v5461
        %v5463 = vpop.f32.mrb[0].mxu0
        %v5464 = vadd.f32 0.0, %v5463
        %v5465 = vpop.f32.mrb[0].mxu0
        %v5466 = vadd.f32 0.0, %v5465
        %5467 = vmatprep.mubr.bf16.mxu0 0
        %5468 = vmatmul.mubr.bf16.gmra.mrb[0].mxu0 %v5214
        %v5469 = vpop.f32.mrb[0].mxu0
        %v5470 = vadd.f32 0.0, %v5469
        %v5471 = vpop.f32.mrb[0].mxu0
        %v5472 = vadd.f32 0.0, %v5471
        %v5473 = vpop.f32.mrb[0].mxu0
        %v5474 = vadd.f32 0.0, %v5473
        %v5475 = vpop.f32.mrb[0].mxu0
        %v5476 = vadd.f32 0.0, %v5475
        %5477 = vmatprep.mubr.bf16.mxu0 0
        %5478 = vmatmul.mubr.bf16.gmra.mrb[0].mxu0 %v5216
        %v5479 = vpop.f32.mrb[0].mxu0
        %v5480 = vadd.f32 0.0, %v5479
        %v5481 = vpop.f32.mrb[0].mxu0
        %v5482 = vadd.f32 0.0, %v5481
        %v5483 = vpop.f32.mrb[0].mxu0
        %v5484 = vadd.f32 0.0, %v5483
        %v5485 = vpop.f32.mrb[0].mxu0
        %v5486 = vadd.f32 0.0, %v5485
        %5487 = vmatprep.mubr.bf16.mxu0 0
        %5488 = vmatmul.mubr.bf16.gmra.mrb[0].mxu0 %v5218
        %v5489 = vpop.f32.mrb[0].mxu0
        %v5490 = vadd.f32 0.0, %v5489
        %v5491 = vpop.f32.mrb[0].mxu0
        %v5492 = vadd.f32 0.0, %v5491
        %v5493 = vpop.f32.mrb[0].mxu0
        %v5494 = vadd.f32 0.0, %v5493
        %v5495 = vpop.f32.mrb[0].mxu0
        %v5496 = vadd.f32 0.0, %v5495
        %5497 = vmatprep.mubr.bf16.mxu0 0
        %5498 = vmatmul.mubr.bf16.gmra.mrb[0].mxu0 %v5220
        %v5499 = vpop.f32.mrb[0].mxu0
        %v5500 = vadd.f32 0.0, %v5499
        %v5501 = vpop.f32.mrb[0].mxu0
        %v5502 = vadd.f32 0.0, %v5501
        %v5503 = vpop.f32.mrb[0].mxu0
        %v5504 = vadd.f32 0.0, %v5503
        %v5505 = vpop.f32.mrb[0].mxu0
        %v5506 = vadd.f32 0.0, %v5505
        %5507 = vmatprep.mubr.bf16.mxu0 0
        %5508 = vmatmul.mubr.bf16.gmra.mrb[0].mxu0 %v5222
        %v5509 = vpop.f32.mrb[0].mxu0
        %v5510 = vadd.f32 0.0, %v5509
        %v5511 = vpop.f32.mrb[0].mxu0
        %v5512 = vadd.f32 0.0, %v5511
        %v5513 = vpop.f32.mrb[0].mxu0
        %v5514 = vadd.f32 0.0, %v5513
        %v5515 = vpop.f32.mrb[0].mxu0
        %v5516 = vadd.f32 0.0, %v5515
        %5517 = vmatprep.mubr.bf16.mxu0 0
        %5518 = vmatmul.mubr.bf16.gmra.mrb[0].mxu0 %v5224
        %v5519 = vpop.f32.mrb[0].mxu0
        %v5520 = vadd.f32 0.0, %v5519
        %v5521 = vpop.f32.mrb[0].mxu0
        %v5522 = vadd.f32 0.0, %v5521
        %v5523 = vpop.f32.mrb[0].mxu0
        %v5524 = vadd.f32 0.0, %v5523
        %v5525 = vpop.f32.mrb[0].mxu0
        %v5526 = vadd.f32 0.0, %v5525
        %5527 = vmatprep.mubr.bf16.mxu0 0
        %5528 = vmatmul.mubr.bf16.gmra.mrb[0].mxu0 %v5226
        %v5529 = vpop.f32.mrb[0].mxu0
        %v5530 = vadd.f32 0.0, %v5529
        %v5531 = vpop.f32.mrb[0].mxu0
        %v5532 = vadd.f32 0.0, %v5531
        %v5533 = vpop.f32.mrb[0].mxu0
        %v5534 = vadd.f32 0.0, %v5533
        %v5535 = vpop.f32.mrb[0].mxu0
        %v5536 = vadd.f32 0.0, %v5535
        %5537 = vdwg.mxu0
        %v5538 = vadd.f32 %v4971, %v5360
        %v5539 = vadd.f32 %v4972, %v5362
        %v5540 = vadd.f32 %v4973, %v5364
        %v5541 = vadd.f32 %v4974, %v5366
        %v5542 = vadd.f32 %v4975, %v5370
        %v5543 = vadd.f32 %v4976, %v5372
        %v5544 = vadd.f32 %v4977, %v5374
        %v5545 = vadd.f32 %v4978, %v5376
        %v5546 = vadd.f32 %v4979, %v5380
        %v5547 = vadd.f32 %v4980, %v5382
        %v5548 = vadd.f32 %v4981, %v5384
        %v5549 = vadd.f32 %v4982, %v5386
        %v5550 = vadd.f32 %v4983, %v5390
        %v5551 = vadd.f32 %v4984, %v5392
        %v5552 = vadd.f32 %v4985, %v5394
        %v5553 = vadd.f32 %v4986, %v5396
        %v5554 = vadd.f32 %v4987, %v5400
        %v5555 = vadd.f32 %v4988, %v5402
        %v5556 = vadd.f32 %v4989, %v5404
        %v5557 = vadd.f32 %v4990, %v5406
        %v5558 = vadd.f32 %v4991, %v5410
        %v5559 = vadd.f32 %v4992, %v5412
        %v5560 = vadd.f32 %v4993, %v5414
        %v5561 = vadd.f32 %v4994, %v5416
        %v5562 = vadd.f32 %v4995, %v5420
        %v5563 = vadd.f32 %v4996, %v5422
        %v5564 = vadd.f32 %v4997, %v5424
        %v5565 = vadd.f32 %v4998, %v5426
        %v5566 = vadd.f32 %v4999, %v5430
        %v5567 = vadd.f32 %v5000, %v5432
        %v5568 = vadd.f32 %v5001, %v5434
        %v5569 = vadd.f32 %v5002, %v5436
        %v5570 = vadd.f32 %v5003, %v5440
        %v5571 = vadd.f32 %v5004, %v5442
        %v5572 = vadd.f32 %v5005, %v5444
        %v5573 = vadd.f32 %v5006, %v5446
        %v5574 = vadd.f32 %v5007, %v5450
        %v5575 = vadd.f32 %v5008, %v5452
        %v5576 = vadd.f32 %v5009, %v5454
        %v5577 = vadd.f32 %v5010, %v5456
        %v5578 = vadd.f32 %v5011, %v5460
        %v5579 = vadd.f32 %v5012, %v5462
        %v5580 = vadd.f32 %v5013, %v5464
        %v5581 = vadd.f32 %v5014, %v5466
        %v5582 = vadd.f32 %v5015, %v5470
        %v5583 = vadd.f32 %v5016, %v5472
        %v5584 = vadd.f32 %v5017, %v5474
        %v5585 = vadd.f32 %v5018, %v5476
        %v5586 = vadd.f32 %v5019, %v5480
        %v5587 = vadd.f32 %v5020, %v5482
        %v5588 = vadd.f32 %v5021, %v5484
        %v5589 = vadd.f32 %v5022, %v5486
        %v5590 = vadd.f32 %v5023, %v5490
        %v5591 = vadd.f32 %v5024, %v5492
        %v5592 = vadd.f32 %v5025, %v5494
        %v5593 = vadd.f32 %v5026, %v5496
        %v5594 = vadd.f32 %v5027, %v5500
        %v5595 = vadd.f32 %v5028, %v5502
        %v5596 = vadd.f32 %v5029, %v5504
        %v5597 = vadd.f32 %v5030, %v5506
        %v5598 = vadd.f32 %v5031, %v5510
        %v5599 = vadd.f32 %v5032, %v5512
        %v5600 = vadd.f32 %v5033, %v5514
        %v5601 = vadd.f32 %v5034, %v5516
        %v5602 = vadd.f32 %v5035, %v5520
        %v5603 = vadd.f32 %v5036, %v5522
        %v5604 = vadd.f32 %v5037, %v5524
        %v5605 = vadd.f32 %v5038, %v5526
        %v5606 = vadd.f32 %v5039, %v5530
        %v5607 = vadd.f32 %v5040, %v5532
        %v5608 = vadd.f32 %v5041, %v5534
        %v5609 = vadd.f32 %v5042, %v5536
        %v5610 = vld [vmem:[#allocation2 + $0x98] sm:$0x3]
        %s5611 = scalar_lea.vmem %s366, 512
        %v5612 = vld [vmem:[%s5611] sm:$0xff]
        %v5613 = vld [vmem:[%s5611 + $0x8] sm:$0xff]
        %v5614 = vld [vmem:[%s5611 + $0x10] sm:$0xff]
        %v5615 = vld [vmem:[%s5611 + $0x18] sm:$0xff]
        %v5616 = vld [vmem:[%s5611 + $0x20] sm:$0xff]
        %v5617 = vld [vmem:[%s5611 + $0x28] sm:$0xff]
        %v5618 = vld [vmem:[%s5611 + $0x30] sm:$0xff]
        %v5619 = vld [vmem:[%s5611 + $0x38] sm:$0xff]
        %v5620 = vld [vmem:[%s5611 + $0x40] sm:$0xff]
        %v5621 = vld [vmem:[%s5611 + $0x48] sm:$0xff]
        %v5622 = vld [vmem:[%s5611 + $0x50] sm:$0xff]
        %v5623 = vld [vmem:[%s5611 + $0x58] sm:$0xff]
        %v5624 = vld [vmem:[%s5611 + $0x60] sm:$0xff]
        %v5625 = vld [vmem:[%s5611 + $0x68] sm:$0xff]
        %v5626 = vld [vmem:[%s5611 + $0x70] sm:$0xff]
        %v5627 = vld [vmem:[%s5611 + $0x78] sm:$0xff]
        %v5629 = vunpack.c.l.b16 %v5610
        %v5630 = vpack.c.b16 %v5629, %v5629
        %vm5631 = vsmask.f32 6400
        %v5633 = vshrl.u32 %v5171, 16
        %v5635 = vrot.slane %v5633, 1
        %v5636 = vshll.u32 %v5171, 16
        %v5638 = vrot.slane %v5636, 2
        %v5639 = vor.u32 %v5635, %v5638
        %v5641 = vshrl.u32 %v5172, 16
        %v5643 = vrot.slane %v5641, 1
        %v5644 = vshll.u32 %v5172, 16
        %v5646 = vrot.slane %v5644, 2
        %v5647 = vor.u32 %v5643, %v5646
        %v5648 = vsel %vm5631, %v5639, %v5647
        %v5650 = vshrl.u32 %v5173, 16
        %v5652 = vrot.slane %v5650, 1
        %v5653 = vshll.u32 %v5173, 16
        %v5655 = vrot.slane %v5653, 2
        %v5656 = vor.u32 %v5652, %v5655
        %v5657 = vsel %vm5631, %v5647, %v5656
        %v5659 = vshrl.u32 %v5174, 16
        %v5661 = vrot.slane %v5659, 1
        %v5662 = vshll.u32 %v5174, 16
        %v5664 = vrot.slane %v5662, 2
        %v5665 = vor.u32 %v5661, %v5664
        %v5666 = vsel %vm5631, %v5656, %v5665
        %v5668 = vshrl.u32 %v5175, 16
        %v5670 = vrot.slane %v5668, 1
        %v5671 = vshll.u32 %v5175, 16
        %v5673 = vrot.slane %v5671, 2
        %v5674 = vor.u32 %v5670, %v5673
        %v5675 = vsel %vm5631, %v5665, %v5674
        %v5677 = vshrl.u32 %v5176, 16
        %v5679 = vrot.slane %v5677, 1
        %v5680 = vshll.u32 %v5176, 16
        %v5682 = vrot.slane %v5680, 2
        %v5683 = vor.u32 %v5679, %v5682
        %v5684 = vsel %vm5631, %v5674, %v5683
        %v5686 = vshrl.u32 %v5177, 16
        %v5688 = vrot.slane %v5686, 1
        %v5689 = vshll.u32 %v5177, 16
        %v5691 = vrot.slane %v5689, 2
        %v5692 = vor.u32 %v5688, %v5691
        %v5693 = vsel %vm5631, %v5683, %v5692
        %v5695 = vshrl.u32 %v5178, 16
        %v5697 = vrot.slane %v5695, 1
        %v5698 = vshll.u32 %v5178, 16
        %v5700 = vrot.slane %v5698, 2
        %v5701 = vor.u32 %v5697, %v5700
        %v5702 = vsel %vm5631, %v5692, %v5701
        %v5704 = vshrl.u32 %v5179, 16
        %v5706 = vrot.slane %v5704, 1
        %v5707 = vshll.u32 %v5179, 16
        %v5709 = vrot.slane %v5707, 2
        %v5710 = vor.u32 %v5706, %v5709
        %v5711 = vsel %vm5631, %v5701, %v5710
        %v5713 = vshrl.u32 %v5180, 16
        %v5715 = vrot.slane %v5713, 1
        %v5716 = vshll.u32 %v5180, 16
        %v5718 = vrot.slane %v5716, 2
        %v5719 = vor.u32 %v5715, %v5718
        %v5720 = vsel %vm5631, %v5710, %v5719
        %v5722 = vshrl.u32 %v5181, 16
        %v5724 = vrot.slane %v5722, 1
        %v5725 = vshll.u32 %v5181, 16
        %v5727 = vrot.slane %v5725, 2
        %v5728 = vor.u32 %v5724, %v5727
        %v5729 = vsel %vm5631, %v5719, %v5728
        %v5731 = vshrl.u32 %v5182, 16
        %v5733 = vrot.slane %v5731, 1
        %v5734 = vshll.u32 %v5182, 16
        %v5736 = vrot.slane %v5734, 2
        %v5737 = vor.u32 %v5733, %v5736
        %v5738 = vsel %vm5631, %v5728, %v5737
        %v5740 = vshrl.u32 %v5183, 16
        %v5742 = vrot.slane %v5740, 1
        %v5743 = vshll.u32 %v5183, 16
        %v5745 = vrot.slane %v5743, 2
        %v5746 = vor.u32 %v5742, %v5745
        %v5747 = vsel %vm5631, %v5737, %v5746
        %v5749 = vshrl.u32 %v5184, 16
        %v5751 = vrot.slane %v5749, 1
        %v5752 = vshll.u32 %v5184, 16
        %v5754 = vrot.slane %v5752, 2
        %v5755 = vor.u32 %v5751, %v5754
        %v5756 = vsel %vm5631, %v5746, %v5755
        %v5758 = vshrl.u32 %v5185, 16
        %v5760 = vrot.slane %v5758, 1
        %v5761 = vshll.u32 %v5185, 16
        %v5763 = vrot.slane %v5761, 2
        %v5764 = vor.u32 %v5760, %v5763
        %v5765 = vsel %vm5631, %v5755, %v5764
        %v5767 = vshrl.u32 %v5186, 16
        %v5769 = vrot.slane %v5767, 1
        %v5770 = vshll.u32 %v5186, 16
        %v5772 = vrot.slane %v5770, 2
        %v5773 = vor.u32 %v5769, %v5772
        %v5774 = vsel %vm5631, %v5764, %v5773
        %v5776 = vshrl.u32 %v5187, 16
        %v5778 = vrot.slane %v5776, 1
        %v5779 = vshll.u32 %v5187, 16
        %v5781 = vrot.slane %v5779, 2
        %v5782 = vor.u32 %v5778, %v5781
        %v5783 = vsel %vm5631, %v5773, %v5782
        %v5785 = vshrl.u32 %v5188, 16
        %v5787 = vrot.slane %v5785, 1
        %v5788 = vshll.u32 %v5188, 16
        %v5790 = vrot.slane %v5788, 2
        %v5791 = vor.u32 %v5787, %v5790
        %v5792 = vsel %vm5631, %v5782, %v5791
        %v5794 = vshrl.u32 %v5630, 16
        %v5796 = vrot.slane %v5794, 1
        %v5797 = vshll.u32 %v5630, 16
        %v5799 = vrot.slane %v5797, 2
        %v5800 = vor.u32 %v5796, %v5799
        %v5801 = vsel %vm5631, %v5791, %v5800
        %v5836 = vunpack.c.l.b16 %v5612
        %v5837 = vunpack.c.h.b16 %v5612
        %v5838 = vunpack.c.l.b16 %v5613
        %v5839 = vunpack.c.h.b16 %v5613
        %v5840 = vunpack.c.l.b16 %v5614
        %v5841 = vunpack.c.h.b16 %v5614
        %v5842 = vunpack.c.l.b16 %v5615
        %v5843 = vunpack.c.h.b16 %v5615
        %v5844 = vunpack.c.l.b16 %v5616
        %v5845 = vunpack.c.h.b16 %v5616
        %v5846 = vunpack.c.l.b16 %v5617
        %v5847 = vunpack.c.h.b16 %v5617
        %v5848 = vunpack.c.l.b16 %v5618
        %v5849 = vunpack.c.h.b16 %v5618
        %v5850 = vunpack.c.l.b16 %v5619
        %v5851 = vunpack.c.h.b16 %v5619
        %v5852 = vunpack.c.l.b16 %v5620
        %v5853 = vunpack.c.h.b16 %v5620
        %v5854 = vunpack.c.l.b16 %v5621
        %v5855 = vunpack.c.h.b16 %v5621
        %v5856 = vunpack.c.l.b16 %v5622
        %v5857 = vunpack.c.h.b16 %v5622
        %v5858 = vunpack.c.l.b16 %v5623
        %v5859 = vunpack.c.h.b16 %v5623
        %v5860 = vunpack.c.l.b16 %v5624
        %v5861 = vunpack.c.h.b16 %v5624
        %v5862 = vunpack.c.l.b16 %v5625
        %v5863 = vunpack.c.h.b16 %v5625
        %v5864 = vunpack.c.l.b16 %v5626
        %v5865 = vunpack.c.h.b16 %v5626
        %v5866 = vunpack.c.l.b16 %v5627
        %v5867 = vunpack.c.h.b16 %v5627
        %v5868 = vpack.c.b16 %v5838, %v5836
        %v5869 = vpack.c.b16 %v5839, %v5837
        %v5870 = vpack.c.b16 %v5842, %v5840
        %v5871 = vpack.c.b16 %v5843, %v5841
        %v5872 = vpack.c.b16 %v5846, %v5844
        %v5873 = vpack.c.b16 %v5847, %v5845
        %v5874 = vpack.c.b16 %v5850, %v5848
        %v5875 = vpack.c.b16 %v5851, %v5849
        %v5876 = vpack.c.b16 %v5854, %v5852
        %v5877 = vpack.c.b16 %v5855, %v5853
        %v5878 = vpack.c.b16 %v5858, %v5856
        %v5879 = vpack.c.b16 %v5859, %v5857
        %v5880 = vpack.c.b16 %v5862, %v5860
        %v5881 = vpack.c.b16 %v5863, %v5861
        %v5882 = vpack.c.b16 %v5866, %v5864
        %v5883 = vpack.c.b16 %v5867, %v5865
        %5900 = vmatprep.subr.bf16.mxu0 %v5869
        %5901 = vmatpush1.bf16.msra.mxu0 %v5868
        %5902 = vmatprep.subr.bf16.mxu0 %v5871
        %5903 = vmatpush1.bf16.msra.mxu0 %v5870
        %5904 = vmatprep.subr.bf16.mxu0 %v5873
        %5905 = vmatpush1.bf16.msra.mxu0 %v5872
        %5906 = vmatprep.subr.bf16.mxu0 %v5875
        %5907 = vmatpush1.bf16.msra.mxu0 %v5874
        %5908 = vmatprep.subr.bf16.mxu0 %v5877
        %5909 = vmatpush1.bf16.msra.mxu0 %v5876
        %5910 = vmatprep.subr.bf16.mxu0 %v5879
        %5911 = vmatpush1.bf16.msra.mxu0 %v5878
        %5912 = vmatprep.subr.bf16.mxu0 %v5881
        %5913 = vmatpush1.bf16.msra.mxu0 %v5880
        %5914 = vmatprep.subr.bf16.mxu0 %v5883
        %5915 = vmatpush1.bf16.msra.mxu0 %v5882
        %5916 = vmatprep.subr.bf16.mxu0 0
        %5917 = vmatpush1.bf16.msra.mxu0 0
        %5918 = vmatprep.subr.bf16.mxu0 0
        %5919 = vmatpush1.bf16.msra.mxu0 0
        %5920 = vmatprep.subr.bf16.mxu0 0
        %5921 = vmatpush1.bf16.msra.mxu0 0
        %5922 = vmatprep.subr.bf16.mxu0 0
        %5923 = vmatpush1.bf16.msra.mxu0 0
        %5924 = vmatprep.subr.bf16.mxu0 0
        %5925 = vmatpush1.bf16.msra.mxu0 0
        %5926 = vmatprep.subr.bf16.mxu0 0
        %5927 = vmatpush1.bf16.msra.mxu0 0
        %5928 = vmatprep.subr.bf16.mxu0 0
        %5929 = vmatpush1.bf16.msra.mxu0 0
        %5930 = vmatprep.subr.bf16.mxu0 0
        %5931 = vmatpush1.bf16.msra.mxu0 0
        %5932 = vmatprep.mubr.bf16.mxu0 0
        %5933 = vmatmul.mubr.bf16.gmra.mrb[0].mxu0 %v5648
        %v5934 = vpop.f32.mrb[0].mxu0
        %v5935 = vadd.f32 0.0, %v5934
        %v5936 = vpop.f32.mrb[0].mxu0
        %v5937 = vadd.f32 0.0, %v5936
        %v5938 = vpop.f32.mrb[0].mxu0
        %v5939 = vadd.f32 0.0, %v5938
        %v5940 = vpop.f32.mrb[0].mxu0
        %v5941 = vadd.f32 0.0, %v5940
        %5942 = vmatprep.mubr.bf16.mxu0 0
        %5943 = vmatmul.mubr.bf16.gmra.mrb[0].mxu0 %v5657
        %v5944 = vpop.f32.mrb[0].mxu0
        %v5945 = vadd.f32 0.0, %v5944
        %v5946 = vpop.f32.mrb[0].mxu0
        %v5947 = vadd.f32 0.0, %v5946
        %v5948 = vpop.f32.mrb[0].mxu0
        %v5949 = vadd.f32 0.0, %v5948
        %v5950 = vpop.f32.mrb[0].mxu0
        %v5951 = vadd.f32 0.0, %v5950
        %5952 = vmatprep.mubr.bf16.mxu0 0
        %5953 = vmatmul.mubr.bf16.gmra.mrb[0].mxu0 %v5666
        %v5954 = vpop.f32.mrb[0].mxu0
        %v5955 = vadd.f32 0.0, %v5954
        %v5956 = vpop.f32.mrb[0].mxu0
        %v5957 = vadd.f32 0.0, %v5956
        %v5958 = vpop.f32.mrb[0].mxu0
        %v5959 = vadd.f32 0.0, %v5958
        %v5960 = vpop.f32.mrb[0].mxu0
        %v5961 = vadd.f32 0.0, %v5960
        %5962 = vmatprep.mubr.bf16.mxu0 0
        %5963 = vmatmul.mubr.bf16.gmra.mrb[0].mxu0 %v5675
        %v5964 = vpop.f32.mrb[0].mxu0
        %v5965 = vadd.f32 0.0, %v5964
        %v5966 = vpop.f32.mrb[0].mxu0
        %v5967 = vadd.f32 0.0, %v5966
        %v5968 = vpop.f32.mrb[0].mxu0
        %v5969 = vadd.f32 0.0, %v5968
        %v5970 = vpop.f32.mrb[0].mxu0
        %v5971 = vadd.f32 0.0, %v5970
        %5972 = vmatprep.mubr.bf16.mxu0 0
        %5973 = vmatmul.mubr.bf16.gmra.mrb[0].mxu0 %v5684
        %v5974 = vpop.f32.mrb[0].mxu0
        %v5975 = vadd.f32 0.0, %v5974
        %v5976 = vpop.f32.mrb[0].mxu0
        %v5977 = vadd.f32 0.0, %v5976
        %v5978 = vpop.f32.mrb[0].mxu0
        %v5979 = vadd.f32 0.0, %v5978
        %v5980 = vpop.f32.mrb[0].mxu0
        %v5981 = vadd.f32 0.0, %v5980
        %5982 = vmatprep.mubr.bf16.mxu0 0
        %5983 = vmatmul.mubr.bf16.gmra.mrb[0].mxu0 %v5693
        %v5984 = vpop.f32.mrb[0].mxu0
        %v5985 = vadd.f32 0.0, %v5984
        %v5986 = vpop.f32.mrb[0].mxu0
        %v5987 = vadd.f32 0.0, %v5986
        %v5988 = vpop.f32.mrb[0].mxu0
        %v5989 = vadd.f32 0.0, %v5988
        %v5990 = vpop.f32.mrb[0].mxu0
        %v5991 = vadd.f32 0.0, %v5990
        %5992 = vmatprep.mubr.bf16.mxu0 0
        %5993 = vmatmul.mubr.bf16.gmra.mrb[0].mxu0 %v5702
        %v5994 = vpop.f32.mrb[0].mxu0
        %v5995 = vadd.f32 0.0, %v5994
        %v5996 = vpop.f32.mrb[0].mxu0
        %v5997 = vadd.f32 0.0, %v5996
        %v5998 = vpop.f32.mrb[0].mxu0
        %v5999 = vadd.f32 0.0, %v5998
        %v6000 = vpop.f32.mrb[0].mxu0
        %v6001 = vadd.f32 0.0, %v6000
        %6002 = vmatprep.mubr.bf16.mxu0 0
        %6003 = vmatmul.mubr.bf16.gmra.mrb[0].mxu0 %v5711
        %v6004 = vpop.f32.mrb[0].mxu0
        %v6005 = vadd.f32 0.0, %v6004
        %v6006 = vpop.f32.mrb[0].mxu0
        %v6007 = vadd.f32 0.0, %v6006
        %v6008 = vpop.f32.mrb[0].mxu0
        %v6009 = vadd.f32 0.0, %v6008
        %v6010 = vpop.f32.mrb[0].mxu0
        %v6011 = vadd.f32 0.0, %v6010
        %6012 = vmatprep.mubr.bf16.mxu0 0
        %6013 = vmatmul.mubr.bf16.gmra.mrb[0].mxu0 %v5720
        %v6014 = vpop.f32.mrb[0].mxu0
        %v6015 = vadd.f32 0.0, %v6014
        %v6016 = vpop.f32.mrb[0].mxu0
        %v6017 = vadd.f32 0.0, %v6016
        %v6018 = vpop.f32.mrb[0].mxu0
        %v6019 = vadd.f32 0.0, %v6018
        %v6020 = vpop.f32.mrb[0].mxu0
        %v6021 = vadd.f32 0.0, %v6020
        %6022 = vmatprep.mubr.bf16.mxu0 0
        %6023 = vmatmul.mubr.bf16.gmra.mrb[0].mxu0 %v5729
        %v6024 = vpop.f32.mrb[0].mxu0
        %v6025 = vadd.f32 0.0, %v6024
        %v6026 = vpop.f32.mrb[0].mxu0
        %v6027 = vadd.f32 0.0, %v6026
        %v6028 = vpop.f32.mrb[0].mxu0
        %v6029 = vadd.f32 0.0, %v6028
        %v6030 = vpop.f32.mrb[0].mxu0
        %v6031 = vadd.f32 0.0, %v6030
        %6032 = vmatprep.mubr.bf16.mxu0 0
        %6033 = vmatmul.mubr.bf16.gmra.mrb[0].mxu0 %v5738
        %v6034 = vpop.f32.mrb[0].mxu0
        %v6035 = vadd.f32 0.0, %v6034
        %v6036 = vpop.f32.mrb[0].mxu0
        %v6037 = vadd.f32 0.0, %v6036
        %v6038 = vpop.f32.mrb[0].mxu0
        %v6039 = vadd.f32 0.0, %v6038
        %v6040 = vpop.f32.mrb[0].mxu0
        %v6041 = vadd.f32 0.0, %v6040
        %6042 = vmatprep.mubr.bf16.mxu0 0
        %6043 = vmatmul.mubr.bf16.gmra.mrb[0].mxu0 %v5747
        %v6044 = vpop.f32.mrb[0].mxu0
        %v6045 = vadd.f32 0.0, %v6044
        %v6046 = vpop.f32.mrb[0].mxu0
        %v6047 = vadd.f32 0.0, %v6046
        %v6048 = vpop.f32.mrb[0].mxu0
        %v6049 = vadd.f32 0.0, %v6048
        %v6050 = vpop.f32.mrb[0].mxu0
        %v6051 = vadd.f32 0.0, %v6050
        %6052 = vmatprep.mubr.bf16.mxu0 0
        %6053 = vmatmul.mubr.bf16.gmra.mrb[0].mxu0 %v5756
        %v6054 = vpop.f32.mrb[0].mxu0
        %v6055 = vadd.f32 0.0, %v6054
        %v6056 = vpop.f32.mrb[0].mxu0
        %v6057 = vadd.f32 0.0, %v6056
        %v6058 = vpop.f32.mrb[0].mxu0
        %v6059 = vadd.f32 0.0, %v6058
        %v6060 = vpop.f32.mrb[0].mxu0
        %v6061 = vadd.f32 0.0, %v6060
        %6062 = vmatprep.mubr.bf16.mxu0 0
        %6063 = vmatmul.mubr.bf16.gmra.mrb[0].mxu0 %v5765
        %v6064 = vpop.f32.mrb[0].mxu0
        %v6065 = vadd.f32 0.0, %v6064
        %v6066 = vpop.f32.mrb[0].mxu0
        %v6067 = vadd.f32 0.0, %v6066
        %v6068 = vpop.f32.mrb[0].mxu0
        %v6069 = vadd.f32 0.0, %v6068
        %v6070 = vpop.f32.mrb[0].mxu0
        %v6071 = vadd.f32 0.0, %v6070
        %6072 = vmatprep.mubr.bf16.mxu0 0
        %6073 = vmatmul.mubr.bf16.gmra.mrb[0].mxu0 %v5774
        %v6074 = vpop.f32.mrb[0].mxu0
        %v6075 = vadd.f32 0.0, %v6074
        %v6076 = vpop.f32.mrb[0].mxu0
        %v6077 = vadd.f32 0.0, %v6076
        %v6078 = vpop.f32.mrb[0].mxu0
        %v6079 = vadd.f32 0.0, %v6078
        %v6080 = vpop.f32.mrb[0].mxu0
        %v6081 = vadd.f32 0.0, %v6080
        %6082 = vmatprep.mubr.bf16.mxu0 0
        %6083 = vmatmul.mubr.bf16.gmra.mrb[0].mxu0 %v5783
        %v6084 = vpop.f32.mrb[0].mxu0
        %v6085 = vadd.f32 0.0, %v6084
        %v6086 = vpop.f32.mrb[0].mxu0
        %v6087 = vadd.f32 0.0, %v6086
        %v6088 = vpop.f32.mrb[0].mxu0
        %v6089 = vadd.f32 0.0, %v6088
        %v6090 = vpop.f32.mrb[0].mxu0
        %v6091 = vadd.f32 0.0, %v6090
        %6092 = vmatprep.mubr.bf16.mxu0 0
        %6093 = vmatmul.mubr.bf16.gmra.mrb[0].mxu0 %v5792
        %v6094 = vpop.f32.mrb[0].mxu0
        %v6095 = vadd.f32 0.0, %v6094
        %v6096 = vpop.f32.mrb[0].mxu0
        %v6097 = vadd.f32 0.0, %v6096
        %v6098 = vpop.f32.mrb[0].mxu0
        %v6099 = vadd.f32 0.0, %v6098
        %v6100 = vpop.f32.mrb[0].mxu0
        %v6101 = vadd.f32 0.0, %v6100
        %6102 = vmatprep.mubr.bf16.mxu0 0
        %6103 = vmatmul.mubr.bf16.gmra.mrb[0].mxu0 %v5801
        %v6104 = vpop.f32.mrb[0].mxu0
        %v6105 = vadd.f32 0.0, %v6104
        %v6106 = vpop.f32.mrb[0].mxu0
        %v6107 = vadd.f32 0.0, %v6106
        %v6108 = vpop.f32.mrb[0].mxu0
        %v6109 = vadd.f32 0.0, %v6108
        %v6110 = vpop.f32.mrb[0].mxu0
        %v6111 = vadd.f32 0.0, %v6110
        %6112 = vdwg.mxu0
        %v6113 = vadd.f32 %v5538, %v5935
        %v6114 = vadd.f32 %v5539, %v5937
        %v6115 = vadd.f32 %v5540, %v5939
        %v6116 = vadd.f32 %v5541, %v5941
        %v6117 = vadd.f32 %v5542, %v5945
        %v6118 = vadd.f32 %v5543, %v5947
        %v6119 = vadd.f32 %v5544, %v5949
        %v6120 = vadd.f32 %v5545, %v5951
        %v6121 = vadd.f32 %v5546, %v5955
        %v6122 = vadd.f32 %v5547, %v5957
        %v6123 = vadd.f32 %v5548, %v5959
        %v6124 = vadd.f32 %v5549, %v5961
        %v6125 = vadd.f32 %v5550, %v5965
        %v6126 = vadd.f32 %v5551, %v5967
        %v6127 = vadd.f32 %v5552, %v5969
        %v6128 = vadd.f32 %v5553, %v5971
        %v6129 = vadd.f32 %v5554, %v5975
        %v6130 = vadd.f32 %v5555, %v5977
        %v6131 = vadd.f32 %v5556, %v5979
        %v6132 = vadd.f32 %v5557, %v5981
        %v6133 = vadd.f32 %v5558, %v5985
        %v6134 = vadd.f32 %v5559, %v5987
        %v6135 = vadd.f32 %v5560, %v5989
        %v6136 = vadd.f32 %v5561, %v5991
        %v6137 = vadd.f32 %v5562, %v5995
        %v6138 = vadd.f32 %v5563, %v5997
        %v6139 = vadd.f32 %v5564, %v5999
        %v6140 = vadd.f32 %v5565, %v6001
        %v6141 = vadd.f32 %v5566, %v6005
        %v6142 = vadd.f32 %v5567, %v6007
        %v6143 = vadd.f32 %v5568, %v6009
        %v6144 = vadd.f32 %v5569, %v6011
        %v6145 = vadd.f32 %v5570, %v6015
        %v6146 = vadd.f32 %v5571, %v6017
        %v6147 = vadd.f32 %v5572, %v6019
        %v6148 = vadd.f32 %v5573, %v6021
        %v6149 = vadd.f32 %v5574, %v6025
        %v6150 = vadd.f32 %v5575, %v6027
        %v6151 = vadd.f32 %v5576, %v6029
        %v6152 = vadd.f32 %v5577, %v6031
        %v6153 = vadd.f32 %v5578, %v6035
        %v6154 = vadd.f32 %v5579, %v6037
        %v6155 = vadd.f32 %v5580, %v6039
        %v6156 = vadd.f32 %v5581, %v6041
        %v6157 = vadd.f32 %v5582, %v6045
        %v6158 = vadd.f32 %v5583, %v6047
        %v6159 = vadd.f32 %v5584, %v6049
        %v6160 = vadd.f32 %v5585, %v6051
        %v6161 = vadd.f32 %v5586, %v6055
        %v6162 = vadd.f32 %v5587, %v6057
        %v6163 = vadd.f32 %v5588, %v6059
        %v6164 = vadd.f32 %v5589, %v6061
        %v6165 = vadd.f32 %v5590, %v6065
        %v6166 = vadd.f32 %v5591, %v6067
        %v6167 = vadd.f32 %v5592, %v6069
        %v6168 = vadd.f32 %v5593, %v6071
        %v6169 = vadd.f32 %v5594, %v6075
        %v6170 = vadd.f32 %v5595, %v6077
        %v6171 = vadd.f32 %v5596, %v6079
        %v6172 = vadd.f32 %v5597, %v6081
        %v6173 = vadd.f32 %v5598, %v6085
        %v6174 = vadd.f32 %v5599, %v6087
        %v6175 = vadd.f32 %v5600, %v6089
        %v6176 = vadd.f32 %v5601, %v6091
        %v6177 = vadd.f32 %v5602, %v6095
        %v6178 = vadd.f32 %v5603, %v6097
        %v6179 = vadd.f32 %v5604, %v6099
        %v6180 = vadd.f32 %v5605, %v6101
        %v6181 = vadd.f32 %v5606, %v6105
        %v6182 = vadd.f32 %v5607, %v6107
        %v6183 = vadd.f32 %v5608, %v6109
        %v6184 = vadd.f32 %v5609, %v6111
        %v6185 = vld [vmem:[#allocation2 + $0x8] sm:$0xc]
        %s6186 = scalar_lea.vmem %s366, 640
        %v6187 = vld [vmem:[%s6186] sm:$0xff]
        %v6188 = vld [vmem:[%s6186 + $0x8] sm:$0xff]
        %v6189 = vld [vmem:[%s6186 + $0x10] sm:$0xff]
        %v6190 = vld [vmem:[%s6186 + $0x18] sm:$0xff]
        %v6191 = vld [vmem:[%s6186 + $0x20] sm:$0xff]
        %v6192 = vld [vmem:[%s6186 + $0x28] sm:$0xff]
        %v6193 = vld [vmem:[%s6186 + $0x30] sm:$0xff]
        %v6194 = vld [vmem:[%s6186 + $0x38] sm:$0xff]
        %v6195 = vld [vmem:[%s6186 + $0x40] sm:$0xff]
        %v6196 = vld [vmem:[%s6186 + $0x48] sm:$0xff]
        %v6197 = vld [vmem:[%s6186 + $0x50] sm:$0xff]
        %v6198 = vld [vmem:[%s6186 + $0x58] sm:$0xff]
        %v6199 = vld [vmem:[%s6186 + $0x60] sm:$0xff]
        %v6200 = vld [vmem:[%s6186 + $0x68] sm:$0xff]
        %v6201 = vld [vmem:[%s6186 + $0x70] sm:$0xff]
        %v6202 = vld [vmem:[%s6186 + $0x78] sm:$0xff]
        %v6204 = vunpack.c.l.b16 %v6185
        %v6205 = vpack.c.b16 %v5135, %v6204
        %vm6206 = vcmask 1045504
        %v6207 = vrot.slane %v6205, 2
        %v6208 = vrot.slane %v5172, 2
        %v6209 = vsel %vm6206, %v6207, %v6208
        %v6210 = vrot.slane %v5173, 2
        %v6211 = vsel %vm6206, %v6208, %v6210
        %v6212 = vrot.slane %v5174, 2
        %v6213 = vsel %vm6206, %v6210, %v6212
        %v6214 = vrot.slane %v5175, 2
        %v6215 = vsel %vm6206, %v6212, %v6214
        %v6216 = vrot.slane %v5176, 2
        %v6217 = vsel %vm6206, %v6214, %v6216
        %v6218 = vrot.slane %v5177, 2
        %v6219 = vsel %vm6206, %v6216, %v6218
        %v6220 = vrot.slane %v5178, 2
        %v6221 = vsel %vm6206, %v6218, %v6220
        %v6222 = vrot.slane %v5179, 2
        %v6223 = vsel %vm6206, %v6220, %v6222
        %v6224 = vrot.slane %v5180, 2
        %v6225 = vsel %vm6206, %v6222, %v6224
        %v6226 = vrot.slane %v5181, 2
        %v6227 = vsel %vm6206, %v6224, %v6226
        %v6228 = vrot.slane %v5182, 2
        %v6229 = vsel %vm6206, %v6226, %v6228
        %v6230 = vrot.slane %v5183, 2
        %v6231 = vsel %vm6206, %v6228, %v6230
        %v6232 = vrot.slane %v5184, 2
        %v6233 = vsel %vm6206, %v6230, %v6232
        %v6234 = vrot.slane %v5185, 2
        %v6235 = vsel %vm6206, %v6232, %v6234
        %v6236 = vrot.slane %v5186, 2
        %v6237 = vsel %vm6206, %v6234, %v6236
        %v6238 = vrot.slane %v5187, 2
        %v6239 = vsel %vm6206, %v6236, %v6238
        %v6240 = vrot.slane %v5188, 2
        %v6241 = vsel %vm6206, %v6238, %v6240
        %v6242 = vrot.slane %v5630, 2
        %v6243 = vsel %vm6206, %v6240, %v6242
        %v6278 = vunpack.c.l.b16 %v6187
        %v6279 = vunpack.c.h.b16 %v6187
        %v6280 = vunpack.c.l.b16 %v6188
        %v6281 = vunpack.c.h.b16 %v6188
        %v6282 = vunpack.c.l.b16 %v6189
        %v6283 = vunpack.c.h.b16 %v6189
        %v6284 = vunpack.c.l.b16 %v6190
        %v6285 = vunpack.c.h.b16 %v6190
        %v6286 = vunpack.c.l.b16 %v6191
        %v6287 = vunpack.c.h.b16 %v6191
        %v6288 = vunpack.c.l.b16 %v6192
        %v6289 = vunpack.c.h.b16 %v6192
        %v6290 = vunpack.c.l.b16 %v6193
        %v6291 = vunpack.c.h.b16 %v6193
        %v6292 = vunpack.c.l.b16 %v6194
        %v6293 = vunpack.c.h.b16 %v6194
        %v6294 = vunpack.c.l.b16 %v6195
        %v6295 = vunpack.c.h.b16 %v6195
        %v6296 = vunpack.c.l.b16 %v6196
        %v6297 = vunpack.c.h.b16 %v6196
        %v6298 = vunpack.c.l.b16 %v6197
        %v6299 = vunpack.c.h.b16 %v6197
        %v6300 = vunpack.c.l.b16 %v6198
        %v6301 = vunpack.c.h.b16 %v6198
        %v6302 = vunpack.c.l.b16 %v6199
        %v6303 = vunpack.c.h.b16 %v6199
        %v6304 = vunpack.c.l.b16 %v6200
        %v6305 = vunpack.c.h.b16 %v6200
        %v6306 = vunpack.c.l.b16 %v6201
        %v6307 = vunpack.c.h.b16 %v6201
        %v6308 = vunpack.c.l.b16 %v6202
        %v6309 = vunpack.c.h.b16 %v6202
        %v6310 = vpack.c.b16 %v6280, %v6278
        %v6311 = vpack.c.b16 %v6281, %v6279
        %v6312 = vpack.c.b16 %v6284, %v6282
        %v6313 = vpack.c.b16 %v6285, %v6283
        %v6314 = vpack.c.b16 %v6288, %v6286
        %v6315 = vpack.c.b16 %v6289, %v6287
        %v6316 = vpack.c.b16 %v6292, %v6290
        %v6317 = vpack.c.b16 %v6293, %v6291
        %v6318 = vpack.c.b16 %v6296, %v6294
        %v6319 = vpack.c.b16 %v6297, %v6295
        %v6320 = vpack.c.b16 %v6300, %v6298
        %v6321 = vpack.c.b16 %v6301, %v6299
        %v6322 = vpack.c.b16 %v6304, %v6302
        %v6323 = vpack.c.b16 %v6305, %v6303
        %v6324 = vpack.c.b16 %v6308, %v6306
        %v6325 = vpack.c.b16 %v6309, %v6307
        %6342 = vmatprep.subr.bf16.mxu0 %v6311
        %6343 = vmatpush1.bf16.msra.mxu0 %v6310
        %6344 = vmatprep.subr.bf16.mxu0 %v6313
        %6345 = vmatpush1.bf16.msra.mxu0 %v6312
        %6346 = vmatprep.subr.bf16.mxu0 %v6315
        %6347 = vmatpush1.bf16.msra.mxu0 %v6314
        %6348 = vmatprep.subr.bf16.mxu0 %v6317
        %6349 = vmatpush1.bf16.msra.mxu0 %v6316
        %6350 = vmatprep.subr.bf16.mxu0 %v6319
        %6351 = vmatpush1.bf16.msra.mxu0 %v6318
        %6352 = vmatprep.subr.bf16.mxu0 %v6321
        %6353 = vmatpush1.bf16.msra.mxu0 %v6320
        %6354 = vmatprep.subr.bf16.mxu0 %v6323
        %6355 = vmatpush1.bf16.msra.mxu0 %v6322
        %6356 = vmatprep.subr.bf16.mxu0 %v6325
        %6357 = vmatpush1.bf16.msra.mxu0 %v6324
        %6358 = vmatprep.subr.bf16.mxu0 0
        %6359 = vmatpush1.bf16.msra.mxu0 0
        %6360 = vmatprep.subr.bf16.mxu0 0
        %6361 = vmatpush1.bf16.msra.mxu0 0
        %6362 = vmatprep.subr.bf16.mxu0 0
        %6363 = vmatpush1.bf16.msra.mxu0 0
        %6364 = vmatprep.subr.bf16.mxu0 0
        %6365 = vmatpush1.bf16.msra.mxu0 0
        %6366 = vmatprep.subr.bf16.mxu0 0
        %6367 = vmatpush1.bf16.msra.mxu0 0
        %6368 = vmatprep.subr.bf16.mxu0 0
        %6369 = vmatpush1.bf16.msra.mxu0 0
        %6370 = vmatprep.subr.bf16.mxu0 0
        %6371 = vmatpush1.bf16.msra.mxu0 0
        %6372 = vmatprep.subr.bf16.mxu0 0
        %6373 = vmatpush1.bf16.msra.mxu0 0
        %6374 = vmatprep.mubr.bf16.mxu0 0
        %6375 = vmatmul.mubr.bf16.gmra.mrb[0].mxu0 %v6209
        %v6376 = vpop.f32.mrb[0].mxu0
        %v6377 = vadd.f32 0.0, %v6376
        %v6378 = vpop.f32.mrb[0].mxu0
        %v6379 = vadd.f32 0.0, %v6378
        %v6380 = vpop.f32.mrb[0].mxu0
        %v6381 = vadd.f32 0.0, %v6380
        %v6382 = vpop.f32.mrb[0].mxu0
        %v6383 = vadd.f32 0.0, %v6382
        %6384 = vmatprep.mubr.bf16.mxu0 0
        %6385 = vmatmul.mubr.bf16.gmra.mrb[0].mxu0 %v6211
        %v6386 = vpop.f32.mrb[0].mxu0
        %v6387 = vadd.f32 0.0, %v6386
        %v6388 = vpop.f32.mrb[0].mxu0
        %v6389 = vadd.f32 0.0, %v6388
        %v6390 = vpop.f32.mrb[0].mxu0
        %v6391 = vadd.f32 0.0, %v6390
        %v6392 = vpop.f32.mrb[0].mxu0
        %v6393 = vadd.f32 0.0, %v6392
        %6394 = vmatprep.mubr.bf16.mxu0 0
        %6395 = vmatmul.mubr.bf16.gmra.mrb[0].mxu0 %v6213
        %v6396 = vpop.f32.mrb[0].mxu0
        %v6397 = vadd.f32 0.0, %v6396
        %v6398 = vpop.f32.mrb[0].mxu0
        %v6399 = vadd.f32 0.0, %v6398
        %v6400 = vpop.f32.mrb[0].mxu0
        %v6401 = vadd.f32 0.0, %v6400
        %v6402 = vpop.f32.mrb[0].mxu0
        %v6403 = vadd.f32 0.0, %v6402
        %6404 = vmatprep.mubr.bf16.mxu0 0
        %6405 = vmatmul.mubr.bf16.gmra.mrb[0].mxu0 %v6215
        %v6406 = vpop.f32.mrb[0].mxu0
        %v6407 = vadd.f32 0.0, %v6406
        %v6408 = vpop.f32.mrb[0].mxu0
        %v6409 = vadd.f32 0.0, %v6408
        %v6410 = vpop.f32.mrb[0].mxu0
        %v6411 = vadd.f32 0.0, %v6410
        %v6412 = vpop.f32.mrb[0].mxu0
        %v6413 = vadd.f32 0.0, %v6412
        %6414 = vmatprep.mubr.bf16.mxu0 0
        %6415 = vmatmul.mubr.bf16.gmra.mrb[0].mxu0 %v6217
        %v6416 = vpop.f32.mrb[0].mxu0
        %v6417 = vadd.f32 0.0, %v6416
        %v6418 = vpop.f32.mrb[0].mxu0
        %v6419 = vadd.f32 0.0, %v6418
        %v6420 = vpop.f32.mrb[0].mxu0
        %v6421 = vadd.f32 0.0, %v6420
        %v6422 = vpop.f32.mrb[0].mxu0
        %v6423 = vadd.f32 0.0, %v6422
        %6424 = vmatprep.mubr.bf16.mxu0 0
        %6425 = vmatmul.mubr.bf16.gmra.mrb[0].mxu0 %v6219
        %v6426 = vpop.f32.mrb[0].mxu0
        %v6427 = vadd.f32 0.0, %v6426
        %v6428 = vpop.f32.mrb[0].mxu0
        %v6429 = vadd.f32 0.0, %v6428
        %v6430 = vpop.f32.mrb[0].mxu0
        %v6431 = vadd.f32 0.0, %v6430
        %v6432 = vpop.f32.mrb[0].mxu0
        %v6433 = vadd.f32 0.0, %v6432
        %6434 = vmatprep.mubr.bf16.mxu0 0
        %6435 = vmatmul.mubr.bf16.gmra.mrb[0].mxu0 %v6221
        %v6436 = vpop.f32.mrb[0].mxu0
        %v6437 = vadd.f32 0.0, %v6436
        %v6438 = vpop.f32.mrb[0].mxu0
        %v6439 = vadd.f32 0.0, %v6438
        %v6440 = vpop.f32.mrb[0].mxu0
        %v6441 = vadd.f32 0.0, %v6440
        %v6442 = vpop.f32.mrb[0].mxu0
        %v6443 = vadd.f32 0.0, %v6442
        %6444 = vmatprep.mubr.bf16.mxu0 0
        %6445 = vmatmul.mubr.bf16.gmra.mrb[0].mxu0 %v6223
        %v6446 = vpop.f32.mrb[0].mxu0
        %v6447 = vadd.f32 0.0, %v6446
        %v6448 = vpop.f32.mrb[0].mxu0
        %v6449 = vadd.f32 0.0, %v6448
        %v6450 = vpop.f32.mrb[0].mxu0
        %v6451 = vadd.f32 0.0, %v6450
        %v6452 = vpop.f32.mrb[0].mxu0
        %v6453 = vadd.f32 0.0, %v6452
        %6454 = vmatprep.mubr.bf16.mxu0 0
        %6455 = vmatmul.mubr.bf16.gmra.mrb[0].mxu0 %v6225
        %v6456 = vpop.f32.mrb[0].mxu0
        %v6457 = vadd.f32 0.0, %v6456
        %v6458 = vpop.f32.mrb[0].mxu0
        %v6459 = vadd.f32 0.0, %v6458
        %v6460 = vpop.f32.mrb[0].mxu0
        %v6461 = vadd.f32 0.0, %v6460
        %v6462 = vpop.f32.mrb[0].mxu0
        %v6463 = vadd.f32 0.0, %v6462
        %6464 = vmatprep.mubr.bf16.mxu0 0
        %6465 = vmatmul.mubr.bf16.gmra.mrb[0].mxu0 %v6227
        %v6466 = vpop.f32.mrb[0].mxu0
        %v6467 = vadd.f32 0.0, %v6466
        %v6468 = vpop.f32.mrb[0].mxu0
        %v6469 = vadd.f32 0.0, %v6468
        %v6470 = vpop.f32.mrb[0].mxu0
        %v6471 = vadd.f32 0.0, %v6470
        %v6472 = vpop.f32.mrb[0].mxu0
        %v6473 = vadd.f32 0.0, %v6472
        %6474 = vmatprep.mubr.bf16.mxu0 0
        %6475 = vmatmul.mubr.bf16.gmra.mrb[0].mxu0 %v6229
        %v6476 = vpop.f32.mrb[0].mxu0
        %v6477 = vadd.f32 0.0, %v6476
        %v6478 = vpop.f32.mrb[0].mxu0
        %v6479 = vadd.f32 0.0, %v6478
        %v6480 = vpop.f32.mrb[0].mxu0
        %v6481 = vadd.f32 0.0, %v6480
        %v6482 = vpop.f32.mrb[0].mxu0
        %v6483 = vadd.f32 0.0, %v6482
        %6484 = vmatprep.mubr.bf16.mxu0 0
        %6485 = vmatmul.mubr.bf16.gmra.mrb[0].mxu0 %v6231
        %v6486 = vpop.f32.mrb[0].mxu0
        %v6487 = vadd.f32 0.0, %v6486
        %v6488 = vpop.f32.mrb[0].mxu0
        %v6489 = vadd.f32 0.0, %v6488
        %v6490 = vpop.f32.mrb[0].mxu0
        %v6491 = vadd.f32 0.0, %v6490
        %v6492 = vpop.f32.mrb[0].mxu0
        %v6493 = vadd.f32 0.0, %v6492
        %6494 = vmatprep.mubr.bf16.mxu0 0
        %6495 = vmatmul.mubr.bf16.gmra.mrb[0].mxu0 %v6233
        %v6496 = vpop.f32.mrb[0].mxu0
        %v6497 = vadd.f32 0.0, %v6496
        %v6498 = vpop.f32.mrb[0].mxu0
        %v6499 = vadd.f32 0.0, %v6498
        %v6500 = vpop.f32.mrb[0].mxu0
        %v6501 = vadd.f32 0.0, %v6500
        %v6502 = vpop.f32.mrb[0].mxu0
        %v6503 = vadd.f32 0.0, %v6502
        %6504 = vmatprep.mubr.bf16.mxu0 0
        %6505 = vmatmul.mubr.bf16.gmra.mrb[0].mxu0 %v6235
        %v6506 = vpop.f32.mrb[0].mxu0
        %v6507 = vadd.f32 0.0, %v6506
        %v6508 = vpop.f32.mrb[0].mxu0
        %v6509 = vadd.f32 0.0, %v6508
        %v6510 = vpop.f32.mrb[0].mxu0
        %v6511 = vadd.f32 0.0, %v6510
        %v6512 = vpop.f32.mrb[0].mxu0
        %v6513 = vadd.f32 0.0, %v6512
        %6514 = vmatprep.mubr.bf16.mxu0 0
        %6515 = vmatmul.mubr.bf16.gmra.mrb[0].mxu0 %v6237
        %v6516 = vpop.f32.mrb[0].mxu0
        %v6517 = vadd.f32 0.0, %v6516
        %v6518 = vpop.f32.mrb[0].mxu0
        %v6519 = vadd.f32 0.0, %v6518
        %v6520 = vpop.f32.mrb[0].mxu0
        %v6521 = vadd.f32 0.0, %v6520
        %v6522 = vpop.f32.mrb[0].mxu0
        %v6523 = vadd.f32 0.0, %v6522
        %6524 = vmatprep.mubr.bf16.mxu0 0
        %6525 = vmatmul.mubr.bf16.gmra.mrb[0].mxu0 %v6239
        %v6526 = vpop.f32.mrb[0].mxu0
        %v6527 = vadd.f32 0.0, %v6526
        %v6528 = vpop.f32.mrb[0].mxu0
        %v6529 = vadd.f32 0.0, %v6528
        %v6530 = vpop.f32.mrb[0].mxu0
        %v6531 = vadd.f32 0.0, %v6530
        %v6532 = vpop.f32.mrb[0].mxu0
        %v6533 = vadd.f32 0.0, %v6532
        %6534 = vmatprep.mubr.bf16.mxu0 0
        %6535 = vmatmul.mubr.bf16.gmra.mrb[0].mxu0 %v6241
        %v6536 = vpop.f32.mrb[0].mxu0
        %v6537 = vadd.f32 0.0, %v6536
        %v6538 = vpop.f32.mrb[0].mxu0
        %v6539 = vadd.f32 0.0, %v6538
        %v6540 = vpop.f32.mrb[0].mxu0
        %v6541 = vadd.f32 0.0, %v6540
        %v6542 = vpop.f32.mrb[0].mxu0
        %v6543 = vadd.f32 0.0, %v6542
        %6544 = vmatprep.mubr.bf16.mxu0 0
        %6545 = vmatmul.mubr.bf16.gmra.mrb[0].mxu0 %v6243
        %v6546 = vpop.f32.mrb[0].mxu0
        %v6547 = vadd.f32 0.0, %v6546
        %v6548 = vpop.f32.mrb[0].mxu0
        %v6549 = vadd.f32 0.0, %v6548
        %v6550 = vpop.f32.mrb[0].mxu0
        %v6551 = vadd.f32 0.0, %v6550
        %v6552 = vpop.f32.mrb[0].mxu0
        %v6553 = vadd.f32 0.0, %v6552
        %6554 = vdwg.mxu0
        %v6555 = vadd.f32 %v6113, %v6377
        %v6556 = vadd.f32 %v6114, %v6379
        %v6557 = vadd.f32 %v6115, %v6381
        %v6558 = vadd.f32 %v6116, %v6383
        %v6559 = vadd.f32 %v6117, %v6387
        %v6560 = vadd.f32 %v6118, %v6389
        %v6561 = vadd.f32 %v6119, %v6391
        %v6562 = vadd.f32 %v6120, %v6393
        %v6563 = vadd.f32 %v6121, %v6397
        %v6564 = vadd.f32 %v6122, %v6399
        %v6565 = vadd.f32 %v6123, %v6401
        %v6566 = vadd.f32 %v6124, %v6403
        %v6567 = vadd.f32 %v6125, %v6407
        %v6568 = vadd.f32 %v6126, %v6409
        %v6569 = vadd.f32 %v6127, %v6411
        %v6570 = vadd.f32 %v6128, %v6413
        %v6571 = vadd.f32 %v6129, %v6417
        %v6572 = vadd.f32 %v6130, %v6419
        %v6573 = vadd.f32 %v6131, %v6421
        %v6574 = vadd.f32 %v6132, %v6423
        %v6575 = vadd.f32 %v6133, %v6427
        %v6576 = vadd.f32 %v6134, %v6429
        %v6577 = vadd.f32 %v6135, %v6431
        %v6578 = vadd.f32 %v6136, %v6433
        %v6579 = vadd.f32 %v6137, %v6437
        %v6580 = vadd.f32 %v6138, %v6439
        %v6581 = vadd.f32 %v6139, %v6441
        %v6582 = vadd.f32 %v6140, %v6443
        %v6583 = vadd.f32 %v6141, %v6447
        %v6584 = vadd.f32 %v6142, %v6449
        %v6585 = vadd.f32 %v6143, %v6451
        %v6586 = vadd.f32 %v6144, %v6453
        %v6587 = vadd.f32 %v6145, %v6457
        %v6588 = vadd.f32 %v6146, %v6459
        %v6589 = vadd.f32 %v6147, %v6461
        %v6590 = vadd.f32 %v6148, %v6463
        %v6591 = vadd.f32 %v6149, %v6467
        %v6592 = vadd.f32 %v6150, %v6469
        %v6593 = vadd.f32 %v6151, %v6471
        %v6594 = vadd.f32 %v6152, %v6473
        %v6595 = vadd.f32 %v6153, %v6477
        %v6596 = vadd.f32 %v6154, %v6479
        %v6597 = vadd.f32 %v6155, %v6481
        %v6598 = vadd.f32 %v6156, %v6483
        %v6599 = vadd.f32 %v6157, %v6487
        %v6600 = vadd.f32 %v6158, %v6489
        %v6601 = vadd.f32 %v6159, %v6491
        %v6602 = vadd.f32 %v6160, %v6493
        %v6603 = vadd.f32 %v6161, %v6497
        %v6604 = vadd.f32 %v6162, %v6499
        %v6605 = vadd.f32 %v6163, %v6501
        %v6606 = vadd.f32 %v6164, %v6503
        %v6607 = vadd.f32 %v6165, %v6507
        %v6608 = vadd.f32 %v6166, %v6509
        %v6609 = vadd.f32 %v6167, %v6511
        %v6610 = vadd.f32 %v6168, %v6513
        %v6611 = vadd.f32 %v6169, %v6517
        %v6612 = vadd.f32 %v6170, %v6519
        %v6613 = vadd.f32 %v6171, %v6521
        %v6614 = vadd.f32 %v6172, %v6523
        %v6615 = vadd.f32 %v6173, %v6527
        %v6616 = vadd.f32 %v6174, %v6529
        %v6617 = vadd.f32 %v6175, %v6531
        %v6618 = vadd.f32 %v6176, %v6533
        %v6619 = vadd.f32 %v6177, %v6537
        %v6620 = vadd.f32 %v6178, %v6539
        %v6621 = vadd.f32 %v6179, %v6541
        %v6622 = vadd.f32 %v6180, %v6543
        %v6623 = vadd.f32 %v6181, %v6547
        %v6624 = vadd.f32 %v6182, %v6549
        %v6625 = vadd.f32 %v6183, %v6551
        %v6626 = vadd.f32 %v6184, %v6553
        %v6627 = vld [vmem:[#allocation2 + $0x10] sm:$0xc]
        %v6628 = vld [vmem:[#allocation2 + $0x14] sm:$0xf]
        %v6629 = vld [vmem:[#allocation2 + $0x18] sm:$0xf]
        %v6630 = vld [vmem:[#allocation2 + $0x1c] sm:$0xf]
        %v6631 = vld [vmem:[#allocation2 + $0x20] sm:$0xf]
        %v6632 = vld [vmem:[#allocation2 + $0x24] sm:$0xf]
        %v6633 = vld [vmem:[#allocation2 + $0x28] sm:$0xf]
        %v6634 = vld [vmem:[#allocation2 + $0x2c] sm:$0xf]
        %v6635 = vld [vmem:[#allocation2 + $0x30] sm:$0xf]
        %v6636 = vld [vmem:[#allocation2 + $0x34] sm:$0xf]
        %v6637 = vld [vmem:[#allocation2 + $0x38] sm:$0xf]
        %v6638 = vld [vmem:[#allocation2 + $0x3c] sm:$0xf]
        %v6639 = vld [vmem:[#allocation2 + $0x40] sm:$0xf]
        %v6640 = vld [vmem:[#allocation2 + $0x44] sm:$0xf]
        %v6641 = vld [vmem:[#allocation2 + $0x48] sm:$0xf]
        %v6642 = vld [vmem:[#allocation2 + $0x4c] sm:$0xf]
        %v6643 = vld [vmem:[#allocation2 + $0x50] sm:$0xf]
        %v6644 = vld [vmem:[#allocation2 + $0x54] sm:$0xf]
        %v6645 = vld [vmem:[#allocation2 + $0x58] sm:$0xf]
        %v6646 = vld [vmem:[#allocation2 + $0x5c] sm:$0xf]
        %v6647 = vld [vmem:[#allocation2 + $0x60] sm:$0xf]
        %v6648 = vld [vmem:[#allocation2 + $0x64] sm:$0xf]
        %v6649 = vld [vmem:[#allocation2 + $0x68] sm:$0xf]
        %v6650 = vld [vmem:[#allocation2 + $0x6c] sm:$0xf]
        %v6651 = vld [vmem:[#allocation2 + $0x70] sm:$0xf]
        %v6652 = vld [vmem:[#allocation2 + $0x74] sm:$0xf]
        %v6653 = vld [vmem:[#allocation2 + $0x78] sm:$0xf]
        %v6654 = vld [vmem:[#allocation2 + $0x7c] sm:$0xf]
        %v6655 = vld [vmem:[#allocation2 + $0x80] sm:$0xf]
        %v6656 = vld [vmem:[#allocation2 + $0x84] sm:$0xf]
        %v6657 = vld [vmem:[#allocation2 + $0x88] sm:$0xf]
        %v6658 = vld [vmem:[#allocation2 + $0x8c] sm:$0xf]
        %v6659 = vld [vmem:[#allocation2 + $0x90] sm:$0xf]
        %v6660 = vld [vmem:[#allocation2 + $0x94] sm:$0xf]
        %v6661 = vld [vmem:[#allocation2 + $0x98] sm:$0xf]
        %v6662 = vld [vmem:[#allocation2 + $0x9c] sm:$0xf]
        %v6663 = vld [vmem:[#allocation2 + $0xa0] sm:$0x3]
        %s6664 = scalar_lea.vmem %s366, 768
        %v6665 = vld [vmem:[%s6664] sm:$0xff]
        %v6666 = vld [vmem:[%s6664 + $0x8] sm:$0xff]
        %v6667 = vld [vmem:[%s6664 + $0x10] sm:$0xff]
        %v6668 = vld [vmem:[%s6664 + $0x18] sm:$0xff]
        %v6669 = vld [vmem:[%s6664 + $0x20] sm:$0xff]
        %v6670 = vld [vmem:[%s6664 + $0x28] sm:$0xff]
        %v6671 = vld [vmem:[%s6664 + $0x30] sm:$0xff]
        %v6672 = vld [vmem:[%s6664 + $0x38] sm:$0xff]
        %v6673 = vld [vmem:[%s6664 + $0x40] sm:$0xff]
        %v6674 = vld [vmem:[%s6664 + $0x48] sm:$0xff]
        %v6675 = vld [vmem:[%s6664 + $0x50] sm:$0xff]
        %v6676 = vld [vmem:[%s6664 + $0x58] sm:$0xff]
        %v6677 = vld [vmem:[%s6664 + $0x60] sm:$0xff]
        %v6678 = vld [vmem:[%s6664 + $0x68] sm:$0xff]
        %v6679 = vld [vmem:[%s6664 + $0x70] sm:$0xff]
        %v6680 = vld [vmem:[%s6664 + $0x78] sm:$0xff]
        %v6718 = vunpack.c.l.b16 %v6627
        %v6719 = vunpack.c.l.b16 %v6628
        %v6720 = vunpack.c.l.b16 %v6629
        %v6721 = vunpack.c.l.b16 %v6630
        %v6722 = vunpack.c.l.b16 %v6631
        %v6723 = vunpack.c.l.b16 %v6632
        %v6724 = vunpack.c.l.b16 %v6633
        %v6725 = vunpack.c.l.b16 %v6634
        %v6726 = vunpack.c.l.b16 %v6635
        %v6727 = vunpack.c.l.b16 %v6636
        %v6728 = vunpack.c.l.b16 %v6637
        %v6729 = vunpack.c.l.b16 %v6638
        %v6730 = vunpack.c.l.b16 %v6639
        %v6731 = vunpack.c.l.b16 %v6640
        %v6732 = vunpack.c.l.b16 %v6641
        %v6733 = vunpack.c.l.b16 %v6642
        %v6734 = vunpack.c.l.b16 %v6643
        %v6735 = vunpack.c.l.b16 %v6644
        %v6736 = vunpack.c.l.b16 %v6645
        %v6737 = vunpack.c.l.b16 %v6646
        %v6738 = vunpack.c.l.b16 %v6647
        %v6739 = vunpack.c.l.b16 %v6648
        %v6740 = vunpack.c.l.b16 %v6649
        %v6741 = vunpack.c.l.b16 %v6650
        %v6742 = vunpack.c.l.b16 %v6651
        %v6743 = vunpack.c.l.b16 %v6652
        %v6744 = vunpack.c.l.b16 %v6653
        %v6745 = vunpack.c.l.b16 %v6654
        %v6746 = vunpack.c.l.b16 %v6655
        %v6747 = vunpack.c.l.b16 %v6656
        %v6748 = vunpack.c.l.b16 %v6657
        %v6749 = vunpack.c.l.b16 %v6658
        %v6750 = vunpack.c.l.b16 %v6659
        %v6751 = vunpack.c.l.b16 %v6660
        %v6752 = vunpack.c.l.b16 %v6661
        %v6753 = vunpack.c.l.b16 %v6662
        %v6754 = vunpack.c.l.b16 %v6663
        %v6755 = vpack.c.b16 %v6719, %v6718
        %v6756 = vpack.c.b16 %v6721, %v6720
        %v6757 = vpack.c.b16 %v6723, %v6722
        %v6758 = vpack.c.b16 %v6725, %v6724
        %v6759 = vpack.c.b16 %v6727, %v6726
        %v6760 = vpack.c.b16 %v6729, %v6728
        %v6761 = vpack.c.b16 %v6731, %v6730
        %v6762 = vpack.c.b16 %v6733, %v6732
        %v6763 = vpack.c.b16 %v6735, %v6734
        %v6764 = vpack.c.b16 %v6737, %v6736
        %v6765 = vpack.c.b16 %v6739, %v6738
        %v6766 = vpack.c.b16 %v6741, %v6740
        %v6767 = vpack.c.b16 %v6743, %v6742
        %v6768 = vpack.c.b16 %v6745, %v6744
        %v6769 = vpack.c.b16 %v6747, %v6746
        %v6770 = vpack.c.b16 %v6749, %v6748
        %v6771 = vpack.c.b16 %v6751, %v6750
        %v6772 = vpack.c.b16 %v6753, %v6752
        %v6773 = vpack.c.b16 %v6754, %v6754
        %v6774 = vrot.slane %v6755, 2
        %v6775 = vrot.slane %v6756, 2
        %v6776 = vsel %vm6206, %v6774, %v6775
        %v6777 = vrot.slane %v6757, 2
        %v6778 = vsel %vm6206, %v6775, %v6777
        %v6779 = vrot.slane %v6758, 2
        %v6780 = vsel %vm6206, %v6777, %v6779
        %v6781 = vrot.slane %v6759, 2
        %v6782 = vsel %vm6206, %v6779, %v6781
        %v6783 = vrot.slane %v6760, 2
        %v6784 = vsel %vm6206, %v6781, %v6783
        %v6785 = vrot.slane %v6761, 2
        %v6786 = vsel %vm6206, %v6783, %v6785
        %v6787 = vrot.slane %v6762, 2
        %v6788 = vsel %vm6206, %v6785, %v6787
        %v6789 = vrot.slane %v6763, 2
        %v6790 = vsel %vm6206, %v6787, %v6789
        %v6791 = vrot.slane %v6764, 2
        %v6792 = vsel %vm6206, %v6789, %v6791
        %v6793 = vrot.slane %v6765, 2
        %v6794 = vsel %vm6206, %v6791, %v6793
        %v6795 = vrot.slane %v6766, 2
        %v6796 = vsel %vm6206, %v6793, %v6795
        %v6797 = vrot.slane %v6767, 2
        %v6798 = vsel %vm6206, %v6795, %v6797
        %v6799 = vrot.slane %v6768, 2
        %v6800 = vsel %vm6206, %v6797, %v6799
        %v6801 = vrot.slane %v6769, 2
        %v6802 = vsel %vm6206, %v6799, %v6801
        %v6803 = vrot.slane %v6770, 2
        %v6804 = vsel %vm6206, %v6801, %v6803
        %v6805 = vrot.slane %v6771, 2
        %v6806 = vsel %vm6206, %v6803, %v6805
        %v6807 = vrot.slane %v6772, 2
        %v6808 = vsel %vm6206, %v6805, %v6807
        %v6809 = vrot.slane %v6773, 2
        %v6810 = vsel %vm6206, %v6807, %v6809
        %v6845 = vunpack.c.l.b16 %v6665
        %v6846 = vunpack.c.h.b16 %v6665
        %v6847 = vunpack.c.l.b16 %v6666
        %v6848 = vunpack.c.h.b16 %v6666
        %v6849 = vunpack.c.l.b16 %v6667
        %v6850 = vunpack.c.h.b16 %v6667
        %v6851 = vunpack.c.l.b16 %v6668
        %v6852 = vunpack.c.h.b16 %v6668
        %v6853 = vunpack.c.l.b16 %v6669
        %v6854 = vunpack.c.h.b16 %v6669
        %v6855 = vunpack.c.l.b16 %v6670
        %v6856 = vunpack.c.h.b16 %v6670
        %v6857 = vunpack.c.l.b16 %v6671
        %v6858 = vunpack.c.h.b16 %v6671
        %v6859 = vunpack.c.l.b16 %v6672
        %v6860 = vunpack.c.h.b16 %v6672
        %v6861 = vunpack.c.l.b16 %v6673
        %v6862 = vunpack.c.h.b16 %v6673
        %v6863 = vunpack.c.l.b16 %v6674
        %v6864 = vunpack.c.h.b16 %v6674
        %v6865 = vunpack.c.l.b16 %v6675
        %v6866 = vunpack.c.h.b16 %v6675
        %v6867 = vunpack.c.l.b16 %v6676
        %v6868 = vunpack.c.h.b16 %v6676
        %v6869 = vunpack.c.l.b16 %v6677
        %v6870 = vunpack.c.h.b16 %v6677
        %v6871 = vunpack.c.l.b16 %v6678
        %v6872 = vunpack.c.h.b16 %v6678
        %v6873 = vunpack.c.l.b16 %v6679
        %v6874 = vunpack.c.h.b16 %v6679
        %v6875 = vunpack.c.l.b16 %v6680
        %v6876 = vunpack.c.h.b16 %v6680
        %v6877 = vpack.c.b16 %v6847, %v6845
        %v6878 = vpack.c.b16 %v6848, %v6846
        %v6879 = vpack.c.b16 %v6851, %v6849
        %v6880 = vpack.c.b16 %v6852, %v6850
        %v6881 = vpack.c.b16 %v6855, %v6853
        %v6882 = vpack.c.b16 %v6856, %v6854
        %v6883 = vpack.c.b16 %v6859, %v6857
        %v6884 = vpack.c.b16 %v6860, %v6858
        %v6885 = vpack.c.b16 %v6863, %v6861
        %v6886 = vpack.c.b16 %v6864, %v6862
        %v6887 = vpack.c.b16 %v6867, %v6865
        %v6888 = vpack.c.b16 %v6868, %v6866
        %v6889 = vpack.c.b16 %v6871, %v6869
        %v6890 = vpack.c.b16 %v6872, %v6870
        %v6891 = vpack.c.b16 %v6875, %v6873
        %v6892 = vpack.c.b16 %v6876, %v6874
        %6909 = vmatprep.subr.bf16.mxu0 %v6878
        %6910 = vmatpush1.bf16.msra.mxu0 %v6877
        %6911 = vmatprep.subr.bf16.mxu0 %v6880
        %6912 = vmatpush1.bf16.msra.mxu0 %v6879
        %6913 = vmatprep.subr.bf16.mxu0 %v6882
        %6914 = vmatpush1.bf16.msra.mxu0 %v6881
        %6915 = vmatprep.subr.bf16.mxu0 %v6884
        %6916 = vmatpush1.bf16.msra.mxu0 %v6883
        %6917 = vmatprep.subr.bf16.mxu0 %v6886
        %6918 = vmatpush1.bf16.msra.mxu0 %v6885
        %6919 = vmatprep.subr.bf16.mxu0 %v6888
        %6920 = vmatpush1.bf16.msra.mxu0 %v6887
        %6921 = vmatprep.subr.bf16.mxu0 %v6890
        %6922 = vmatpush1.bf16.msra.mxu0 %v6889
        %6923 = vmatprep.subr.bf16.mxu0 %v6892
        %6924 = vmatpush1.bf16.msra.mxu0 %v6891
        %6925 = vmatprep.subr.bf16.mxu0 0
        %6926 = vmatpush1.bf16.msra.mxu0 0
        %6927 = vmatprep.subr.bf16.mxu0 0
        %6928 = vmatpush1.bf16.msra.mxu0 0
        %6929 = vmatprep.subr.bf16.mxu0 0
        %6930 = vmatpush1.bf16.msra.mxu0 0
        %6931 = vmatprep.subr.bf16.mxu0 0
        %6932 = vmatpush1.bf16.msra.mxu0 0
        %6933 = vmatprep.subr.bf16.mxu0 0
        %6934 = vmatpush1.bf16.msra.mxu0 0
        %6935 = vmatprep.subr.bf16.mxu0 0
        %6936 = vmatpush1.bf16.msra.mxu0 0
        %6937 = vmatprep.subr.bf16.mxu0 0
        %6938 = vmatpush1.bf16.msra.mxu0 0
        %6939 = vmatprep.subr.bf16.mxu0 0
        %6940 = vmatpush1.bf16.msra.mxu0 0
        %6941 = vmatprep.mubr.bf16.mxu0 0
        %6942 = vmatmul.mubr.bf16.gmra.mrb[0].mxu0 %v6776
        %v6943 = vpop.f32.mrb[0].mxu0
        %v6944 = vadd.f32 0.0, %v6943
        %v6945 = vpop.f32.mrb[0].mxu0
        %v6946 = vadd.f32 0.0, %v6945
        %v6947 = vpop.f32.mrb[0].mxu0
        %v6948 = vadd.f32 0.0, %v6947
        %v6949 = vpop.f32.mrb[0].mxu0
        %v6950 = vadd.f32 0.0, %v6949
        %6951 = vmatprep.mubr.bf16.mxu0 0
        %6952 = vmatmul.mubr.bf16.gmra.mrb[0].mxu0 %v6778
        %v6953 = vpop.f32.mrb[0].mxu0
        %v6954 = vadd.f32 0.0, %v6953
        %v6955 = vpop.f32.mrb[0].mxu0
        %v6956 = vadd.f32 0.0, %v6955
        %v6957 = vpop.f32.mrb[0].mxu0
        %v6958 = vadd.f32 0.0, %v6957
        %v6959 = vpop.f32.mrb[0].mxu0
        %v6960 = vadd.f32 0.0, %v6959
        %6961 = vmatprep.mubr.bf16.mxu0 0
        %6962 = vmatmul.mubr.bf16.gmra.mrb[0].mxu0 %v6780
        %v6963 = vpop.f32.mrb[0].mxu0
        %v6964 = vadd.f32 0.0, %v6963
        %v6965 = vpop.f32.mrb[0].mxu0
        %v6966 = vadd.f32 0.0, %v6965
        %v6967 = vpop.f32.mrb[0].mxu0
        %v6968 = vadd.f32 0.0, %v6967
        %v6969 = vpop.f32.mrb[0].mxu0
        %v6970 = vadd.f32 0.0, %v6969
        %6971 = vmatprep.mubr.bf16.mxu0 0
        %6972 = vmatmul.mubr.bf16.gmra.mrb[0].mxu0 %v6782
        %v6973 = vpop.f32.mrb[0].mxu0
        %v6974 = vadd.f32 0.0, %v6973
        %v6975 = vpop.f32.mrb[0].mxu0
        %v6976 = vadd.f32 0.0, %v6975
        %v6977 = vpop.f32.mrb[0].mxu0
        %v6978 = vadd.f32 0.0, %v6977
        %v6979 = vpop.f32.mrb[0].mxu0
        %v6980 = vadd.f32 0.0, %v6979
        %6981 = vmatprep.mubr.bf16.mxu0 0
        %6982 = vmatmul.mubr.bf16.gmra.mrb[0].mxu0 %v6784
        %v6983 = vpop.f32.mrb[0].mxu0
        %v6984 = vadd.f32 0.0, %v6983
        %v6985 = vpop.f32.mrb[0].mxu0
        %v6986 = vadd.f32 0.0, %v6985
        %v6987 = vpop.f32.mrb[0].mxu0
        %v6988 = vadd.f32 0.0, %v6987
        %v6989 = vpop.f32.mrb[0].mxu0
        %v6990 = vadd.f32 0.0, %v6989
        %6991 = vmatprep.mubr.bf16.mxu0 0
        %6992 = vmatmul.mubr.bf16.gmra.mrb[0].mxu0 %v6786
        %v6993 = vpop.f32.mrb[0].mxu0
        %v6994 = vadd.f32 0.0, %v6993
        %v6995 = vpop.f32.mrb[0].mxu0
        %v6996 = vadd.f32 0.0, %v6995
        %v6997 = vpop.f32.mrb[0].mxu0
        %v6998 = vadd.f32 0.0, %v6997
        %v6999 = vpop.f32.mrb[0].mxu0
        %v7000 = vadd.f32 0.0, %v6999
        %7001 = vmatprep.mubr.bf16.mxu0 0
        %7002 = vmatmul.mubr.bf16.gmra.mrb[0].mxu0 %v6788
        %v7003 = vpop.f32.mrb[0].mxu0
        %v7004 = vadd.f32 0.0, %v7003
        %v7005 = vpop.f32.mrb[0].mxu0
        %v7006 = vadd.f32 0.0, %v7005
        %v7007 = vpop.f32.mrb[0].mxu0
        %v7008 = vadd.f32 0.0, %v7007
        %v7009 = vpop.f32.mrb[0].mxu0
        %v7010 = vadd.f32 0.0, %v7009
        %7011 = vmatprep.mubr.bf16.mxu0 0
        %7012 = vmatmul.mubr.bf16.gmra.mrb[0].mxu0 %v6790
        %v7013 = vpop.f32.mrb[0].mxu0
        %v7014 = vadd.f32 0.0, %v7013
        %v7015 = vpop.f32.mrb[0].mxu0
        %v7016 = vadd.f32 0.0, %v7015
        %v7017 = vpop.f32.mrb[0].mxu0
        %v7018 = vadd.f32 0.0, %v7017
        %v7019 = vpop.f32.mrb[0].mxu0
        %v7020 = vadd.f32 0.0, %v7019
        %7021 = vmatprep.mubr.bf16.mxu0 0
        %7022 = vmatmul.mubr.bf16.gmra.mrb[0].mxu0 %v6792
        %v7023 = vpop.f32.mrb[0].mxu0
        %v7024 = vadd.f32 0.0, %v7023
        %v7025 = vpop.f32.mrb[0].mxu0
        %v7026 = vadd.f32 0.0, %v7025
        %v7027 = vpop.f32.mrb[0].mxu0
        %v7028 = vadd.f32 0.0, %v7027
        %v7029 = vpop.f32.mrb[0].mxu0
        %v7030 = vadd.f32 0.0, %v7029
        %7031 = vmatprep.mubr.bf16.mxu0 0
        %7032 = vmatmul.mubr.bf16.gmra.mrb[0].mxu0 %v6794
        %v7033 = vpop.f32.mrb[0].mxu0
        %v7034 = vadd.f32 0.0, %v7033
        %v7035 = vpop.f32.mrb[0].mxu0
        %v7036 = vadd.f32 0.0, %v7035
        %v7037 = vpop.f32.mrb[0].mxu0
        %v7038 = vadd.f32 0.0, %v7037
        %v7039 = vpop.f32.mrb[0].mxu0
        %v7040 = vadd.f32 0.0, %v7039
        %7041 = vmatprep.mubr.bf16.mxu0 0
        %7042 = vmatmul.mubr.bf16.gmra.mrb[0].mxu0 %v6796
        %v7043 = vpop.f32.mrb[0].mxu0
        %v7044 = vadd.f32 0.0, %v7043
        %v7045 = vpop.f32.mrb[0].mxu0
        %v7046 = vadd.f32 0.0, %v7045
        %v7047 = vpop.f32.mrb[0].mxu0
        %v7048 = vadd.f32 0.0, %v7047
        %v7049 = vpop.f32.mrb[0].mxu0
        %v7050 = vadd.f32 0.0, %v7049
        %7051 = vmatprep.mubr.bf16.mxu0 0
        %7052 = vmatmul.mubr.bf16.gmra.mrb[0].mxu0 %v6798
        %v7053 = vpop.f32.mrb[0].mxu0
        %v7054 = vadd.f32 0.0, %v7053
        %v7055 = vpop.f32.mrb[0].mxu0
        %v7056 = vadd.f32 0.0, %v7055
        %v7057 = vpop.f32.mrb[0].mxu0
        %v7058 = vadd.f32 0.0, %v7057
        %v7059 = vpop.f32.mrb[0].mxu0
        %v7060 = vadd.f32 0.0, %v7059
        %7061 = vmatprep.mubr.bf16.mxu0 0
        %7062 = vmatmul.mubr.bf16.gmra.mrb[0].mxu0 %v6800
        %v7063 = vpop.f32.mrb[0].mxu0
        %v7064 = vadd.f32 0.0, %v7063
        %v7065 = vpop.f32.mrb[0].mxu0
        %v7066 = vadd.f32 0.0, %v7065
        %v7067 = vpop.f32.mrb[0].mxu0
        %v7068 = vadd.f32 0.0, %v7067
        %v7069 = vpop.f32.mrb[0].mxu0
        %v7070 = vadd.f32 0.0, %v7069
        %7071 = vmatprep.mubr.bf16.mxu0 0
        %7072 = vmatmul.mubr.bf16.gmra.mrb[0].mxu0 %v6802
        %v7073 = vpop.f32.mrb[0].mxu0
        %v7074 = vadd.f32 0.0, %v7073
        %v7075 = vpop.f32.mrb[0].mxu0
        %v7076 = vadd.f32 0.0, %v7075
        %v7077 = vpop.f32.mrb[0].mxu0
        %v7078 = vadd.f32 0.0, %v7077
        %v7079 = vpop.f32.mrb[0].mxu0
        %v7080 = vadd.f32 0.0, %v7079
        %7081 = vmatprep.mubr.bf16.mxu0 0
        %7082 = vmatmul.mubr.bf16.gmra.mrb[0].mxu0 %v6804
        %v7083 = vpop.f32.mrb[0].mxu0
        %v7084 = vadd.f32 0.0, %v7083
        %v7085 = vpop.f32.mrb[0].mxu0
        %v7086 = vadd.f32 0.0, %v7085
        %v7087 = vpop.f32.mrb[0].mxu0
        %v7088 = vadd.f32 0.0, %v7087
        %v7089 = vpop.f32.mrb[0].mxu0
        %v7090 = vadd.f32 0.0, %v7089
        %7091 = vmatprep.mubr.bf16.mxu0 0
        %7092 = vmatmul.mubr.bf16.gmra.mrb[0].mxu0 %v6806
        %v7093 = vpop.f32.mrb[0].mxu0
        %v7094 = vadd.f32 0.0, %v7093
        %v7095 = vpop.f32.mrb[0].mxu0
        %v7096 = vadd.f32 0.0, %v7095
        %v7097 = vpop.f32.mrb[0].mxu0
        %v7098 = vadd.f32 0.0, %v7097
        %v7099 = vpop.f32.mrb[0].mxu0
        %v7100 = vadd.f32 0.0, %v7099
        %7101 = vmatprep.mubr.bf16.mxu0 0
        %7102 = vmatmul.mubr.bf16.gmra.mrb[0].mxu0 %v6808
        %v7103 = vpop.f32.mrb[0].mxu0
        %v7104 = vadd.f32 0.0, %v7103
        %v7105 = vpop.f32.mrb[0].mxu0
        %v7106 = vadd.f32 0.0, %v7105
        %v7107 = vpop.f32.mrb[0].mxu0
        %v7108 = vadd.f32 0.0, %v7107
        %v7109 = vpop.f32.mrb[0].mxu0
        %v7110 = vadd.f32 0.0, %v7109
        %7111 = vmatprep.mubr.bf16.mxu0 0
        %7112 = vmatmul.mubr.bf16.gmra.mrb[0].mxu0 %v6810
        %v7113 = vpop.f32.mrb[0].mxu0
        %v7114 = vadd.f32 0.0, %v7113
        %v7115 = vpop.f32.mrb[0].mxu0
        %v7116 = vadd.f32 0.0, %v7115
        %v7117 = vpop.f32.mrb[0].mxu0
        %v7118 = vadd.f32 0.0, %v7117
        %v7119 = vpop.f32.mrb[0].mxu0
        %v7120 = vadd.f32 0.0, %v7119
        %7121 = vdwg.mxu0
        %v7122 = vadd.f32 %v6555, %v6944
        %v7123 = vadd.f32 %v6556, %v6946
        %v7124 = vadd.f32 %v6557, %v6948
        %v7125 = vadd.f32 %v6558, %v6950
        %v7126 = vadd.f32 %v6559, %v6954
        %v7127 = vadd.f32 %v6560, %v6956
        %v7128 = vadd.f32 %v6561, %v6958
        %v7129 = vadd.f32 %v6562, %v6960
        %v7130 = vadd.f32 %v6563, %v6964
        %v7131 = vadd.f32 %v6564, %v6966
        %v7132 = vadd.f32 %v6565, %v6968
        %v7133 = vadd.f32 %v6566, %v6970
        %v7134 = vadd.f32 %v6567, %v6974
        %v7135 = vadd.f32 %v6568, %v6976
        %v7136 = vadd.f32 %v6569, %v6978
        %v7137 = vadd.f32 %v6570, %v6980
        %v7138 = vadd.f32 %v6571, %v6984
        %v7139 = vadd.f32 %v6572, %v6986
        %v7140 = vadd.f32 %v6573, %v6988
        %v7141 = vadd.f32 %v6574, %v6990
        %v7142 = vadd.f32 %v6575, %v6994
        %v7143 = vadd.f32 %v6576, %v6996
        %v7144 = vadd.f32 %v6577, %v6998
        %v7145 = vadd.f32 %v6578, %v7000
        %v7146 = vadd.f32 %v6579, %v7004
        %v7147 = vadd.f32 %v6580, %v7006
        %v7148 = vadd.f32 %v6581, %v7008
        %v7149 = vadd.f32 %v6582, %v7010
        %v7150 = vadd.f32 %v6583, %v7014
        %v7151 = vadd.f32 %v6584, %v7016
        %v7152 = vadd.f32 %v6585, %v7018
        %v7153 = vadd.f32 %v6586, %v7020
        %v7154 = vadd.f32 %v6587, %v7024
        %v7155 = vadd.f32 %v6588, %v7026
        %v7156 = vadd.f32 %v6589, %v7028
        %v7157 = vadd.f32 %v6590, %v7030
        %v7158 = vadd.f32 %v6591, %v7034
        %v7159 = vadd.f32 %v6592, %v7036
        %v7160 = vadd.f32 %v6593, %v7038
        %v7161 = vadd.f32 %v6594, %v7040
        %v7162 = vadd.f32 %v6595, %v7044
        %v7163 = vadd.f32 %v6596, %v7046
        %v7164 = vadd.f32 %v6597, %v7048
        %v7165 = vadd.f32 %v6598, %v7050
        %v7166 = vadd.f32 %v6599, %v7054
        %v7167 = vadd.f32 %v6600, %v7056
        %v7168 = vadd.f32 %v6601, %v7058
        %v7169 = vadd.f32 %v6602, %v7060
        %v7170 = vadd.f32 %v6603, %v7064
        %v7171 = vadd.f32 %v6604, %v7066
        %v7172 = vadd.f32 %v6605, %v7068
        %v7173 = vadd.f32 %v6606, %v7070
        %v7174 = vadd.f32 %v6607, %v7074
        %v7175 = vadd.f32 %v6608, %v7076
        %v7176 = vadd.f32 %v6609, %v7078
        %v7177 = vadd.f32 %v6610, %v7080
        %v7178 = vadd.f32 %v6611, %v7084
        %v7179 = vadd.f32 %v6612, %v7086
        %v7180 = vadd.f32 %v6613, %v7088
        %v7181 = vadd.f32 %v6614, %v7090
        %v7182 = vadd.f32 %v6615, %v7094
        %v7183 = vadd.f32 %v6616, %v7096
        %v7184 = vadd.f32 %v6617, %v7098
        %v7185 = vadd.f32 %v6618, %v7100
        %v7186 = vadd.f32 %v6619, %v7104
        %v7187 = vadd.f32 %v6620, %v7106
        %v7188 = vadd.f32 %v6621, %v7108
        %v7189 = vadd.f32 %v6622, %v7110
        %v7190 = vadd.f32 %v6623, %v7114
        %v7191 = vadd.f32 %v6624, %v7116
        %v7192 = vadd.f32 %v6625, %v7118
        %v7193 = vadd.f32 %v6626, %v7120
        %v7194 = vld [vmem:[#allocation2 + $0xa0] sm:$0x7]
        %s7195 = scalar_lea.vmem %s366, 896
        %v7196 = vld [vmem:[%s7195] sm:$0xff]
        %v7197 = vld [vmem:[%s7195 + $0x8] sm:$0xff]
        %v7198 = vld [vmem:[%s7195 + $0x10] sm:$0xff]
        %v7199 = vld [vmem:[%s7195 + $0x18] sm:$0xff]
        %v7200 = vld [vmem:[%s7195 + $0x20] sm:$0xff]
        %v7201 = vld [vmem:[%s7195 + $0x28] sm:$0xff]
        %v7202 = vld [vmem:[%s7195 + $0x30] sm:$0xff]
        %v7203 = vld [vmem:[%s7195 + $0x38] sm:$0xff]
        %v7204 = vld [vmem:[%s7195 + $0x40] sm:$0xff]
        %v7205 = vld [vmem:[%s7195 + $0x48] sm:$0xff]
        %v7206 = vld [vmem:[%s7195 + $0x50] sm:$0xff]
        %v7207 = vld [vmem:[%s7195 + $0x58] sm:$0xff]
        %v7208 = vld [vmem:[%s7195 + $0x60] sm:$0xff]
        %v7209 = vld [vmem:[%s7195 + $0x68] sm:$0xff]
        %v7210 = vld [vmem:[%s7195 + $0x70] sm:$0xff]
        %v7211 = vld [vmem:[%s7195 + $0x78] sm:$0xff]
        %v7213 = vunpack.c.l.b16 %v7194
        %v7214 = vpack.c.b16 %v7213, %v7213
        %vm7215 = vsmask.f32 5376
        %v7217 = vshrl.u32 %v6755, 16
        %v7219 = vrot.slane %v7217, 2
        %v7220 = vshll.u32 %v6755, 16
        %v7222 = vrot.slane %v7220, 3
        %v7223 = vor.u32 %v7219, %v7222
        %v7225 = vshrl.u32 %v6756, 16
        %v7227 = vrot.slane %v7225, 2
        %v7228 = vshll.u32 %v6756, 16
        %v7230 = vrot.slane %v7228, 3
        %v7231 = vor.u32 %v7227, %v7230
        %v7232 = vsel %vm7215, %v7223, %v7231
        %v7234 = vshrl.u32 %v6757, 16
        %v7236 = vrot.slane %v7234, 2
        %v7237 = vshll.u32 %v6757, 16
        %v7239 = vrot.slane %v7237, 3
        %v7240 = vor.u32 %v7236, %v7239
        %v7241 = vsel %vm7215, %v7231, %v7240
        %v7243 = vshrl.u32 %v6758, 16
        %v7245 = vrot.slane %v7243, 2
        %v7246 = vshll.u32 %v6758, 16
        %v7248 = vrot.slane %v7246, 3
        %v7249 = vor.u32 %v7245, %v7248
        %v7250 = vsel %vm7215, %v7240, %v7249
        %v7252 = vshrl.u32 %v6759, 16
        %v7254 = vrot.slane %v7252, 2
        %v7255 = vshll.u32 %v6759, 16
        %v7257 = vrot.slane %v7255, 3
        %v7258 = vor.u32 %v7254, %v7257
        %v7259 = vsel %vm7215, %v7249, %v7258
        %v7261 = vshrl.u32 %v6760, 16
        %v7263 = vrot.slane %v7261, 2
        %v7264 = vshll.u32 %v6760, 16
        %v7266 = vrot.slane %v7264, 3
        %v7267 = vor.u32 %v7263, %v7266
        %v7268 = vsel %vm7215, %v7258, %v7267
        %v7270 = vshrl.u32 %v6761, 16
        %v7272 = vrot.slane %v7270, 2
        %v7273 = vshll.u32 %v6761, 16
        %v7275 = vrot.slane %v7273, 3
        %v7276 = vor.u32 %v7272, %v7275
        %v7277 = vsel %vm7215, %v7267, %v7276
        %v7279 = vshrl.u32 %v6762, 16
        %v7281 = vrot.slane %v7279, 2
        %v7282 = vshll.u32 %v6762, 16
        %v7284 = vrot.slane %v7282, 3
        %v7285 = vor.u32 %v7281, %v7284
        %v7286 = vsel %vm7215, %v7276, %v7285
        %v7288 = vshrl.u32 %v6763, 16
        %v7290 = vrot.slane %v7288, 2
        %v7291 = vshll.u32 %v6763, 16
        %v7293 = vrot.slane %v7291, 3
        %v7294 = vor.u32 %v7290, %v7293
        %v7295 = vsel %vm7215, %v7285, %v7294
        %v7297 = vshrl.u32 %v6764, 16
        %v7299 = vrot.slane %v7297, 2
        %v7300 = vshll.u32 %v6764, 16
        %v7302 = vrot.slane %v7300, 3
        %v7303 = vor.u32 %v7299, %v7302
        %v7304 = vsel %vm7215, %v7294, %v7303
        %v7306 = vshrl.u32 %v6765, 16
        %v7308 = vrot.slane %v7306, 2
        %v7309 = vshll.u32 %v6765, 16
        %v7311 = vrot.slane %v7309, 3
        %v7312 = vor.u32 %v7308, %v7311
        %v7313 = vsel %vm7215, %v7303, %v7312
        %v7315 = vshrl.u32 %v6766, 16
        %v7317 = vrot.slane %v7315, 2
        %v7318 = vshll.u32 %v6766, 16
        %v7320 = vrot.slane %v7318, 3
        %v7321 = vor.u32 %v7317, %v7320
        %v7322 = vsel %vm7215, %v7312, %v7321
        %v7324 = vshrl.u32 %v6767, 16
        %v7326 = vrot.slane %v7324, 2
        %v7327 = vshll.u32 %v6767, 16
        %v7329 = vrot.slane %v7327, 3
        %v7330 = vor.u32 %v7326, %v7329
        %v7331 = vsel %vm7215, %v7321, %v7330
        %v7333 = vshrl.u32 %v6768, 16
        %v7335 = vrot.slane %v7333, 2
        %v7336 = vshll.u32 %v6768, 16
        %v7338 = vrot.slane %v7336, 3
        %v7339 = vor.u32 %v7335, %v7338
        %v7340 = vsel %vm7215, %v7330, %v7339
        %v7342 = vshrl.u32 %v6769, 16
        %v7344 = vrot.slane %v7342, 2
        %v7345 = vshll.u32 %v6769, 16
        %v7347 = vrot.slane %v7345, 3
        %v7348 = vor.u32 %v7344, %v7347
        %v7349 = vsel %vm7215, %v7339, %v7348
        %v7351 = vshrl.u32 %v6770, 16
        %v7353 = vrot.slane %v7351, 2
        %v7354 = vshll.u32 %v6770, 16
        %v7356 = vrot.slane %v7354, 3
        %v7357 = vor.u32 %v7353, %v7356
        %v7358 = vsel %vm7215, %v7348, %v7357
        %v7360 = vshrl.u32 %v6771, 16
        %v7362 = vrot.slane %v7360, 2
        %v7363 = vshll.u32 %v6771, 16
        %v7365 = vrot.slane %v7363, 3
        %v7366 = vor.u32 %v7362, %v7365
        %v7367 = vsel %vm7215, %v7357, %v7366
        %v7369 = vshrl.u32 %v6772, 16
        %v7371 = vrot.slane %v7369, 2
        %v7372 = vshll.u32 %v6772, 16
        %v7374 = vrot.slane %v7372, 3
        %v7375 = vor.u32 %v7371, %v7374
        %v7376 = vsel %vm7215, %v7366, %v7375
        %v7378 = vshrl.u32 %v7214, 16
        %v7380 = vrot.slane %v7378, 2
        %v7381 = vshll.u32 %v7214, 16
        %v7383 = vrot.slane %v7381, 3
        %v7384 = vor.u32 %v7380, %v7383
        %v7385 = vsel %vm7215, %v7375, %v7384
        %v7420 = vunpack.c.l.b16 %v7196
        %v7421 = vunpack.c.h.b16 %v7196
        %v7422 = vunpack.c.l.b16 %v7197
        %v7423 = vunpack.c.h.b16 %v7197
        %v7424 = vunpack.c.l.b16 %v7198
        %v7425 = vunpack.c.h.b16 %v7198
        %v7426 = vunpack.c.l.b16 %v7199
        %v7427 = vunpack.c.h.b16 %v7199
        %v7428 = vunpack.c.l.b16 %v7200
        %v7429 = vunpack.c.h.b16 %v7200
        %v7430 = vunpack.c.l.b16 %v7201
        %v7431 = vunpack.c.h.b16 %v7201
        %v7432 = vunpack.c.l.b16 %v7202
        %v7433 = vunpack.c.h.b16 %v7202
        %v7434 = vunpack.c.l.b16 %v7203
        %v7435 = vunpack.c.h.b16 %v7203
        %v7436 = vunpack.c.l.b16 %v7204
        %v7437 = vunpack.c.h.b16 %v7204
        %v7438 = vunpack.c.l.b16 %v7205
        %v7439 = vunpack.c.h.b16 %v7205
        %v7440 = vunpack.c.l.b16 %v7206
        %v7441 = vunpack.c.h.b16 %v7206
        %v7442 = vunpack.c.l.b16 %v7207
        %v7443 = vunpack.c.h.b16 %v7207
        %v7444 = vunpack.c.l.b16 %v7208
        %v7445 = vunpack.c.h.b16 %v7208
        %v7446 = vunpack.c.l.b16 %v7209
        %v7447 = vunpack.c.h.b16 %v7209
        %v7448 = vunpack.c.l.b16 %v7210
        %v7449 = vunpack.c.h.b16 %v7210
        %v7450 = vunpack.c.l.b16 %v7211
        %v7451 = vunpack.c.h.b16 %v7211
        %v7452 = vpack.c.b16 %v7422, %v7420
        %v7453 = vpack.c.b16 %v7423, %v7421
        %v7454 = vpack.c.b16 %v7426, %v7424
        %v7455 = vpack.c.b16 %v7427, %v7425
        %v7456 = vpack.c.b16 %v7430, %v7428
        %v7457 = vpack.c.b16 %v7431, %v7429
        %v7458 = vpack.c.b16 %v7434, %v7432
        %v7459 = vpack.c.b16 %v7435, %v7433
        %v7460 = vpack.c.b16 %v7438, %v7436
        %v7461 = vpack.c.b16 %v7439, %v7437
        %v7462 = vpack.c.b16 %v7442, %v7440
        %v7463 = vpack.c.b16 %v7443, %v7441
        %v7464 = vpack.c.b16 %v7446, %v7444
        %v7465 = vpack.c.b16 %v7447, %v7445
        %v7466 = vpack.c.b16 %v7450, %v7448
        %v7467 = vpack.c.b16 %v7451, %v7449
        %7484 = vmatprep.subr.bf16.mxu0 %v7453
        %7485 = vmatpush1.bf16.msra.mxu0 %v7452
        %7486 = vmatprep.subr.bf16.mxu0 %v7455
        %7487 = vmatpush1.bf16.msra.mxu0 %v7454
        %7488 = vmatprep.subr.bf16.mxu0 %v7457
        %7489 = vmatpush1.bf16.msra.mxu0 %v7456
        %7490 = vmatprep.subr.bf16.mxu0 %v7459
        %7491 = vmatpush1.bf16.msra.mxu0 %v7458
        %7492 = vmatprep.subr.bf16.mxu0 %v7461
        %7493 = vmatpush1.bf16.msra.mxu0 %v7460
        %7494 = vmatprep.subr.bf16.mxu0 %v7463
        %7495 = vmatpush1.bf16.msra.mxu0 %v7462
        %7496 = vmatprep.subr.bf16.mxu0 %v7465
        %7497 = vmatpush1.bf16.msra.mxu0 %v7464
        %7498 = vmatprep.subr.bf16.mxu0 %v7467
        %7499 = vmatpush1.bf16.msra.mxu0 %v7466
        %7500 = vmatprep.subr.bf16.mxu0 0
        %7501 = vmatpush1.bf16.msra.mxu0 0
        %7502 = vmatprep.subr.bf16.mxu0 0
        %7503 = vmatpush1.bf16.msra.mxu0 0
        %7504 = vmatprep.subr.bf16.mxu0 0
        %7505 = vmatpush1.bf16.msra.mxu0 0
        %7506 = vmatprep.subr.bf16.mxu0 0
        %7507 = vmatpush1.bf16.msra.mxu0 0
        %7508 = vmatprep.subr.bf16.mxu0 0
        %7509 = vmatpush1.bf16.msra.mxu0 0
        %7510 = vmatprep.subr.bf16.mxu0 0
        %7511 = vmatpush1.bf16.msra.mxu0 0
        %7512 = vmatprep.subr.bf16.mxu0 0
        %7513 = vmatpush1.bf16.msra.mxu0 0
        %7514 = vmatprep.subr.bf16.mxu0 0
        %7515 = vmatpush1.bf16.msra.mxu0 0
        %7516 = vmatprep.mubr.bf16.mxu0 0
        %7517 = vmatmul.mubr.bf16.gmra.mrb[0].mxu0 %v7232
        %v7518 = vpop.f32.mrb[0].mxu0
        %v7519 = vadd.f32 0.0, %v7518
        %v7520 = vpop.f32.mrb[0].mxu0
        %v7521 = vadd.f32 0.0, %v7520
        %v7522 = vpop.f32.mrb[0].mxu0
        %v7523 = vadd.f32 0.0, %v7522
        %v7524 = vpop.f32.mrb[0].mxu0
        %v7525 = vadd.f32 0.0, %v7524
        %7526 = vmatprep.mubr.bf16.mxu0 0
        %7527 = vmatmul.mubr.bf16.gmra.mrb[0].mxu0 %v7241
        %v7528 = vpop.f32.mrb[0].mxu0
        %v7529 = vadd.f32 0.0, %v7528
        %v7530 = vpop.f32.mrb[0].mxu0
        %v7531 = vadd.f32 0.0, %v7530
        %v7532 = vpop.f32.mrb[0].mxu0
        %v7533 = vadd.f32 0.0, %v7532
        %v7534 = vpop.f32.mrb[0].mxu0
        %v7535 = vadd.f32 0.0, %v7534
        %7536 = vmatprep.mubr.bf16.mxu0 0
        %7537 = vmatmul.mubr.bf16.gmra.mrb[0].mxu0 %v7250
        %v7538 = vpop.f32.mrb[0].mxu0
        %v7539 = vadd.f32 0.0, %v7538
        %v7540 = vpop.f32.mrb[0].mxu0
        %v7541 = vadd.f32 0.0, %v7540
        %v7542 = vpop.f32.mrb[0].mxu0
        %v7543 = vadd.f32 0.0, %v7542
        %v7544 = vpop.f32.mrb[0].mxu0
        %v7545 = vadd.f32 0.0, %v7544
        %7546 = vmatprep.mubr.bf16.mxu0 0
        %7547 = vmatmul.mubr.bf16.gmra.mrb[0].mxu0 %v7259
        %v7548 = vpop.f32.mrb[0].mxu0
        %v7549 = vadd.f32 0.0, %v7548
        %v7550 = vpop.f32.mrb[0].mxu0
        %v7551 = vadd.f32 0.0, %v7550
        %v7552 = vpop.f32.mrb[0].mxu0
        %v7553 = vadd.f32 0.0, %v7552
        %v7554 = vpop.f32.mrb[0].mxu0
        %v7555 = vadd.f32 0.0, %v7554
        %7556 = vmatprep.mubr.bf16.mxu0 0
        %7557 = vmatmul.mubr.bf16.gmra.mrb[0].mxu0 %v7268
        %v7558 = vpop.f32.mrb[0].mxu0
        %v7559 = vadd.f32 0.0, %v7558
        %v7560 = vpop.f32.mrb[0].mxu0
        %v7561 = vadd.f32 0.0, %v7560
        %v7562 = vpop.f32.mrb[0].mxu0
        %v7563 = vadd.f32 0.0, %v7562
        %v7564 = vpop.f32.mrb[0].mxu0
        %v7565 = vadd.f32 0.0, %v7564
        %7566 = vmatprep.mubr.bf16.mxu0 0
        %7567 = vmatmul.mubr.bf16.gmra.mrb[0].mxu0 %v7277
        %v7568 = vpop.f32.mrb[0].mxu0
        %v7569 = vadd.f32 0.0, %v7568
        %v7570 = vpop.f32.mrb[0].mxu0
        %v7571 = vadd.f32 0.0, %v7570
        %v7572 = vpop.f32.mrb[0].mxu0
        %v7573 = vadd.f32 0.0, %v7572
        %v7574 = vpop.f32.mrb[0].mxu0
        %v7575 = vadd.f32 0.0, %v7574
        %7576 = vmatprep.mubr.bf16.mxu0 0
        %7577 = vmatmul.mubr.bf16.gmra.mrb[0].mxu0 %v7286
        %v7578 = vpop.f32.mrb[0].mxu0
        %v7579 = vadd.f32 0.0, %v7578
        %v7580 = vpop.f32.mrb[0].mxu0
        %v7581 = vadd.f32 0.0, %v7580
        %v7582 = vpop.f32.mrb[0].mxu0
        %v7583 = vadd.f32 0.0, %v7582
        %v7584 = vpop.f32.mrb[0].mxu0
        %v7585 = vadd.f32 0.0, %v7584
        %7586 = vmatprep.mubr.bf16.mxu0 0
        %7587 = vmatmul.mubr.bf16.gmra.mrb[0].mxu0 %v7295
        %v7588 = vpop.f32.mrb[0].mxu0
        %v7589 = vadd.f32 0.0, %v7588
        %v7590 = vpop.f32.mrb[0].mxu0
        %v7591 = vadd.f32 0.0, %v7590
        %v7592 = vpop.f32.mrb[0].mxu0
        %v7593 = vadd.f32 0.0, %v7592
        %v7594 = vpop.f32.mrb[0].mxu0
        %v7595 = vadd.f32 0.0, %v7594
        %7596 = vmatprep.mubr.bf16.mxu0 0
        %7597 = vmatmul.mubr.bf16.gmra.mrb[0].mxu0 %v7304
        %v7598 = vpop.f32.mrb[0].mxu0
        %v7599 = vadd.f32 0.0, %v7598
        %v7600 = vpop.f32.mrb[0].mxu0
        %v7601 = vadd.f32 0.0, %v7600
        %v7602 = vpop.f32.mrb[0].mxu0
        %v7603 = vadd.f32 0.0, %v7602
        %v7604 = vpop.f32.mrb[0].mxu0
        %v7605 = vadd.f32 0.0, %v7604
        %7606 = vmatprep.mubr.bf16.mxu0 0
        %7607 = vmatmul.mubr.bf16.gmra.mrb[0].mxu0 %v7313
        %v7608 = vpop.f32.mrb[0].mxu0
        %v7609 = vadd.f32 0.0, %v7608
        %v7610 = vpop.f32.mrb[0].mxu0
        %v7611 = vadd.f32 0.0, %v7610
        %v7612 = vpop.f32.mrb[0].mxu0
        %v7613 = vadd.f32 0.0, %v7612
        %v7614 = vpop.f32.mrb[0].mxu0
        %v7615 = vadd.f32 0.0, %v7614
        %7616 = vmatprep.mubr.bf16.mxu0 0
        %7617 = vmatmul.mubr.bf16.gmra.mrb[0].mxu0 %v7322
        %v7618 = vpop.f32.mrb[0].mxu0
        %v7619 = vadd.f32 0.0, %v7618
        %v7620 = vpop.f32.mrb[0].mxu0
        %v7621 = vadd.f32 0.0, %v7620
        %v7622 = vpop.f32.mrb[0].mxu0
        %v7623 = vadd.f32 0.0, %v7622
        %v7624 = vpop.f32.mrb[0].mxu0
        %v7625 = vadd.f32 0.0, %v7624
        %7626 = vmatprep.mubr.bf16.mxu0 0
        %7627 = vmatmul.mubr.bf16.gmra.mrb[0].mxu0 %v7331
        %v7628 = vpop.f32.mrb[0].mxu0
        %v7629 = vadd.f32 0.0, %v7628
        %v7630 = vpop.f32.mrb[0].mxu0
        %v7631 = vadd.f32 0.0, %v7630
        %v7632 = vpop.f32.mrb[0].mxu0
        %v7633 = vadd.f32 0.0, %v7632
        %v7634 = vpop.f32.mrb[0].mxu0
        %v7635 = vadd.f32 0.0, %v7634
        %7636 = vmatprep.mubr.bf16.mxu0 0
        %7637 = vmatmul.mubr.bf16.gmra.mrb[0].mxu0 %v7340
        %v7638 = vpop.f32.mrb[0].mxu0
        %v7639 = vadd.f32 0.0, %v7638
        %v7640 = vpop.f32.mrb[0].mxu0
        %v7641 = vadd.f32 0.0, %v7640
        %v7642 = vpop.f32.mrb[0].mxu0
        %v7643 = vadd.f32 0.0, %v7642
        %v7644 = vpop.f32.mrb[0].mxu0
        %v7645 = vadd.f32 0.0, %v7644
        %7646 = vmatprep.mubr.bf16.mxu0 0
        %7647 = vmatmul.mubr.bf16.gmra.mrb[0].mxu0 %v7349
        %v7648 = vpop.f32.mrb[0].mxu0
        %v7649 = vadd.f32 0.0, %v7648
        %v7650 = vpop.f32.mrb[0].mxu0
        %v7651 = vadd.f32 0.0, %v7650
        %v7652 = vpop.f32.mrb[0].mxu0
        %v7653 = vadd.f32 0.0, %v7652
        %v7654 = vpop.f32.mrb[0].mxu0
        %v7655 = vadd.f32 0.0, %v7654
        %7656 = vmatprep.mubr.bf16.mxu0 0
        %7657 = vmatmul.mubr.bf16.gmra.mrb[0].mxu0 %v7358
        %v7658 = vpop.f32.mrb[0].mxu0
        %v7659 = vadd.f32 0.0, %v7658
        %v7660 = vpop.f32.mrb[0].mxu0
        %v7661 = vadd.f32 0.0, %v7660
        %v7662 = vpop.f32.mrb[0].mxu0
        %v7663 = vadd.f32 0.0, %v7662
        %v7664 = vpop.f32.mrb[0].mxu0
        %v7665 = vadd.f32 0.0, %v7664
        %7666 = vmatprep.mubr.bf16.mxu0 0
        %7667 = vmatmul.mubr.bf16.gmra.mrb[0].mxu0 %v7367
        %v7668 = vpop.f32.mrb[0].mxu0
        %v7669 = vadd.f32 0.0, %v7668
        %v7670 = vpop.f32.mrb[0].mxu0
        %v7671 = vadd.f32 0.0, %v7670
        %v7672 = vpop.f32.mrb[0].mxu0
        %v7673 = vadd.f32 0.0, %v7672
        %v7674 = vpop.f32.mrb[0].mxu0
        %v7675 = vadd.f32 0.0, %v7674
        %7676 = vmatprep.mubr.bf16.mxu0 0
        %7677 = vmatmul.mubr.bf16.gmra.mrb[0].mxu0 %v7376
        %v7678 = vpop.f32.mrb[0].mxu0
        %v7679 = vadd.f32 0.0, %v7678
        %v7680 = vpop.f32.mrb[0].mxu0
        %v7681 = vadd.f32 0.0, %v7680
        %v7682 = vpop.f32.mrb[0].mxu0
        %v7683 = vadd.f32 0.0, %v7682
        %v7684 = vpop.f32.mrb[0].mxu0
        %v7685 = vadd.f32 0.0, %v7684
        %7686 = vmatprep.mubr.bf16.mxu0 0
        %7687 = vmatmul.mubr.bf16.gmra.mrb[0].mxu0 %v7385
        %v7688 = vpop.f32.mrb[0].mxu0
        %v7689 = vadd.f32 0.0, %v7688
        %v7690 = vpop.f32.mrb[0].mxu0
        %v7691 = vadd.f32 0.0, %v7690
        %v7692 = vpop.f32.mrb[0].mxu0
        %v7693 = vadd.f32 0.0, %v7692
        %v7694 = vpop.f32.mrb[0].mxu0
        %v7695 = vadd.f32 0.0, %v7694
        %7696 = vdwg.mxu0
        %v7697 = vadd.f32 %v7122, %v7519
        %v7698 = vadd.f32 %v7123, %v7521
        %v7699 = vadd.f32 %v7124, %v7523
        %v7700 = vadd.f32 %v7125, %v7525
        %v7701 = vadd.f32 %v7126, %v7529
        %v7702 = vadd.f32 %v7127, %v7531
        %v7703 = vadd.f32 %v7128, %v7533
        %v7704 = vadd.f32 %v7129, %v7535
        %v7705 = vadd.f32 %v7130, %v7539
        %v7706 = vadd.f32 %v7131, %v7541
        %v7707 = vadd.f32 %v7132, %v7543
        %v7708 = vadd.f32 %v7133, %v7545
        %v7709 = vadd.f32 %v7134, %v7549
        %v7710 = vadd.f32 %v7135, %v7551
        %v7711 = vadd.f32 %v7136, %v7553
        %v7712 = vadd.f32 %v7137, %v7555
        %v7713 = vadd.f32 %v7138, %v7559
        %v7714 = vadd.f32 %v7139, %v7561
        %v7715 = vadd.f32 %v7140, %v7563
        %v7716 = vadd.f32 %v7141, %v7565
        %v7717 = vadd.f32 %v7142, %v7569
        %v7718 = vadd.f32 %v7143, %v7571
        %v7719 = vadd.f32 %v7144, %v7573
        %v7720 = vadd.f32 %v7145, %v7575
        %v7721 = vadd.f32 %v7146, %v7579
        %v7722 = vadd.f32 %v7147, %v7581
        %v7723 = vadd.f32 %v7148, %v7583
        %v7724 = vadd.f32 %v7149, %v7585
        %v7725 = vadd.f32 %v7150, %v7589
        %v7726 = vadd.f32 %v7151, %v7591
        %v7727 = vadd.f32 %v7152, %v7593
        %v7728 = vadd.f32 %v7153, %v7595
        %v7729 = vadd.f32 %v7154, %v7599
        %v7730 = vadd.f32 %v7155, %v7601
        %v7731 = vadd.f32 %v7156, %v7603
        %v7732 = vadd.f32 %v7157, %v7605
        %v7733 = vadd.f32 %v7158, %v7609
        %v7734 = vadd.f32 %v7159, %v7611
        %v7735 = vadd.f32 %v7160, %v7613
        %v7736 = vadd.f32 %v7161, %v7615
        %v7737 = vadd.f32 %v7162, %v7619
        %v7738 = vadd.f32 %v7163, %v7621
        %v7739 = vadd.f32 %v7164, %v7623
        %v7740 = vadd.f32 %v7165, %v7625
        %v7741 = vadd.f32 %v7166, %v7629
        %v7742 = vadd.f32 %v7167, %v7631
        %v7743 = vadd.f32 %v7168, %v7633
        %v7744 = vadd.f32 %v7169, %v7635
        %v7745 = vadd.f32 %v7170, %v7639
        %v7746 = vadd.f32 %v7171, %v7641
        %v7747 = vadd.f32 %v7172, %v7643
        %v7748 = vadd.f32 %v7173, %v7645
        %v7749 = vadd.f32 %v7174, %v7649
        %v7750 = vadd.f32 %v7175, %v7651
        %v7751 = vadd.f32 %v7176, %v7653
        %v7752 = vadd.f32 %v7177, %v7655
        %v7753 = vadd.f32 %v7178, %v7659
        %v7754 = vadd.f32 %v7179, %v7661
        %v7755 = vadd.f32 %v7180, %v7663
        %v7756 = vadd.f32 %v7181, %v7665
        %v7757 = vadd.f32 %v7182, %v7669
        %v7758 = vadd.f32 %v7183, %v7671
        %v7759 = vadd.f32 %v7184, %v7673
        %v7760 = vadd.f32 %v7185, %v7675
        %v7761 = vadd.f32 %v7186, %v7679
        %v7762 = vadd.f32 %v7187, %v7681
        %v7763 = vadd.f32 %v7188, %v7683
        %v7764 = vadd.f32 %v7189, %v7685
        %v7765 = vadd.f32 %v7190, %v7689
        %v7766 = vadd.f32 %v7191, %v7691
        %v7767 = vadd.f32 %v7192, %v7693
        %v7768 = vadd.f32 %v7193, %v7695
        %v7769 = vld [vmem:[#allocation2 + $0x10] sm:$0x8]
        %s7770 = scalar_lea.vmem %s366, 1024
        %v7771 = vld [vmem:[%s7770] sm:$0xff]
        %v7772 = vld [vmem:[%s7770 + $0x8] sm:$0xff]
        %v7773 = vld [vmem:[%s7770 + $0x10] sm:$0xff]
        %v7774 = vld [vmem:[%s7770 + $0x18] sm:$0xff]
        %v7775 = vld [vmem:[%s7770 + $0x20] sm:$0xff]
        %v7776 = vld [vmem:[%s7770 + $0x28] sm:$0xff]
        %v7777 = vld [vmem:[%s7770 + $0x30] sm:$0xff]
        %v7778 = vld [vmem:[%s7770 + $0x38] sm:$0xff]
        %v7779 = vld [vmem:[%s7770 + $0x40] sm:$0xff]
        %v7780 = vld [vmem:[%s7770 + $0x48] sm:$0xff]
        %v7781 = vld [vmem:[%s7770 + $0x50] sm:$0xff]
        %v7782 = vld [vmem:[%s7770 + $0x58] sm:$0xff]
        %v7783 = vld [vmem:[%s7770 + $0x60] sm:$0xff]
        %v7784 = vld [vmem:[%s7770 + $0x68] sm:$0xff]
        %v7785 = vld [vmem:[%s7770 + $0x70] sm:$0xff]
        %v7786 = vld [vmem:[%s7770 + $0x78] sm:$0xff]
        %v7788 = vunpack.c.l.b16 %v7769
        %v7789 = vpack.c.b16 %v6719, %v7788
        %vm7790 = vcmask 1044480
        %v7791 = vrot.slane %v7789, 3
        %v7792 = vrot.slane %v6756, 3
        %v7793 = vsel %vm7790, %v7791, %v7792
        %v7794 = vrot.slane %v6757, 3
        %v7795 = vsel %vm7790, %v7792, %v7794
        %v7796 = vrot.slane %v6758, 3
        %v7797 = vsel %vm7790, %v7794, %v7796
        %v7798 = vrot.slane %v6759, 3
        %v7799 = vsel %vm7790, %v7796, %v7798
        %v7800 = vrot.slane %v6760, 3
        %v7801 = vsel %vm7790, %v7798, %v7800
        %v7802 = vrot.slane %v6761, 3
        %v7803 = vsel %vm7790, %v7800, %v7802
        %v7804 = vrot.slane %v6762, 3
        %v7805 = vsel %vm7790, %v7802, %v7804
        %v7806 = vrot.slane %v6763, 3
        %v7807 = vsel %vm7790, %v7804, %v7806
        %v7808 = vrot.slane %v6764, 3
        %v7809 = vsel %vm7790, %v7806, %v7808
        %v7810 = vrot.slane %v6765, 3
        %v7811 = vsel %vm7790, %v7808, %v7810
        %v7812 = vrot.slane %v6766, 3
        %v7813 = vsel %vm7790, %v7810, %v7812
        %v7814 = vrot.slane %v6767, 3
        %v7815 = vsel %vm7790, %v7812, %v7814
        %v7816 = vrot.slane %v6768, 3
        %v7817 = vsel %vm7790, %v7814, %v7816
        %v7818 = vrot.slane %v6769, 3
        %v7819 = vsel %vm7790, %v7816, %v7818
        %v7820 = vrot.slane %v6770, 3
        %v7821 = vsel %vm7790, %v7818, %v7820
        %v7822 = vrot.slane %v6771, 3
        %v7823 = vsel %vm7790, %v7820, %v7822
        %v7824 = vrot.slane %v6772, 3
        %v7825 = vsel %vm7790, %v7822, %v7824
        %v7826 = vrot.slane %v7214, 3
        %v7827 = vsel %vm7790, %v7824, %v7826
        %v7862 = vunpack.c.l.b16 %v7771
        %v7863 = vunpack.c.h.b16 %v7771
        %v7864 = vunpack.c.l.b16 %v7772
        %v7865 = vunpack.c.h.b16 %v7772
        %v7866 = vunpack.c.l.b16 %v7773
        %v7867 = vunpack.c.h.b16 %v7773
        %v7868 = vunpack.c.l.b16 %v7774
        %v7869 = vunpack.c.h.b16 %v7774
        %v7870 = vunpack.c.l.b16 %v7775
        %v7871 = vunpack.c.h.b16 %v7775
        %v7872 = vunpack.c.l.b16 %v7776
        %v7873 = vunpack.c.h.b16 %v7776
        %v7874 = vunpack.c.l.b16 %v7777
        %v7875 = vunpack.c.h.b16 %v7777
        %v7876 = vunpack.c.l.b16 %v7778
        %v7877 = vunpack.c.h.b16 %v7778
        %v7878 = vunpack.c.l.b16 %v7779
        %v7879 = vunpack.c.h.b16 %v7779
        %v7880 = vunpack.c.l.b16 %v7780
        %v7881 = vunpack.c.h.b16 %v7780
        %v7882 = vunpack.c.l.b16 %v7781
        %v7883 = vunpack.c.h.b16 %v7781
        %v7884 = vunpack.c.l.b16 %v7782
        %v7885 = vunpack.c.h.b16 %v7782
        %v7886 = vunpack.c.l.b16 %v7783
        %v7887 = vunpack.c.h.b16 %v7783
        %v7888 = vunpack.c.l.b16 %v7784
        %v7889 = vunpack.c.h.b16 %v7784
        %v7890 = vunpack.c.l.b16 %v7785
        %v7891 = vunpack.c.h.b16 %v7785
        %v7892 = vunpack.c.l.b16 %v7786
        %v7893 = vunpack.c.h.b16 %v7786
        %v7894 = vpack.c.b16 %v7864, %v7862
        %v7895 = vpack.c.b16 %v7865, %v7863
        %v7896 = vpack.c.b16 %v7868, %v7866
        %v7897 = vpack.c.b16 %v7869, %v7867
        %v7898 = vpack.c.b16 %v7872, %v7870
        %v7899 = vpack.c.b16 %v7873, %v7871
        %v7900 = vpack.c.b16 %v7876, %v7874
        %v7901 = vpack.c.b16 %v7877, %v7875
        %v7902 = vpack.c.b16 %v7880, %v7878
        %v7903 = vpack.c.b16 %v7881, %v7879
        %v7904 = vpack.c.b16 %v7884, %v7882
        %v7905 = vpack.c.b16 %v7885, %v7883
        %v7906 = vpack.c.b16 %v7888, %v7886
        %v7907 = vpack.c.b16 %v7889, %v7887
        %v7908 = vpack.c.b16 %v7892, %v7890
        %v7909 = vpack.c.b16 %v7893, %v7891
        %7926 = vmatprep.subr.bf16.mxu0 %v7895
        %7927 = vmatpush1.bf16.msra.mxu0 %v7894
        %7928 = vmatprep.subr.bf16.mxu0 %v7897
        %7929 = vmatpush1.bf16.msra.mxu0 %v7896
        %7930 = vmatprep.subr.bf16.mxu0 %v7899
        %7931 = vmatpush1.bf16.msra.mxu0 %v7898
        %7932 = vmatprep.subr.bf16.mxu0 %v7901
        %7933 = vmatpush1.bf16.msra.mxu0 %v7900
        %7934 = vmatprep.subr.bf16.mxu0 %v7903
        %7935 = vmatpush1.bf16.msra.mxu0 %v7902
        %7936 = vmatprep.subr.bf16.mxu0 %v7905
        %7937 = vmatpush1.bf16.msra.mxu0 %v7904
        %7938 = vmatprep.subr.bf16.mxu0 %v7907
        %7939 = vmatpush1.bf16.msra.mxu0 %v7906
        %7940 = vmatprep.subr.bf16.mxu0 %v7909
        %7941 = vmatpush1.bf16.msra.mxu0 %v7908
        %7942 = vmatprep.subr.bf16.mxu0 0
        %7943 = vmatpush1.bf16.msra.mxu0 0
        %7944 = vmatprep.subr.bf16.mxu0 0
        %7945 = vmatpush1.bf16.msra.mxu0 0
        %7946 = vmatprep.subr.bf16.mxu0 0
        %7947 = vmatpush1.bf16.msra.mxu0 0
        %7948 = vmatprep.subr.bf16.mxu0 0
        %7949 = vmatpush1.bf16.msra.mxu0 0
        %7950 = vmatprep.subr.bf16.mxu0 0
        %7951 = vmatpush1.bf16.msra.mxu0 0
        %7952 = vmatprep.subr.bf16.mxu0 0
        %7953 = vmatpush1.bf16.msra.mxu0 0
        %7954 = vmatprep.subr.bf16.mxu0 0
        %7955 = vmatpush1.bf16.msra.mxu0 0
        %7956 = vmatprep.subr.bf16.mxu0 0
        %7957 = vmatpush1.bf16.msra.mxu0 0
        %7958 = vmatprep.mubr.bf16.mxu0 0
        %7959 = vmatmul.mubr.bf16.gmra.mrb[0].mxu0 %v7793
        %v7960 = vpop.f32.mrb[0].mxu0
        %v7961 = vadd.f32 0.0, %v7960
        %v7962 = vpop.f32.mrb[0].mxu0
        %v7963 = vadd.f32 0.0, %v7962
        %v7964 = vpop.f32.mrb[0].mxu0
        %v7965 = vadd.f32 0.0, %v7964
        %v7966 = vpop.f32.mrb[0].mxu0
        %v7967 = vadd.f32 0.0, %v7966
        %7968 = vmatprep.mubr.bf16.mxu0 0
        %7969 = vmatmul.mubr.bf16.gmra.mrb[0].mxu0 %v7795
        %v7970 = vpop.f32.mrb[0].mxu0
        %v7971 = vadd.f32 0.0, %v7970
        %v7972 = vpop.f32.mrb[0].mxu0
        %v7973 = vadd.f32 0.0, %v7972
        %v7974 = vpop.f32.mrb[0].mxu0
        %v7975 = vadd.f32 0.0, %v7974
        %v7976 = vpop.f32.mrb[0].mxu0
        %v7977 = vadd.f32 0.0, %v7976
        %7978 = vmatprep.mubr.bf16.mxu0 0
        %7979 = vmatmul.mubr.bf16.gmra.mrb[0].mxu0 %v7797
        %v7980 = vpop.f32.mrb[0].mxu0
        %v7981 = vadd.f32 0.0, %v7980
        %v7982 = vpop.f32.mrb[0].mxu0
        %v7983 = vadd.f32 0.0, %v7982
        %v7984 = vpop.f32.mrb[0].mxu0
        %v7985 = vadd.f32 0.0, %v7984
        %v7986 = vpop.f32.mrb[0].mxu0
        %v7987 = vadd.f32 0.0, %v7986
        %7988 = vmatprep.mubr.bf16.mxu0 0
        %7989 = vmatmul.mubr.bf16.gmra.mrb[0].mxu0 %v7799
        %v7990 = vpop.f32.mrb[0].mxu0
        %v7991 = vadd.f32 0.0, %v7990
        %v7992 = vpop.f32.mrb[0].mxu0
        %v7993 = vadd.f32 0.0, %v7992
        %v7994 = vpop.f32.mrb[0].mxu0
        %v7995 = vadd.f32 0.0, %v7994
        %v7996 = vpop.f32.mrb[0].mxu0
        %v7997 = vadd.f32 0.0, %v7996
        %7998 = vmatprep.mubr.bf16.mxu0 0
        %7999 = vmatmul.mubr.bf16.gmra.mrb[0].mxu0 %v7801
        %v8000 = vpop.f32.mrb[0].mxu0
        %v8001 = vadd.f32 0.0, %v8000
        %v8002 = vpop.f32.mrb[0].mxu0
        %v8003 = vadd.f32 0.0, %v8002
        %v8004 = vpop.f32.mrb[0].mxu0
        %v8005 = vadd.f32 0.0, %v8004
        %v8006 = vpop.f32.mrb[0].mxu0
        %v8007 = vadd.f32 0.0, %v8006
        %8008 = vmatprep.mubr.bf16.mxu0 0
        %8009 = vmatmul.mubr.bf16.gmra.mrb[0].mxu0 %v7803
        %v8010 = vpop.f32.mrb[0].mxu0
        %v8011 = vadd.f32 0.0, %v8010
        %v8012 = vpop.f32.mrb[0].mxu0
        %v8013 = vadd.f32 0.0, %v8012
        %v8014 = vpop.f32.mrb[0].mxu0
        %v8015 = vadd.f32 0.0, %v8014
        %v8016 = vpop.f32.mrb[0].mxu0
        %v8017 = vadd.f32 0.0, %v8016
        %8018 = vmatprep.mubr.bf16.mxu0 0
        %8019 = vmatmul.mubr.bf16.gmra.mrb[0].mxu0 %v7805
        %v8020 = vpop.f32.mrb[0].mxu0
        %v8021 = vadd.f32 0.0, %v8020
        %v8022 = vpop.f32.mrb[0].mxu0
        %v8023 = vadd.f32 0.0, %v8022
        %v8024 = vpop.f32.mrb[0].mxu0
        %v8025 = vadd.f32 0.0, %v8024
        %v8026 = vpop.f32.mrb[0].mxu0
        %v8027 = vadd.f32 0.0, %v8026
        %8028 = vmatprep.mubr.bf16.mxu0 0
        %8029 = vmatmul.mubr.bf16.gmra.mrb[0].mxu0 %v7807
        %v8030 = vpop.f32.mrb[0].mxu0
        %v8031 = vadd.f32 0.0, %v8030
        %v8032 = vpop.f32.mrb[0].mxu0
        %v8033 = vadd.f32 0.0, %v8032
        %v8034 = vpop.f32.mrb[0].mxu0
        %v8035 = vadd.f32 0.0, %v8034
        %v8036 = vpop.f32.mrb[0].mxu0
        %v8037 = vadd.f32 0.0, %v8036
        %8038 = vmatprep.mubr.bf16.mxu0 0
        %8039 = vmatmul.mubr.bf16.gmra.mrb[0].mxu0 %v7809
        %v8040 = vpop.f32.mrb[0].mxu0
        %v8041 = vadd.f32 0.0, %v8040
        %v8042 = vpop.f32.mrb[0].mxu0
        %v8043 = vadd.f32 0.0, %v8042
        %v8044 = vpop.f32.mrb[0].mxu0
        %v8045 = vadd.f32 0.0, %v8044
        %v8046 = vpop.f32.mrb[0].mxu0
        %v8047 = vadd.f32 0.0, %v8046
        %8048 = vmatprep.mubr.bf16.mxu0 0
        %8049 = vmatmul.mubr.bf16.gmra.mrb[0].mxu0 %v7811
        %v8050 = vpop.f32.mrb[0].mxu0
        %v8051 = vadd.f32 0.0, %v8050
        %v8052 = vpop.f32.mrb[0].mxu0
        %v8053 = vadd.f32 0.0, %v8052
        %v8054 = vpop.f32.mrb[0].mxu0
        %v8055 = vadd.f32 0.0, %v8054
        %v8056 = vpop.f32.mrb[0].mxu0
        %v8057 = vadd.f32 0.0, %v8056
        %8058 = vmatprep.mubr.bf16.mxu0 0
        %8059 = vmatmul.mubr.bf16.gmra.mrb[0].mxu0 %v7813
        %v8060 = vpop.f32.mrb[0].mxu0
        %v8061 = vadd.f32 0.0, %v8060
        %v8062 = vpop.f32.mrb[0].mxu0
        %v8063 = vadd.f32 0.0, %v8062
        %v8064 = vpop.f32.mrb[0].mxu0
        %v8065 = vadd.f32 0.0, %v8064
        %v8066 = vpop.f32.mrb[0].mxu0
        %v8067 = vadd.f32 0.0, %v8066
        %8068 = vmatprep.mubr.bf16.mxu0 0
        %8069 = vmatmul.mubr.bf16.gmra.mrb[0].mxu0 %v7815
        %v8070 = vpop.f32.mrb[0].mxu0
        %v8071 = vadd.f32 0.0, %v8070
        %v8072 = vpop.f32.mrb[0].mxu0
        %v8073 = vadd.f32 0.0, %v8072
        %v8074 = vpop.f32.mrb[0].mxu0
        %v8075 = vadd.f32 0.0, %v8074
        %v8076 = vpop.f32.mrb[0].mxu0
        %v8077 = vadd.f32 0.0, %v8076
        %8078 = vmatprep.mubr.bf16.mxu0 0
        %8079 = vmatmul.mubr.bf16.gmra.mrb[0].mxu0 %v7817
        %v8080 = vpop.f32.mrb[0].mxu0
        %v8081 = vadd.f32 0.0, %v8080
        %v8082 = vpop.f32.mrb[0].mxu0
        %v8083 = vadd.f32 0.0, %v8082
        %v8084 = vpop.f32.mrb[0].mxu0
        %v8085 = vadd.f32 0.0, %v8084
        %v8086 = vpop.f32.mrb[0].mxu0
        %v8087 = vadd.f32 0.0, %v8086
        %8088 = vmatprep.mubr.bf16.mxu0 0
        %8089 = vmatmul.mubr.bf16.gmra.mrb[0].mxu0 %v7819
        %v8090 = vpop.f32.mrb[0].mxu0
        %v8091 = vadd.f32 0.0, %v8090
        %v8092 = vpop.f32.mrb[0].mxu0
        %v8093 = vadd.f32 0.0, %v8092
        %v8094 = vpop.f32.mrb[0].mxu0
        %v8095 = vadd.f32 0.0, %v8094
        %v8096 = vpop.f32.mrb[0].mxu0
        %v8097 = vadd.f32 0.0, %v8096
        %8098 = vmatprep.mubr.bf16.mxu0 0
        %8099 = vmatmul.mubr.bf16.gmra.mrb[0].mxu0 %v7821
        %v8100 = vpop.f32.mrb[0].mxu0
        %v8101 = vadd.f32 0.0, %v8100
        %v8102 = vpop.f32.mrb[0].mxu0
        %v8103 = vadd.f32 0.0, %v8102
        %v8104 = vpop.f32.mrb[0].mxu0
        %v8105 = vadd.f32 0.0, %v8104
        %v8106 = vpop.f32.mrb[0].mxu0
        %v8107 = vadd.f32 0.0, %v8106
        %8108 = vmatprep.mubr.bf16.mxu0 0
        %8109 = vmatmul.mubr.bf16.gmra.mrb[0].mxu0 %v7823
        %v8110 = vpop.f32.mrb[0].mxu0
        %v8111 = vadd.f32 0.0, %v8110
        %v8112 = vpop.f32.mrb[0].mxu0
        %v8113 = vadd.f32 0.0, %v8112
        %v8114 = vpop.f32.mrb[0].mxu0
        %v8115 = vadd.f32 0.0, %v8114
        %v8116 = vpop.f32.mrb[0].mxu0
        %v8117 = vadd.f32 0.0, %v8116
        %8118 = vmatprep.mubr.bf16.mxu0 0
        %8119 = vmatmul.mubr.bf16.gmra.mrb[0].mxu0 %v7825
        %v8120 = vpop.f32.mrb[0].mxu0
        %v8121 = vadd.f32 0.0, %v8120
        %v8122 = vpop.f32.mrb[0].mxu0
        %v8123 = vadd.f32 0.0, %v8122
        %v8124 = vpop.f32.mrb[0].mxu0
        %v8125 = vadd.f32 0.0, %v8124
        %v8126 = vpop.f32.mrb[0].mxu0
        %v8127 = vadd.f32 0.0, %v8126
        %8128 = vmatprep.mubr.bf16.mxu0 0
        %8129 = vmatmul.mubr.bf16.gmra.mrb[0].mxu0 %v7827
        %v8130 = vpop.f32.mrb[0].mxu0
        %v8131 = vadd.f32 0.0, %v8130
        %v8132 = vpop.f32.mrb[0].mxu0
        %v8133 = vadd.f32 0.0, %v8132
        %v8134 = vpop.f32.mrb[0].mxu0
        %v8135 = vadd.f32 0.0, %v8134
        %v8136 = vpop.f32.mrb[0].mxu0
        %v8137 = vadd.f32 0.0, %v8136
        %8138 = vdwg.mxu0
        %v8139 = vadd.f32 %v7697, %v7961
        %v8140 = vadd.f32 %v7698, %v7963
        %v8141 = vadd.f32 %v7699, %v7965
        %v8142 = vadd.f32 %v7700, %v7967
        %v8143 = vadd.f32 %v7701, %v7971
        %v8144 = vadd.f32 %v7702, %v7973
        %v8145 = vadd.f32 %v7703, %v7975
        %v8146 = vadd.f32 %v7704, %v7977
        %v8147 = vadd.f32 %v7705, %v7981
        %v8148 = vadd.f32 %v7706, %v7983
        %v8149 = vadd.f32 %v7707, %v7985
        %v8150 = vadd.f32 %v7708, %v7987
        %v8151 = vadd.f32 %v7709, %v7991
        %v8152 = vadd.f32 %v7710, %v7993
        %v8153 = vadd.f32 %v7711, %v7995
        %v8154 = vadd.f32 %v7712, %v7997
        %v8155 = vadd.f32 %v7713, %v8001
        %v8156 = vadd.f32 %v7714, %v8003
        %v8157 = vadd.f32 %v7715, %v8005
        %v8158 = vadd.f32 %v7716, %v8007
        %v8159 = vadd.f32 %v7717, %v8011
        %v8160 = vadd.f32 %v7718, %v8013
        %v8161 = vadd.f32 %v7719, %v8015
        %v8162 = vadd.f32 %v7720, %v8017
        %v8163 = vadd.f32 %v7721, %v8021
        %v8164 = vadd.f32 %v7722, %v8023
        %v8165 = vadd.f32 %v7723, %v8025
        %v8166 = vadd.f32 %v7724, %v8027
        %v8167 = vadd.f32 %v7725, %v8031
        %v8168 = vadd.f32 %v7726, %v8033
        %v8169 = vadd.f32 %v7727, %v8035
        %v8170 = vadd.f32 %v7728, %v8037
        %v8171 = vadd.f32 %v7729, %v8041
        %v8172 = vadd.f32 %v7730, %v8043
        %v8173 = vadd.f32 %v7731, %v8045
        %v8174 = vadd.f32 %v7732, %v8047
        %v8175 = vadd.f32 %v7733, %v8051
        %v8176 = vadd.f32 %v7734, %v8053
        %v8177 = vadd.f32 %v7735, %v8055
        %v8178 = vadd.f32 %v7736, %v8057
        %v8179 = vadd.f32 %v7737, %v8061
        %v8180 = vadd.f32 %v7738, %v8063
        %v8181 = vadd.f32 %v7739, %v8065
        %v8182 = vadd.f32 %v7740, %v8067
        %v8183 = vadd.f32 %v7741, %v8071
        %v8184 = vadd.f32 %v7742, %v8073
        %v8185 = vadd.f32 %v7743, %v8075
        %v8186 = vadd.f32 %v7744, %v8077
        %v8187 = vadd.f32 %v7745, %v8081
        %v8188 = vadd.f32 %v7746, %v8083
        %v8189 = vadd.f32 %v7747, %v8085
        %v8190 = vadd.f32 %v7748, %v8087
        %v8191 = vadd.f32 %v7749, %v8091
        %v8192 = vadd.f32 %v7750, %v8093
        %v8193 = vadd.f32 %v7751, %v8095
        %v8194 = vadd.f32 %v7752, %v8097
        %v8195 = vadd.f32 %v7753, %v8101
        %v8196 = vadd.f32 %v7754, %v8103
        %v8197 = vadd.f32 %v7755, %v8105
        %v8198 = vadd.f32 %v7756, %v8107
        %v8199 = vadd.f32 %v7757, %v8111
        %v8200 = vadd.f32 %v7758, %v8113
        %v8201 = vadd.f32 %v7759, %v8115
        %v8202 = vadd.f32 %v7760, %v8117
        %v8203 = vadd.f32 %v7761, %v8121
        %v8204 = vadd.f32 %v7762, %v8123
        %v8205 = vadd.f32 %v7763, %v8125
        %v8206 = vadd.f32 %v7764, %v8127
        %v8207 = vadd.f32 %v7765, %v8131
        %v8208 = vadd.f32 %v7766, %v8133
        %v8209 = vadd.f32 %v7767, %v8135
        %v8210 = vadd.f32 %v7768, %v8137
        %v8211 = vld [vmem:[%s370] sm:$0x3]
        %v8213 = vlaneseq
        %v8214 = vshrl.u32 %v8213, 7
        %v8215 = vsub.s32 0, %v8214
        %v8216 = vrot.slane %v8211, %v8215
        %v8217 = vlaneseq
        %v8218 = vshrl.u32 %v8217, 7
        %v8219 = vsub.s32 1, %v8218
        %v8220 = vrot.slane %v8211, %v8219
        %v8223 = vadd.f32 %v8139, %v8216
        %v8224 = vadd.f32 %v8140, %v8220
        %v8225 = vadd.f32 %v8141, %v8216
        %v8226 = vadd.f32 %v8142, %v8220
        %v8227 = vadd.f32 %v8143, %v8216
        %v8228 = vadd.f32 %v8144, %v8220
        %v8229 = vadd.f32 %v8145, %v8216
        %v8230 = vadd.f32 %v8146, %v8220
        %v8231 = vadd.f32 %v8147, %v8216
        %v8232 = vadd.f32 %v8148, %v8220
        %v8233 = vadd.f32 %v8149, %v8216
        %v8234 = vadd.f32 %v8150, %v8220
        %v8235 = vadd.f32 %v8151, %v8216
        %v8236 = vadd.f32 %v8152, %v8220
        %v8237 = vadd.f32 %v8153, %v8216
        %v8238 = vadd.f32 %v8154, %v8220
        %v8239 = vadd.f32 %v8155, %v8216
        %v8240 = vadd.f32 %v8156, %v8220
        %v8241 = vadd.f32 %v8157, %v8216
        %v8242 = vadd.f32 %v8158, %v8220
        %v8243 = vadd.f32 %v8159, %v8216
        %v8244 = vadd.f32 %v8160, %v8220
        %v8245 = vadd.f32 %v8161, %v8216
        %v8246 = vadd.f32 %v8162, %v8220
        %v8247 = vadd.f32 %v8163, %v8216
        %v8248 = vadd.f32 %v8164, %v8220
        %v8249 = vadd.f32 %v8165, %v8216
        %v8250 = vadd.f32 %v8166, %v8220
        %v8251 = vadd.f32 %v8167, %v8216
        %v8252 = vadd.f32 %v8168, %v8220
        %v8253 = vadd.f32 %v8169, %v8216
        %v8254 = vadd.f32 %v8170, %v8220
        %v8255 = vadd.f32 %v8171, %v8216
        %v8256 = vadd.f32 %v8172, %v8220
        %v8257 = vadd.f32 %v8173, %v8216
        %v8258 = vadd.f32 %v8174, %v8220
        %v8259 = vadd.f32 %v8175, %v8216
        %v8260 = vadd.f32 %v8176, %v8220
        %v8261 = vadd.f32 %v8177, %v8216
        %v8262 = vadd.f32 %v8178, %v8220
        %v8263 = vadd.f32 %v8179, %v8216
        %v8264 = vadd.f32 %v8180, %v8220
        %v8265 = vadd.f32 %v8181, %v8216
        %v8266 = vadd.f32 %v8182, %v8220
        %v8267 = vadd.f32 %v8183, %v8216
        %v8268 = vadd.f32 %v8184, %v8220
        %v8269 = vadd.f32 %v8185, %v8216
        %v8270 = vadd.f32 %v8186, %v8220
        %v8271 = vadd.f32 %v8187, %v8216
        %v8272 = vadd.f32 %v8188, %v8220
        %v8273 = vadd.f32 %v8189, %v8216
        %v8274 = vadd.f32 %v8190, %v8220
        %v8275 = vadd.f32 %v8191, %v8216
        %v8276 = vadd.f32 %v8192, %v8220
        %v8277 = vadd.f32 %v8193, %v8216
        %v8278 = vadd.f32 %v8194, %v8220
        %v8279 = vadd.f32 %v8195, %v8216
        %v8280 = vadd.f32 %v8196, %v8220
        %v8281 = vadd.f32 %v8197, %v8216
        %v8282 = vadd.f32 %v8198, %v8220
        %v8283 = vadd.f32 %v8199, %v8216
        %v8284 = vadd.f32 %v8200, %v8220
        %v8285 = vadd.f32 %v8201, %v8216
        %v8286 = vadd.f32 %v8202, %v8220
        %v8287 = vadd.f32 %v8203, %v8216
        %v8288 = vadd.f32 %v8204, %v8220
        %v8289 = vadd.f32 %v8205, %v8216
        %v8290 = vadd.f32 %v8206, %v8220
        %v8291 = vadd.f32 %v8207, %v8216
        %v8292 = vadd.f32 %v8208, %v8220
        %v8293 = vadd.f32 %v8209, %v8216
        %v8294 = vadd.f32 %v8210, %v8220
        %v8295 = vld [vmem:[%s2] sm:$0xff]
        %v8296 = vld [vmem:[%s2 + $0x8] sm:$0xff]
        %v8297 = vld [vmem:[%s2 + $0x10] sm:$0xff]
        %v8298 = vld [vmem:[%s2 + $0x18] sm:$0xff]
        %v8299 = vld [vmem:[%s2 + $0x20] sm:$0xff]
        %v8300 = vld [vmem:[%s2 + $0x28] sm:$0xff]
        %v8301 = vld [vmem:[%s2 + $0x30] sm:$0xff]
        %v8302 = vld [vmem:[%s2 + $0x38] sm:$0xff]
        %v8303 = vld [vmem:[%s2 + $0x40] sm:$0xff]
        %v8304 = vld [vmem:[%s2 + $0x48] sm:$0xff]
        %v8305 = vld [vmem:[%s2 + $0x50] sm:$0xff]
        %v8306 = vld [vmem:[%s2 + $0x58] sm:$0xff]
        %v8307 = vld [vmem:[%s2 + $0x60] sm:$0xff]
        %v8308 = vld [vmem:[%s2 + $0x68] sm:$0xff]
        %v8309 = vld [vmem:[%s2 + $0x70] sm:$0xff]
        %v8310 = vld [vmem:[%s2 + $0x78] sm:$0xff]
        %v8311 = vld [vmem:[%s2 + $0x80] sm:$0xff]
        %v8312 = vld [vmem:[%s2 + $0x88] sm:$0xff]
        %v8313 = vld [vmem:[%s2 + $0x90] sm:$0xff]
        %v8314 = vld [vmem:[%s2 + $0x98] sm:$0xff]
        %v8315 = vld [vmem:[%s2 + $0xa0] sm:$0xff]
        %v8316 = vld [vmem:[%s2 + $0xa8] sm:$0xff]
        %v8317 = vld [vmem:[%s2 + $0xb0] sm:$0xff]
        %v8318 = vld [vmem:[%s2 + $0xb8] sm:$0xff]
        %v8319 = vld [vmem:[%s2 + $0xc0] sm:$0xff]
        %v8320 = vld [vmem:[%s2 + $0xc8] sm:$0xff]
        %v8321 = vld [vmem:[%s2 + $0xd0] sm:$0xff]
        %v8322 = vld [vmem:[%s2 + $0xd8] sm:$0xff]
        %v8323 = vld [vmem:[%s2 + $0xe0] sm:$0xff]
        %v8324 = vld [vmem:[%s2 + $0xe8] sm:$0xff]
        %v8325 = vld [vmem:[%s2 + $0xf0] sm:$0xff]
        %v8326 = vld [vmem:[%s2 + $0xf8] sm:$0xff]
        %v8327 = vld [vmem:[%s2 + $0x100] sm:$0xff]
        %v8328 = vld [vmem:[%s2 + $0x108] sm:$0xff]
        %v8329 = vld [vmem:[%s2 + $0x110] sm:$0xff]
        %v8330 = vld [vmem:[%s2 + $0x118] sm:$0xff]
        %v8331 = vld [vmem:[%s312] sm:$0xff]
        %v8332 = vld [vmem:[%s312 + $0x8] sm:$0xff]
        %v8333 = vld [vmem:[%s312 + $0x10] sm:$0xff]
        %v8334 = vld [vmem:[%s312 + $0x18] sm:$0xff]
        %v8335 = vld [vmem:[%s312 + $0x20] sm:$0xff]
        %v8336 = vld [vmem:[%s312 + $0x28] sm:$0xff]
        %v8337 = vld [vmem:[%s312 + $0x30] sm:$0xff]
        %v8338 = vld [vmem:[%s312 + $0x38] sm:$0xff]
        %v8339 = vld [vmem:[%s312 + $0x40] sm:$0xff]
        %v8340 = vld [vmem:[%s312 + $0x48] sm:$0xff]
        %v8341 = vld [vmem:[%s312 + $0x50] sm:$0xff]
        %v8342 = vld [vmem:[%s312 + $0x58] sm:$0xff]
        %v8343 = vld [vmem:[%s312 + $0x60] sm:$0xff]
        %v8344 = vld [vmem:[%s312 + $0x68] sm:$0xff]
        %v8345 = vld [vmem:[%s312 + $0x70] sm:$0xff]
        %v8346 = vld [vmem:[%s312 + $0x78] sm:$0xff]
        %v8347 = vld [vmem:[%s312 + $0x80] sm:$0xff]
        %v8348 = vld [vmem:[%s312 + $0x88] sm:$0xff]
        %v8349 = vld [vmem:[%s312 + $0x90] sm:$0xff]
        %v8350 = vld [vmem:[%s312 + $0x98] sm:$0xff]
        %v8351 = vld [vmem:[%s312 + $0xa0] sm:$0xff]
        %v8352 = vld [vmem:[%s312 + $0xa8] sm:$0xff]
        %v8353 = vld [vmem:[%s312 + $0xb0] sm:$0xff]
        %v8354 = vld [vmem:[%s312 + $0xb8] sm:$0xff]
        %v8355 = vld [vmem:[%s312 + $0xc0] sm:$0xff]
        %v8356 = vld [vmem:[%s312 + $0xc8] sm:$0xff]
        %v8357 = vld [vmem:[%s312 + $0xd0] sm:$0xff]
        %v8358 = vld [vmem:[%s312 + $0xd8] sm:$0xff]
        %v8359 = vld [vmem:[%s312 + $0xe0] sm:$0xff]
        %v8360 = vld [vmem:[%s312 + $0xe8] sm:$0xff]
        %v8361 = vld [vmem:[%s312 + $0xf0] sm:$0xff]
        %v8362 = vld [vmem:[%s312 + $0xf8] sm:$0xff]
        %v8363 = vld [vmem:[%s312 + $0x100] sm:$0xff]
        %v8364 = vld [vmem:[%s312 + $0x108] sm:$0xff]
        %v8365 = vld [vmem:[%s312 + $0x110] sm:$0xff]
        %v8366 = vld [vmem:[%s312 + $0x118] sm:$0xff]
        %8368 = vset.pattern.permute.xlu0 0
        %8369 = vperm.xlu0 %8368, %v8295
        %v8370 = vpop.permute.xlu0 %8369
        %8373 = vset.pattern.permute.xlu0 0
        %8374 = vperm.xlu0 %8373, %v8296
        %v8375 = vpop.permute.xlu0 %8374
        %8378 = vset.pattern.permute.xlu0 0
        %8379 = vperm.xlu0 %8378, %v8297
        %v8380 = vpop.permute.xlu0 %8379
        %8383 = vset.pattern.permute.xlu0 0
        %8384 = vperm.xlu0 %8383, %v8298
        %v8385 = vpop.permute.xlu0 %8384
        %8388 = vset.pattern.permute.xlu0 0
        %8389 = vperm.xlu0 %8388, %v8299
        %v8390 = vpop.permute.xlu0 %8389
        %8393 = vset.pattern.permute.xlu0 0
        %8394 = vperm.xlu0 %8393, %v8300
        %v8395 = vpop.permute.xlu0 %8394
        %8398 = vset.pattern.permute.xlu0 0
        %8399 = vperm.xlu0 %8398, %v8301
        %v8400 = vpop.permute.xlu0 %8399
        %8403 = vset.pattern.permute.xlu0 0
        %8404 = vperm.xlu0 %8403, %v8302
        %v8405 = vpop.permute.xlu0 %8404
        %8408 = vset.pattern.permute.xlu0 0
        %8409 = vperm.xlu0 %8408, %v8303
        %v8410 = vpop.permute.xlu0 %8409
        %8413 = vset.pattern.permute.xlu0 0
        %8414 = vperm.xlu0 %8413, %v8304
        %v8415 = vpop.permute.xlu0 %8414
        %8418 = vset.pattern.permute.xlu0 0
        %8419 = vperm.xlu0 %8418, %v8305
        %v8420 = vpop.permute.xlu0 %8419
        %8423 = vset.pattern.permute.xlu0 0
        %8424 = vperm.xlu0 %8423, %v8306
        %v8425 = vpop.permute.xlu0 %8424
        %8428 = vset.pattern.permute.xlu0 0
        %8429 = vperm.xlu0 %8428, %v8307
        %v8430 = vpop.permute.xlu0 %8429
        %8433 = vset.pattern.permute.xlu0 0
        %8434 = vperm.xlu0 %8433, %v8308
        %v8435 = vpop.permute.xlu0 %8434
        %8438 = vset.pattern.permute.xlu0 0
        %8439 = vperm.xlu0 %8438, %v8309
        %v8440 = vpop.permute.xlu0 %8439
        %8443 = vset.pattern.permute.xlu0 0
        %8444 = vperm.xlu0 %8443, %v8310
        %v8445 = vpop.permute.xlu0 %8444
        %8448 = vset.pattern.permute.xlu0 0
        %8449 = vperm.xlu0 %8448, %v8311
        %v8450 = vpop.permute.xlu0 %8449
        %8453 = vset.pattern.permute.xlu0 0
        %8454 = vperm.xlu0 %8453, %v8312
        %v8455 = vpop.permute.xlu0 %8454
        %8458 = vset.pattern.permute.xlu0 0
        %8459 = vperm.xlu0 %8458, %v8313
        %v8460 = vpop.permute.xlu0 %8459
        %8463 = vset.pattern.permute.xlu0 0
        %8464 = vperm.xlu0 %8463, %v8314
        %v8465 = vpop.permute.xlu0 %8464
        %8468 = vset.pattern.permute.xlu0 0
        %8469 = vperm.xlu0 %8468, %v8315
        %v8470 = vpop.permute.xlu0 %8469
        %8473 = vset.pattern.permute.xlu0 0
        %8474 = vperm.xlu0 %8473, %v8316
        %v8475 = vpop.permute.xlu0 %8474
        %8478 = vset.pattern.permute.xlu0 0
        %8479 = vperm.xlu0 %8478, %v8317
        %v8480 = vpop.permute.xlu0 %8479
        %8483 = vset.pattern.permute.xlu0 0
        %8484 = vperm.xlu0 %8483, %v8318
        %v8485 = vpop.permute.xlu0 %8484
        %8488 = vset.pattern.permute.xlu0 0
        %8489 = vperm.xlu0 %8488, %v8319
        %v8490 = vpop.permute.xlu0 %8489
        %8493 = vset.pattern.permute.xlu0 0
        %8494 = vperm.xlu0 %8493, %v8320
        %v8495 = vpop.permute.xlu0 %8494
        %8498 = vset.pattern.permute.xlu0 0
        %8499 = vperm.xlu0 %8498, %v8321
        %v8500 = vpop.permute.xlu0 %8499
        %8503 = vset.pattern.permute.xlu0 0
        %8504 = vperm.xlu0 %8503, %v8322
        %v8505 = vpop.permute.xlu0 %8504
        %8508 = vset.pattern.permute.xlu0 0
        %8509 = vperm.xlu0 %8508, %v8323
        %v8510 = vpop.permute.xlu0 %8509
        %8513 = vset.pattern.permute.xlu0 0
        %8514 = vperm.xlu0 %8513, %v8324
        %v8515 = vpop.permute.xlu0 %8514
        %8518 = vset.pattern.permute.xlu0 0
        %8519 = vperm.xlu0 %8518, %v8325
        %v8520 = vpop.permute.xlu0 %8519
        %8523 = vset.pattern.permute.xlu0 0
        %8524 = vperm.xlu0 %8523, %v8326
        %v8525 = vpop.permute.xlu0 %8524
        %8528 = vset.pattern.permute.xlu0 0
        %8529 = vperm.xlu0 %8528, %v8327
        %v8530 = vpop.permute.xlu0 %8529
        %8533 = vset.pattern.permute.xlu0 0
        %8534 = vperm.xlu0 %8533, %v8328
        %v8535 = vpop.permute.xlu0 %8534
        %8538 = vset.pattern.permute.xlu0 0
        %8539 = vperm.xlu0 %8538, %v8329
        %v8540 = vpop.permute.xlu0 %8539
        %8543 = vset.pattern.permute.xlu0 0
        %8544 = vperm.xlu0 %8543, %v8330
        %v8545 = vpop.permute.xlu0 %8544
        %v8547 = vmul.f32 %v8331, %v8370
        %v8548 = vmul.f32 %v8332, %v8375
        %v8549 = vmul.f32 %v8333, %v8380
        %v8550 = vmul.f32 %v8334, %v8385
        %v8551 = vmul.f32 %v8335, %v8390
        %v8552 = vmul.f32 %v8336, %v8395
        %v8553 = vmul.f32 %v8337, %v8400
        %v8554 = vmul.f32 %v8338, %v8405
        %v8555 = vmul.f32 %v8339, %v8410
        %v8556 = vmul.f32 %v8340, %v8415
        %v8557 = vmul.f32 %v8341, %v8420
        %v8558 = vmul.f32 %v8342, %v8425
        %v8559 = vmul.f32 %v8343, %v8430
        %v8560 = vmul.f32 %v8344, %v8435
        %v8561 = vmul.f32 %v8345, %v8440
        %v8562 = vmul.f32 %v8346, %v8445
        %v8563 = vmul.f32 %v8347, %v8450
        %v8564 = vmul.f32 %v8348, %v8455
        %v8565 = vmul.f32 %v8349, %v8460
        %v8566 = vmul.f32 %v8350, %v8465
        %v8567 = vmul.f32 %v8351, %v8470
        %v8568 = vmul.f32 %v8352, %v8475
        %v8569 = vmul.f32 %v8353, %v8480
        %v8570 = vmul.f32 %v8354, %v8485
        %v8571 = vmul.f32 %v8355, %v8490
        %v8572 = vmul.f32 %v8356, %v8495
        %v8573 = vmul.f32 %v8357, %v8500
        %v8574 = vmul.f32 %v8358, %v8505
        %v8575 = vmul.f32 %v8359, %v8510
        %v8576 = vmul.f32 %v8360, %v8515
        %v8577 = vmul.f32 %v8361, %v8520
        %v8578 = vmul.f32 %v8362, %v8525
        %v8579 = vmul.f32 %v8363, %v8530
        %v8580 = vmul.f32 %v8364, %v8535
        %v8581 = vmul.f32 %v8365, %v8540
        %v8582 = vmul.f32 %v8366, %v8545
        %v8583 = vadd.f32 %v8547, %v8548
        %v8584 = vadd.f32 %v8583, %v8549
        %v8585 = vadd.f32 %v8584, %v8550
        %v8586 = vadd.f32 %v8585, %v8551
        %v8587 = vadd.f32 %v8586, %v8552
        %v8588 = vadd.f32 %v8587, %v8553
        %v8589 = vadd.f32 %v8588, %v8554
        %v8590 = vadd.f32 %v8589, %v8555
        %v8591 = vadd.f32 %v8590, %v8556
        %v8592 = vadd.f32 %v8591, %v8557
        %v8593 = vadd.f32 %v8592, %v8558
        %v8594 = vadd.f32 %v8593, %v8559
        %v8595 = vadd.f32 %v8594, %v8560
        %v8596 = vadd.f32 %v8595, %v8561
        %v8597 = vadd.f32 %v8596, %v8562
        %v8598 = vadd.f32 %v8597, %v8563
        %v8599 = vadd.f32 %v8598, %v8564
        %v8600 = vadd.f32 %v8599, %v8565
        %v8601 = vadd.f32 %v8600, %v8566
        %v8602 = vadd.f32 %v8601, %v8567
        %v8603 = vadd.f32 %v8602, %v8568
        %v8604 = vadd.f32 %v8603, %v8569
        %v8605 = vadd.f32 %v8604, %v8570
        %v8606 = vadd.f32 %v8605, %v8571
        %v8607 = vadd.f32 %v8606, %v8572
        %v8608 = vadd.f32 %v8607, %v8573
        %v8609 = vadd.f32 %v8608, %v8574
        %v8610 = vadd.f32 %v8609, %v8575
        %v8611 = vadd.f32 %v8610, %v8576
        %v8612 = vadd.f32 %v8611, %v8577
        %v8613 = vadd.f32 %v8612, %v8578
        %v8614 = vadd.f32 %v8613, %v8579
        %v8615 = vadd.f32 %v8614, %v8580
        %v8616 = vadd.f32 %v8615, %v8581
        %v8617 = vadd.f32 %v8616, %v8582
        %v8618 = vrot.slane %v8617, 4
        %v8619 = vadd.f32 %v8617, %v8618
        %v8620 = vrot.slane %v8619, 2
        %v8621 = vadd.f32 %v8619, %v8620
        %v8622 = vrot.slane %v8621, 1
        %v8623 = vadd.f32 %v8621, %v8622
        %v8624 = vmul.f32 %v8623, 0.00390625
        %v8625 = vsub.f32 %v8331, %v8624
        %v8626 = vsub.f32 %v8332, %v8624
        %v8627 = vsub.f32 %v8333, %v8624
        %v8628 = vsub.f32 %v8334, %v8624
        %v8629 = vsub.f32 %v8335, %v8624
        %v8630 = vsub.f32 %v8336, %v8624
        %v8631 = vsub.f32 %v8337, %v8624
        %v8632 = vsub.f32 %v8338, %v8624
        %v8633 = vsub.f32 %v8339, %v8624
        %v8634 = vsub.f32 %v8340, %v8624
        %v8635 = vsub.f32 %v8341, %v8624
        %v8636 = vsub.f32 %v8342, %v8624
        %v8637 = vsub.f32 %v8343, %v8624
        %v8638 = vsub.f32 %v8344, %v8624
        %v8639 = vsub.f32 %v8345, %v8624
        %v8640 = vsub.f32 %v8346, %v8624
        %v8641 = vsub.f32 %v8347, %v8624
        %v8642 = vsub.f32 %v8348, %v8624
        %v8643 = vsub.f32 %v8349, %v8624
        %v8644 = vsub.f32 %v8350, %v8624
        %v8645 = vsub.f32 %v8351, %v8624
        %v8646 = vsub.f32 %v8352, %v8624
        %v8647 = vsub.f32 %v8353, %v8624
        %v8648 = vsub.f32 %v8354, %v8624
        %v8649 = vsub.f32 %v8355, %v8624
        %v8650 = vsub.f32 %v8356, %v8624
        %v8651 = vsub.f32 %v8357, %v8624
        %v8652 = vsub.f32 %v8358, %v8624
        %v8653 = vsub.f32 %v8359, %v8624
        %v8654 = vsub.f32 %v8360, %v8624
        %v8655 = vsub.f32 %v8361, %v8624
        %v8656 = vsub.f32 %v8362, %v8624
        %v8657 = vsub.f32 %v8363, %v8624
        %v8658 = vsub.f32 %v8364, %v8624
        %v8659 = vsub.f32 %v8365, %v8624
        %v8660 = vsub.f32 %v8366, %v8624
        %v8661 = vmul.f32 %v8625, %v8370
        %v8662 = vmul.f32 %v8626, %v8375
        %v8663 = vmul.f32 %v8627, %v8380
        %v8664 = vmul.f32 %v8628, %v8385
        %v8665 = vmul.f32 %v8629, %v8390
        %v8666 = vmul.f32 %v8630, %v8395
        %v8667 = vmul.f32 %v8631, %v8400
        %v8668 = vmul.f32 %v8632, %v8405
        %v8669 = vmul.f32 %v8633, %v8410
        %v8670 = vmul.f32 %v8634, %v8415
        %v8671 = vmul.f32 %v8635, %v8420
        %v8672 = vmul.f32 %v8636, %v8425
        %v8673 = vmul.f32 %v8637, %v8430
        %v8674 = vmul.f32 %v8638, %v8435
        %v8675 = vmul.f32 %v8639, %v8440
        %v8676 = vmul.f32 %v8640, %v8445
        %v8677 = vmul.f32 %v8641, %v8450
        %v8678 = vmul.f32 %v8642, %v8455
        %v8679 = vmul.f32 %v8643, %v8460
        %v8680 = vmul.f32 %v8644, %v8465
        %v8681 = vmul.f32 %v8645, %v8470
        %v8682 = vmul.f32 %v8646, %v8475
        %v8683 = vmul.f32 %v8647, %v8480
        %v8684 = vmul.f32 %v8648, %v8485
        %v8685 = vmul.f32 %v8649, %v8490
        %v8686 = vmul.f32 %v8650, %v8495
        %v8687 = vmul.f32 %v8651, %v8500
        %v8688 = vmul.f32 %v8652, %v8505
        %v8689 = vmul.f32 %v8653, %v8510
        %v8690 = vmul.f32 %v8654, %v8515
        %v8691 = vmul.f32 %v8655, %v8520
        %v8692 = vmul.f32 %v8656, %v8525
        %v8693 = vmul.f32 %v8657, %v8530
        %v8694 = vmul.f32 %v8658, %v8535
        %v8695 = vmul.f32 %v8659, %v8540
        %v8696 = vmul.f32 %v8660, %v8545
        %v8697 = vmul.f32 %v8661, %v8661
        %v8698 = vmul.f32 %v8662, %v8662
        %v8699 = vmul.f32 %v8663, %v8663
        %v8700 = vmul.f32 %v8664, %v8664
        %v8701 = vmul.f32 %v8665, %v8665
        %v8702 = vmul.f32 %v8666, %v8666
        %v8703 = vmul.f32 %v8667, %v8667
        %v8704 = vmul.f32 %v8668, %v8668
        %v8705 = vmul.f32 %v8669, %v8669
        %v8706 = vmul.f32 %v8670, %v8670
        %v8707 = vmul.f32 %v8671, %v8671
        %v8708 = vmul.f32 %v8672, %v8672
        %v8709 = vmul.f32 %v8673, %v8673
        %v8710 = vmul.f32 %v8674, %v8674
        %v8711 = vmul.f32 %v8675, %v8675
        %v8712 = vmul.f32 %v8676, %v8676
        %v8713 = vmul.f32 %v8677, %v8677
        %v8714 = vmul.f32 %v8678, %v8678
        %v8715 = vmul.f32 %v8679, %v8679
        %v8716 = vmul.f32 %v8680, %v8680
        %v8717 = vmul.f32 %v8681, %v8681
        %v8718 = vmul.f32 %v8682, %v8682
        %v8719 = vmul.f32 %v8683, %v8683
        %v8720 = vmul.f32 %v8684, %v8684
        %v8721 = vmul.f32 %v8685, %v8685
        %v8722 = vmul.f32 %v8686, %v8686
        %v8723 = vmul.f32 %v8687, %v8687
        %v8724 = vmul.f32 %v8688, %v8688
        %v8725 = vmul.f32 %v8689, %v8689
        %v8726 = vmul.f32 %v8690, %v8690
        %v8727 = vmul.f32 %v8691, %v8691
        %v8728 = vmul.f32 %v8692, %v8692
        %v8729 = vmul.f32 %v8693, %v8693
        %v8730 = vmul.f32 %v8694, %v8694
        %v8731 = vmul.f32 %v8695, %v8695
        %v8732 = vmul.f32 %v8696, %v8696
        %v8733 = vadd.f32 %v8697, %v8698
        %v8734 = vadd.f32 %v8733, %v8699
        %v8735 = vadd.f32 %v8734, %v8700
        %v8736 = vadd.f32 %v8735, %v8701
        %v8737 = vadd.f32 %v8736, %v8702
        %v8738 = vadd.f32 %v8737, %v8703
        %v8739 = vadd.f32 %v8738, %v8704
        %v8740 = vadd.f32 %v8739, %v8705
        %v8741 = vadd.f32 %v8740, %v8706
        %v8742 = vadd.f32 %v8741, %v8707
        %v8743 = vadd.f32 %v8742, %v8708
        %v8744 = vadd.f32 %v8743, %v8709
        %v8745 = vadd.f32 %v8744, %v8710
        %v8746 = vadd.f32 %v8745, %v8711
        %v8747 = vadd.f32 %v8746, %v8712
        %v8748 = vadd.f32 %v8747, %v8713
        %v8749 = vadd.f32 %v8748, %v8714
        %v8750 = vadd.f32 %v8749, %v8715
        %v8751 = vadd.f32 %v8750, %v8716
        %v8752 = vadd.f32 %v8751, %v8717
        %v8753 = vadd.f32 %v8752, %v8718
        %v8754 = vadd.f32 %v8753, %v8719
        %v8755 = vadd.f32 %v8754, %v8720
        %v8756 = vadd.f32 %v8755, %v8721
        %v8757 = vadd.f32 %v8756, %v8722
        %v8758 = vadd.f32 %v8757, %v8723
        %v8759 = vadd.f32 %v8758, %v8724
        %v8760 = vadd.f32 %v8759, %v8725
        %v8761 = vadd.f32 %v8760, %v8726
        %v8762 = vadd.f32 %v8761, %v8727
        %v8763 = vadd.f32 %v8762, %v8728
        %v8764 = vadd.f32 %v8763, %v8729
        %v8765 = vadd.f32 %v8764, %v8730
        %v8766 = vadd.f32 %v8765, %v8731
        %v8767 = vadd.f32 %v8766, %v8732
        %v8768 = vrot.slane %v8767, 4
        %v8769 = vadd.f32 %v8767, %v8768
        %v8770 = vrot.slane %v8769, 2
        %v8771 = vadd.f32 %v8769, %v8770
        %v8772 = vrot.slane %v8771, 1
        %v8773 = vadd.f32 %v8771, %v8772
        %v8774 = vmul.f32 %v8773, 0.00390625
        %v8775 = vadd.f32 %v8774, 1e-05
        %v8776 = vrsqrt.pop %v8775
        %v8777 = vmul.f32 %v8625, %v8776
        %v8778 = vmul.f32 %v8626, %v8776
        %v8779 = vmul.f32 %v8627, %v8776
        %v8780 = vmul.f32 %v8628, %v8776
        %v8781 = vmul.f32 %v8629, %v8776
        %v8782 = vmul.f32 %v8630, %v8776
        %v8783 = vmul.f32 %v8631, %v8776
        %v8784 = vmul.f32 %v8632, %v8776
        %v8785 = vmul.f32 %v8633, %v8776
        %v8786 = vmul.f32 %v8634, %v8776
        %v8787 = vmul.f32 %v8635, %v8776
        %v8788 = vmul.f32 %v8636, %v8776
        %v8789 = vmul.f32 %v8637, %v8776
        %v8790 = vmul.f32 %v8638, %v8776
        %v8791 = vmul.f32 %v8639, %v8776
        %v8792 = vmul.f32 %v8640, %v8776
        %v8793 = vmul.f32 %v8641, %v8776
        %v8794 = vmul.f32 %v8642, %v8776
        %v8795 = vmul.f32 %v8643, %v8776
        %v8796 = vmul.f32 %v8644, %v8776
        %v8797 = vmul.f32 %v8645, %v8776
        %v8798 = vmul.f32 %v8646, %v8776
        %v8799 = vmul.f32 %v8647, %v8776
        %v8800 = vmul.f32 %v8648, %v8776
        %v8801 = vmul.f32 %v8649, %v8776
        %v8802 = vmul.f32 %v8650, %v8776
        %v8803 = vmul.f32 %v8651, %v8776
        %v8804 = vmul.f32 %v8652, %v8776
        %v8805 = vmul.f32 %v8653, %v8776
        %v8806 = vmul.f32 %v8654, %v8776
        %v8807 = vmul.f32 %v8655, %v8776
        %v8808 = vmul.f32 %v8656, %v8776
        %v8809 = vmul.f32 %v8657, %v8776
        %v8810 = vmul.f32 %v8658, %v8776
        %v8811 = vmul.f32 %v8659, %v8776
        %v8812 = vmul.f32 %v8660, %v8776
        %v8813 = vadd.f32 %v8223, 1.0
        %v8814 = vadd.f32 %v8225, 1.0
        %v8815 = vadd.f32 %v8227, 1.0
        %v8816 = vadd.f32 %v8229, 1.0
        %v8817 = vadd.f32 %v8231, 1.0
        %v8818 = vadd.f32 %v8233, 1.0
        %v8819 = vadd.f32 %v8235, 1.0
        %v8820 = vadd.f32 %v8237, 1.0
        %v8821 = vadd.f32 %v8239, 1.0
        %v8822 = vadd.f32 %v8241, 1.0
        %v8823 = vadd.f32 %v8243, 1.0
        %v8824 = vadd.f32 %v8245, 1.0
        %v8825 = vadd.f32 %v8247, 1.0
        %v8826 = vadd.f32 %v8249, 1.0
        %v8827 = vadd.f32 %v8251, 1.0
        %v8828 = vadd.f32 %v8253, 1.0
        %v8829 = vadd.f32 %v8255, 1.0
        %v8830 = vadd.f32 %v8257, 1.0
        %v8831 = vadd.f32 %v8259, 1.0
        %v8832 = vadd.f32 %v8261, 1.0
        %v8833 = vadd.f32 %v8263, 1.0
        %v8834 = vadd.f32 %v8265, 1.0
        %v8835 = vadd.f32 %v8267, 1.0
        %v8836 = vadd.f32 %v8269, 1.0
        %v8837 = vadd.f32 %v8271, 1.0
        %v8838 = vadd.f32 %v8273, 1.0
        %v8839 = vadd.f32 %v8275, 1.0
        %v8840 = vadd.f32 %v8277, 1.0
        %v8841 = vadd.f32 %v8279, 1.0
        %v8842 = vadd.f32 %v8281, 1.0
        %v8843 = vadd.f32 %v8283, 1.0
        %v8844 = vadd.f32 %v8285, 1.0
        %v8845 = vadd.f32 %v8287, 1.0
        %v8846 = vadd.f32 %v8289, 1.0
        %v8847 = vadd.f32 %v8291, 1.0
        %v8848 = vadd.f32 %v8293, 1.0
        %v8849 = vmul.f32 %v8777, %v8813
        %v8850 = vmul.f32 %v8778, %v8814
        %v8851 = vmul.f32 %v8779, %v8815
        %v8852 = vmul.f32 %v8780, %v8816
        %v8853 = vmul.f32 %v8781, %v8817
        %v8854 = vmul.f32 %v8782, %v8818
        %v8855 = vmul.f32 %v8783, %v8819
        %v8856 = vmul.f32 %v8784, %v8820
        %v8857 = vmul.f32 %v8785, %v8821
        %v8858 = vmul.f32 %v8786, %v8822
        %v8859 = vmul.f32 %v8787, %v8823
        %v8860 = vmul.f32 %v8788, %v8824
        %v8861 = vmul.f32 %v8789, %v8825
        %v8862 = vmul.f32 %v8790, %v8826
        %v8863 = vmul.f32 %v8791, %v8827
        %v8864 = vmul.f32 %v8792, %v8828
        %v8865 = vmul.f32 %v8793, %v8829
        %v8866 = vmul.f32 %v8794, %v8830
        %v8867 = vmul.f32 %v8795, %v8831
        %v8868 = vmul.f32 %v8796, %v8832
        %v8869 = vmul.f32 %v8797, %v8833
        %v8870 = vmul.f32 %v8798, %v8834
        %v8871 = vmul.f32 %v8799, %v8835
        %v8872 = vmul.f32 %v8800, %v8836
        %v8873 = vmul.f32 %v8801, %v8837
        %v8874 = vmul.f32 %v8802, %v8838
        %v8875 = vmul.f32 %v8803, %v8839
        %v8876 = vmul.f32 %v8804, %v8840
        %v8877 = vmul.f32 %v8805, %v8841
        %v8878 = vmul.f32 %v8806, %v8842
        %v8879 = vmul.f32 %v8807, %v8843
        %v8880 = vmul.f32 %v8808, %v8844
        %v8881 = vmul.f32 %v8809, %v8845
        %v8882 = vmul.f32 %v8810, %v8846
        %v8883 = vmul.f32 %v8811, %v8847
        %v8884 = vmul.f32 %v8812, %v8848
        %v8885 = vadd.f32 %v8849, %v8224
        %v8886 = vadd.f32 %v8850, %v8226
        %v8887 = vadd.f32 %v8851, %v8228
        %v8888 = vadd.f32 %v8852, %v8230
        %v8889 = vadd.f32 %v8853, %v8232
        %v8890 = vadd.f32 %v8854, %v8234
        %v8891 = vadd.f32 %v8855, %v8236
        %v8892 = vadd.f32 %v8856, %v8238
        %v8893 = vadd.f32 %v8857, %v8240
        %v8894 = vadd.f32 %v8858, %v8242
        %v8895 = vadd.f32 %v8859, %v8244
        %v8896 = vadd.f32 %v8860, %v8246
        %v8897 = vadd.f32 %v8861, %v8248
        %v8898 = vadd.f32 %v8862, %v8250
        %v8899 = vadd.f32 %v8863, %v8252
        %v8900 = vadd.f32 %v8864, %v8254
        %v8901 = vadd.f32 %v8865, %v8256
        %v8902 = vadd.f32 %v8866, %v8258
        %v8903 = vadd.f32 %v8867, %v8260
        %v8904 = vadd.f32 %v8868, %v8262
        %v8905 = vadd.f32 %v8869, %v8264
        %v8906 = vadd.f32 %v8870, %v8266
        %v8907 = vadd.f32 %v8871, %v8268
        %v8908 = vadd.f32 %v8872, %v8270
        %v8909 = vadd.f32 %v8873, %v8272
        %v8910 = vadd.f32 %v8874, %v8274
        %v8911 = vadd.f32 %v8875, %v8276
        %v8912 = vadd.f32 %v8876, %v8278
        %v8913 = vadd.f32 %v8877, %v8280
        %v8914 = vadd.f32 %v8878, %v8282
        %v8915 = vadd.f32 %v8879, %v8284
        %v8916 = vadd.f32 %v8880, %v8286
        %v8917 = vadd.f32 %v8881, %v8288
        %v8918 = vadd.f32 %v8882, %v8290
        %v8919 = vadd.f32 %v8883, %v8292
        %v8920 = vadd.f32 %v8884, %v8294
        %v8921 = vmul.f32 %v8885, %v8370
        %v8922 = vmul.f32 %v8886, %v8375
        %v8923 = vmul.f32 %v8887, %v8380
        %v8924 = vmul.f32 %v8888, %v8385
        %v8925 = vmul.f32 %v8889, %v8390
        %v8926 = vmul.f32 %v8890, %v8395
        %v8927 = vmul.f32 %v8891, %v8400
        %v8928 = vmul.f32 %v8892, %v8405
        %v8929 = vmul.f32 %v8893, %v8410
        %v8930 = vmul.f32 %v8894, %v8415
        %v8931 = vmul.f32 %v8895, %v8420
        %v8932 = vmul.f32 %v8896, %v8425
        %v8933 = vmul.f32 %v8897, %v8430
        %v8934 = vmul.f32 %v8898, %v8435
        %v8935 = vmul.f32 %v8899, %v8440
        %v8936 = vmul.f32 %v8900, %v8445
        %v8937 = vmul.f32 %v8901, %v8450
        %v8938 = vmul.f32 %v8902, %v8455
        %v8939 = vmul.f32 %v8903, %v8460
        %v8940 = vmul.f32 %v8904, %v8465
        %v8941 = vmul.f32 %v8905, %v8470
        %v8942 = vmul.f32 %v8906, %v8475
        %v8943 = vmul.f32 %v8907, %v8480
        %v8944 = vmul.f32 %v8908, %v8485
        %v8945 = vmul.f32 %v8909, %v8490
        %v8946 = vmul.f32 %v8910, %v8495
        %v8947 = vmul.f32 %v8911, %v8500
        %v8948 = vmul.f32 %v8912, %v8505
        %v8949 = vmul.f32 %v8913, %v8510
        %v8950 = vmul.f32 %v8914, %v8515
        %v8951 = vmul.f32 %v8915, %v8520
        %v8952 = vmul.f32 %v8916, %v8525
        %v8953 = vmul.f32 %v8917, %v8530
        %v8954 = vmul.f32 %v8918, %v8535
        %v8955 = vmul.f32 %v8919, %v8540
        %v8956 = vmul.f32 %v8920, %v8545
        %v8957 = vpack.c.bf16 %v8922, %v8921
        %v8958 = vpack.c.bf16 %v8924, %v8923
        %v8959 = vpack.c.bf16 %v8926, %v8925
        %v8960 = vpack.c.bf16 %v8928, %v8927
        %v8961 = vpack.c.bf16 %v8930, %v8929
        %v8962 = vpack.c.bf16 %v8932, %v8931
        %v8963 = vpack.c.bf16 %v8934, %v8933
        %v8964 = vpack.c.bf16 %v8936, %v8935
        %v8965 = vpack.c.bf16 %v8938, %v8937
        %v8966 = vpack.c.bf16 %v8940, %v8939
        %v8967 = vpack.c.bf16 %v8942, %v8941
        %v8968 = vpack.c.bf16 %v8944, %v8943
        %v8969 = vpack.c.bf16 %v8946, %v8945
        %v8970 = vpack.c.bf16 %v8948, %v8947
        %v8971 = vpack.c.bf16 %v8950, %v8949
        %v8972 = vpack.c.bf16 %v8952, %v8951
        %v8973 = vpack.c.bf16 %v8954, %v8953
        %v8974 = vpack.c.bf16 %v8956, %v8955
        %v8993 = vunpack.c.l.b16 %v8957
        %v8994 = vunpack.c.h.b16 %v8957
        %v8995 = vunpack.c.l.b16 %v8958
        %v8996 = vunpack.c.h.b16 %v8958
        %v8997 = vunpack.c.l.b16 %v8959
        %v8998 = vunpack.c.h.b16 %v8959
        %v8999 = vunpack.c.l.b16 %v8960
        %v9000 = vunpack.c.h.b16 %v8960
        %v9001 = vunpack.c.l.b16 %v8961
        %v9002 = vunpack.c.h.b16 %v8961
        %v9003 = vunpack.c.l.b16 %v8962
        %v9004 = vunpack.c.h.b16 %v8962
        %v9005 = vunpack.c.l.b16 %v8963
        %v9006 = vunpack.c.h.b16 %v8963
        %v9007 = vunpack.c.l.b16 %v8964
        %v9008 = vunpack.c.h.b16 %v8964
        %v9009 = vunpack.c.l.b16 %v8965
        %v9010 = vunpack.c.h.b16 %v8965
        %v9011 = vunpack.c.l.b16 %v8966
        %v9012 = vunpack.c.h.b16 %v8966
        %v9013 = vunpack.c.l.b16 %v8967
        %v9014 = vunpack.c.h.b16 %v8967
        %v9015 = vunpack.c.l.b16 %v8968
        %v9016 = vunpack.c.h.b16 %v8968
        %v9017 = vunpack.c.l.b16 %v8969
        %v9018 = vunpack.c.h.b16 %v8969
        %v9019 = vunpack.c.l.b16 %v8970
        %v9020 = vunpack.c.h.b16 %v8970
        %v9021 = vunpack.c.l.b16 %v8971
        %v9022 = vunpack.c.h.b16 %v8971
        %v9023 = vunpack.c.l.b16 %v8972
        %v9024 = vunpack.c.h.b16 %v8972
        %v9025 = vunpack.c.l.b16 %v8973
        %v9026 = vunpack.c.h.b16 %v8973
        %v9027 = vunpack.c.l.b16 %v8974
        %v9028 = vunpack.c.h.b16 %v8974
        %v9029 = vpack.c.b16 %v8993, %v8993
        %v9030 = vpack.c.b16 %v8994, %v8994
        %v9031 = vpack.c.b16 %v8995, %v8995
        %v9032 = vpack.c.b16 %v8996, %v8996
        %v9033 = vpack.c.b16 %v8997, %v8997
        %v9034 = vpack.c.b16 %v8998, %v8998
        %v9035 = vpack.c.b16 %v8999, %v8999
        %v9036 = vpack.c.b16 %v9000, %v9000
        %v9037 = vpack.c.b16 %v9001, %v9001
        %v9038 = vpack.c.b16 %v9002, %v9002
        %v9039 = vpack.c.b16 %v9003, %v9003
        %v9040 = vpack.c.b16 %v9004, %v9004
        %v9041 = vpack.c.b16 %v9005, %v9005
        %v9042 = vpack.c.b16 %v9006, %v9006
        %v9043 = vpack.c.b16 %v9007, %v9007
        %v9044 = vpack.c.b16 %v9008, %v9008
        %v9045 = vpack.c.b16 %v9009, %v9009
        %v9046 = vpack.c.b16 %v9010, %v9010
        %v9047 = vpack.c.b16 %v9011, %v9011
        %v9048 = vpack.c.b16 %v9012, %v9012
        %v9049 = vpack.c.b16 %v9013, %v9013
        %v9050 = vpack.c.b16 %v9014, %v9014
        %v9051 = vpack.c.b16 %v9015, %v9015
        %v9052 = vpack.c.b16 %v9016, %v9016
        %v9053 = vpack.c.b16 %v9017, %v9017
        %v9054 = vpack.c.b16 %v9018, %v9018
        %v9055 = vpack.c.b16 %v9019, %v9019
        %v9056 = vpack.c.b16 %v9020, %v9020
        %v9057 = vpack.c.b16 %v9021, %v9021
        %v9058 = vpack.c.b16 %v9022, %v9022
        %v9059 = vpack.c.b16 %v9023, %v9023
        %v9060 = vpack.c.b16 %v9024, %v9024
        %v9061 = vpack.c.b16 %v9025, %v9025
        %v9062 = vpack.c.b16 %v9026, %v9026
        %v9063 = vpack.c.b16 %v9027, %v9027
        %v9064 = vpack.c.b16 %v9028, %v9028
        %9101 = vst [vmem:[%s356] sm:$0xf] %v9029
        %9102 = vst [vmem:[%s356 + $0x4] sm:$0xf] %v9030
        %9103 = vst [vmem:[%s356 + $0x8] sm:$0xf] %v9031
        %9104 = vst [vmem:[%s356 + $0xc] sm:$0xf] %v9032
        %9105 = vst [vmem:[%s356 + $0x10] sm:$0xf] %v9033
        %9106 = vst [vmem:[%s356 + $0x14] sm:$0xf] %v9034
        %9107 = vst [vmem:[%s356 + $0x18] sm:$0xf] %v9035
        %9108 = vst [vmem:[%s356 + $0x1c] sm:$0xf] %v9036
        %9109 = vst [vmem:[%s356 + $0x20] sm:$0xf] %v9037
        %9110 = vst [vmem:[%s356 + $0x24] sm:$0xf] %v9038
        %9111 = vst [vmem:[%s356 + $0x28] sm:$0xf] %v9039
        %9112 = vst [vmem:[%s356 + $0x2c] sm:$0xf] %v9040
        %9113 = vst [vmem:[%s356 + $0x30] sm:$0xf] %v9041
        %9114 = vst [vmem:[%s356 + $0x34] sm:$0xf] %v9042
        %9115 = vst [vmem:[%s356 + $0x38] sm:$0xf] %v9043
        %9116 = vst [vmem:[%s356 + $0x3c] sm:$0xf] %v9044
        %9117 = vst [vmem:[%s356 + $0x40] sm:$0xf] %v9045
        %9118 = vst [vmem:[%s356 + $0x44] sm:$0xf] %v9046
        %9119 = vst [vmem:[%s356 + $0x48] sm:$0xf] %v9047
        %9120 = vst [vmem:[%s356 + $0x4c] sm:$0xf] %v9048
        %9121 = vst [vmem:[%s356 + $0x50] sm:$0xf] %v9049
        %9122 = vst [vmem:[%s356 + $0x54] sm:$0xf] %v9050
        %9123 = vst [vmem:[%s356 + $0x58] sm:$0xf] %v9051
        %9124 = vst [vmem:[%s356 + $0x5c] sm:$0xf] %v9052
        %9125 = vst [vmem:[%s356 + $0x60] sm:$0xf] %v9053
        %9126 = vst [vmem:[%s356 + $0x64] sm:$0xf] %v9054
        %9127 = vst [vmem:[%s356 + $0x68] sm:$0xf] %v9055
        %9128 = vst [vmem:[%s356 + $0x6c] sm:$0xf] %v9056
        %9129 = vst [vmem:[%s356 + $0x70] sm:$0xf] %v9057
        %9130 = vst [vmem:[%s356 + $0x74] sm:$0xf] %v9058
        %9131 = vst [vmem:[%s356 + $0x78] sm:$0xf] %v9059
        %9132 = vst [vmem:[%s356 + $0x7c] sm:$0xf] %v9060
        %9133 = vst [vmem:[%s356 + $0x80] sm:$0xf] %v9061
        %9134 = vst [vmem:[%s356 + $0x84] sm:$0xf] %v9062
        %9135 = vst [vmem:[%s356 + $0x88] sm:$0xf] %v9063
        %9136 = vst [vmem:[%s356 + $0x8c] sm:$0xf] %v9064
        %s9137 = sand.u32 %s215, 1
        %s9138 = scalar_lea.sflag [#allocation5], %s9137
        %s9139 = sand.u32 %s215, 1
        %s9140 = smul.addr %s9139, 144
        %s9141 = scalar_lea.vmem [#allocation6], %s9140
        // Predicated region
        $region57: #{tpu_custom_call.1} parent=47 // pred_check
          %p9142 = pneg %p225
        $region58: #{tpu_custom_call.1} parent=47 // pred_check_branch
          %9144 = sbr.rel (%p9142) target = $region60
        $region59: #{tpu_custom_call.1} parent=47 // pred_region
          %s9146 = ssub.s32 2304, 2304
          %9147 = vsyncadd %s9138, %s9146
          %s9148 = smul.addr %s28, 36
          %s9149 = sadd.s32 %s29, %s9148
          %s9150 = smul.addr %s9149, 64
          %s9151 = scalar_lea.hbm %s7, %s9150
          %s9152 = sshll.u32 %s9141, 4
          %s9153 = int_to_ptr.vmem [resolvable:$true] %s9152
          %9158 = dma.vmem_to_hbm [thread:$0]  %s9153, 2304, %s9151, %s9138, 64, 64, 4
        $region60: #{tpu_custom_call.1} parent=47 // pred_fallthru
          _
      $region48: #{tpu_custom_call.1} parent=5 // pred_fallthru
        _
      %p9159 = scmp.le.s32.totalorder 2, %s19
      // Predicated region
      $region61: #{tpu_custom_call.1} parent=5 // pred_check
        %p9160 = pneg %p9159
      $region62: #{tpu_custom_call.1} parent=5 // pred_check_branch
        %9162 = sbr.rel (%p9160) target = $region64
      $region63: #{tpu_custom_call.1} parent=5 // pred_region
        %s9163 = ssub.s32 %s19, 2
        // Predicated region
        $region65: #{tpu_custom_call.1} parent=63 // pred_check
          %p9164 = pneg %p231
        $region66: #{tpu_custom_call.1} parent=63 // pred_check_branch
          %9166 = sbr.rel (%p9164) target = $region68
        $region67: #{tpu_custom_call.1} parent=63 // pred_region
          %s9167 = sand.u32 %s216, 1
          %s9168 = scalar_lea.sflag [#allocation5], %s9167
          %s9169 = sand.u32 %s216, 1
          %s9170 = smul.addr %s9169, 144
          %s9171 = scalar_lea.vmem [#allocation6], %s9170
          %9172 = dma.done %s9168, 2304
        $region68: #{tpu_custom_call.1} parent=63 // pred_fallthru
          _
      $region64: #{tpu_custom_call.1} parent=5 // pred_fallthru
        _
    $region6: #{tpu_custom_call.1} parent=1 // loop_footer
      %s23 = sadd.s32 1, %s19
    $region7: #{tpu_custom_call.1} parent=1 // loop_footer_branch
      %18 = sbr.rel target = $region3
    $region8: #{tpu_custom_call.1} parent=1 // loop_exit
      _
    %9173 = vsyncpa [#allocation4], 1
    %s9174 = scalar_lea.sflag [#allocation4], 1
    %9175 = vsyncpa %s9174, 1
    %9176 = vsyncpa [#allocation5], 1
    %s9177 = scalar_lea.sflag [#allocation5], 1
    %9178 = vsyncpa %s9177, 1

</llo_original>
